<compile_context>
chip_gen: v7x
topology: tpu7x:2x2x1
jax: 0.10.0
libtpu: 0.0.40
codegen_flags: <defaults>
</compile_context>

<pallas_src>
import functools

import jax
import jax.numpy as jnp
from jax.experimental import pallas as pl
from jax.experimental.pallas import tpu as pltpu

LANES = 128          # pad every GEMM output (N) dim to the 128-lane vreg width
VMEM_LIMIT = 32 * 1024 * 1024


# ----------------------------- Pallas kernels ------------------------------

def _conv_relu_pool_kernel(x_ref, w_ref, b_ref, o_ref, *, out_w):
    """im2col GEMM + bias + ReLU + fused 2x2/stride-2 max-pool.

    x_ref: (R, K)   patch rows for a whole number of images, (img, h, w) order
    w_ref: (K, 128) zero-padded weight;  b_ref: (1, 128) zero-padded bias
    o_ref: (R//4, 128) pooled activations, (img, h//2, w//2) row order
    """
    acc = jnp.dot(x_ref[...], w_ref[...], preferred_element_type=jnp.float32)
    acc = jnp.maximum(acc + b_ref[...], 0.0)
    r, n = acc.shape
    # pool along w: adjacent row pairs (w is the minor row index)
    m1 = jnp.max(acc.reshape(r // 2, 2, n), axis=1)
    # pool along h: row pairs separated by out_w // 2
    m2 = jnp.max(m1.reshape(r // (2 * out_w), 2, out_w // 2, n), axis=1)
    o_ref[...] = m2.reshape(r // 4, n).astype(o_ref.dtype)


def _fc_fused_kernel(x_ref, w1_ref, b1_ref, w2_ref, b2_ref, o_ref, *, valid_n):
    """Fused fc1 + ReLU + fc2 + log_softmax; intermediate stays in VMEM/vregs."""
    h = jnp.dot(x_ref[...], w1_ref[...], preferred_element_type=jnp.float32)
    h = jnp.maximum(h + b1_ref[...], 0.0)
    logits = jnp.dot(h, w2_ref[...], preferred_element_type=jnp.float32)
    logits = logits + b2_ref[...]
    # mask padded output lanes so they cannot perturb max / logsumexp
    col = jax.lax.broadcasted_iota(jnp.int32, logits.shape, 1)
    logits = jnp.where(col < valid_n, logits, -jnp.inf)
    m = jnp.max(logits, axis=-1, keepdims=True)
    s = logits - m
    lse = jnp.log(jnp.sum(jnp.exp(s), axis=-1, keepdims=True))
    o_ref[...] = (s - lse).astype(o_ref.dtype)


# ------------------------------ call wrappers -------------------------------

def conv_relu_pool(patches, w, b, *, out_h, out_w, rows_per_block):
    m, k = patches.shape
    kw_, n = w.shape
    assert k == kw_ and n == LANES
    assert m % rows_per_block == 0
    assert rows_per_block % (out_h * out_w) == 0      # whole images per block
    out_rows = rows_per_block // 4

    cost = pl.CostEstimate(
        flops=2 * m * k * n + 3 * m * n,
        transcendentals=0,
        bytes_accessed=4 * (m * k + k * n + n + (m // 4) * n))

    return pl.pallas_call(
        functools.partial(_conv_relu_pool_kernel, out_w=out_w),
        out_shape=jax.ShapeDtypeStruct((m // 4, n), jnp.float32),
        grid=(m // rows_per_block,),
        in_specs=[
            pl.BlockSpec((rows_per_block, k), lambda i: (i, 0)),
            pl.BlockSpec((k, n), lambda i: (0, 0)),
            pl.BlockSpec((1, n), lambda i: (0, 0)),
        ],
        out_specs=pl.BlockSpec((out_rows, n), lambda i: (i, 0)),
        compiler_params=pltpu.CompilerParams(
            dimension_semantics=("parallel",),
            vmem_limit_bytes=VMEM_LIMIT),
        cost_estimate=cost,
    )(patches, w, b)


def fc_fused_logsoftmax(x, w1, b1, w2, b2, *, valid_n):
    m, k = x.shape
    _, hdim = w1.shape
    _, n = w2.shape

    cost = pl.CostEstimate(
        flops=2 * m * k * hdim + 2 * m * hdim * n + 2 * m * hdim + 4 * m * n,
        transcendentals=m * n + m,
        bytes_accessed=4 * (m * k + k * hdim + hdim + hdim * n + n + m * n))

    return pl.pallas_call(
        functools.partial(_fc_fused_kernel, valid_n=valid_n),
        out_shape=jax.ShapeDtypeStruct((m, n), jnp.float32),
        grid=(1,),
        in_specs=[
            pl.BlockSpec((m, k), lambda i: (0, 0)),
            pl.BlockSpec((k, hdim), lambda i: (0, 0)),
            pl.BlockSpec((1, hdim), lambda i: (0, 0)),
            pl.BlockSpec((hdim, n), lambda i: (0, 0)),
            pl.BlockSpec((1, n), lambda i: (0, 0)),
        ],
        out_specs=pl.BlockSpec((m, n), lambda i: (0, 0)),
        compiler_params=pltpu.CompilerParams(
            dimension_semantics=("arbitrary",),
            vmem_limit_bytes=VMEM_LIMIT),
        cost_estimate=cost,
    )(x, w1, b1, w2, b2)


# ------------------------------ JAX glue ops -------------------------------
# im2col patch extraction is a pure data rearrangement; it stays as plain-JAX
# glue feeding the Pallas GEMM kernels.

def im2col_nhwc(x, kh, kw):
    """(B, H, W, C) -> (B*Ho*Wo, kh*kw*C), per-row feature order (kh, kw, C)."""
    b, h, w, c = x.shape
    ho, wo = h - kh + 1, w - kw + 1
    taps = [x[:, i:i + ho, j:j + wo, :] for i in range(kh) for j in range(kw)]
    p = jnp.stack(taps, axis=3)                       # (B, Ho, Wo, kh*kw, C)
    return p.reshape(b * ho * wo, kh * kw * c), (ho, wo)


def _pad_last(a, target):
    pad = target - a.shape[-1]
    if pad == 0:
        return a
    return jnp.pad(a, [(0, 0)] * (a.ndim - 1) + [(0, pad)])


def _rows_per_block(rows_per_image, num_images, max_rows=1024):
    """Whole images per block, targeting <= ~1024 rows per grid step."""
    ipb = max(1, max_rows // rows_per_image)
    while num_images % ipb:
        ipb -= 1
    return ipb * rows_per_image


# --------------------------- parameter repacking ----------------------------

def init_params(key):
    """Deterministic synthetic parameters matching the PyTorch module shapes."""
    ks = jax.random.split(key, 8)

    def u(k, shape, fan_in):
        bound = 1.0 / jnp.sqrt(fan_in)
        return jax.random.uniform(k, shape, jnp.float32, -bound, bound)

    return {
        "conv1_w": u(ks[0], (20, 1, 5, 5), 1 * 5 * 5),
        "conv1_b": u(ks[1], (20,), 1 * 5 * 5),
        "conv2_w": u(ks[2], (50, 20, 5, 5), 20 * 5 * 5),
        "conv2_b": u(ks[3], (50,), 20 * 5 * 5),
        "fc1_w":   u(ks[4], (500, 800), 800),
        "fc1_b":   u(ks[5], (500,), 800),
        "fc2_w":   u(ks[6], (10, 500), 500),
        "fc2_b":   u(ks[7], (10,), 500),
    }


def prepare_params(p):
    """One-time repack: transpose/pad weights into lane-dense GEMM form.

    * conv weights -> (kh*kw*Cin, 128) matching the (kh, kw, C) im2col order
    * fc1 rows reordered from PyTorch's (c, h, w) flatten to the kernel's
      (h, w, c_padded_to_128) flatten of the pooled conv2 output, so the
      activation flatten is a free reshape (no transpose / channel slice)
    * all N dims padded to 128, K dims to 32 / 512 / 2048->512 as needed
    """
    # conv1: (20,1,5,5) -> (25, 20) -> (32, 128)
    w1 = p["conv1_w"].transpose(2, 3, 1, 0).reshape(25, 20)
    w1 = _pad_last(jnp.pad(w1, ((0, 7), (0, 0))), LANES)
    b1 = _pad_last(p["conv1_b"], LANES).reshape(1, LANES)

    # conv2: (50,20,5,5) -> (500, 50) -> (512, 128)
    w2 = p["conv2_w"].transpose(2, 3, 1, 0).reshape(500, 50)
    w2 = _pad_last(jnp.pad(w2, ((0, 12), (0, 0))), LANES)
    b2 = _pad_last(p["conv2_b"], LANES).reshape(1, LANES)

    # fc1: (500, 800) -> rows in (h, w, c_pad) order -> (2048, 512)
    fw = p["fc1_w"].reshape(500, 50, 4, 4).transpose(2, 3, 1, 0)   # (4,4,50,500)
    fw = jnp.pad(fw, ((0, 0), (0, 0), (0, LANES - 50), (0, 0)))    # (4,4,128,500)
    fw = fw.reshape(4 * 4 * LANES, 500)                            # (2048, 500)
    fw = _pad_last(fw, 512)                                        # (2048, 512)
    fb = _pad_last(p["fc1_b"], 512).reshape(1, 512)

    # fc2: (10, 500) -> (512, 128)
    gw = _pad_last(jnp.pad(p["fc2_w"].T, ((0, 12), (0, 0))), LANES)
    gb = _pad_last(p["fc2_b"], LANES).reshape(1, LANES)

    return {"conv1_w": w1, "conv1_b": b1, "conv2_w": w2, "conv2_b": b2,
            "fc1_w": fw, "fc1_b": fb, "fc2_w": gw, "fc2_b": gb}


# ------------------------------ Net forward --------------------------------

def net_forward(pp, x_nchw):
    b = x_nchw.shape[0]

    # conv1 (1->20, 5x5) + ReLU + 2x2 max-pool  (one Pallas call)
    x_nhwc = x_nchw.transpose(0, 2, 3, 1)                 # (B, 28, 28, 1)
    patches, (ho, wo) = im2col_nhwc(x_nhwc, 5, 5)         # (B*576, 25)
    patches = _pad_last(patches, 32)                      # K 25 -> 32
    y = conv_relu_pool(patches, pp["conv1_w"], pp["conv1_b"],
                       out_h=ho, out_w=wo,
                       rows_per_block=_rows_per_block(ho * wo, b))
    y = y.reshape(b, ho // 2, wo // 2, LANES)[..., :20]   # (B, 12, 12, 20)

    # conv2 (20->50, 5x5) + ReLU + 2x2 max-pool  (one Pallas call)
    patches2, (ho2, wo2) = im2col_nhwc(y, 5, 5)           # (B*64, 500)
    patches2 = _pad_last(patches2, 512)                   # K 500 -> 512
    y = conv_relu_pool(patches2, pp["conv2_w"], pp["conv2_b"],
                       out_h=ho2, out_w=wo2,
                       rows_per_block=_rows_per_block(ho2 * wo2, b))
    # pooled output is (B*16, 128); flatten to (h, w, c_pad) features — matches
    # the reordered/zero-padded fc1 weight, so this reshape is free.
    y = y.reshape(b, (ho2 // 2) * (wo2 // 2) * LANES)     # (B, 2048)

    # fused fc1 + ReLU + fc2 + log_softmax  (one Pallas call)
    out = fc_fused_logsoftmax(y, pp["fc1_w"], pp["fc1_b"],
                              pp["fc2_w"], pp["fc2_b"], valid_n=10)
    return out[:, :10]


# ------------------------------- Reference ---------------------------------

def net_forward_ref(params, x_nchw):
    """Pure-JAX f32 reference of the PyTorch module (sanity check only)."""
    dn = jax.lax.conv_dimension_numbers(x_nchw.shape, params["conv1_w"].shape,
                                        ("NCHW", "OIHW", "NCHW"))
    y = jax.lax.conv_general_dilated(x_nchw, params["conv1_w"], (1, 1), "VALID",
                                     dimension_numbers=dn)
    y = jax.nn.relu(y + params["conv1_b"][None, :, None, None])
    y = jax.lax.reduce_window(y, -jnp.inf, jax.lax.max,
                              (1, 1, 2, 2), (1, 1, 2, 2), "VALID")
    dn2 = jax.lax.conv_dimension_numbers(y.shape, params["conv2_w"].shape,
                                         ("NCHW", "OIHW", "NCHW"))
    y = jax.lax.conv_general_dilated(y, params["conv2_w"], (1, 1), "VALID",
                                     dimension_numbers=dn2)
    y = jax.nn.relu(y + params["conv2_b"][None, :, None, None])
    y = jax.lax.reduce_window(y, -jnp.inf, jax.lax.max,
                              (1, 1, 2, 2), (1, 1, 2, 2), "VALID")
    y = y.reshape(y.shape[0], -1)
    y = jax.nn.relu(y @ params["fc1_w"].T + params["fc1_b"])
    y = y @ params["fc2_w"].T + params["fc2_b"]
    return jax.nn.log_softmax(y, axis=1)


# --------------------------------- Main -------------------------------------

if __name__ == "__main__":
    key = jax.random.PRNGKey(0)
    k_x, k_p = jax.random.split(key)

    # Input must be [B, 1, 28, 28] for the 4*4*50 = 800-feature flatten.
    x = jax.random.normal(k_x, (2, 1, 28, 28), jnp.float32)
    params = init_params(k_p)
    packed = prepare_params(params)          # one-time weight repack (off hot path)

    fwd = jax.jit(net_forward)
    out = jax.block_until_ready(fwd(packed, x))
    ref = jax.block_until_ready(net_forward_ref(params, x))

    assert out.shape == (2, 10), out.shape
    assert jnp.allclose(out, ref, atol=1e-4, rtol=1e-4), (
        float(jnp.max(jnp.abs(out - ref))))
    print("KERNEL_OK")
</pallas_src>

<mosaic_0001>
module attributes {stable_mosaic.version = 11 : i64} {
  func.func @_conv_relu_pool_kernel(%arg0: i32, %arg1: memref<576x32xf32, #tpu.memory_space<vmem>>, %arg2: memref<32x128xf32, #tpu.memory_space<vmem>>, %arg3: memref<1x128xf32, #tpu.memory_space<vmem>>, %arg4: memref<144x128xf32, #tpu.memory_space<vmem>>) attributes {dimension_semantics = [#tpu.dimension_semantics<parallel>], iteration_bounds = array<i64: 2>, scalar_prefetch = 0 : i64, scratch_operands = 0 : i64, tpu.core_type = #tpu.core_type<tc>, window_params = [{transform_indices = @transform_0, window_bounds = array<i64: 576, 32>}, {pipeline_mode = #tpu.pipeline_mode<synchronous>, transform_indices = @transform_1, window_bounds = array<i64: 32, 128>}, {pipeline_mode = #tpu.pipeline_mode<synchronous>, transform_indices = @transform_2, window_bounds = array<i64: 1, 128>}, {transform_indices = @transform_3, window_bounds = array<i64: 144, 128>}]} {
    %c0 = arith.constant 0 : index
    %c0_0 = arith.constant 0 : index
    %0 = vector.load %arg1[%c0, %c0_0] : memref<576x32xf32, #tpu.memory_space<vmem>>, vector<576x32xf32>
    %c0_1 = arith.constant 0 : index
    %c0_2 = arith.constant 0 : index
    %1 = vector.load %arg2[%c0_1, %c0_2] : memref<32x128xf32, #tpu.memory_space<vmem>>, vector<32x128xf32>
    %cst = arith.constant dense<0.000000e+00> : vector<576x128xf32>
    %2 = tpu.matmul %0, %1, %cst {dimension_numbers = #tpu.dot_dimension_numbers<[1], [0], [0], [1], [0, 0, 1, 1], [], []>} : vector<576x32xf32>, vector<32x128xf32>, vector<576x128xf32> -> vector<576x128xf32>
    %c0_3 = arith.constant 0 : index
    %c0_4 = arith.constant 0 : index
    %3 = vector.load %arg3[%c0_3, %c0_4] : memref<1x128xf32, #tpu.memory_space<vmem>>, vector<1x128xf32>
    %4 = vector.broadcast %3 : vector<1x128xf32> to vector<576x128xf32>
    %5 = arith.addf %2, %4 : vector<576x128xf32>
    %cst_5 = arith.constant 0.000000e+00 : f32
    %6 = vector.broadcast %cst_5 : f32 to vector<576x128xf32>
    %7 = arith.maximumf %5, %6 : vector<576x128xf32>
    %8 = vector.shape_cast %7 : vector<576x128xf32> to vector<288x2x128xf32>
    %cst_6 = arith.constant dense<0xFF800000> : vector<288x128xf32>
    %9 = vector.multi_reduction <maximumf>, %8, %cst_6 [1] : vector<288x2x128xf32> to vector<288x128xf32>
    %10 = vector.shape_cast %9 : vector<288x128xf32> to vector<12x2x12x128xf32>
    %cst_7 = arith.constant dense<0xFF800000> : vector<12x12x128xf32>
    %11 = vector.multi_reduction <maximumf>, %10, %cst_7 [1] : vector<12x2x12x128xf32> to vector<12x12x128xf32>
    %12 = vector.shape_cast %11 : vector<12x12x128xf32> to vector<144x128xf32>
    %c0_8 = arith.constant 0 : index
    %c0_9 = arith.constant 0 : index
    %13 = vector.load %arg4[%c0_8, %c0_9] : memref<144x128xf32, #tpu.memory_space<vmem>>, vector<144x128xf32>
    tpu.vector_store %arg4[%c0_8, %c0_9], %12 {strides = array<i32>} : memref<144x128xf32, #tpu.memory_space<vmem>>, vector<144x128xf32>,
    return
  }
  func.func @transform_0(%arg0: i32) -> (i32, i32) {
    %c0_i32 = arith.constant 0 : i32
    %c0_i32_0 = arith.constant 0 : i32
    return %arg0, %c0_i32 : i32, i32
  }
  func.func @transform_1(%arg0: i32) -> (i32, i32) {
    %c0_i32 = arith.constant 0 : i32
    %c0_i32_0 = arith.constant 0 : i32
    %c0_i32_1 = arith.constant 0 : i32
    return %c0_i32, %c0_i32_0 : i32, i32
  }
  func.func @transform_2(%arg0: i32) -> (i32, i32) {
    %c0_i32 = arith.constant 0 : i32
    %c0_i32_0 = arith.constant 0 : i32
    %c0_i32_1 = arith.constant 0 : i32
    return %c0_i32, %c0_i32_0 : i32, i32
  }
  func.func @transform_3(%arg0: i32) -> (i32, i32) {
    %c0_i32 = arith.constant 0 : i32
    %c0_i32_0 = arith.constant 0 : i32
    return %arg0, %c0_i32 : i32, i32
  }
}

module attributes {stable_mosaic.version = 11 : i64} {
  func.func @_conv_relu_pool_kernel(%arg0: i32, %arg1: memref<128x512xf32, #tpu.memory_space<vmem>>, %arg2: memref<512x128xf32, #tpu.memory_space<vmem>>, %arg3: memref<1x128xf32, #tpu.memory_space<vmem>>, %arg4: memref<32x128xf32, #tpu.memory_space<vmem>>) attributes {dimension_semantics = [#tpu.dimension_semantics<parallel>], iteration_bounds = array<i64: 1>, scalar_prefetch = 0 : i64, scratch_operands = 0 : i64, tpu.core_type = #tpu.core_type<tc>, window_params = [{transform_indices = @transform_0, window_bounds = array<i64: 128, 512>}, {pipeline_mode = #tpu.pipeline_mode<synchronous>, transform_indices = @transform_1, window_bounds = array<i64: 512, 128>}, {pipeline_mode = #tpu.pipeline_mode<synchronous>, transform_indices = @transform_2, window_bounds = array<i64: 1, 128>}, {transform_indices = @transform_3, window_bounds = array<i64: 32, 128>}]} {
    %c0 = arith.constant 0 : index
    %c0_0 = arith.constant 0 : index
    %0 = vector.load %arg1[%c0, %c0_0] : memref<128x512xf32, #tpu.memory_space<vmem>>, vector<128x512xf32>
    %c0_1 = arith.constant 0 : index
    %c0_2 = arith.constant 0 : index
    %1 = vector.load %arg2[%c0_1, %c0_2] : memref<512x128xf32, #tpu.memory_space<vmem>>, vector<512x128xf32>
    %cst = arith.constant dense<0.000000e+00> : vector<128x128xf32>
    %2 = tpu.matmul %0, %1, %cst {dimension_numbers = #tpu.dot_dimension_numbers<[1], [0], [0], [1], [0, 0, 1, 1], [], []>} : vector<128x512xf32>, vector<512x128xf32>, vector<128x128xf32> -> vector<128x128xf32>
    %c0_3 = arith.constant 0 : index
    %c0_4 = arith.constant 0 : index
    %3 = vector.load %arg3[%c0_3, %c0_4] : memref<1x128xf32, #tpu.memory_space<vmem>>, vector<1x128xf32>
    %4 = vector.broadcast %3 : vector<1x128xf32> to vector<128x128xf32>
    %5 = arith.addf %2, %4 : vector<128x128xf32>
    %cst_5 = arith.constant 0.000000e+00 : f32
    %6 = vector.broadcast %cst_5 : f32 to vector<128x128xf32>
    %7 = arith.maximumf %5, %6 : vector<128x128xf32>
    %8 = vector.shape_cast %7 : vector<128x128xf32> to vector<64x2x128xf32>
    %cst_6 = arith.constant dense<0xFF800000> : vector<64x128xf32>
    %9 = vector.multi_reduction <maximumf>, %8, %cst_6 [1] : vector<64x2x128xf32> to vector<64x128xf32>
    %10 = vector.shape_cast %9 : vector<64x128xf32> to vector<8x2x4x128xf32>
    %cst_7 = arith.constant dense<0xFF800000> : vector<8x4x128xf32>
    %11 = vector.multi_reduction <maximumf>, %10, %cst_7 [1] : vector<8x2x4x128xf32> to vector<8x4x128xf32>
    %12 = vector.shape_cast %11 : vector<8x4x128xf32> to vector<32x128xf32>
    %c0_8 = arith.constant 0 : index
    %c0_9 = arith.constant 0 : index
    %13 = vector.load %arg4[%c0_8, %c0_9] : memref<32x128xf32, #tpu.memory_space<vmem>>, vector<32x128xf32>
    tpu.vector_store %arg4[%c0_8, %c0_9], %12 {strides = array<i32>} : memref<32x128xf32, #tpu.memory_space<vmem>>, vector<32x128xf32>,
    return
  }
  func.func @transform_0(%arg0: i32) -> (i32, i32) {
    %c0_i32 = arith.constant 0 : i32
    %c0_i32_0 = arith.constant 0 : i32
    return %arg0, %c0_i32 : i32, i32
  }
  func.func @transform_1(%arg0: i32) -> (i32, i32) {
    %c0_i32 = arith.constant 0 : i32
    %c0_i32_0 = arith.constant 0 : i32
    %c0_i32_1 = arith.constant 0 : i32
    return %c0_i32, %c0_i32_0 : i32, i32
  }
  func.func @transform_2(%arg0: i32) -> (i32, i32) {
    %c0_i32 = arith.constant 0 : i32
    %c0_i32_0 = arith.constant 0 : i32
    %c0_i32_1 = arith.constant 0 : i32
    return %c0_i32, %c0_i32_0 : i32, i32
  }
  func.func @transform_3(%arg0: i32) -> (i32, i32) {
    %c0_i32 = arith.constant 0 : i32
    %c0_i32_0 = arith.constant 0 : i32
    return %arg0, %c0_i32 : i32, i32
  }
}

module attributes {stable_mosaic.version = 11 : i64} {
  func.func @_fc_fused_kernel(%arg0: i32, %arg1: memref<2x2048xf32, #tpu.memory_space<vmem>>, %arg2: memref<2048x512xf32, #tpu.memory_space<vmem>>, %arg3: memref<1x512xf32, #tpu.memory_space<vmem>>, %arg4: memref<512x128xf32, #tpu.memory_space<vmem>>, %arg5: memref<1x128xf32, #tpu.memory_space<vmem>>, %arg6: memref<2x128xf32, #tpu.memory_space<vmem>>) attributes {dimension_semantics = [#tpu.dimension_semantics<arbitrary>], iteration_bounds = array<i64: 1>, scalar_prefetch = 0 : i64, scratch_operands = 0 : i64, tpu.core_type = #tpu.core_type<tc>, window_params = [{pipeline_mode = #tpu.pipeline_mode<synchronous>, transform_indices = @transform_0, window_bounds = array<i64: 2, 2048>}, {pipeline_mode = #tpu.pipeline_mode<synchronous>, transform_indices = @transform_1, window_bounds = array<i64: 2048, 512>}, {pipeline_mode = #tpu.pipeline_mode<synchronous>, transform_indices = @transform_2, window_bounds = array<i64: 1, 512>}, {pipeline_mode = #tpu.pipeline_mode<synchronous>, transform_indices = @transform_3, window_bounds = array<i64: 512, 128>}, {pipeline_mode = #tpu.pipeline_mode<synchronous>, transform_indices = @transform_4, window_bounds = array<i64: 1, 128>}, {pipeline_mode = #tpu.pipeline_mode<synchronous>, transform_indices = @transform_5, window_bounds = array<i64: 2, 128>}]} {
    %c0 = arith.constant 0 : index
    %c0_0 = arith.constant 0 : index
    %0 = vector.load %arg1[%c0, %c0_0] : memref<2x2048xf32, #tpu.memory_space<vmem>>, vector<2x2048xf32>
    %c0_1 = arith.constant 0 : index
    %c0_2 = arith.constant 0 : index
    %1 = vector.load %arg2[%c0_1, %c0_2] : memref<2048x512xf32, #tpu.memory_space<vmem>>, vector<2048x512xf32>
    %cst = arith.constant dense<0.000000e+00> : vector<2x512xf32>
    %2 = tpu.matmul %0, %1, %cst {dimension_numbers = #tpu.dot_dimension_numbers<[1], [0], [0], [1], [0, 0, 1, 1], [], []>} : vector<2x2048xf32>, vector<2048x512xf32>, vector<2x512xf32> -> vector<2x512xf32>
    %c0_3 = arith.constant 0 : index
    %c0_4 = arith.constant 0 : index
    %3 = vector.load %arg3[%c0_3, %c0_4] : memref<1x512xf32, #tpu.memory_space<vmem>>, vector<1x512xf32>
    %4 = vector.broadcast %3 : vector<1x512xf32> to vector<2x512xf32>
    %5 = arith.addf %2, %4 : vector<2x512xf32>
    %cst_5 = arith.constant 0.000000e+00 : f32
    %6 = vector.broadcast %cst_5 : f32 to vector<2x512xf32>
    %7 = arith.maximumf %5, %6 : vector<2x512xf32>
    %c0_6 = arith.constant 0 : index
    %c0_7 = arith.constant 0 : index
    %8 = vector.load %arg4[%c0_6, %c0_7] : memref<512x128xf32, #tpu.memory_space<vmem>>, vector<512x128xf32>
    %cst_8 = arith.constant dense<0.000000e+00> : vector<2x128xf32>
    %9 = tpu.matmul %7, %8, %cst_8 {dimension_numbers = #tpu.dot_dimension_numbers<[1], [0], [0], [1], [0, 0, 1, 1], [], []>} : vector<2x512xf32>, vector<512x128xf32>, vector<2x128xf32> -> vector<2x128xf32>
    %c0_9 = arith.constant 0 : index
    %c0_10 = arith.constant 0 : index
    %10 = vector.load %arg5[%c0_9, %c0_10] : memref<1x128xf32, #tpu.memory_space<vmem>>, vector<1x128xf32>
    %11 = vector.broadcast %10 : vector<1x128xf32> to vector<2x128xf32>
    %12 = arith.addf %9, %11 : vector<2x128xf32>
    %13 = tpu.iota {dimensions = array<i32: 1>} : vector<2x128xi32>
    %c10_i32 = arith.constant 10 : i32
    %14 = vector.broadcast %c10_i32 : i32 to vector<2x128xi32>
    %15 = arith.cmpi slt, %13, %14 : vector<2x128xi32>
    %cst_11 = arith.constant 0xFF800000 : f32
    %16 = vector.broadcast %cst_11 : f32 to vector<2x128xf32>
    %17 = arith.select %15, %12, %16 : vector<2x128xi1>, vector<2x128xf32>
    %cst_12 = arith.constant dense<0xFF800000> : vector<2xf32>
    %18 = vector.multi_reduction <maximumf>, %17, %cst_12 [1] : vector<2x128xf32> to vector<2xf32>
    %19 = vector.shape_cast %18 : vector<2xf32> to vector<2x1xf32>
    %20 = vector.broadcast %19 : vector<2x1xf32> to vector<2x128xf32>
    %21 = arith.subf %17, %20 : vector<2x128xf32>
    %22 = math.exp %21 : vector<2x128xf32>
    %cst_13 = arith.constant dense<0.000000e+00> : vector<2xf32>
    %23 = vector.multi_reduction <add>, %22, %cst_13 [1] : vector<2x128xf32> to vector<2xf32>
    %24 = vector.shape_cast %23 : vector<2xf32> to vector<2x1xf32>
    %25 = math.log %24 : vector<2x1xf32>
    %26 = vector.broadcast %25 : vector<2x1xf32> to vector<2x128xf32>
    %27 = arith.subf %21, %26 : vector<2x128xf32>
    %c0_14 = arith.constant 0 : index
    %c0_15 = arith.constant 0 : index
    %28 = vector.load %arg6[%c0_14, %c0_15] : memref<2x128xf32, #tpu.memory_space<vmem>>, vector<2x128xf32>
    tpu.vector_store %arg6[%c0_14, %c0_15], %27 {strides = array<i32>} : memref<2x128xf32, #tpu.memory_space<vmem>>, vector<2x128xf32>,
    return
  }
  func.func @transform_0(%arg0: i32) -> (i32, i32) {
    %c0_i32 = arith.constant 0 : i32
    %c0_i32_0 = arith.constant 0 : i32
    %c0_i32_1 = arith.constant 0 : i32
    return %c0_i32, %c0_i32_0 : i32, i32
  }
  func.func @transform_1(%arg0: i32) -> (i32, i32) {
    %c0_i32 = arith.constant 0 : i32
    %c0_i32_0 = arith.constant 0 : i32
    %c0_i32_1 = arith.constant 0 : i32
    return %c0_i32, %c0_i32_0 : i32, i32
  }
  func.func @transform_2(%arg0: i32) -> (i32, i32) {
    %c0_i32 = arith.constant 0 : i32
    %c0_i32_0 = arith.constant 0 : i32
    %c0_i32_1 = arith.constant 0 : i32
    return %c0_i32, %c0_i32_0 : i32, i32
  }
  func.func @transform_3(%arg0: i32) -> (i32, i32) {
    %c0_i32 = arith.constant 0 : i32
    %c0_i32_0 = arith.constant 0 : i32
    %c0_i32_1 = arith.constant 0 : i32
    return %c0_i32, %c0_i32_0 : i32, i32
  }
  func.func @transform_4(%arg0: i32) -> (i32, i32) {
    %c0_i32 = arith.constant 0 : i32
    %c0_i32_0 = arith.constant 0 : i32
    %c0_i32_1 = arith.constant 0 : i32
    return %c0_i32, %c0_i32_0 : i32, i32
  }
  func.func @transform_5(%arg0: i32) -> (i32, i32) {
    %c0_i32 = arith.constant 0 : i32
    %c0_i32_0 = arith.constant 0 : i32
    %c0_i32_1 = arith.constant 0 : i32
    return %c0_i32, %c0_i32_0 : i32, i32
  }
}

</mosaic_0001>

<llo_original>
// kernel: net_forward.3
$region0: #{net_forward.3}
  #allocation0 [shape = 'u32[]', space=smem, size = 0x4, offset = 0x4, fixed_abs, tag = 'smem constant byte address 0x4 - core index']
  #allocation1 [shape = 'u32[144,128]{1,0:T(1,128)}', space=vmem, size = 0x12000, scoped, tag = 'internal scratch']
  %s0 = inlined_call_operand.vmem [shape: f32[1152,32], index: 0, kind: input, shape index: {}]
  %s1 = inlined_call_operand.vmem [shape: f32[32,128], index: 1, kind: input, shape index: {}]
  %s2 = inlined_call_operand.vmem [shape: f32[1,128], index: 2, kind: input, shape index: {}]
  %s3 = inlined_call_operand.vmem [shape: f32[288,128], index: 3, kind: output, shape index: {}]
  %s4 = sld [smem:[#allocation0]]
  $region45: #{net_forward.3} parent=0
    _
  %s6 = ssub.s32 1, %s4
  %s7 = scalar_select 0, %s6, %s4
  loop: start=0, step=1, limit=4
  $region2: #{net_forward.3} parent=0 // loop_pre_header
    _
  $region3: #{net_forward.3} parent=0 // loop_header
    %s9 = sphi 0, %s13
    %p10 = scmp.ge.s32.totalorder %s9, 4
    %s19 = sphi 0, %s21
    %s22 = sphi 0, %s19
    %s23 = sphi 0, %s22
    %s39 = sphi 0, %s23
    %s43 = sphi 0, %s43
    %s45 = sphi 0, %s43
    %s46 = sphi 0, %s45
    %s60 = sphi 0, %s46
    %s64 = sphi 0, %s64
    %s66 = sphi 0, %s64
    %s67 = sphi 0, %s66
    %s81 = sphi 0, %s67
    %s87 = sphi 0, %s89
    %s90 = sphi 0, %s87
    %s91 = sphi 0, %s90
    %s107 = sphi 0, %s91
  $region4: #{net_forward.3} parent=0 // loop_header_branch
    %12 = sbr.rel (%p10) target = $region8
  $region5: #{net_forward.3} parent=0 // loop_body
    %s14 = ssub.s32 %s9, 1
    %s15 = ssub.s32 %s9, 2
    %s16 = sadd.s32 %s9, 1
    %s17 = ssub.s32 %s9, %s16
    %p18 = scmp.eq.s32.totalorder %s17, 0
    %s20 = sadd.s32 %s19, 1
    %s21 = scalar_select %p18, %s19, %s20
    %p24 = pneg %p18
    %p25 = scmp.eq.s32.totalorder %s9, 1
    %p26 = por %p24, %p25
    %p27 = scmp.ne.s32.totalorder %s19, %s22
    %p28 = scmp.eq.s32.totalorder %s9, 0
    %p29 = por %p27, %p28
    %p30 = scmp.ne.s32.totalorder %s19, %s22
    %p31 = scmp.eq.s32.totalorder %s14, 1
    %p32 = por %p30, %p31
    %p33 = scmp.ne.s32.totalorder %s22, %s23
    %p34 = scmp.eq.s32.totalorder %s14, 0
    %p35 = por %p33, %p34
    %p36 = scmp.ne.s32.totalorder %s22, %s23
    %p37 = scmp.eq.s32.totalorder %s15, 1
    %p38 = por %p36, %p37
    %p40 = scmp.ne.s32.totalorder %s23, %s39
    %p41 = scmp.eq.s32.totalorder %s15, 0
    %p42 = por %p40, %p41
    %s44 = sadd.s32 %s43, 1
    %p47 = scmp.eq.s32.totalorder %s9, 1
    %p48 = scmp.ne.s32.totalorder %s43, %s45
    %p49 = scmp.eq.s32.totalorder %s9, 0
    %p50 = por %p48, %p49
    %p51 = scmp.ne.s32.totalorder %s43, %s45
    %p52 = scmp.eq.s32.totalorder %s14, 1
    %p53 = por %p51, %p52
    %p54 = scmp.ne.s32.totalorder %s45, %s46
    %p55 = scmp.eq.s32.totalorder %s14, 0
    %p56 = por %p54, %p55
    %p57 = scmp.ne.s32.totalorder %s45, %s46
    %p58 = scmp.eq.s32.totalorder %s15, 1
    %p59 = por %p57, %p58
    %p61 = scmp.ne.s32.totalorder %s46, %s60
    %p62 = scmp.eq.s32.totalorder %s15, 0
    %p63 = por %p61, %p62
    %s65 = sadd.s32 %s64, 1
    %p68 = scmp.eq.s32.totalorder %s9, 1
    %p69 = scmp.ne.s32.totalorder %s64, %s66
    %p70 = scmp.eq.s32.totalorder %s9, 0
    %p71 = por %p69, %p70
    %p72 = scmp.ne.s32.totalorder %s64, %s66
    %p73 = scmp.eq.s32.totalorder %s14, 1
    %p74 = por %p72, %p73
    %p75 = scmp.ne.s32.totalorder %s66, %s67
    %p76 = scmp.eq.s32.totalorder %s14, 0
    %p77 = por %p75, %p76
    %p78 = scmp.ne.s32.totalorder %s66, %s67
    %p79 = scmp.eq.s32.totalorder %s15, 1
    %p80 = por %p78, %p79
    %p82 = scmp.ne.s32.totalorder %s67, %s81
    %p83 = scmp.eq.s32.totalorder %s15, 0
    %p84 = por %p82, %p83
    %s85 = ssub.s32 %s9, %s16
    %p86 = scmp.eq.s32.totalorder %s85, 0
    %s88 = sadd.s32 %s87, 1
    %s89 = scalar_select %p86, %s87, %s88
    %p92 = pneg %p86
    %p93 = scmp.eq.s32.totalorder %s9, 1
    %p94 = por %p92, %p93
    %p95 = scmp.ne.s32.totalorder %s87, %s90
    %p96 = scmp.eq.s32.totalorder %s9, 0
    %p97 = por %p95, %p96
    %p98 = scmp.ne.s32.totalorder %s87, %s90
    %p99 = scmp.eq.s32.totalorder %s14, 1
    %p100 = por %p98, %p99
    %p101 = scmp.ne.s32.totalorder %s90, %s91
    %p102 = scmp.eq.s32.totalorder %s14, 0
    %p103 = por %p101, %p102
    %p104 = scmp.ne.s32.totalorder %s90, %s91
    %p105 = scmp.eq.s32.totalorder %s15, 1
    %p106 = por %p104, %p105
    %p108 = scmp.ne.s32.totalorder %s91, %s107
    %p109 = scmp.eq.s32.totalorder %s15, 0
    %p110 = por %p108, %p109
    %p111 = scmp.le.s32.totalorder 1, %s9
    %p112 = scmp.lt.s32.totalorder %s9, 3
    %p113 = pnand %p111, %p112
    %p114 = pneg %p113
    // Predicated region
    $region9: #{net_forward.3} parent=5 // pred_check
      _
    $region10: #{net_forward.3} parent=5 // pred_check_branch
      %116 = sbr.rel (%p113) target = $region12
    $region11: #{net_forward.3} parent=5 // pred_region
      %s117 = ssub.s32 %s9, 1
      // Predicated region
      $region13: #{net_forward.3} parent=11 // pred_check
        %p118 = pneg %p56
      $region14: #{net_forward.3} parent=11 // pred_check_branch
        %120 = sbr.rel (%p118) target = $region16
      $region15: #{net_forward.3} parent=11 // pred_region
        _
      $region16: #{net_forward.3} parent=11 // pred_fallthru
        _
      // Predicated region
      $region17: #{net_forward.3} parent=11 // pred_check
        %p121 = pneg %p77
      $region18: #{net_forward.3} parent=11 // pred_check_branch
        %123 = sbr.rel (%p121) target = $region20
      $region19: #{net_forward.3} parent=11 // pred_region
        _
      $region20: #{net_forward.3} parent=11 // pred_fallthru
        _
    $region12: #{net_forward.3} parent=5 // pred_fallthru
      _
    %p124 = scmp.lt.s32.totalorder %s9, 2
    // Predicated region
    $region21: #{net_forward.3} parent=5 // pred_check
      %p125 = pneg %p124
    $region22: #{net_forward.3} parent=5 // pred_check_branch
      %127 = sbr.rel (%p125) target = $region24
    $region23: #{net_forward.3} parent=5 // pred_region
      // Predicated region
      $region25: #{net_forward.3} parent=23 // pred_check
        %p128 = pneg %p29
      $region26: #{net_forward.3} parent=23 // pred_check_branch
        %130 = sbr.rel (%p128) target = $region28
      $region27: #{net_forward.3} parent=23 // pred_region
        %s131 = smul.u32 72, %s9
        %p132 = scmp.lt.s32.totalorder %s131, 143
        %s133 = scalar_select %p132, %s131, 143
        %s134 = smul.addr %s133, 8
        %s135 = scalar_lea.vmem %s0, %s134
        %s136 = smul.u32 72, %s9
      $region28: #{net_forward.3} parent=23 // pred_fallthru
        _
    $region24: #{net_forward.3} parent=5 // pred_fallthru
      _
    %p137 = scmp.le.s32.totalorder 1, %s9
    %p138 = scmp.lt.s32.totalorder %s9, 3
    %p139 = pnand %p137, %p138
    %p140 = pneg %p139
    // Predicated region
    $region29: #{net_forward.3} parent=5 // pred_check
      _
    $region30: #{net_forward.3} parent=5 // pred_check_branch
      %142 = sbr.rel (%p139) target = $region32
    $region31: #{net_forward.3} parent=5 // pred_region
      %s143 = ssub.s32 %s9, 1
      %s144 = smul.u32 72, %s14
      %p145 = scmp.lt.s32.totalorder %s144, 143
      %s146 = scalar_select %p145, %s144, 143
      %s147 = smul.addr %s146, 8
      %s148 = scalar_lea.vmem %s0, %s147
      %p149 = pneg %p35
      %p150 = pneg %p32
      %p151 = pneg %p56
      %p152 = pneg %p53
      %p153 = pneg %p77
      %p154 = pneg %p74
      %p155 = pneg %p103
      %p156 = pneg %p100
      %s157 = smul.u32 18, %s14
      %p158 = scmp.lt.s32.totalorder %s157, 35
      %s159 = scalar_select %p158, %s157, 35
      %s160 = smul.addr %s159, 8
      %s161 = scalar_lea.vmem %s3, %s160
      %s162 = smul.u32 72, %s14
      %p163 = scmp.lt.s32.totalorder %s162, 143
      %s164 = scalar_select %p163, %s162, 143
      %s165 = smul.addr %s164, 8
      %s166 = scalar_lea.vmem %s0, %s165
      %s167 = smul.u32 72, %s14
      %s168 = smul.u32 18, %s14
      %p169 = scmp.lt.s32.totalorder %s168, 35
      %s170 = scalar_select %p169, %s168, 35
      %s171 = smul.addr %s170, 8
      %s172 = scalar_lea.vmem %s3, %s171
      %s173 = smul.u32 18, %s14
      %v174 = vld [vmem:[%s166] sm:$0xff]
      %v175 = vld [vmem:[%s166 + $0x8] sm:$0xff]
      %v176 = vld [vmem:[%s166 + $0x10] sm:$0xff]
      %v177 = vld [vmem:[%s166 + $0x18] sm:$0xff]
      %v178 = vld [vmem:[%s166 + $0x20] sm:$0xff]
      %v179 = vld [vmem:[%s166 + $0x28] sm:$0xff]
      %v180 = vld [vmem:[%s166 + $0x30] sm:$0xff]
      %v181 = vld [vmem:[%s166 + $0x38] sm:$0xff]
      %v182 = vld [vmem:[%s166 + $0x40] sm:$0xff]
      %v183 = vld [vmem:[%s166 + $0x48] sm:$0xff]
      %v184 = vld [vmem:[%s166 + $0x50] sm:$0xff]
      %v185 = vld [vmem:[%s166 + $0x58] sm:$0xff]
      %v186 = vld [vmem:[%s166 + $0x60] sm:$0xff]
      %v187 = vld [vmem:[%s166 + $0x68] sm:$0xff]
      %v188 = vld [vmem:[%s166 + $0x70] sm:$0xff]
      %v189 = vld [vmem:[%s166 + $0x78] sm:$0xff]
      %v190 = vld [vmem:[%s166 + $0x80] sm:$0xff]
      %v191 = vld [vmem:[%s166 + $0x88] sm:$0xff]
      %v192 = vld [vmem:[%s166 + $0x90] sm:$0xff]
      %v193 = vld [vmem:[%s166 + $0x98] sm:$0xff]
      %v194 = vld [vmem:[%s166 + $0xa0] sm:$0xff]
      %v195 = vld [vmem:[%s166 + $0xa8] sm:$0xff]
      %v196 = vld [vmem:[%s166 + $0xb0] sm:$0xff]
      %v197 = vld [vmem:[%s166 + $0xb8] sm:$0xff]
      %v198 = vld [vmem:[%s166 + $0xc0] sm:$0xff]
      %v199 = vld [vmem:[%s166 + $0xc8] sm:$0xff]
      %v200 = vld [vmem:[%s166 + $0xd0] sm:$0xff]
      %v201 = vld [vmem:[%s166 + $0xd8] sm:$0xff]
      %v202 = vld [vmem:[%s166 + $0xe0] sm:$0xff]
      %v203 = vld [vmem:[%s166 + $0xe8] sm:$0xff]
      %v204 = vld [vmem:[%s166 + $0xf0] sm:$0xff]
      %v205 = vld [vmem:[%s166 + $0xf8] sm:$0xff]
      %v206 = vld [vmem:[%s166 + $0x100] sm:$0xff]
      %v207 = vld [vmem:[%s166 + $0x108] sm:$0xff]
      %v208 = vld [vmem:[%s166 + $0x110] sm:$0xff]
      %v209 = vld [vmem:[%s166 + $0x118] sm:$0xff]
      %v210 = vld [vmem:[%s166 + $0x120] sm:$0xff]
      %v211 = vld [vmem:[%s166 + $0x128] sm:$0xff]
      %v212 = vld [vmem:[%s166 + $0x130] sm:$0xff]
      %v213 = vld [vmem:[%s166 + $0x138] sm:$0xff]
      %v214 = vld [vmem:[%s166 + $0x140] sm:$0xff]
      %v215 = vld [vmem:[%s166 + $0x148] sm:$0xff]
      %v216 = vld [vmem:[%s166 + $0x150] sm:$0xff]
      %v217 = vld [vmem:[%s166 + $0x158] sm:$0xff]
      %v218 = vld [vmem:[%s166 + $0x160] sm:$0xff]
      %v219 = vld [vmem:[%s166 + $0x168] sm:$0xff]
      %v220 = vld [vmem:[%s166 + $0x170] sm:$0xff]
      %v221 = vld [vmem:[%s166 + $0x178] sm:$0xff]
      %v222 = vld [vmem:[%s166 + $0x180] sm:$0xff]
      %v223 = vld [vmem:[%s166 + $0x188] sm:$0xff]
      %v224 = vld [vmem:[%s166 + $0x190] sm:$0xff]
      %v225 = vld [vmem:[%s166 + $0x198] sm:$0xff]
      %v226 = vld [vmem:[%s166 + $0x1a0] sm:$0xff]
      %v227 = vld [vmem:[%s166 + $0x1a8] sm:$0xff]
      %v228 = vld [vmem:[%s166 + $0x1b0] sm:$0xff]
      %v229 = vld [vmem:[%s166 + $0x1b8] sm:$0xff]
      %v230 = vld [vmem:[%s166 + $0x1c0] sm:$0xff]
      %v231 = vld [vmem:[%s166 + $0x1c8] sm:$0xff]
      %v232 = vld [vmem:[%s166 + $0x1d0] sm:$0xff]
      %v233 = vld [vmem:[%s166 + $0x1d8] sm:$0xff]
      %v234 = vld [vmem:[%s166 + $0x1e0] sm:$0xff]
      %v235 = vld [vmem:[%s166 + $0x1e8] sm:$0xff]
      %v236 = vld [vmem:[%s166 + $0x1f0] sm:$0xff]
      %v237 = vld [vmem:[%s166 + $0x1f8] sm:$0xff]
      %v238 = vld [vmem:[%s166 + $0x200] sm:$0xff]
      %v239 = vld [vmem:[%s166 + $0x208] sm:$0xff]
      %v240 = vld [vmem:[%s166 + $0x210] sm:$0xff]
      %v241 = vld [vmem:[%s166 + $0x218] sm:$0xff]
      %v242 = vld [vmem:[%s166 + $0x220] sm:$0xff]
      %v243 = vld [vmem:[%s166 + $0x228] sm:$0xff]
      %v244 = vld [vmem:[%s166 + $0x230] sm:$0xff]
      %v245 = vld [vmem:[%s166 + $0x238] sm:$0xff]
      %v246 = vld [vmem:[%s1] sm:$0xff]
      %v247 = vld [vmem:[%s1 + $0x8] sm:$0xff]
      %v248 = vld [vmem:[%s1 + $0x10] sm:$0xff]
      %v249 = vld [vmem:[%s1 + $0x18] sm:$0xff]
      %v250 = vld [vmem:[%s2] sm:$0x1]
      %v252 = vlaneseq
      %v253 = vshrl.u32 %v252, 7
      %v254 = vsub.s32 0, %v253
      %v255 = vrot.slane %v250, %v254
      %vm257 = vcmask 261120
      %v259 = vsel %vm257, %v174, 0
      %v262 = vsel %vm257, %v175, 0
      %v265 = vsel %vm257, %v176, 0
      %v268 = vsel %vm257, %v177, 0
      %v271 = vsel %vm257, %v178, 0
      %v274 = vsel %vm257, %v179, 0
      %v277 = vsel %vm257, %v180, 0
      %v280 = vsel %vm257, %v181, 0
      %v283 = vsel %vm257, %v182, 0
      %v286 = vsel %vm257, %v183, 0
      %v289 = vsel %vm257, %v184, 0
      %v292 = vsel %vm257, %v185, 0
      %v295 = vsel %vm257, %v186, 0
      %v298 = vsel %vm257, %v187, 0
      %v301 = vsel %vm257, %v188, 0
      %v304 = vsel %vm257, %v189, 0
      %v307 = vsel %vm257, %v190, 0
      %v310 = vsel %vm257, %v191, 0
      %v313 = vsel %vm257, %v192, 0
      %v316 = vsel %vm257, %v193, 0
      %v319 = vsel %vm257, %v194, 0
      %v322 = vsel %vm257, %v195, 0
      %v325 = vsel %vm257, %v196, 0
      %v328 = vsel %vm257, %v197, 0
      %v331 = vsel %vm257, %v198, 0
      %v334 = vsel %vm257, %v199, 0
      %v337 = vsel %vm257, %v200, 0
      %v340 = vsel %vm257, %v201, 0
      %v343 = vsel %vm257, %v202, 0
      %v346 = vsel %vm257, %v203, 0
      %v349 = vsel %vm257, %v204, 0
      %v352 = vsel %vm257, %v205, 0
      %v355 = vsel %vm257, %v206, 0
      %v358 = vsel %vm257, %v207, 0
      %v361 = vsel %vm257, %v208, 0
      %v364 = vsel %vm257, %v209, 0
      %v367 = vsel %vm257, %v210, 0
      %v370 = vsel %vm257, %v211, 0
      %v373 = vsel %vm257, %v212, 0
      %v376 = vsel %vm257, %v213, 0
      %v379 = vsel %vm257, %v214, 0
      %v382 = vsel %vm257, %v215, 0
      %v385 = vsel %vm257, %v216, 0
      %v388 = vsel %vm257, %v217, 0
      %v391 = vsel %vm257, %v218, 0
      %v394 = vsel %vm257, %v219, 0
      %v397 = vsel %vm257, %v220, 0
      %v400 = vsel %vm257, %v221, 0
      %v403 = vsel %vm257, %v222, 0
      %v406 = vsel %vm257, %v223, 0
      %v409 = vsel %vm257, %v224, 0
      %v412 = vsel %vm257, %v225, 0
      %v415 = vsel %vm257, %v226, 0
      %v418 = vsel %vm257, %v227, 0
      %v421 = vsel %vm257, %v228, 0
      %v424 = vsel %vm257, %v229, 0
      %v427 = vsel %vm257, %v230, 0
      %v430 = vsel %vm257, %v231, 0
      %v433 = vsel %vm257, %v232, 0
      %v436 = vsel %vm257, %v233, 0
      %v439 = vsel %vm257, %v234, 0
      %v442 = vsel %vm257, %v235, 0
      %v445 = vsel %vm257, %v236, 0
      %v448 = vsel %vm257, %v237, 0
      %v451 = vsel %vm257, %v238, 0
      %v454 = vsel %vm257, %v239, 0
      %v457 = vsel %vm257, %v240, 0
      %v460 = vsel %vm257, %v241, 0
      %v463 = vsel %vm257, %v242, 0
      %v466 = vsel %vm257, %v243, 0
      %v469 = vsel %vm257, %v244, 0
      %v472 = vsel %vm257, %v245, 0
      %474 = vmatprep.subr.mxu0 0.0
      %475 = vmatpush1.msra.mxu0 %v246
      %476 = vmatprep.subr.mxu0 0.0
      %477 = vmatpush1.msra.mxu0 %v247
      %478 = vmatprep.subr.mxu0 0.0
      %479 = vmatpush1.msra.mxu0 %v248
      %480 = vmatprep.subr.mxu0 0.0
      %481 = vmatpush1.msra.mxu0 %v249
      %482 = vmatprep.subr.mxu0 0.0
      %483 = vmatpush1.msra.mxu0 0.0
      %484 = vmatprep.subr.mxu0 0.0
      %485 = vmatpush1.msra.mxu0 0.0
      %486 = vmatprep.subr.mxu0 0.0
      %487 = vmatpush1.msra.mxu0 0.0
      %488 = vmatprep.subr.mxu0 0.0
      %489 = vmatpush1.msra.mxu0 0.0
      %490 = vmatprep.subr.mxu0 0.0
      %491 = vmatpush1.msra.mxu0 0.0
      %492 = vmatprep.subr.mxu0 0.0
      %493 = vmatpush1.msra.mxu0 0.0
      %494 = vmatprep.subr.mxu0 0.0
      %495 = vmatpush1.msra.mxu0 0.0
      %496 = vmatprep.subr.mxu0 0.0
      %497 = vmatpush1.msra.mxu0 0.0
      %498 = vmatprep.subr.mxu0 0.0
      %499 = vmatpush1.msra.mxu0 0.0
      %500 = vmatprep.subr.mxu0 0.0
      %501 = vmatpush1.msra.mxu0 0.0
      %502 = vmatprep.subr.mxu0 0.0
      %503 = vmatpush1.msra.mxu0 0.0
      %504 = vmatprep.subr.mxu0 0.0
      %505 = vmatpush1.msra.mxu0 0.0
      %506 = vmatprep.subr.mxu0 0.0
      %507 = vmatpush1.msra.mxu0 0.0
      %508 = vmatprep.subr.mxu0 0.0
      %509 = vmatpush1.msra.mxu0 0.0
      %510 = vmatprep.subr.mxu0 0.0
      %511 = vmatpush1.msra.mxu0 0.0
      %512 = vmatprep.subr.mxu0 0.0
      %513 = vmatpush1.msra.mxu0 0.0
      %514 = vmatprep.subr.mxu0 0.0
      %515 = vmatpush1.msra.mxu0 0.0
      %516 = vmatprep.subr.mxu0 0.0
      %517 = vmatpush1.msra.mxu0 0.0
      %518 = vmatprep.subr.mxu0 0.0
      %519 = vmatpush1.msra.mxu0 0.0
      %520 = vmatprep.subr.mxu0 0.0
      %521 = vmatpush1.msra.mxu0 0.0
      %522 = vmatprep.subr.mxu0 0.0
      %523 = vmatpush1.msra.mxu0 0.0
      %524 = vmatprep.subr.mxu0 0.0
      %525 = vmatpush1.msra.mxu0 0.0
      %526 = vmatprep.subr.mxu0 0.0
      %527 = vmatpush1.msra.mxu0 0.0
      %528 = vmatprep.subr.mxu0 0.0
      %529 = vmatpush1.msra.mxu0 0.0
      %530 = vmatprep.subr.mxu0 0.0
      %531 = vmatpush1.msra.mxu0 0.0
      %532 = vmatprep.subr.mxu0 0.0
      %533 = vmatpush1.msra.mxu0 0.0
      %534 = vmatprep.subr.mxu0 0.0
      %535 = vmatpush1.msra.mxu0 0.0
      %536 = vmatprep.subr.mxu0 0.0
      %537 = vmatpush1.msra.mxu0 0.0
      %538 = vmatprep.mubr.f32.mxu0 0.0
      %539 = vmatmul.mubr.f32.gmra.mrb[0].mxu0 %v259
      %v540 = vpop.f32.mrb[0].mxu0
      %v541 = vadd.f32 %v255, %v540
      %v542 = vpop.f32.mrb[0].mxu0
      %543 = vmatprep.mubr.f32.mxu0 0.0
      %544 = vmatmul.mubr.f32.gmra.mrb[0].mxu0 %v262
      %v545 = vpop.f32.mrb[0].mxu0
      %v546 = vadd.f32 %v255, %v545
      %v547 = vpop.f32.mrb[0].mxu0
      %548 = vmatprep.mubr.f32.mxu0 0.0
      %549 = vmatmul.mubr.f32.gmra.mrb[0].mxu0 %v265
      %v550 = vpop.f32.mrb[0].mxu0
      %v551 = vadd.f32 %v255, %v550
      %v552 = vpop.f32.mrb[0].mxu0
      %553 = vmatprep.mubr.f32.mxu0 0.0
      %554 = vmatmul.mubr.f32.gmra.mrb[0].mxu0 %v268
      %v555 = vpop.f32.mrb[0].mxu0
      %v556 = vadd.f32 %v255, %v555
      %v557 = vpop.f32.mrb[0].mxu0
      %558 = vmatprep.mubr.f32.mxu0 0.0
      %559 = vmatmul.mubr.f32.gmra.mrb[0].mxu0 %v271
      %v560 = vpop.f32.mrb[0].mxu0
      %v561 = vadd.f32 %v255, %v560
      %v562 = vpop.f32.mrb[0].mxu0
      %563 = vmatprep.mubr.f32.mxu0 0.0
      %564 = vmatmul.mubr.f32.gmra.mrb[0].mxu0 %v274
      %v565 = vpop.f32.mrb[0].mxu0
      %v566 = vadd.f32 %v255, %v565
      %v567 = vpop.f32.mrb[0].mxu0
      %568 = vmatprep.mubr.f32.mxu0 0.0
      %569 = vmatmul.mubr.f32.gmra.mrb[0].mxu0 %v277
      %v570 = vpop.f32.mrb[0].mxu0
      %v571 = vadd.f32 %v255, %v570
      %v572 = vpop.f32.mrb[0].mxu0
      %573 = vmatprep.mubr.f32.mxu0 0.0
      %574 = vmatmul.mubr.f32.gmra.mrb[0].mxu0 %v280
      %v575 = vpop.f32.mrb[0].mxu0
      %v576 = vadd.f32 %v255, %v575
      %v577 = vpop.f32.mrb[0].mxu0
      %578 = vmatprep.mubr.f32.mxu0 0.0
      %579 = vmatmul.mubr.f32.gmra.mrb[0].mxu0 %v283
      %v580 = vpop.f32.mrb[0].mxu0
      %v581 = vadd.f32 %v255, %v580
      %v582 = vpop.f32.mrb[0].mxu0
      %583 = vmatprep.mubr.f32.mxu0 0.0
      %584 = vmatmul.mubr.f32.gmra.mrb[0].mxu0 %v286
      %v585 = vpop.f32.mrb[0].mxu0
      %v586 = vadd.f32 %v255, %v585
      %v587 = vpop.f32.mrb[0].mxu0
      %588 = vmatprep.mubr.f32.mxu0 0.0
      %589 = vmatmul.mubr.f32.gmra.mrb[0].mxu0 %v289
      %v590 = vpop.f32.mrb[0].mxu0
      %v591 = vadd.f32 %v255, %v590
      %v592 = vpop.f32.mrb[0].mxu0
      %593 = vmatprep.mubr.f32.mxu0 0.0
      %594 = vmatmul.mubr.f32.gmra.mrb[0].mxu0 %v292
      %v595 = vpop.f32.mrb[0].mxu0
      %v596 = vadd.f32 %v255, %v595
      %v597 = vpop.f32.mrb[0].mxu0
      %598 = vmatprep.mubr.f32.mxu0 0.0
      %599 = vmatmul.mubr.f32.gmra.mrb[0].mxu0 %v295
      %v600 = vpop.f32.mrb[0].mxu0
      %v601 = vadd.f32 %v255, %v600
      %v602 = vpop.f32.mrb[0].mxu0
      %603 = vmatprep.mubr.f32.mxu0 0.0
      %604 = vmatmul.mubr.f32.gmra.mrb[0].mxu0 %v298
      %v605 = vpop.f32.mrb[0].mxu0
      %v606 = vadd.f32 %v255, %v605
      %v607 = vpop.f32.mrb[0].mxu0
      %608 = vmatprep.mubr.f32.mxu0 0.0
      %609 = vmatmul.mubr.f32.gmra.mrb[0].mxu0 %v301
      %v610 = vpop.f32.mrb[0].mxu0
      %v611 = vadd.f32 %v255, %v610
      %v612 = vpop.f32.mrb[0].mxu0
      %613 = vmatprep.mubr.f32.mxu0 0.0
      %614 = vmatmul.mubr.f32.gmra.mrb[0].mxu0 %v304
      %v615 = vpop.f32.mrb[0].mxu0
      %v616 = vadd.f32 %v255, %v615
      %v617 = vpop.f32.mrb[0].mxu0
      %618 = vmatprep.mubr.f32.mxu0 0.0
      %619 = vmatmul.mubr.f32.gmra.mrb[0].mxu0 %v307
      %v620 = vpop.f32.mrb[0].mxu0
      %v621 = vadd.f32 %v255, %v620
      %v622 = vpop.f32.mrb[0].mxu0
      %623 = vmatprep.mubr.f32.mxu0 0.0
      %624 = vmatmul.mubr.f32.gmra.mrb[0].mxu0 %v310
      %v625 = vpop.f32.mrb[0].mxu0
      %v626 = vadd.f32 %v255, %v625
      %v627 = vpop.f32.mrb[0].mxu0
      %628 = vmatprep.mubr.f32.mxu0 0.0
      %629 = vmatmul.mubr.f32.gmra.mrb[0].mxu0 %v313
      %v630 = vpop.f32.mrb[0].mxu0
      %v631 = vadd.f32 %v255, %v630
      %v632 = vpop.f32.mrb[0].mxu0
      %633 = vmatprep.mubr.f32.mxu0 0.0
      %634 = vmatmul.mubr.f32.gmra.mrb[0].mxu0 %v316
      %v635 = vpop.f32.mrb[0].mxu0
      %v636 = vadd.f32 %v255, %v635
      %v637 = vpop.f32.mrb[0].mxu0
      %638 = vmatprep.mubr.f32.mxu0 0.0
      %639 = vmatmul.mubr.f32.gmra.mrb[0].mxu0 %v319
      %v640 = vpop.f32.mrb[0].mxu0
      %v641 = vadd.f32 %v255, %v640
      %v642 = vpop.f32.mrb[0].mxu0
      %643 = vmatprep.mubr.f32.mxu0 0.0
      %644 = vmatmul.mubr.f32.gmra.mrb[0].mxu0 %v322
      %v645 = vpop.f32.mrb[0].mxu0
      %v646 = vadd.f32 %v255, %v645
      %v647 = vpop.f32.mrb[0].mxu0
      %648 = vmatprep.mubr.f32.mxu0 0.0
      %649 = vmatmul.mubr.f32.gmra.mrb[0].mxu0 %v325
      %v650 = vpop.f32.mrb[0].mxu0
      %v651 = vadd.f32 %v255, %v650
      %v652 = vpop.f32.mrb[0].mxu0
      %653 = vmatprep.mubr.f32.mxu0 0.0
      %654 = vmatmul.mubr.f32.gmra.mrb[0].mxu0 %v328
      %v655 = vpop.f32.mrb[0].mxu0
      %v656 = vadd.f32 %v255, %v655
      %v657 = vpop.f32.mrb[0].mxu0
      %658 = vmatprep.mubr.f32.mxu0 0.0
      %659 = vmatmul.mubr.f32.gmra.mrb[0].mxu0 %v331
      %v660 = vpop.f32.mrb[0].mxu0
      %v661 = vadd.f32 %v255, %v660
      %v662 = vpop.f32.mrb[0].mxu0
      %663 = vmatprep.mubr.f32.mxu0 0.0
      %664 = vmatmul.mubr.f32.gmra.mrb[0].mxu0 %v334
      %v665 = vpop.f32.mrb[0].mxu0
      %v666 = vadd.f32 %v255, %v665
      %v667 = vpop.f32.mrb[0].mxu0
      %668 = vmatprep.mubr.f32.mxu0 0.0
      %669 = vmatmul.mubr.f32.gmra.mrb[0].mxu0 %v337
      %v670 = vpop.f32.mrb[0].mxu0
      %v671 = vadd.f32 %v255, %v670
      %v672 = vpop.f32.mrb[0].mxu0
      %673 = vmatprep.mubr.f32.mxu0 0.0
      %674 = vmatmul.mubr.f32.gmra.mrb[0].mxu0 %v340
      %v675 = vpop.f32.mrb[0].mxu0
      %v676 = vadd.f32 %v255, %v675
      %v677 = vpop.f32.mrb[0].mxu0
      %678 = vmatprep.mubr.f32.mxu0 0.0
      %679 = vmatmul.mubr.f32.gmra.mrb[0].mxu0 %v343
      %v680 = vpop.f32.mrb[0].mxu0
      %v681 = vadd.f32 %v255, %v680
      %v682 = vpop.f32.mrb[0].mxu0
      %683 = vmatprep.mubr.f32.mxu0 0.0
      %684 = vmatmul.mubr.f32.gmra.mrb[0].mxu0 %v346
      %v685 = vpop.f32.mrb[0].mxu0
      %v686 = vadd.f32 %v255, %v685
      %v687 = vpop.f32.mrb[0].mxu0
      %688 = vmatprep.mubr.f32.mxu0 0.0
      %689 = vmatmul.mubr.f32.gmra.mrb[0].mxu0 %v349
      %v690 = vpop.f32.mrb[0].mxu0
      %v691 = vadd.f32 %v255, %v690
      %v692 = vpop.f32.mrb[0].mxu0
      %693 = vmatprep.mubr.f32.mxu0 0.0
      %694 = vmatmul.mubr.f32.gmra.mrb[0].mxu0 %v352
      %v695 = vpop.f32.mrb[0].mxu0
      %v696 = vadd.f32 %v255, %v695
      %v697 = vpop.f32.mrb[0].mxu0
      %698 = vmatprep.mubr.f32.mxu0 0.0
      %699 = vmatmul.mubr.f32.gmra.mrb[0].mxu0 %v355
      %v700 = vpop.f32.mrb[0].mxu0
      %v701 = vadd.f32 %v255, %v700
      %v702 = vpop.f32.mrb[0].mxu0
      %703 = vmatprep.mubr.f32.mxu0 0.0
      %704 = vmatmul.mubr.f32.gmra.mrb[0].mxu0 %v358
      %v705 = vpop.f32.mrb[0].mxu0
      %v706 = vadd.f32 %v255, %v705
      %v707 = vpop.f32.mrb[0].mxu0
      %708 = vmatprep.mubr.f32.mxu0 0.0
      %709 = vmatmul.mubr.f32.gmra.mrb[0].mxu0 %v361
      %v710 = vpop.f32.mrb[0].mxu0
      %v711 = vadd.f32 %v255, %v710
      %v712 = vpop.f32.mrb[0].mxu0
      %713 = vmatprep.mubr.f32.mxu0 0.0
      %714 = vmatmul.mubr.f32.gmra.mrb[0].mxu0 %v364
      %v715 = vpop.f32.mrb[0].mxu0
      %v716 = vadd.f32 %v255, %v715
      %v717 = vpop.f32.mrb[0].mxu0
      %718 = vmatprep.mubr.f32.mxu0 0.0
      %719 = vmatmul.mubr.f32.gmra.mrb[0].mxu0 %v367
      %v720 = vpop.f32.mrb[0].mxu0
      %v721 = vadd.f32 %v255, %v720
      %v722 = vpop.f32.mrb[0].mxu0
      %723 = vmatprep.mubr.f32.mxu0 0.0
      %724 = vmatmul.mubr.f32.gmra.mrb[0].mxu0 %v370
      %v725 = vpop.f32.mrb[0].mxu0
      %v726 = vadd.f32 %v255, %v725
      %v727 = vpop.f32.mrb[0].mxu0
      %728 = vmatprep.mubr.f32.mxu0 0.0
      %729 = vmatmul.mubr.f32.gmra.mrb[0].mxu0 %v373
      %v730 = vpop.f32.mrb[0].mxu0
      %v731 = vadd.f32 %v255, %v730
      %v732 = vpop.f32.mrb[0].mxu0
      %733 = vmatprep.mubr.f32.mxu0 0.0
      %734 = vmatmul.mubr.f32.gmra.mrb[0].mxu0 %v376
      %v735 = vpop.f32.mrb[0].mxu0
      %v736 = vadd.f32 %v255, %v735
      %v737 = vpop.f32.mrb[0].mxu0
      %738 = vmatprep.mubr.f32.mxu0 0.0
      %739 = vmatmul.mubr.f32.gmra.mrb[0].mxu0 %v379
      %v740 = vpop.f32.mrb[0].mxu0
      %v741 = vadd.f32 %v255, %v740
      %v742 = vpop.f32.mrb[0].mxu0
      %743 = vmatprep.mubr.f32.mxu0 0.0
      %744 = vmatmul.mubr.f32.gmra.mrb[0].mxu0 %v382
      %v745 = vpop.f32.mrb[0].mxu0
      %v746 = vadd.f32 %v255, %v745
      %v747 = vpop.f32.mrb[0].mxu0
      %748 = vmatprep.mubr.f32.mxu0 0.0
      %749 = vmatmul.mubr.f32.gmra.mrb[0].mxu0 %v385
      %v750 = vpop.f32.mrb[0].mxu0
      %v751 = vadd.f32 %v255, %v750
      %v752 = vpop.f32.mrb[0].mxu0
      %753 = vmatprep.mubr.f32.mxu0 0.0
      %754 = vmatmul.mubr.f32.gmra.mrb[0].mxu0 %v388
      %v755 = vpop.f32.mrb[0].mxu0
      %v756 = vadd.f32 %v255, %v755
      %v757 = vpop.f32.mrb[0].mxu0
      %758 = vmatprep.mubr.f32.mxu0 0.0
      %759 = vmatmul.mubr.f32.gmra.mrb[0].mxu0 %v391
      %v760 = vpop.f32.mrb[0].mxu0
      %v761 = vadd.f32 %v255, %v760
      %v762 = vpop.f32.mrb[0].mxu0
      %763 = vmatprep.mubr.f32.mxu0 0.0
      %764 = vmatmul.mubr.f32.gmra.mrb[0].mxu0 %v394
      %v765 = vpop.f32.mrb[0].mxu0
      %v766 = vadd.f32 %v255, %v765
      %v767 = vpop.f32.mrb[0].mxu0
      %768 = vmatprep.mubr.f32.mxu0 0.0
      %769 = vmatmul.mubr.f32.gmra.mrb[0].mxu0 %v397
      %v770 = vpop.f32.mrb[0].mxu0
      %v771 = vadd.f32 %v255, %v770
      %v772 = vpop.f32.mrb[0].mxu0
      %773 = vmatprep.mubr.f32.mxu0 0.0
      %774 = vmatmul.mubr.f32.gmra.mrb[0].mxu0 %v400
      %v775 = vpop.f32.mrb[0].mxu0
      %v776 = vadd.f32 %v255, %v775
      %v777 = vpop.f32.mrb[0].mxu0
      %778 = vmatprep.mubr.f32.mxu0 0.0
      %779 = vmatmul.mubr.f32.gmra.mrb[0].mxu0 %v403
      %v780 = vpop.f32.mrb[0].mxu0
      %v781 = vadd.f32 %v255, %v780
      %v782 = vpop.f32.mrb[0].mxu0
      %783 = vmatprep.mubr.f32.mxu0 0.0
      %784 = vmatmul.mubr.f32.gmra.mrb[0].mxu0 %v406
      %v785 = vpop.f32.mrb[0].mxu0
      %v786 = vadd.f32 %v255, %v785
      %v787 = vpop.f32.mrb[0].mxu0
      %788 = vmatprep.mubr.f32.mxu0 0.0
      %789 = vmatmul.mubr.f32.gmra.mrb[0].mxu0 %v409
      %v790 = vpop.f32.mrb[0].mxu0
      %v791 = vadd.f32 %v255, %v790
      %v792 = vpop.f32.mrb[0].mxu0
      %793 = vmatprep.mubr.f32.mxu0 0.0
      %794 = vmatmul.mubr.f32.gmra.mrb[0].mxu0 %v412
      %v795 = vpop.f32.mrb[0].mxu0
      %v796 = vadd.f32 %v255, %v795
      %v797 = vpop.f32.mrb[0].mxu0
      %798 = vmatprep.mubr.f32.mxu0 0.0
      %799 = vmatmul.mubr.f32.gmra.mrb[0].mxu0 %v415
      %v800 = vpop.f32.mrb[0].mxu0
      %v801 = vadd.f32 %v255, %v800
      %v802 = vpop.f32.mrb[0].mxu0
      %803 = vmatprep.mubr.f32.mxu0 0.0
      %804 = vmatmul.mubr.f32.gmra.mrb[0].mxu0 %v418
      %v805 = vpop.f32.mrb[0].mxu0
      %v806 = vadd.f32 %v255, %v805
      %v807 = vpop.f32.mrb[0].mxu0
      %808 = vmatprep.mubr.f32.mxu0 0.0
      %809 = vmatmul.mubr.f32.gmra.mrb[0].mxu0 %v421
      %v810 = vpop.f32.mrb[0].mxu0
      %v811 = vadd.f32 %v255, %v810
      %v812 = vpop.f32.mrb[0].mxu0
      %813 = vmatprep.mubr.f32.mxu0 0.0
      %814 = vmatmul.mubr.f32.gmra.mrb[0].mxu0 %v424
      %v815 = vpop.f32.mrb[0].mxu0
      %v816 = vadd.f32 %v255, %v815
      %v817 = vpop.f32.mrb[0].mxu0
      %818 = vmatprep.mubr.f32.mxu0 0.0
      %819 = vmatmul.mubr.f32.gmra.mrb[0].mxu0 %v427
      %v820 = vpop.f32.mrb[0].mxu0
      %v821 = vadd.f32 %v255, %v820
      %v822 = vpop.f32.mrb[0].mxu0
      %823 = vmatprep.mubr.f32.mxu0 0.0
      %824 = vmatmul.mubr.f32.gmra.mrb[0].mxu0 %v430
      %v825 = vpop.f32.mrb[0].mxu0
      %v826 = vadd.f32 %v255, %v825
      %v827 = vpop.f32.mrb[0].mxu0
      %828 = vmatprep.mubr.f32.mxu0 0.0
      %829 = vmatmul.mubr.f32.gmra.mrb[0].mxu0 %v433
      %v830 = vpop.f32.mrb[0].mxu0
      %v831 = vadd.f32 %v255, %v830
      %v832 = vpop.f32.mrb[0].mxu0
      %833 = vmatprep.mubr.f32.mxu0 0.0
      %834 = vmatmul.mubr.f32.gmra.mrb[0].mxu0 %v436
      %v835 = vpop.f32.mrb[0].mxu0
      %v836 = vadd.f32 %v255, %v835
      %v837 = vpop.f32.mrb[0].mxu0
      %838 = vmatprep.mubr.f32.mxu0 0.0
      %839 = vmatmul.mubr.f32.gmra.mrb[0].mxu0 %v439
      %v840 = vpop.f32.mrb[0].mxu0
      %v841 = vadd.f32 %v255, %v840
      %v842 = vpop.f32.mrb[0].mxu0
      %843 = vmatprep.mubr.f32.mxu0 0.0
      %844 = vmatmul.mubr.f32.gmra.mrb[0].mxu0 %v442
      %v845 = vpop.f32.mrb[0].mxu0
      %v846 = vadd.f32 %v255, %v845
      %v847 = vpop.f32.mrb[0].mxu0
      %848 = vmatprep.mubr.f32.mxu0 0.0
      %849 = vmatmul.mubr.f32.gmra.mrb[0].mxu0 %v445
      %v850 = vpop.f32.mrb[0].mxu0
      %v851 = vadd.f32 %v255, %v850
      %v852 = vpop.f32.mrb[0].mxu0
      %853 = vmatprep.mubr.f32.mxu0 0.0
      %854 = vmatmul.mubr.f32.gmra.mrb[0].mxu0 %v448
      %v855 = vpop.f32.mrb[0].mxu0
      %v856 = vadd.f32 %v255, %v855
      %v857 = vpop.f32.mrb[0].mxu0
      %858 = vmatprep.mubr.f32.mxu0 0.0
      %859 = vmatmul.mubr.f32.gmra.mrb[0].mxu0 %v451
      %v860 = vpop.f32.mrb[0].mxu0
      %v861 = vadd.f32 %v255, %v860
      %v862 = vpop.f32.mrb[0].mxu0
      %863 = vmatprep.mubr.f32.mxu0 0.0
      %864 = vmatmul.mubr.f32.gmra.mrb[0].mxu0 %v454
      %v865 = vpop.f32.mrb[0].mxu0
      %v866 = vadd.f32 %v255, %v865
      %v867 = vpop.f32.mrb[0].mxu0
      %868 = vmatprep.mubr.f32.mxu0 0.0
      %869 = vmatmul.mubr.f32.gmra.mrb[0].mxu0 %v457
      %v870 = vpop.f32.mrb[0].mxu0
      %v871 = vadd.f32 %v255, %v870
      %v872 = vpop.f32.mrb[0].mxu0
      %873 = vmatprep.mubr.f32.mxu0 0.0
      %874 = vmatmul.mubr.f32.gmra.mrb[0].mxu0 %v460
      %v875 = vpop.f32.mrb[0].mxu0
      %v876 = vadd.f32 %v255, %v875
      %v877 = vpop.f32.mrb[0].mxu0
      %878 = vmatprep.mubr.f32.mxu0 0.0
      %879 = vmatmul.mubr.f32.gmra.mrb[0].mxu0 %v463
      %v880 = vpop.f32.mrb[0].mxu0
      %v881 = vadd.f32 %v255, %v880
      %v882 = vpop.f32.mrb[0].mxu0
      %883 = vmatprep.mubr.f32.mxu0 0.0
      %884 = vmatmul.mubr.f32.gmra.mrb[0].mxu0 %v466
      %v885 = vpop.f32.mrb[0].mxu0
      %v886 = vadd.f32 %v255, %v885
      %v887 = vpop.f32.mrb[0].mxu0
      %888 = vmatprep.mubr.f32.mxu0 0.0
      %889 = vmatmul.mubr.f32.gmra.mrb[0].mxu0 %v469
      %v890 = vpop.f32.mrb[0].mxu0
      %v891 = vadd.f32 %v255, %v890
      %v892 = vpop.f32.mrb[0].mxu0
      %893 = vmatprep.mubr.f32.mxu0 0.0
      %894 = vmatmul.mubr.f32.gmra.mrb[0].mxu0 %v472
      %v895 = vpop.f32.mrb[0].mxu0
      %v896 = vadd.f32 %v255, %v895
      %v897 = vpop.f32.mrb[0].mxu0
      %898 = vdwg.mxu0
      %v899 = vmax.f32 %v541, 0.0
      %v900 = vmax.f32 %v546, 0.0
      %v901 = vmax.f32 %v551, 0.0
      %v902 = vmax.f32 %v556, 0.0
      %v903 = vmax.f32 %v561, 0.0
      %v904 = vmax.f32 %v566, 0.0
      %v905 = vmax.f32 %v571, 0.0
      %v906 = vmax.f32 %v576, 0.0
      %v907 = vmax.f32 %v581, 0.0
      %v908 = vmax.f32 %v586, 0.0
      %v909 = vmax.f32 %v591, 0.0
      %v910 = vmax.f32 %v596, 0.0
      %v911 = vmax.f32 %v601, 0.0
      %v912 = vmax.f32 %v606, 0.0
      %v913 = vmax.f32 %v611, 0.0
      %v914 = vmax.f32 %v616, 0.0
      %v915 = vmax.f32 %v621, 0.0
      %v916 = vmax.f32 %v626, 0.0
      %v917 = vmax.f32 %v631, 0.0
      %v918 = vmax.f32 %v636, 0.0
      %v919 = vmax.f32 %v641, 0.0
      %v920 = vmax.f32 %v646, 0.0
      %v921 = vmax.f32 %v651, 0.0
      %v922 = vmax.f32 %v656, 0.0
      %v923 = vmax.f32 %v661, 0.0
      %v924 = vmax.f32 %v666, 0.0
      %v925 = vmax.f32 %v671, 0.0
      %v926 = vmax.f32 %v676, 0.0
      %v927 = vmax.f32 %v681, 0.0
      %v928 = vmax.f32 %v686, 0.0
      %v929 = vmax.f32 %v691, 0.0
      %v930 = vmax.f32 %v696, 0.0
      %v931 = vmax.f32 %v701, 0.0
      %v932 = vmax.f32 %v706, 0.0
      %v933 = vmax.f32 %v711, 0.0
      %v934 = vmax.f32 %v716, 0.0
      %v935 = vmax.f32 %v721, 0.0
      %v936 = vmax.f32 %v726, 0.0
      %v937 = vmax.f32 %v731, 0.0
      %v938 = vmax.f32 %v736, 0.0
      %v939 = vmax.f32 %v741, 0.0
      %v940 = vmax.f32 %v746, 0.0
      %v941 = vmax.f32 %v751, 0.0
      %v942 = vmax.f32 %v756, 0.0
      %v943 = vmax.f32 %v761, 0.0
      %v944 = vmax.f32 %v766, 0.0
      %v945 = vmax.f32 %v771, 0.0
      %v946 = vmax.f32 %v776, 0.0
      %v947 = vmax.f32 %v781, 0.0
      %v948 = vmax.f32 %v786, 0.0
      %v949 = vmax.f32 %v791, 0.0
      %v950 = vmax.f32 %v796, 0.0
      %v951 = vmax.f32 %v801, 0.0
      %v952 = vmax.f32 %v806, 0.0
      %v953 = vmax.f32 %v811, 0.0
      %v954 = vmax.f32 %v816, 0.0
      %v955 = vmax.f32 %v821, 0.0
      %v956 = vmax.f32 %v826, 0.0
      %v957 = vmax.f32 %v831, 0.0
      %v958 = vmax.f32 %v836, 0.0
      %v959 = vmax.f32 %v841, 0.0
      %v960 = vmax.f32 %v846, 0.0
      %v961 = vmax.f32 %v851, 0.0
      %v962 = vmax.f32 %v856, 0.0
      %v963 = vmax.f32 %v861, 0.0
      %v964 = vmax.f32 %v866, 0.0
      %v965 = vmax.f32 %v871, 0.0
      %v966 = vmax.f32 %v876, 0.0
      %v967 = vmax.f32 %v881, 0.0
      %v968 = vmax.f32 %v886, 0.0
      %v969 = vmax.f32 %v891, 0.0
      %v970 = vmax.f32 %v896, 0.0
      %v1043 = vcombine.high %v899, %v899
      %v1045 = vunpack.c.l.s4 1983009808
      %v1046 = vunpack.c.0.s8 %v1045
      %v1047 = vlaneseq
      %v1048 = vshrl.u32 %v1047, 7
      %v1049 = vsub.s32 %v1046, %v1048
      %v1050 = vrot.slane %v899, %v1049
      %v1052 = vunpack.c.l.s4 1983009808
      %v1053 = vunpack.c.0.s8 %v1052
      %v1054 = vlaneseq
      %v1055 = vshrl.u32 %v1054, 7
      %v1056 = vsub.s32 %v1053, %v1055
      %v1057 = vrot.slane %v1043, %v1056
      %v1058 = vcombine.high %v1050, %v1050
      %v1059 = vcombine.high %v1057, %v1057
      %v1060 = vcombine.high %v900, %v900
      %v1062 = vunpack.c.l.s4 1983009808
      %v1063 = vunpack.c.0.s8 %v1062
      %v1064 = vlaneseq
      %v1065 = vshrl.u32 %v1064, 7
      %v1066 = vsub.s32 %v1063, %v1065
      %v1067 = vrot.slane %v900, %v1066
      %v1069 = vunpack.c.l.s4 1983009808
      %v1070 = vunpack.c.0.s8 %v1069
      %v1071 = vlaneseq
      %v1072 = vshrl.u32 %v1071, 7
      %v1073 = vsub.s32 %v1070, %v1072
      %v1074 = vrot.slane %v1060, %v1073
      %v1075 = vcombine.high %v1067, %v1067
      %v1076 = vcombine.high %v1074, %v1074
      %v1077 = vcombine.high %v901, %v901
      %v1079 = vunpack.c.l.s4 1983009808
      %v1080 = vunpack.c.0.s8 %v1079
      %v1081 = vlaneseq
      %v1082 = vshrl.u32 %v1081, 7
      %v1083 = vsub.s32 %v1080, %v1082
      %v1084 = vrot.slane %v901, %v1083
      %v1086 = vunpack.c.l.s4 1983009808
      %v1087 = vunpack.c.0.s8 %v1086
      %v1088 = vlaneseq
      %v1089 = vshrl.u32 %v1088, 7
      %v1090 = vsub.s32 %v1087, %v1089
      %v1091 = vrot.slane %v1077, %v1090
      %v1092 = vcombine.high %v1084, %v1084
      %v1093 = vcombine.high %v1091, %v1091
      %v1094 = vcombine.high %v902, %v902
      %v1096 = vunpack.c.l.s4 1983009808
      %v1097 = vunpack.c.0.s8 %v1096
      %v1098 = vlaneseq
      %v1099 = vshrl.u32 %v1098, 7
      %v1100 = vsub.s32 %v1097, %v1099
      %v1101 = vrot.slane %v902, %v1100
      %v1103 = vunpack.c.l.s4 1983009808
      %v1104 = vunpack.c.0.s8 %v1103
      %v1105 = vlaneseq
      %v1106 = vshrl.u32 %v1105, 7
      %v1107 = vsub.s32 %v1104, %v1106
      %v1108 = vrot.slane %v1094, %v1107
      %v1109 = vcombine.high %v1101, %v1101
      %v1110 = vcombine.high %v1108, %v1108
      %v1111 = vcombine.high %v903, %v903
      %v1113 = vunpack.c.l.s4 1983009808
      %v1114 = vunpack.c.0.s8 %v1113
      %v1115 = vlaneseq
      %v1116 = vshrl.u32 %v1115, 7
      %v1117 = vsub.s32 %v1114, %v1116
      %v1118 = vrot.slane %v903, %v1117
      %v1120 = vunpack.c.l.s4 1983009808
      %v1121 = vunpack.c.0.s8 %v1120
      %v1122 = vlaneseq
      %v1123 = vshrl.u32 %v1122, 7
      %v1124 = vsub.s32 %v1121, %v1123
      %v1125 = vrot.slane %v1111, %v1124
      %v1126 = vcombine.high %v1118, %v1118
      %v1127 = vcombine.high %v1125, %v1125
      %v1128 = vcombine.high %v904, %v904
      %v1130 = vunpack.c.l.s4 1983009808
      %v1131 = vunpack.c.0.s8 %v1130
      %v1132 = vlaneseq
      %v1133 = vshrl.u32 %v1132, 7
      %v1134 = vsub.s32 %v1131, %v1133
      %v1135 = vrot.slane %v904, %v1134
      %v1137 = vunpack.c.l.s4 1983009808
      %v1138 = vunpack.c.0.s8 %v1137
      %v1139 = vlaneseq
      %v1140 = vshrl.u32 %v1139, 7
      %v1141 = vsub.s32 %v1138, %v1140
      %v1142 = vrot.slane %v1128, %v1141
      %v1143 = vcombine.high %v1135, %v1135
      %v1144 = vcombine.high %v1142, %v1142
      %v1145 = vcombine.high %v905, %v905
      %v1147 = vunpack.c.l.s4 1983009808
      %v1148 = vunpack.c.0.s8 %v1147
      %v1149 = vlaneseq
      %v1150 = vshrl.u32 %v1149, 7
      %v1151 = vsub.s32 %v1148, %v1150
      %v1152 = vrot.slane %v905, %v1151
      %v1154 = vunpack.c.l.s4 1983009808
      %v1155 = vunpack.c.0.s8 %v1154
      %v1156 = vlaneseq
      %v1157 = vshrl.u32 %v1156, 7
      %v1158 = vsub.s32 %v1155, %v1157
      %v1159 = vrot.slane %v1145, %v1158
      %v1160 = vcombine.high %v1152, %v1152
      %v1161 = vcombine.high %v1159, %v1159
      %v1162 = vcombine.high %v906, %v906
      %v1164 = vunpack.c.l.s4 1983009808
      %v1165 = vunpack.c.0.s8 %v1164
      %v1166 = vlaneseq
      %v1167 = vshrl.u32 %v1166, 7
      %v1168 = vsub.s32 %v1165, %v1167
      %v1169 = vrot.slane %v906, %v1168
      %v1171 = vunpack.c.l.s4 1983009808
      %v1172 = vunpack.c.0.s8 %v1171
      %v1173 = vlaneseq
      %v1174 = vshrl.u32 %v1173, 7
      %v1175 = vsub.s32 %v1172, %v1174
      %v1176 = vrot.slane %v1162, %v1175
      %v1177 = vcombine.high %v1169, %v1169
      %v1178 = vcombine.high %v1176, %v1176
      %v1179 = vcombine.high %v907, %v907
      %v1181 = vunpack.c.l.s4 1983009808
      %v1182 = vunpack.c.0.s8 %v1181
      %v1183 = vlaneseq
      %v1184 = vshrl.u32 %v1183, 7
      %v1185 = vsub.s32 %v1182, %v1184
      %v1186 = vrot.slane %v907, %v1185
      %v1188 = vunpack.c.l.s4 1983009808
      %v1189 = vunpack.c.0.s8 %v1188
      %v1190 = vlaneseq
      %v1191 = vshrl.u32 %v1190, 7
      %v1192 = vsub.s32 %v1189, %v1191
      %v1193 = vrot.slane %v1179, %v1192
      %v1194 = vcombine.high %v1186, %v1186
      %v1195 = vcombine.high %v1193, %v1193
      %v1196 = vcombine.high %v908, %v908
      %v1198 = vunpack.c.l.s4 1983009808
      %v1199 = vunpack.c.0.s8 %v1198
      %v1200 = vlaneseq
      %v1201 = vshrl.u32 %v1200, 7
      %v1202 = vsub.s32 %v1199, %v1201
      %v1203 = vrot.slane %v908, %v1202
      %v1205 = vunpack.c.l.s4 1983009808
      %v1206 = vunpack.c.0.s8 %v1205
      %v1207 = vlaneseq
      %v1208 = vshrl.u32 %v1207, 7
      %v1209 = vsub.s32 %v1206, %v1208
      %v1210 = vrot.slane %v1196, %v1209
      %v1211 = vcombine.high %v1203, %v1203
      %v1212 = vcombine.high %v1210, %v1210
      %v1213 = vcombine.high %v909, %v909
      %v1215 = vunpack.c.l.s4 1983009808
      %v1216 = vunpack.c.0.s8 %v1215
      %v1217 = vlaneseq
      %v1218 = vshrl.u32 %v1217, 7
      %v1219 = vsub.s32 %v1216, %v1218
      %v1220 = vrot.slane %v909, %v1219
      %v1222 = vunpack.c.l.s4 1983009808
      %v1223 = vunpack.c.0.s8 %v1222
      %v1224 = vlaneseq
      %v1225 = vshrl.u32 %v1224, 7
      %v1226 = vsub.s32 %v1223, %v1225
      %v1227 = vrot.slane %v1213, %v1226
      %v1228 = vcombine.high %v1220, %v1220
      %v1229 = vcombine.high %v1227, %v1227
      %v1230 = vcombine.high %v910, %v910
      %v1232 = vunpack.c.l.s4 1983009808
      %v1233 = vunpack.c.0.s8 %v1232
      %v1234 = vlaneseq
      %v1235 = vshrl.u32 %v1234, 7
      %v1236 = vsub.s32 %v1233, %v1235
      %v1237 = vrot.slane %v910, %v1236
      %v1239 = vunpack.c.l.s4 1983009808
      %v1240 = vunpack.c.0.s8 %v1239
      %v1241 = vlaneseq
      %v1242 = vshrl.u32 %v1241, 7
      %v1243 = vsub.s32 %v1240, %v1242
      %v1244 = vrot.slane %v1230, %v1243
      %v1245 = vcombine.high %v1237, %v1237
      %v1246 = vcombine.high %v1244, %v1244
      %v1247 = vcombine.high %v911, %v911
      %v1249 = vunpack.c.l.s4 1983009808
      %v1250 = vunpack.c.0.s8 %v1249
      %v1251 = vlaneseq
      %v1252 = vshrl.u32 %v1251, 7
      %v1253 = vsub.s32 %v1250, %v1252
      %v1254 = vrot.slane %v911, %v1253
      %v1256 = vunpack.c.l.s4 1983009808
      %v1257 = vunpack.c.0.s8 %v1256
      %v1258 = vlaneseq
      %v1259 = vshrl.u32 %v1258, 7
      %v1260 = vsub.s32 %v1257, %v1259
      %v1261 = vrot.slane %v1247, %v1260
      %v1262 = vcombine.high %v1254, %v1254
      %v1263 = vcombine.high %v1261, %v1261
      %v1264 = vcombine.high %v912, %v912
      %v1266 = vunpack.c.l.s4 1983009808
      %v1267 = vunpack.c.0.s8 %v1266
      %v1268 = vlaneseq
      %v1269 = vshrl.u32 %v1268, 7
      %v1270 = vsub.s32 %v1267, %v1269
      %v1271 = vrot.slane %v912, %v1270
      %v1273 = vunpack.c.l.s4 1983009808
      %v1274 = vunpack.c.0.s8 %v1273
      %v1275 = vlaneseq
      %v1276 = vshrl.u32 %v1275, 7
      %v1277 = vsub.s32 %v1274, %v1276
      %v1278 = vrot.slane %v1264, %v1277
      %v1279 = vcombine.high %v1271, %v1271
      %v1280 = vcombine.high %v1278, %v1278
      %v1281 = vcombine.high %v913, %v913
      %v1283 = vunpack.c.l.s4 1983009808
      %v1284 = vunpack.c.0.s8 %v1283
      %v1285 = vlaneseq
      %v1286 = vshrl.u32 %v1285, 7
      %v1287 = vsub.s32 %v1284, %v1286
      %v1288 = vrot.slane %v913, %v1287
      %v1290 = vunpack.c.l.s4 1983009808
      %v1291 = vunpack.c.0.s8 %v1290
      %v1292 = vlaneseq
      %v1293 = vshrl.u32 %v1292, 7
      %v1294 = vsub.s32 %v1291, %v1293
      %v1295 = vrot.slane %v1281, %v1294
      %v1296 = vcombine.high %v1288, %v1288
      %v1297 = vcombine.high %v1295, %v1295
      %v1298 = vcombine.high %v914, %v914
      %v1300 = vunpack.c.l.s4 1983009808
      %v1301 = vunpack.c.0.s8 %v1300
      %v1302 = vlaneseq
      %v1303 = vshrl.u32 %v1302, 7
      %v1304 = vsub.s32 %v1301, %v1303
      %v1305 = vrot.slane %v914, %v1304
      %v1307 = vunpack.c.l.s4 1983009808
      %v1308 = vunpack.c.0.s8 %v1307
      %v1309 = vlaneseq
      %v1310 = vshrl.u32 %v1309, 7
      %v1311 = vsub.s32 %v1308, %v1310
      %v1312 = vrot.slane %v1298, %v1311
      %v1313 = vcombine.high %v1305, %v1305
      %v1314 = vcombine.high %v1312, %v1312
      %v1315 = vcombine.high %v915, %v915
      %v1317 = vunpack.c.l.s4 1983009808
      %v1318 = vunpack.c.0.s8 %v1317
      %v1319 = vlaneseq
      %v1320 = vshrl.u32 %v1319, 7
      %v1321 = vsub.s32 %v1318, %v1320
      %v1322 = vrot.slane %v915, %v1321
      %v1324 = vunpack.c.l.s4 1983009808
      %v1325 = vunpack.c.0.s8 %v1324
      %v1326 = vlaneseq
      %v1327 = vshrl.u32 %v1326, 7
      %v1328 = vsub.s32 %v1325, %v1327
      %v1329 = vrot.slane %v1315, %v1328
      %v1330 = vcombine.high %v1322, %v1322
      %v1331 = vcombine.high %v1329, %v1329
      %v1332 = vcombine.high %v916, %v916
      %v1334 = vunpack.c.l.s4 1983009808
      %v1335 = vunpack.c.0.s8 %v1334
      %v1336 = vlaneseq
      %v1337 = vshrl.u32 %v1336, 7
      %v1338 = vsub.s32 %v1335, %v1337
      %v1339 = vrot.slane %v916, %v1338
      %v1341 = vunpack.c.l.s4 1983009808
      %v1342 = vunpack.c.0.s8 %v1341
      %v1343 = vlaneseq
      %v1344 = vshrl.u32 %v1343, 7
      %v1345 = vsub.s32 %v1342, %v1344
      %v1346 = vrot.slane %v1332, %v1345
      %v1347 = vcombine.high %v1339, %v1339
      %v1348 = vcombine.high %v1346, %v1346
      %v1349 = vcombine.high %v917, %v917
      %v1351 = vunpack.c.l.s4 1983009808
      %v1352 = vunpack.c.0.s8 %v1351
      %v1353 = vlaneseq
      %v1354 = vshrl.u32 %v1353, 7
      %v1355 = vsub.s32 %v1352, %v1354
      %v1356 = vrot.slane %v917, %v1355
      %v1358 = vunpack.c.l.s4 1983009808
      %v1359 = vunpack.c.0.s8 %v1358
      %v1360 = vlaneseq
      %v1361 = vshrl.u32 %v1360, 7
      %v1362 = vsub.s32 %v1359, %v1361
      %v1363 = vrot.slane %v1349, %v1362
      %v1364 = vcombine.high %v1356, %v1356
      %v1365 = vcombine.high %v1363, %v1363
      %v1366 = vcombine.high %v918, %v918
      %v1368 = vunpack.c.l.s4 1983009808
      %v1369 = vunpack.c.0.s8 %v1368
      %v1370 = vlaneseq
      %v1371 = vshrl.u32 %v1370, 7
      %v1372 = vsub.s32 %v1369, %v1371
      %v1373 = vrot.slane %v918, %v1372
      %v1375 = vunpack.c.l.s4 1983009808
      %v1376 = vunpack.c.0.s8 %v1375
      %v1377 = vlaneseq
      %v1378 = vshrl.u32 %v1377, 7
      %v1379 = vsub.s32 %v1376, %v1378
      %v1380 = vrot.slane %v1366, %v1379
      %v1381 = vcombine.high %v1373, %v1373
      %v1382 = vcombine.high %v1380, %v1380
      %v1383 = vcombine.high %v919, %v919
      %v1385 = vunpack.c.l.s4 1983009808
      %v1386 = vunpack.c.0.s8 %v1385
      %v1387 = vlaneseq
      %v1388 = vshrl.u32 %v1387, 7
      %v1389 = vsub.s32 %v1386, %v1388
      %v1390 = vrot.slane %v919, %v1389
      %v1392 = vunpack.c.l.s4 1983009808
      %v1393 = vunpack.c.0.s8 %v1392
      %v1394 = vlaneseq
      %v1395 = vshrl.u32 %v1394, 7
      %v1396 = vsub.s32 %v1393, %v1395
      %v1397 = vrot.slane %v1383, %v1396
      %v1398 = vcombine.high %v1390, %v1390
      %v1399 = vcombine.high %v1397, %v1397
      %v1400 = vcombine.high %v920, %v920
      %v1402 = vunpack.c.l.s4 1983009808
      %v1403 = vunpack.c.0.s8 %v1402
      %v1404 = vlaneseq
      %v1405 = vshrl.u32 %v1404, 7
      %v1406 = vsub.s32 %v1403, %v1405
      %v1407 = vrot.slane %v920, %v1406
      %v1409 = vunpack.c.l.s4 1983009808
      %v1410 = vunpack.c.0.s8 %v1409
      %v1411 = vlaneseq
      %v1412 = vshrl.u32 %v1411, 7
      %v1413 = vsub.s32 %v1410, %v1412
      %v1414 = vrot.slane %v1400, %v1413
      %v1415 = vcombine.high %v1407, %v1407
      %v1416 = vcombine.high %v1414, %v1414
      %v1417 = vcombine.high %v921, %v921
      %v1419 = vunpack.c.l.s4 1983009808
      %v1420 = vunpack.c.0.s8 %v1419
      %v1421 = vlaneseq
      %v1422 = vshrl.u32 %v1421, 7
      %v1423 = vsub.s32 %v1420, %v1422
      %v1424 = vrot.slane %v921, %v1423
      %v1426 = vunpack.c.l.s4 1983009808
      %v1427 = vunpack.c.0.s8 %v1426
      %v1428 = vlaneseq
      %v1429 = vshrl.u32 %v1428, 7
      %v1430 = vsub.s32 %v1427, %v1429
      %v1431 = vrot.slane %v1417, %v1430
      %v1432 = vcombine.high %v1424, %v1424
      %v1433 = vcombine.high %v1431, %v1431
      %v1434 = vcombine.high %v922, %v922
      %v1436 = vunpack.c.l.s4 1983009808
      %v1437 = vunpack.c.0.s8 %v1436
      %v1438 = vlaneseq
      %v1439 = vshrl.u32 %v1438, 7
      %v1440 = vsub.s32 %v1437, %v1439
      %v1441 = vrot.slane %v922, %v1440
      %v1443 = vunpack.c.l.s4 1983009808
      %v1444 = vunpack.c.0.s8 %v1443
      %v1445 = vlaneseq
      %v1446 = vshrl.u32 %v1445, 7
      %v1447 = vsub.s32 %v1444, %v1446
      %v1448 = vrot.slane %v1434, %v1447
      %v1449 = vcombine.high %v1441, %v1441
      %v1450 = vcombine.high %v1448, %v1448
      %v1451 = vcombine.high %v923, %v923
      %v1453 = vunpack.c.l.s4 1983009808
      %v1454 = vunpack.c.0.s8 %v1453
      %v1455 = vlaneseq
      %v1456 = vshrl.u32 %v1455, 7
      %v1457 = vsub.s32 %v1454, %v1456
      %v1458 = vrot.slane %v923, %v1457
      %v1460 = vunpack.c.l.s4 1983009808
      %v1461 = vunpack.c.0.s8 %v1460
      %v1462 = vlaneseq
      %v1463 = vshrl.u32 %v1462, 7
      %v1464 = vsub.s32 %v1461, %v1463
      %v1465 = vrot.slane %v1451, %v1464
      %v1466 = vcombine.high %v1458, %v1458
      %v1467 = vcombine.high %v1465, %v1465
      %v1468 = vcombine.high %v924, %v924
      %v1470 = vunpack.c.l.s4 1983009808
      %v1471 = vunpack.c.0.s8 %v1470
      %v1472 = vlaneseq
      %v1473 = vshrl.u32 %v1472, 7
      %v1474 = vsub.s32 %v1471, %v1473
      %v1475 = vrot.slane %v924, %v1474
      %v1477 = vunpack.c.l.s4 1983009808
      %v1478 = vunpack.c.0.s8 %v1477
      %v1479 = vlaneseq
      %v1480 = vshrl.u32 %v1479, 7
      %v1481 = vsub.s32 %v1478, %v1480
      %v1482 = vrot.slane %v1468, %v1481
      %v1483 = vcombine.high %v1475, %v1475
      %v1484 = vcombine.high %v1482, %v1482
      %v1485 = vcombine.high %v925, %v925
      %v1487 = vunpack.c.l.s4 1983009808
      %v1488 = vunpack.c.0.s8 %v1487
      %v1489 = vlaneseq
      %v1490 = vshrl.u32 %v1489, 7
      %v1491 = vsub.s32 %v1488, %v1490
      %v1492 = vrot.slane %v925, %v1491
      %v1494 = vunpack.c.l.s4 1983009808
      %v1495 = vunpack.c.0.s8 %v1494
      %v1496 = vlaneseq
      %v1497 = vshrl.u32 %v1496, 7
      %v1498 = vsub.s32 %v1495, %v1497
      %v1499 = vrot.slane %v1485, %v1498
      %v1500 = vcombine.high %v1492, %v1492
      %v1501 = vcombine.high %v1499, %v1499
      %v1502 = vcombine.high %v926, %v926
      %v1504 = vunpack.c.l.s4 1983009808
      %v1505 = vunpack.c.0.s8 %v1504
      %v1506 = vlaneseq
      %v1507 = vshrl.u32 %v1506, 7
      %v1508 = vsub.s32 %v1505, %v1507
      %v1509 = vrot.slane %v926, %v1508
      %v1511 = vunpack.c.l.s4 1983009808
      %v1512 = vunpack.c.0.s8 %v1511
      %v1513 = vlaneseq
      %v1514 = vshrl.u32 %v1513, 7
      %v1515 = vsub.s32 %v1512, %v1514
      %v1516 = vrot.slane %v1502, %v1515
      %v1517 = vcombine.high %v1509, %v1509
      %v1518 = vcombine.high %v1516, %v1516
      %v1519 = vcombine.high %v927, %v927
      %v1521 = vunpack.c.l.s4 1983009808
      %v1522 = vunpack.c.0.s8 %v1521
      %v1523 = vlaneseq
      %v1524 = vshrl.u32 %v1523, 7
      %v1525 = vsub.s32 %v1522, %v1524
      %v1526 = vrot.slane %v927, %v1525
      %v1528 = vunpack.c.l.s4 1983009808
      %v1529 = vunpack.c.0.s8 %v1528
      %v1530 = vlaneseq
      %v1531 = vshrl.u32 %v1530, 7
      %v1532 = vsub.s32 %v1529, %v1531
      %v1533 = vrot.slane %v1519, %v1532
      %v1534 = vcombine.high %v1526, %v1526
      %v1535 = vcombine.high %v1533, %v1533
      %v1536 = vcombine.high %v928, %v928
      %v1538 = vunpack.c.l.s4 1983009808
      %v1539 = vunpack.c.0.s8 %v1538
      %v1540 = vlaneseq
      %v1541 = vshrl.u32 %v1540, 7
      %v1542 = vsub.s32 %v1539, %v1541
      %v1543 = vrot.slane %v928, %v1542
      %v1545 = vunpack.c.l.s4 1983009808
      %v1546 = vunpack.c.0.s8 %v1545
      %v1547 = vlaneseq
      %v1548 = vshrl.u32 %v1547, 7
      %v1549 = vsub.s32 %v1546, %v1548
      %v1550 = vrot.slane %v1536, %v1549
      %v1551 = vcombine.high %v1543, %v1543
      %v1552 = vcombine.high %v1550, %v1550
      %v1553 = vcombine.high %v929, %v929
      %v1555 = vunpack.c.l.s4 1983009808
      %v1556 = vunpack.c.0.s8 %v1555
      %v1557 = vlaneseq
      %v1558 = vshrl.u32 %v1557, 7
      %v1559 = vsub.s32 %v1556, %v1558
      %v1560 = vrot.slane %v929, %v1559
      %v1562 = vunpack.c.l.s4 1983009808
      %v1563 = vunpack.c.0.s8 %v1562
      %v1564 = vlaneseq
      %v1565 = vshrl.u32 %v1564, 7
      %v1566 = vsub.s32 %v1563, %v1565
      %v1567 = vrot.slane %v1553, %v1566
      %v1568 = vcombine.high %v1560, %v1560
      %v1569 = vcombine.high %v1567, %v1567
      %v1570 = vcombine.high %v930, %v930
      %v1572 = vunpack.c.l.s4 1983009808
      %v1573 = vunpack.c.0.s8 %v1572
      %v1574 = vlaneseq
      %v1575 = vshrl.u32 %v1574, 7
      %v1576 = vsub.s32 %v1573, %v1575
      %v1577 = vrot.slane %v930, %v1576
      %v1579 = vunpack.c.l.s4 1983009808
      %v1580 = vunpack.c.0.s8 %v1579
      %v1581 = vlaneseq
      %v1582 = vshrl.u32 %v1581, 7
      %v1583 = vsub.s32 %v1580, %v1582
      %v1584 = vrot.slane %v1570, %v1583
      %v1585 = vcombine.high %v1577, %v1577
      %v1586 = vcombine.high %v1584, %v1584
      %v1587 = vcombine.high %v931, %v931
      %v1589 = vunpack.c.l.s4 1983009808
      %v1590 = vunpack.c.0.s8 %v1589
      %v1591 = vlaneseq
      %v1592 = vshrl.u32 %v1591, 7
      %v1593 = vsub.s32 %v1590, %v1592
      %v1594 = vrot.slane %v931, %v1593
      %v1596 = vunpack.c.l.s4 1983009808
      %v1597 = vunpack.c.0.s8 %v1596
      %v1598 = vlaneseq
      %v1599 = vshrl.u32 %v1598, 7
      %v1600 = vsub.s32 %v1597, %v1599
      %v1601 = vrot.slane %v1587, %v1600
      %v1602 = vcombine.high %v1594, %v1594
      %v1603 = vcombine.high %v1601, %v1601
      %v1604 = vcombine.high %v932, %v932
      %v1606 = vunpack.c.l.s4 1983009808
      %v1607 = vunpack.c.0.s8 %v1606
      %v1608 = vlaneseq
      %v1609 = vshrl.u32 %v1608, 7
      %v1610 = vsub.s32 %v1607, %v1609
      %v1611 = vrot.slane %v932, %v1610
      %v1613 = vunpack.c.l.s4 1983009808
      %v1614 = vunpack.c.0.s8 %v1613
      %v1615 = vlaneseq
      %v1616 = vshrl.u32 %v1615, 7
      %v1617 = vsub.s32 %v1614, %v1616
      %v1618 = vrot.slane %v1604, %v1617
      %v1619 = vcombine.high %v1611, %v1611
      %v1620 = vcombine.high %v1618, %v1618
      %v1621 = vcombine.high %v933, %v933
      %v1623 = vunpack.c.l.s4 1983009808
      %v1624 = vunpack.c.0.s8 %v1623
      %v1625 = vlaneseq
      %v1626 = vshrl.u32 %v1625, 7
      %v1627 = vsub.s32 %v1624, %v1626
      %v1628 = vrot.slane %v933, %v1627
      %v1630 = vunpack.c.l.s4 1983009808
      %v1631 = vunpack.c.0.s8 %v1630
      %v1632 = vlaneseq
      %v1633 = vshrl.u32 %v1632, 7
      %v1634 = vsub.s32 %v1631, %v1633
      %v1635 = vrot.slane %v1621, %v1634
      %v1636 = vcombine.high %v1628, %v1628
      %v1637 = vcombine.high %v1635, %v1635
      %v1638 = vcombine.high %v934, %v934
      %v1640 = vunpack.c.l.s4 1983009808
      %v1641 = vunpack.c.0.s8 %v1640
      %v1642 = vlaneseq
      %v1643 = vshrl.u32 %v1642, 7
      %v1644 = vsub.s32 %v1641, %v1643
      %v1645 = vrot.slane %v934, %v1644
      %v1647 = vunpack.c.l.s4 1983009808
      %v1648 = vunpack.c.0.s8 %v1647
      %v1649 = vlaneseq
      %v1650 = vshrl.u32 %v1649, 7
      %v1651 = vsub.s32 %v1648, %v1650
      %v1652 = vrot.slane %v1638, %v1651
      %v1653 = vcombine.high %v1645, %v1645
      %v1654 = vcombine.high %v1652, %v1652
      %v1655 = vcombine.high %v935, %v935
      %v1657 = vunpack.c.l.s4 1983009808
      %v1658 = vunpack.c.0.s8 %v1657
      %v1659 = vlaneseq
      %v1660 = vshrl.u32 %v1659, 7
      %v1661 = vsub.s32 %v1658, %v1660
      %v1662 = vrot.slane %v935, %v1661
      %v1664 = vunpack.c.l.s4 1983009808
      %v1665 = vunpack.c.0.s8 %v1664
      %v1666 = vlaneseq
      %v1667 = vshrl.u32 %v1666, 7
      %v1668 = vsub.s32 %v1665, %v1667
      %v1669 = vrot.slane %v1655, %v1668
      %v1670 = vcombine.high %v1662, %v1662
      %v1671 = vcombine.high %v1669, %v1669
      %v1672 = vcombine.high %v936, %v936
      %v1674 = vunpack.c.l.s4 1983009808
      %v1675 = vunpack.c.0.s8 %v1674
      %v1676 = vlaneseq
      %v1677 = vshrl.u32 %v1676, 7
      %v1678 = vsub.s32 %v1675, %v1677
      %v1679 = vrot.slane %v936, %v1678
      %v1681 = vunpack.c.l.s4 1983009808
      %v1682 = vunpack.c.0.s8 %v1681
      %v1683 = vlaneseq
      %v1684 = vshrl.u32 %v1683, 7
      %v1685 = vsub.s32 %v1682, %v1684
      %v1686 = vrot.slane %v1672, %v1685
      %v1687 = vcombine.high %v1679, %v1679
      %v1688 = vcombine.high %v1686, %v1686
      %v1689 = vcombine.high %v937, %v937
      %v1691 = vunpack.c.l.s4 1983009808
      %v1692 = vunpack.c.0.s8 %v1691
      %v1693 = vlaneseq
      %v1694 = vshrl.u32 %v1693, 7
      %v1695 = vsub.s32 %v1692, %v1694
      %v1696 = vrot.slane %v937, %v1695
      %v1698 = vunpack.c.l.s4 1983009808
      %v1699 = vunpack.c.0.s8 %v1698
      %v1700 = vlaneseq
      %v1701 = vshrl.u32 %v1700, 7
      %v1702 = vsub.s32 %v1699, %v1701
      %v1703 = vrot.slane %v1689, %v1702
      %v1704 = vcombine.high %v1696, %v1696
      %v1705 = vcombine.high %v1703, %v1703
      %v1706 = vcombine.high %v938, %v938
      %v1708 = vunpack.c.l.s4 1983009808
      %v1709 = vunpack.c.0.s8 %v1708
      %v1710 = vlaneseq
      %v1711 = vshrl.u32 %v1710, 7
      %v1712 = vsub.s32 %v1709, %v1711
      %v1713 = vrot.slane %v938, %v1712
      %v1715 = vunpack.c.l.s4 1983009808
      %v1716 = vunpack.c.0.s8 %v1715
      %v1717 = vlaneseq
      %v1718 = vshrl.u32 %v1717, 7
      %v1719 = vsub.s32 %v1716, %v1718
      %v1720 = vrot.slane %v1706, %v1719
      %v1721 = vcombine.high %v1713, %v1713
      %v1722 = vcombine.high %v1720, %v1720
      %v1723 = vcombine.high %v939, %v939
      %v1725 = vunpack.c.l.s4 1983009808
      %v1726 = vunpack.c.0.s8 %v1725
      %v1727 = vlaneseq
      %v1728 = vshrl.u32 %v1727, 7
      %v1729 = vsub.s32 %v1726, %v1728
      %v1730 = vrot.slane %v939, %v1729
      %v1732 = vunpack.c.l.s4 1983009808
      %v1733 = vunpack.c.0.s8 %v1732
      %v1734 = vlaneseq
      %v1735 = vshrl.u32 %v1734, 7
      %v1736 = vsub.s32 %v1733, %v1735
      %v1737 = vrot.slane %v1723, %v1736
      %v1738 = vcombine.high %v1730, %v1730
      %v1739 = vcombine.high %v1737, %v1737
      %v1740 = vcombine.high %v940, %v940
      %v1742 = vunpack.c.l.s4 1983009808
      %v1743 = vunpack.c.0.s8 %v1742
      %v1744 = vlaneseq
      %v1745 = vshrl.u32 %v1744, 7
      %v1746 = vsub.s32 %v1743, %v1745
      %v1747 = vrot.slane %v940, %v1746
      %v1749 = vunpack.c.l.s4 1983009808
      %v1750 = vunpack.c.0.s8 %v1749
      %v1751 = vlaneseq
      %v1752 = vshrl.u32 %v1751, 7
      %v1753 = vsub.s32 %v1750, %v1752
      %v1754 = vrot.slane %v1740, %v1753
      %v1755 = vcombine.high %v1747, %v1747
      %v1756 = vcombine.high %v1754, %v1754
      %v1757 = vcombine.high %v941, %v941
      %v1759 = vunpack.c.l.s4 1983009808
      %v1760 = vunpack.c.0.s8 %v1759
      %v1761 = vlaneseq
      %v1762 = vshrl.u32 %v1761, 7
      %v1763 = vsub.s32 %v1760, %v1762
      %v1764 = vrot.slane %v941, %v1763
      %v1766 = vunpack.c.l.s4 1983009808
      %v1767 = vunpack.c.0.s8 %v1766
      %v1768 = vlaneseq
      %v1769 = vshrl.u32 %v1768, 7
      %v1770 = vsub.s32 %v1767, %v1769
      %v1771 = vrot.slane %v1757, %v1770
      %v1772 = vcombine.high %v1764, %v1764
      %v1773 = vcombine.high %v1771, %v1771
      %v1774 = vcombine.high %v942, %v942
      %v1776 = vunpack.c.l.s4 1983009808
      %v1777 = vunpack.c.0.s8 %v1776
      %v1778 = vlaneseq
      %v1779 = vshrl.u32 %v1778, 7
      %v1780 = vsub.s32 %v1777, %v1779
      %v1781 = vrot.slane %v942, %v1780
      %v1783 = vunpack.c.l.s4 1983009808
      %v1784 = vunpack.c.0.s8 %v1783
      %v1785 = vlaneseq
      %v1786 = vshrl.u32 %v1785, 7
      %v1787 = vsub.s32 %v1784, %v1786
      %v1788 = vrot.slane %v1774, %v1787
      %v1789 = vcombine.high %v1781, %v1781
      %v1790 = vcombine.high %v1788, %v1788
      %v1791 = vcombine.high %v943, %v943
      %v1793 = vunpack.c.l.s4 1983009808
      %v1794 = vunpack.c.0.s8 %v1793
      %v1795 = vlaneseq
      %v1796 = vshrl.u32 %v1795, 7
      %v1797 = vsub.s32 %v1794, %v1796
      %v1798 = vrot.slane %v943, %v1797
      %v1800 = vunpack.c.l.s4 1983009808
      %v1801 = vunpack.c.0.s8 %v1800
      %v1802 = vlaneseq
      %v1803 = vshrl.u32 %v1802, 7
      %v1804 = vsub.s32 %v1801, %v1803
      %v1805 = vrot.slane %v1791, %v1804
      %v1806 = vcombine.high %v1798, %v1798
      %v1807 = vcombine.high %v1805, %v1805
      %v1808 = vcombine.high %v944, %v944
      %v1810 = vunpack.c.l.s4 1983009808
      %v1811 = vunpack.c.0.s8 %v1810
      %v1812 = vlaneseq
      %v1813 = vshrl.u32 %v1812, 7
      %v1814 = vsub.s32 %v1811, %v1813
      %v1815 = vrot.slane %v944, %v1814
      %v1817 = vunpack.c.l.s4 1983009808
      %v1818 = vunpack.c.0.s8 %v1817
      %v1819 = vlaneseq
      %v1820 = vshrl.u32 %v1819, 7
      %v1821 = vsub.s32 %v1818, %v1820
      %v1822 = vrot.slane %v1808, %v1821
      %v1823 = vcombine.high %v1815, %v1815
      %v1824 = vcombine.high %v1822, %v1822
      %v1825 = vcombine.high %v945, %v945
      %v1827 = vunpack.c.l.s4 1983009808
      %v1828 = vunpack.c.0.s8 %v1827
      %v1829 = vlaneseq
      %v1830 = vshrl.u32 %v1829, 7
      %v1831 = vsub.s32 %v1828, %v1830
      %v1832 = vrot.slane %v945, %v1831
      %v1834 = vunpack.c.l.s4 1983009808
      %v1835 = vunpack.c.0.s8 %v1834
      %v1836 = vlaneseq
      %v1837 = vshrl.u32 %v1836, 7
      %v1838 = vsub.s32 %v1835, %v1837
      %v1839 = vrot.slane %v1825, %v1838
      %v1840 = vcombine.high %v1832, %v1832
      %v1841 = vcombine.high %v1839, %v1839
      %v1842 = vcombine.high %v946, %v946
      %v1844 = vunpack.c.l.s4 1983009808
      %v1845 = vunpack.c.0.s8 %v1844
      %v1846 = vlaneseq
      %v1847 = vshrl.u32 %v1846, 7
      %v1848 = vsub.s32 %v1845, %v1847
      %v1849 = vrot.slane %v946, %v1848
      %v1851 = vunpack.c.l.s4 1983009808
      %v1852 = vunpack.c.0.s8 %v1851
      %v1853 = vlaneseq
      %v1854 = vshrl.u32 %v1853, 7
      %v1855 = vsub.s32 %v1852, %v1854
      %v1856 = vrot.slane %v1842, %v1855
      %v1857 = vcombine.high %v1849, %v1849
      %v1858 = vcombine.high %v1856, %v1856
      %v1859 = vcombine.high %v947, %v947
      %v1861 = vunpack.c.l.s4 1983009808
      %v1862 = vunpack.c.0.s8 %v1861
      %v1863 = vlaneseq
      %v1864 = vshrl.u32 %v1863, 7
      %v1865 = vsub.s32 %v1862, %v1864
      %v1866 = vrot.slane %v947, %v1865
      %v1868 = vunpack.c.l.s4 1983009808
      %v1869 = vunpack.c.0.s8 %v1868
      %v1870 = vlaneseq
      %v1871 = vshrl.u32 %v1870, 7
      %v1872 = vsub.s32 %v1869, %v1871
      %v1873 = vrot.slane %v1859, %v1872
      %v1874 = vcombine.high %v1866, %v1866
      %v1875 = vcombine.high %v1873, %v1873
      %v1876 = vcombine.high %v948, %v948
      %v1878 = vunpack.c.l.s4 1983009808
      %v1879 = vunpack.c.0.s8 %v1878
      %v1880 = vlaneseq
      %v1881 = vshrl.u32 %v1880, 7
      %v1882 = vsub.s32 %v1879, %v1881
      %v1883 = vrot.slane %v948, %v1882
      %v1885 = vunpack.c.l.s4 1983009808
      %v1886 = vunpack.c.0.s8 %v1885
      %v1887 = vlaneseq
      %v1888 = vshrl.u32 %v1887, 7
      %v1889 = vsub.s32 %v1886, %v1888
      %v1890 = vrot.slane %v1876, %v1889
      %v1891 = vcombine.high %v1883, %v1883
      %v1892 = vcombine.high %v1890, %v1890
      %v1893 = vcombine.high %v949, %v949
      %v1895 = vunpack.c.l.s4 1983009808
      %v1896 = vunpack.c.0.s8 %v1895
      %v1897 = vlaneseq
      %v1898 = vshrl.u32 %v1897, 7
      %v1899 = vsub.s32 %v1896, %v1898
      %v1900 = vrot.slane %v949, %v1899
      %v1902 = vunpack.c.l.s4 1983009808
      %v1903 = vunpack.c.0.s8 %v1902
      %v1904 = vlaneseq
      %v1905 = vshrl.u32 %v1904, 7
      %v1906 = vsub.s32 %v1903, %v1905
      %v1907 = vrot.slane %v1893, %v1906
      %v1908 = vcombine.high %v1900, %v1900
      %v1909 = vcombine.high %v1907, %v1907
      %v1910 = vcombine.high %v950, %v950
      %v1912 = vunpack.c.l.s4 1983009808
      %v1913 = vunpack.c.0.s8 %v1912
      %v1914 = vlaneseq
      %v1915 = vshrl.u32 %v1914, 7
      %v1916 = vsub.s32 %v1913, %v1915
      %v1917 = vrot.slane %v950, %v1916
      %v1919 = vunpack.c.l.s4 1983009808
      %v1920 = vunpack.c.0.s8 %v1919
      %v1921 = vlaneseq
      %v1922 = vshrl.u32 %v1921, 7
      %v1923 = vsub.s32 %v1920, %v1922
      %v1924 = vrot.slane %v1910, %v1923
      %v1925 = vcombine.high %v1917, %v1917
      %v1926 = vcombine.high %v1924, %v1924
      %v1927 = vcombine.high %v951, %v951
      %v1929 = vunpack.c.l.s4 1983009808
      %v1930 = vunpack.c.0.s8 %v1929
      %v1931 = vlaneseq
      %v1932 = vshrl.u32 %v1931, 7
      %v1933 = vsub.s32 %v1930, %v1932
      %v1934 = vrot.slane %v951, %v1933
      %v1936 = vunpack.c.l.s4 1983009808
      %v1937 = vunpack.c.0.s8 %v1936
      %v1938 = vlaneseq
      %v1939 = vshrl.u32 %v1938, 7
      %v1940 = vsub.s32 %v1937, %v1939
      %v1941 = vrot.slane %v1927, %v1940
      %v1942 = vcombine.high %v1934, %v1934
      %v1943 = vcombine.high %v1941, %v1941
      %v1944 = vcombine.high %v952, %v952
      %v1946 = vunpack.c.l.s4 1983009808
      %v1947 = vunpack.c.0.s8 %v1946
      %v1948 = vlaneseq
      %v1949 = vshrl.u32 %v1948, 7
      %v1950 = vsub.s32 %v1947, %v1949
      %v1951 = vrot.slane %v952, %v1950
      %v1953 = vunpack.c.l.s4 1983009808
      %v1954 = vunpack.c.0.s8 %v1953
      %v1955 = vlaneseq
      %v1956 = vshrl.u32 %v1955, 7
      %v1957 = vsub.s32 %v1954, %v1956
      %v1958 = vrot.slane %v1944, %v1957
      %v1959 = vcombine.high %v1951, %v1951
      %v1960 = vcombine.high %v1958, %v1958
      %v1961 = vcombine.high %v953, %v953
      %v1963 = vunpack.c.l.s4 1983009808
      %v1964 = vunpack.c.0.s8 %v1963
      %v1965 = vlaneseq
      %v1966 = vshrl.u32 %v1965, 7
      %v1967 = vsub.s32 %v1964, %v1966
      %v1968 = vrot.slane %v953, %v1967
      %v1970 = vunpack.c.l.s4 1983009808
      %v1971 = vunpack.c.0.s8 %v1970
      %v1972 = vlaneseq
      %v1973 = vshrl.u32 %v1972, 7
      %v1974 = vsub.s32 %v1971, %v1973
      %v1975 = vrot.slane %v1961, %v1974
      %v1976 = vcombine.high %v1968, %v1968
      %v1977 = vcombine.high %v1975, %v1975
      %v1978 = vcombine.high %v954, %v954
      %v1980 = vunpack.c.l.s4 1983009808
      %v1981 = vunpack.c.0.s8 %v1980
      %v1982 = vlaneseq
      %v1983 = vshrl.u32 %v1982, 7
      %v1984 = vsub.s32 %v1981, %v1983
      %v1985 = vrot.slane %v954, %v1984
      %v1987 = vunpack.c.l.s4 1983009808
      %v1988 = vunpack.c.0.s8 %v1987
      %v1989 = vlaneseq
      %v1990 = vshrl.u32 %v1989, 7
      %v1991 = vsub.s32 %v1988, %v1990
      %v1992 = vrot.slane %v1978, %v1991
      %v1993 = vcombine.high %v1985, %v1985
      %v1994 = vcombine.high %v1992, %v1992
      %v1995 = vcombine.high %v955, %v955
      %v1997 = vunpack.c.l.s4 1983009808
      %v1998 = vunpack.c.0.s8 %v1997
      %v1999 = vlaneseq
      %v2000 = vshrl.u32 %v1999, 7
      %v2001 = vsub.s32 %v1998, %v2000
      %v2002 = vrot.slane %v955, %v2001
      %v2004 = vunpack.c.l.s4 1983009808
      %v2005 = vunpack.c.0.s8 %v2004
      %v2006 = vlaneseq
      %v2007 = vshrl.u32 %v2006, 7
      %v2008 = vsub.s32 %v2005, %v2007
      %v2009 = vrot.slane %v1995, %v2008
      %v2010 = vcombine.high %v2002, %v2002
      %v2011 = vcombine.high %v2009, %v2009
      %v2012 = vcombine.high %v956, %v956
      %v2014 = vunpack.c.l.s4 1983009808
      %v2015 = vunpack.c.0.s8 %v2014
      %v2016 = vlaneseq
      %v2017 = vshrl.u32 %v2016, 7
      %v2018 = vsub.s32 %v2015, %v2017
      %v2019 = vrot.slane %v956, %v2018
      %v2021 = vunpack.c.l.s4 1983009808
      %v2022 = vunpack.c.0.s8 %v2021
      %v2023 = vlaneseq
      %v2024 = vshrl.u32 %v2023, 7
      %v2025 = vsub.s32 %v2022, %v2024
      %v2026 = vrot.slane %v2012, %v2025
      %v2027 = vcombine.high %v2019, %v2019
      %v2028 = vcombine.high %v2026, %v2026
      %v2029 = vcombine.high %v957, %v957
      %v2031 = vunpack.c.l.s4 1983009808
      %v2032 = vunpack.c.0.s8 %v2031
      %v2033 = vlaneseq
      %v2034 = vshrl.u32 %v2033, 7
      %v2035 = vsub.s32 %v2032, %v2034
      %v2036 = vrot.slane %v957, %v2035
      %v2038 = vunpack.c.l.s4 1983009808
      %v2039 = vunpack.c.0.s8 %v2038
      %v2040 = vlaneseq
      %v2041 = vshrl.u32 %v2040, 7
      %v2042 = vsub.s32 %v2039, %v2041
      %v2043 = vrot.slane %v2029, %v2042
      %v2044 = vcombine.high %v2036, %v2036
      %v2045 = vcombine.high %v2043, %v2043
      %v2046 = vcombine.high %v958, %v958
      %v2048 = vunpack.c.l.s4 1983009808
      %v2049 = vunpack.c.0.s8 %v2048
      %v2050 = vlaneseq
      %v2051 = vshrl.u32 %v2050, 7
      %v2052 = vsub.s32 %v2049, %v2051
      %v2053 = vrot.slane %v958, %v2052
      %v2055 = vunpack.c.l.s4 1983009808
      %v2056 = vunpack.c.0.s8 %v2055
      %v2057 = vlaneseq
      %v2058 = vshrl.u32 %v2057, 7
      %v2059 = vsub.s32 %v2056, %v2058
      %v2060 = vrot.slane %v2046, %v2059
      %v2061 = vcombine.high %v2053, %v2053
      %v2062 = vcombine.high %v2060, %v2060
      %v2063 = vcombine.high %v959, %v959
      %v2065 = vunpack.c.l.s4 1983009808
      %v2066 = vunpack.c.0.s8 %v2065
      %v2067 = vlaneseq
      %v2068 = vshrl.u32 %v2067, 7
      %v2069 = vsub.s32 %v2066, %v2068
      %v2070 = vrot.slane %v959, %v2069
      %v2072 = vunpack.c.l.s4 1983009808
      %v2073 = vunpack.c.0.s8 %v2072
      %v2074 = vlaneseq
      %v2075 = vshrl.u32 %v2074, 7
      %v2076 = vsub.s32 %v2073, %v2075
      %v2077 = vrot.slane %v2063, %v2076
      %v2078 = vcombine.high %v2070, %v2070
      %v2079 = vcombine.high %v2077, %v2077
      %v2080 = vcombine.high %v960, %v960
      %v2082 = vunpack.c.l.s4 1983009808
      %v2083 = vunpack.c.0.s8 %v2082
      %v2084 = vlaneseq
      %v2085 = vshrl.u32 %v2084, 7
      %v2086 = vsub.s32 %v2083, %v2085
      %v2087 = vrot.slane %v960, %v2086
      %v2089 = vunpack.c.l.s4 1983009808
      %v2090 = vunpack.c.0.s8 %v2089
      %v2091 = vlaneseq
      %v2092 = vshrl.u32 %v2091, 7
      %v2093 = vsub.s32 %v2090, %v2092
      %v2094 = vrot.slane %v2080, %v2093
      %v2095 = vcombine.high %v2087, %v2087
      %v2096 = vcombine.high %v2094, %v2094
      %v2097 = vcombine.high %v961, %v961
      %v2099 = vunpack.c.l.s4 1983009808
      %v2100 = vunpack.c.0.s8 %v2099
      %v2101 = vlaneseq
      %v2102 = vshrl.u32 %v2101, 7
      %v2103 = vsub.s32 %v2100, %v2102
      %v2104 = vrot.slane %v961, %v2103
      %v2106 = vunpack.c.l.s4 1983009808
      %v2107 = vunpack.c.0.s8 %v2106
      %v2108 = vlaneseq
      %v2109 = vshrl.u32 %v2108, 7
      %v2110 = vsub.s32 %v2107, %v2109
      %v2111 = vrot.slane %v2097, %v2110
      %v2112 = vcombine.high %v2104, %v2104
      %v2113 = vcombine.high %v2111, %v2111
      %v2114 = vcombine.high %v962, %v962
      %v2116 = vunpack.c.l.s4 1983009808
      %v2117 = vunpack.c.0.s8 %v2116
      %v2118 = vlaneseq
      %v2119 = vshrl.u32 %v2118, 7
      %v2120 = vsub.s32 %v2117, %v2119
      %v2121 = vrot.slane %v962, %v2120
      %v2123 = vunpack.c.l.s4 1983009808
      %v2124 = vunpack.c.0.s8 %v2123
      %v2125 = vlaneseq
      %v2126 = vshrl.u32 %v2125, 7
      %v2127 = vsub.s32 %v2124, %v2126
      %v2128 = vrot.slane %v2114, %v2127
      %v2129 = vcombine.high %v2121, %v2121
      %v2130 = vcombine.high %v2128, %v2128
      %v2131 = vcombine.high %v963, %v963
      %v2133 = vunpack.c.l.s4 1983009808
      %v2134 = vunpack.c.0.s8 %v2133
      %v2135 = vlaneseq
      %v2136 = vshrl.u32 %v2135, 7
      %v2137 = vsub.s32 %v2134, %v2136
      %v2138 = vrot.slane %v963, %v2137
      %v2140 = vunpack.c.l.s4 1983009808
      %v2141 = vunpack.c.0.s8 %v2140
      %v2142 = vlaneseq
      %v2143 = vshrl.u32 %v2142, 7
      %v2144 = vsub.s32 %v2141, %v2143
      %v2145 = vrot.slane %v2131, %v2144
      %v2146 = vcombine.high %v2138, %v2138
      %v2147 = vcombine.high %v2145, %v2145
      %v2148 = vcombine.high %v964, %v964
      %v2150 = vunpack.c.l.s4 1983009808
      %v2151 = vunpack.c.0.s8 %v2150
      %v2152 = vlaneseq
      %v2153 = vshrl.u32 %v2152, 7
      %v2154 = vsub.s32 %v2151, %v2153
      %v2155 = vrot.slane %v964, %v2154
      %v2157 = vunpack.c.l.s4 1983009808
      %v2158 = vunpack.c.0.s8 %v2157
      %v2159 = vlaneseq
      %v2160 = vshrl.u32 %v2159, 7
      %v2161 = vsub.s32 %v2158, %v2160
      %v2162 = vrot.slane %v2148, %v2161
      %v2163 = vcombine.high %v2155, %v2155
      %v2164 = vcombine.high %v2162, %v2162
      %v2165 = vcombine.high %v965, %v965
      %v2167 = vunpack.c.l.s4 1983009808
      %v2168 = vunpack.c.0.s8 %v2167
      %v2169 = vlaneseq
      %v2170 = vshrl.u32 %v2169, 7
      %v2171 = vsub.s32 %v2168, %v2170
      %v2172 = vrot.slane %v965, %v2171
      %v2174 = vunpack.c.l.s4 1983009808
      %v2175 = vunpack.c.0.s8 %v2174
      %v2176 = vlaneseq
      %v2177 = vshrl.u32 %v2176, 7
      %v2178 = vsub.s32 %v2175, %v2177
      %v2179 = vrot.slane %v2165, %v2178
      %v2180 = vcombine.high %v2172, %v2172
      %v2181 = vcombine.high %v2179, %v2179
      %v2182 = vcombine.high %v966, %v966
      %v2184 = vunpack.c.l.s4 1983009808
      %v2185 = vunpack.c.0.s8 %v2184
      %v2186 = vlaneseq
      %v2187 = vshrl.u32 %v2186, 7
      %v2188 = vsub.s32 %v2185, %v2187
      %v2189 = vrot.slane %v966, %v2188
      %v2191 = vunpack.c.l.s4 1983009808
      %v2192 = vunpack.c.0.s8 %v2191
      %v2193 = vlaneseq
      %v2194 = vshrl.u32 %v2193, 7
      %v2195 = vsub.s32 %v2192, %v2194
      %v2196 = vrot.slane %v2182, %v2195
      %v2197 = vcombine.high %v2189, %v2189
      %v2198 = vcombine.high %v2196, %v2196
      %v2199 = vcombine.high %v967, %v967
      %v2201 = vunpack.c.l.s4 1983009808
      %v2202 = vunpack.c.0.s8 %v2201
      %v2203 = vlaneseq
      %v2204 = vshrl.u32 %v2203, 7
      %v2205 = vsub.s32 %v2202, %v2204
      %v2206 = vrot.slane %v967, %v2205
      %v2208 = vunpack.c.l.s4 1983009808
      %v2209 = vunpack.c.0.s8 %v2208
      %v2210 = vlaneseq
      %v2211 = vshrl.u32 %v2210, 7
      %v2212 = vsub.s32 %v2209, %v2211
      %v2213 = vrot.slane %v2199, %v2212
      %v2214 = vcombine.high %v2206, %v2206
      %v2215 = vcombine.high %v2213, %v2213
      %v2216 = vcombine.high %v968, %v968
      %v2218 = vunpack.c.l.s4 1983009808
      %v2219 = vunpack.c.0.s8 %v2218
      %v2220 = vlaneseq
      %v2221 = vshrl.u32 %v2220, 7
      %v2222 = vsub.s32 %v2219, %v2221
      %v2223 = vrot.slane %v968, %v2222
      %v2225 = vunpack.c.l.s4 1983009808
      %v2226 = vunpack.c.0.s8 %v2225
      %v2227 = vlaneseq
      %v2228 = vshrl.u32 %v2227, 7
      %v2229 = vsub.s32 %v2226, %v2228
      %v2230 = vrot.slane %v2216, %v2229
      %v2231 = vcombine.high %v2223, %v2223
      %v2232 = vcombine.high %v2230, %v2230
      %v2233 = vcombine.high %v969, %v969
      %v2235 = vunpack.c.l.s4 1983009808
      %v2236 = vunpack.c.0.s8 %v2235
      %v2237 = vlaneseq
      %v2238 = vshrl.u32 %v2237, 7
      %v2239 = vsub.s32 %v2236, %v2238
      %v2240 = vrot.slane %v969, %v2239
      %v2242 = vunpack.c.l.s4 1983009808
      %v2243 = vunpack.c.0.s8 %v2242
      %v2244 = vlaneseq
      %v2245 = vshrl.u32 %v2244, 7
      %v2246 = vsub.s32 %v2243, %v2245
      %v2247 = vrot.slane %v2233, %v2246
      %v2248 = vcombine.high %v2240, %v2240
      %v2249 = vcombine.high %v2247, %v2247
      %v2250 = vcombine.high %v970, %v970
      %v2252 = vunpack.c.l.s4 1983009808
      %v2253 = vunpack.c.0.s8 %v2252
      %v2254 = vlaneseq
      %v2255 = vshrl.u32 %v2254, 7
      %v2256 = vsub.s32 %v2253, %v2255
      %v2257 = vrot.slane %v970, %v2256
      %v2259 = vunpack.c.l.s4 1983009808
      %v2260 = vunpack.c.0.s8 %v2259
      %v2261 = vlaneseq
      %v2262 = vshrl.u32 %v2261, 7
      %v2263 = vsub.s32 %v2260, %v2262
      %v2264 = vrot.slane %v2250, %v2263
      %v2265 = vcombine.high %v2257, %v2257
      %v2266 = vcombine.high %v2264, %v2264
      %vm2555 = vcmask 1041408
      %v2556 = vsel %vm2555, %v1050, -inf
      %v2557 = vrot.slane %v2556, 4
      %v2558 = vmax.f32 %v2556, %v2557
      %v2559 = vrot.slane %v2558, 2
      %v2560 = vmax.f32 %v2558, %v2559
      %v2561 = vrot.slane %v2560, 1
      %v2562 = vmax.f32 %v2560, %v2561
      %v2563 = vsel %vm2555, %v1058, -inf
      %v2564 = vrot.slane %v2563, 4
      %v2565 = vmax.f32 %v2563, %v2564
      %v2566 = vrot.slane %v2565, 2
      %v2567 = vmax.f32 %v2565, %v2566
      %v2568 = vrot.slane %v2567, 1
      %v2569 = vmax.f32 %v2567, %v2568
      %v2570 = vsel %vm2555, %v1057, -inf
      %v2571 = vrot.slane %v2570, 4
      %v2572 = vmax.f32 %v2570, %v2571
      %v2573 = vrot.slane %v2572, 2
      %v2574 = vmax.f32 %v2572, %v2573
      %v2575 = vrot.slane %v2574, 1
      %v2576 = vmax.f32 %v2574, %v2575
      %v2577 = vsel %vm2555, %v1059, -inf
      %v2578 = vrot.slane %v2577, 4
      %v2579 = vmax.f32 %v2577, %v2578
      %v2580 = vrot.slane %v2579, 2
      %v2581 = vmax.f32 %v2579, %v2580
      %v2582 = vrot.slane %v2581, 1
      %v2583 = vmax.f32 %v2581, %v2582
      %v2584 = vsel %vm2555, %v1067, -inf
      %v2585 = vrot.slane %v2584, 4
      %v2586 = vmax.f32 %v2584, %v2585
      %v2587 = vrot.slane %v2586, 2
      %v2588 = vmax.f32 %v2586, %v2587
      %v2589 = vrot.slane %v2588, 1
      %v2590 = vmax.f32 %v2588, %v2589
      %v2591 = vsel %vm2555, %v1075, -inf
      %v2592 = vrot.slane %v2591, 4
      %v2593 = vmax.f32 %v2591, %v2592
      %v2594 = vrot.slane %v2593, 2
      %v2595 = vmax.f32 %v2593, %v2594
      %v2596 = vrot.slane %v2595, 1
      %v2597 = vmax.f32 %v2595, %v2596
      %v2598 = vsel %vm2555, %v1074, -inf
      %v2599 = vrot.slane %v2598, 4
      %v2600 = vmax.f32 %v2598, %v2599
      %v2601 = vrot.slane %v2600, 2
      %v2602 = vmax.f32 %v2600, %v2601
      %v2603 = vrot.slane %v2602, 1
      %v2604 = vmax.f32 %v2602, %v2603
      %v2605 = vsel %vm2555, %v1076, -inf
      %v2606 = vrot.slane %v2605, 4
      %v2607 = vmax.f32 %v2605, %v2606
      %v2608 = vrot.slane %v2607, 2
      %v2609 = vmax.f32 %v2607, %v2608
      %v2610 = vrot.slane %v2609, 1
      %v2611 = vmax.f32 %v2609, %v2610
      %v2612 = vsel %vm2555, %v1084, -inf
      %v2613 = vrot.slane %v2612, 4
      %v2614 = vmax.f32 %v2612, %v2613
      %v2615 = vrot.slane %v2614, 2
      %v2616 = vmax.f32 %v2614, %v2615
      %v2617 = vrot.slane %v2616, 1
      %v2618 = vmax.f32 %v2616, %v2617
      %v2619 = vsel %vm2555, %v1092, -inf
      %v2620 = vrot.slane %v2619, 4
      %v2621 = vmax.f32 %v2619, %v2620
      %v2622 = vrot.slane %v2621, 2
      %v2623 = vmax.f32 %v2621, %v2622
      %v2624 = vrot.slane %v2623, 1
      %v2625 = vmax.f32 %v2623, %v2624
      %v2626 = vsel %vm2555, %v1091, -inf
      %v2627 = vrot.slane %v2626, 4
      %v2628 = vmax.f32 %v2626, %v2627
      %v2629 = vrot.slane %v2628, 2
      %v2630 = vmax.f32 %v2628, %v2629
      %v2631 = vrot.slane %v2630, 1
      %v2632 = vmax.f32 %v2630, %v2631
      %v2633 = vsel %vm2555, %v1093, -inf
      %v2634 = vrot.slane %v2633, 4
      %v2635 = vmax.f32 %v2633, %v2634
      %v2636 = vrot.slane %v2635, 2
      %v2637 = vmax.f32 %v2635, %v2636
      %v2638 = vrot.slane %v2637, 1
      %v2639 = vmax.f32 %v2637, %v2638
      %v2640 = vsel %vm2555, %v1101, -inf
      %v2641 = vrot.slane %v2640, 4
      %v2642 = vmax.f32 %v2640, %v2641
      %v2643 = vrot.slane %v2642, 2
      %v2644 = vmax.f32 %v2642, %v2643
      %v2645 = vrot.slane %v2644, 1
      %v2646 = vmax.f32 %v2644, %v2645
      %v2647 = vsel %vm2555, %v1109, -inf
      %v2648 = vrot.slane %v2647, 4
      %v2649 = vmax.f32 %v2647, %v2648
      %v2650 = vrot.slane %v2649, 2
      %v2651 = vmax.f32 %v2649, %v2650
      %v2652 = vrot.slane %v2651, 1
      %v2653 = vmax.f32 %v2651, %v2652
      %v2654 = vsel %vm2555, %v1108, -inf
      %v2655 = vrot.slane %v2654, 4
      %v2656 = vmax.f32 %v2654, %v2655
      %v2657 = vrot.slane %v2656, 2
      %v2658 = vmax.f32 %v2656, %v2657
      %v2659 = vrot.slane %v2658, 1
      %v2660 = vmax.f32 %v2658, %v2659
      %v2661 = vsel %vm2555, %v1110, -inf
      %v2662 = vrot.slane %v2661, 4
      %v2663 = vmax.f32 %v2661, %v2662
      %v2664 = vrot.slane %v2663, 2
      %v2665 = vmax.f32 %v2663, %v2664
      %v2666 = vrot.slane %v2665, 1
      %v2667 = vmax.f32 %v2665, %v2666
      %v2668 = vsel %vm2555, %v1118, -inf
      %v2669 = vrot.slane %v2668, 4
      %v2670 = vmax.f32 %v2668, %v2669
      %v2671 = vrot.slane %v2670, 2
      %v2672 = vmax.f32 %v2670, %v2671
      %v2673 = vrot.slane %v2672, 1
      %v2674 = vmax.f32 %v2672, %v2673
      %v2675 = vsel %vm2555, %v1126, -inf
      %v2676 = vrot.slane %v2675, 4
      %v2677 = vmax.f32 %v2675, %v2676
      %v2678 = vrot.slane %v2677, 2
      %v2679 = vmax.f32 %v2677, %v2678
      %v2680 = vrot.slane %v2679, 1
      %v2681 = vmax.f32 %v2679, %v2680
      %v2682 = vsel %vm2555, %v1125, -inf
      %v2683 = vrot.slane %v2682, 4
      %v2684 = vmax.f32 %v2682, %v2683
      %v2685 = vrot.slane %v2684, 2
      %v2686 = vmax.f32 %v2684, %v2685
      %v2687 = vrot.slane %v2686, 1
      %v2688 = vmax.f32 %v2686, %v2687
      %v2689 = vsel %vm2555, %v1127, -inf
      %v2690 = vrot.slane %v2689, 4
      %v2691 = vmax.f32 %v2689, %v2690
      %v2692 = vrot.slane %v2691, 2
      %v2693 = vmax.f32 %v2691, %v2692
      %v2694 = vrot.slane %v2693, 1
      %v2695 = vmax.f32 %v2693, %v2694
      %v2696 = vsel %vm2555, %v1135, -inf
      %v2697 = vrot.slane %v2696, 4
      %v2698 = vmax.f32 %v2696, %v2697
      %v2699 = vrot.slane %v2698, 2
      %v2700 = vmax.f32 %v2698, %v2699
      %v2701 = vrot.slane %v2700, 1
      %v2702 = vmax.f32 %v2700, %v2701
      %v2703 = vsel %vm2555, %v1143, -inf
      %v2704 = vrot.slane %v2703, 4
      %v2705 = vmax.f32 %v2703, %v2704
      %v2706 = vrot.slane %v2705, 2
      %v2707 = vmax.f32 %v2705, %v2706
      %v2708 = vrot.slane %v2707, 1
      %v2709 = vmax.f32 %v2707, %v2708
      %v2710 = vsel %vm2555, %v1142, -inf
      %v2711 = vrot.slane %v2710, 4
      %v2712 = vmax.f32 %v2710, %v2711
      %v2713 = vrot.slane %v2712, 2
      %v2714 = vmax.f32 %v2712, %v2713
      %v2715 = vrot.slane %v2714, 1
      %v2716 = vmax.f32 %v2714, %v2715
      %v2717 = vsel %vm2555, %v1144, -inf
      %v2718 = vrot.slane %v2717, 4
      %v2719 = vmax.f32 %v2717, %v2718
      %v2720 = vrot.slane %v2719, 2
      %v2721 = vmax.f32 %v2719, %v2720
      %v2722 = vrot.slane %v2721, 1
      %v2723 = vmax.f32 %v2721, %v2722
      %v2724 = vsel %vm2555, %v1152, -inf
      %v2725 = vrot.slane %v2724, 4
      %v2726 = vmax.f32 %v2724, %v2725
      %v2727 = vrot.slane %v2726, 2
      %v2728 = vmax.f32 %v2726, %v2727
      %v2729 = vrot.slane %v2728, 1
      %v2730 = vmax.f32 %v2728, %v2729
      %v2731 = vsel %vm2555, %v1160, -inf
      %v2732 = vrot.slane %v2731, 4
      %v2733 = vmax.f32 %v2731, %v2732
      %v2734 = vrot.slane %v2733, 2
      %v2735 = vmax.f32 %v2733, %v2734
      %v2736 = vrot.slane %v2735, 1
      %v2737 = vmax.f32 %v2735, %v2736
      %v2738 = vsel %vm2555, %v1159, -inf
      %v2739 = vrot.slane %v2738, 4
      %v2740 = vmax.f32 %v2738, %v2739
      %v2741 = vrot.slane %v2740, 2
      %v2742 = vmax.f32 %v2740, %v2741
      %v2743 = vrot.slane %v2742, 1
      %v2744 = vmax.f32 %v2742, %v2743
      %v2745 = vsel %vm2555, %v1161, -inf
      %v2746 = vrot.slane %v2745, 4
      %v2747 = vmax.f32 %v2745, %v2746
      %v2748 = vrot.slane %v2747, 2
      %v2749 = vmax.f32 %v2747, %v2748
      %v2750 = vrot.slane %v2749, 1
      %v2751 = vmax.f32 %v2749, %v2750
      %v2752 = vsel %vm2555, %v1169, -inf
      %v2753 = vrot.slane %v2752, 4
      %v2754 = vmax.f32 %v2752, %v2753
      %v2755 = vrot.slane %v2754, 2
      %v2756 = vmax.f32 %v2754, %v2755
      %v2757 = vrot.slane %v2756, 1
      %v2758 = vmax.f32 %v2756, %v2757
      %v2759 = vsel %vm2555, %v1177, -inf
      %v2760 = vrot.slane %v2759, 4
      %v2761 = vmax.f32 %v2759, %v2760
      %v2762 = vrot.slane %v2761, 2
      %v2763 = vmax.f32 %v2761, %v2762
      %v2764 = vrot.slane %v2763, 1
      %v2765 = vmax.f32 %v2763, %v2764
      %v2766 = vsel %vm2555, %v1176, -inf
      %v2767 = vrot.slane %v2766, 4
      %v2768 = vmax.f32 %v2766, %v2767
      %v2769 = vrot.slane %v2768, 2
      %v2770 = vmax.f32 %v2768, %v2769
      %v2771 = vrot.slane %v2770, 1
      %v2772 = vmax.f32 %v2770, %v2771
      %v2773 = vsel %vm2555, %v1178, -inf
      %v2774 = vrot.slane %v2773, 4
      %v2775 = vmax.f32 %v2773, %v2774
      %v2776 = vrot.slane %v2775, 2
      %v2777 = vmax.f32 %v2775, %v2776
      %v2778 = vrot.slane %v2777, 1
      %v2779 = vmax.f32 %v2777, %v2778
      %v2780 = vsel %vm2555, %v1186, -inf
      %v2781 = vrot.slane %v2780, 4
      %v2782 = vmax.f32 %v2780, %v2781
      %v2783 = vrot.slane %v2782, 2
      %v2784 = vmax.f32 %v2782, %v2783
      %v2785 = vrot.slane %v2784, 1
      %v2786 = vmax.f32 %v2784, %v2785
      %v2787 = vsel %vm2555, %v1194, -inf
      %v2788 = vrot.slane %v2787, 4
      %v2789 = vmax.f32 %v2787, %v2788
      %v2790 = vrot.slane %v2789, 2
      %v2791 = vmax.f32 %v2789, %v2790
      %v2792 = vrot.slane %v2791, 1
      %v2793 = vmax.f32 %v2791, %v2792
      %v2794 = vsel %vm2555, %v1193, -inf
      %v2795 = vrot.slane %v2794, 4
      %v2796 = vmax.f32 %v2794, %v2795
      %v2797 = vrot.slane %v2796, 2
      %v2798 = vmax.f32 %v2796, %v2797
      %v2799 = vrot.slane %v2798, 1
      %v2800 = vmax.f32 %v2798, %v2799
      %v2801 = vsel %vm2555, %v1195, -inf
      %v2802 = vrot.slane %v2801, 4
      %v2803 = vmax.f32 %v2801, %v2802
      %v2804 = vrot.slane %v2803, 2
      %v2805 = vmax.f32 %v2803, %v2804
      %v2806 = vrot.slane %v2805, 1
      %v2807 = vmax.f32 %v2805, %v2806
      %v2808 = vsel %vm2555, %v1203, -inf
      %v2809 = vrot.slane %v2808, 4
      %v2810 = vmax.f32 %v2808, %v2809
      %v2811 = vrot.slane %v2810, 2
      %v2812 = vmax.f32 %v2810, %v2811
      %v2813 = vrot.slane %v2812, 1
      %v2814 = vmax.f32 %v2812, %v2813
      %v2815 = vsel %vm2555, %v1211, -inf
      %v2816 = vrot.slane %v2815, 4
      %v2817 = vmax.f32 %v2815, %v2816
      %v2818 = vrot.slane %v2817, 2
      %v2819 = vmax.f32 %v2817, %v2818
      %v2820 = vrot.slane %v2819, 1
      %v2821 = vmax.f32 %v2819, %v2820
      %v2822 = vsel %vm2555, %v1210, -inf
      %v2823 = vrot.slane %v2822, 4
      %v2824 = vmax.f32 %v2822, %v2823
      %v2825 = vrot.slane %v2824, 2
      %v2826 = vmax.f32 %v2824, %v2825
      %v2827 = vrot.slane %v2826, 1
      %v2828 = vmax.f32 %v2826, %v2827
      %v2829 = vsel %vm2555, %v1212, -inf
      %v2830 = vrot.slane %v2829, 4
      %v2831 = vmax.f32 %v2829, %v2830
      %v2832 = vrot.slane %v2831, 2
      %v2833 = vmax.f32 %v2831, %v2832
      %v2834 = vrot.slane %v2833, 1
      %v2835 = vmax.f32 %v2833, %v2834
      %v2836 = vsel %vm2555, %v1220, -inf
      %v2837 = vrot.slane %v2836, 4
      %v2838 = vmax.f32 %v2836, %v2837
      %v2839 = vrot.slane %v2838, 2
      %v2840 = vmax.f32 %v2838, %v2839
      %v2841 = vrot.slane %v2840, 1
      %v2842 = vmax.f32 %v2840, %v2841
      %v2843 = vsel %vm2555, %v1228, -inf
      %v2844 = vrot.slane %v2843, 4
      %v2845 = vmax.f32 %v2843, %v2844
      %v2846 = vrot.slane %v2845, 2
      %v2847 = vmax.f32 %v2845, %v2846
      %v2848 = vrot.slane %v2847, 1
      %v2849 = vmax.f32 %v2847, %v2848
      %v2850 = vsel %vm2555, %v1227, -inf
      %v2851 = vrot.slane %v2850, 4
      %v2852 = vmax.f32 %v2850, %v2851
      %v2853 = vrot.slane %v2852, 2
      %v2854 = vmax.f32 %v2852, %v2853
      %v2855 = vrot.slane %v2854, 1
      %v2856 = vmax.f32 %v2854, %v2855
      %v2857 = vsel %vm2555, %v1229, -inf
      %v2858 = vrot.slane %v2857, 4
      %v2859 = vmax.f32 %v2857, %v2858
      %v2860 = vrot.slane %v2859, 2
      %v2861 = vmax.f32 %v2859, %v2860
      %v2862 = vrot.slane %v2861, 1
      %v2863 = vmax.f32 %v2861, %v2862
      %v2864 = vsel %vm2555, %v1237, -inf
      %v2865 = vrot.slane %v2864, 4
      %v2866 = vmax.f32 %v2864, %v2865
      %v2867 = vrot.slane %v2866, 2
      %v2868 = vmax.f32 %v2866, %v2867
      %v2869 = vrot.slane %v2868, 1
      %v2870 = vmax.f32 %v2868, %v2869
      %v2871 = vsel %vm2555, %v1245, -inf
      %v2872 = vrot.slane %v2871, 4
      %v2873 = vmax.f32 %v2871, %v2872
      %v2874 = vrot.slane %v2873, 2
      %v2875 = vmax.f32 %v2873, %v2874
      %v2876 = vrot.slane %v2875, 1
      %v2877 = vmax.f32 %v2875, %v2876
      %v2878 = vsel %vm2555, %v1244, -inf
      %v2879 = vrot.slane %v2878, 4
      %v2880 = vmax.f32 %v2878, %v2879
      %v2881 = vrot.slane %v2880, 2
      %v2882 = vmax.f32 %v2880, %v2881
      %v2883 = vrot.slane %v2882, 1
      %v2884 = vmax.f32 %v2882, %v2883
      %v2885 = vsel %vm2555, %v1246, -inf
      %v2886 = vrot.slane %v2885, 4
      %v2887 = vmax.f32 %v2885, %v2886
      %v2888 = vrot.slane %v2887, 2
      %v2889 = vmax.f32 %v2887, %v2888
      %v2890 = vrot.slane %v2889, 1
      %v2891 = vmax.f32 %v2889, %v2890
      %v2892 = vsel %vm2555, %v1254, -inf
      %v2893 = vrot.slane %v2892, 4
      %v2894 = vmax.f32 %v2892, %v2893
      %v2895 = vrot.slane %v2894, 2
      %v2896 = vmax.f32 %v2894, %v2895
      %v2897 = vrot.slane %v2896, 1
      %v2898 = vmax.f32 %v2896, %v2897
      %v2899 = vsel %vm2555, %v1262, -inf
      %v2900 = vrot.slane %v2899, 4
      %v2901 = vmax.f32 %v2899, %v2900
      %v2902 = vrot.slane %v2901, 2
      %v2903 = vmax.f32 %v2901, %v2902
      %v2904 = vrot.slane %v2903, 1
      %v2905 = vmax.f32 %v2903, %v2904
      %v2906 = vsel %vm2555, %v1261, -inf
      %v2907 = vrot.slane %v2906, 4
      %v2908 = vmax.f32 %v2906, %v2907
      %v2909 = vrot.slane %v2908, 2
      %v2910 = vmax.f32 %v2908, %v2909
      %v2911 = vrot.slane %v2910, 1
      %v2912 = vmax.f32 %v2910, %v2911
      %v2913 = vsel %vm2555, %v1263, -inf
      %v2914 = vrot.slane %v2913, 4
      %v2915 = vmax.f32 %v2913, %v2914
      %v2916 = vrot.slane %v2915, 2
      %v2917 = vmax.f32 %v2915, %v2916
      %v2918 = vrot.slane %v2917, 1
      %v2919 = vmax.f32 %v2917, %v2918
      %v2920 = vsel %vm2555, %v1271, -inf
      %v2921 = vrot.slane %v2920, 4
      %v2922 = vmax.f32 %v2920, %v2921
      %v2923 = vrot.slane %v2922, 2
      %v2924 = vmax.f32 %v2922, %v2923
      %v2925 = vrot.slane %v2924, 1
      %v2926 = vmax.f32 %v2924, %v2925
      %v2927 = vsel %vm2555, %v1279, -inf
      %v2928 = vrot.slane %v2927, 4
      %v2929 = vmax.f32 %v2927, %v2928
      %v2930 = vrot.slane %v2929, 2
      %v2931 = vmax.f32 %v2929, %v2930
      %v2932 = vrot.slane %v2931, 1
      %v2933 = vmax.f32 %v2931, %v2932
      %v2934 = vsel %vm2555, %v1278, -inf
      %v2935 = vrot.slane %v2934, 4
      %v2936 = vmax.f32 %v2934, %v2935
      %v2937 = vrot.slane %v2936, 2
      %v2938 = vmax.f32 %v2936, %v2937
      %v2939 = vrot.slane %v2938, 1
      %v2940 = vmax.f32 %v2938, %v2939
      %v2941 = vsel %vm2555, %v1280, -inf
      %v2942 = vrot.slane %v2941, 4
      %v2943 = vmax.f32 %v2941, %v2942
      %v2944 = vrot.slane %v2943, 2
      %v2945 = vmax.f32 %v2943, %v2944
      %v2946 = vrot.slane %v2945, 1
      %v2947 = vmax.f32 %v2945, %v2946
      %v2948 = vsel %vm2555, %v1288, -inf
      %v2949 = vrot.slane %v2948, 4
      %v2950 = vmax.f32 %v2948, %v2949
      %v2951 = vrot.slane %v2950, 2
      %v2952 = vmax.f32 %v2950, %v2951
      %v2953 = vrot.slane %v2952, 1
      %v2954 = vmax.f32 %v2952, %v2953
      %v2955 = vsel %vm2555, %v1296, -inf
      %v2956 = vrot.slane %v2955, 4
      %v2957 = vmax.f32 %v2955, %v2956
      %v2958 = vrot.slane %v2957, 2
      %v2959 = vmax.f32 %v2957, %v2958
      %v2960 = vrot.slane %v2959, 1
      %v2961 = vmax.f32 %v2959, %v2960
      %v2962 = vsel %vm2555, %v1295, -inf
      %v2963 = vrot.slane %v2962, 4
      %v2964 = vmax.f32 %v2962, %v2963
      %v2965 = vrot.slane %v2964, 2
      %v2966 = vmax.f32 %v2964, %v2965
      %v2967 = vrot.slane %v2966, 1
      %v2968 = vmax.f32 %v2966, %v2967
      %v2969 = vsel %vm2555, %v1297, -inf
      %v2970 = vrot.slane %v2969, 4
      %v2971 = vmax.f32 %v2969, %v2970
      %v2972 = vrot.slane %v2971, 2
      %v2973 = vmax.f32 %v2971, %v2972
      %v2974 = vrot.slane %v2973, 1
      %v2975 = vmax.f32 %v2973, %v2974
      %v2976 = vsel %vm2555, %v1305, -inf
      %v2977 = vrot.slane %v2976, 4
      %v2978 = vmax.f32 %v2976, %v2977
      %v2979 = vrot.slane %v2978, 2
      %v2980 = vmax.f32 %v2978, %v2979
      %v2981 = vrot.slane %v2980, 1
      %v2982 = vmax.f32 %v2980, %v2981
      %v2983 = vsel %vm2555, %v1313, -inf
      %v2984 = vrot.slane %v2983, 4
      %v2985 = vmax.f32 %v2983, %v2984
      %v2986 = vrot.slane %v2985, 2
      %v2987 = vmax.f32 %v2985, %v2986
      %v2988 = vrot.slane %v2987, 1
      %v2989 = vmax.f32 %v2987, %v2988
      %v2990 = vsel %vm2555, %v1312, -inf
      %v2991 = vrot.slane %v2990, 4
      %v2992 = vmax.f32 %v2990, %v2991
      %v2993 = vrot.slane %v2992, 2
      %v2994 = vmax.f32 %v2992, %v2993
      %v2995 = vrot.slane %v2994, 1
      %v2996 = vmax.f32 %v2994, %v2995
      %v2997 = vsel %vm2555, %v1314, -inf
      %v2998 = vrot.slane %v2997, 4
      %v2999 = vmax.f32 %v2997, %v2998
      %v3000 = vrot.slane %v2999, 2
      %v3001 = vmax.f32 %v2999, %v3000
      %v3002 = vrot.slane %v3001, 1
      %v3003 = vmax.f32 %v3001, %v3002
      %v3004 = vsel %vm2555, %v1322, -inf
      %v3005 = vrot.slane %v3004, 4
      %v3006 = vmax.f32 %v3004, %v3005
      %v3007 = vrot.slane %v3006, 2
      %v3008 = vmax.f32 %v3006, %v3007
      %v3009 = vrot.slane %v3008, 1
      %v3010 = vmax.f32 %v3008, %v3009
      %v3011 = vsel %vm2555, %v1330, -inf
      %v3012 = vrot.slane %v3011, 4
      %v3013 = vmax.f32 %v3011, %v3012
      %v3014 = vrot.slane %v3013, 2
      %v3015 = vmax.f32 %v3013, %v3014
      %v3016 = vrot.slane %v3015, 1
      %v3017 = vmax.f32 %v3015, %v3016
      %v3018 = vsel %vm2555, %v1329, -inf
      %v3019 = vrot.slane %v3018, 4
      %v3020 = vmax.f32 %v3018, %v3019
      %v3021 = vrot.slane %v3020, 2
      %v3022 = vmax.f32 %v3020, %v3021
      %v3023 = vrot.slane %v3022, 1
      %v3024 = vmax.f32 %v3022, %v3023
      %v3025 = vsel %vm2555, %v1331, -inf
      %v3026 = vrot.slane %v3025, 4
      %v3027 = vmax.f32 %v3025, %v3026
      %v3028 = vrot.slane %v3027, 2
      %v3029 = vmax.f32 %v3027, %v3028
      %v3030 = vrot.slane %v3029, 1
      %v3031 = vmax.f32 %v3029, %v3030
      %v3032 = vsel %vm2555, %v1339, -inf
      %v3033 = vrot.slane %v3032, 4
      %v3034 = vmax.f32 %v3032, %v3033
      %v3035 = vrot.slane %v3034, 2
      %v3036 = vmax.f32 %v3034, %v3035
      %v3037 = vrot.slane %v3036, 1
      %v3038 = vmax.f32 %v3036, %v3037
      %v3039 = vsel %vm2555, %v1347, -inf
      %v3040 = vrot.slane %v3039, 4
      %v3041 = vmax.f32 %v3039, %v3040
      %v3042 = vrot.slane %v3041, 2
      %v3043 = vmax.f32 %v3041, %v3042
      %v3044 = vrot.slane %v3043, 1
      %v3045 = vmax.f32 %v3043, %v3044
      %v3046 = vsel %vm2555, %v1346, -inf
      %v3047 = vrot.slane %v3046, 4
      %v3048 = vmax.f32 %v3046, %v3047
      %v3049 = vrot.slane %v3048, 2
      %v3050 = vmax.f32 %v3048, %v3049
      %v3051 = vrot.slane %v3050, 1
      %v3052 = vmax.f32 %v3050, %v3051
      %v3053 = vsel %vm2555, %v1348, -inf
      %v3054 = vrot.slane %v3053, 4
      %v3055 = vmax.f32 %v3053, %v3054
      %v3056 = vrot.slane %v3055, 2
      %v3057 = vmax.f32 %v3055, %v3056
      %v3058 = vrot.slane %v3057, 1
      %v3059 = vmax.f32 %v3057, %v3058
      %v3060 = vsel %vm2555, %v1356, -inf
      %v3061 = vrot.slane %v3060, 4
      %v3062 = vmax.f32 %v3060, %v3061
      %v3063 = vrot.slane %v3062, 2
      %v3064 = vmax.f32 %v3062, %v3063
      %v3065 = vrot.slane %v3064, 1
      %v3066 = vmax.f32 %v3064, %v3065
      %v3067 = vsel %vm2555, %v1364, -inf
      %v3068 = vrot.slane %v3067, 4
      %v3069 = vmax.f32 %v3067, %v3068
      %v3070 = vrot.slane %v3069, 2
      %v3071 = vmax.f32 %v3069, %v3070
      %v3072 = vrot.slane %v3071, 1
      %v3073 = vmax.f32 %v3071, %v3072
      %v3074 = vsel %vm2555, %v1363, -inf
      %v3075 = vrot.slane %v3074, 4
      %v3076 = vmax.f32 %v3074, %v3075
      %v3077 = vrot.slane %v3076, 2
      %v3078 = vmax.f32 %v3076, %v3077
      %v3079 = vrot.slane %v3078, 1
      %v3080 = vmax.f32 %v3078, %v3079
      %v3081 = vsel %vm2555, %v1365, -inf
      %v3082 = vrot.slane %v3081, 4
      %v3083 = vmax.f32 %v3081, %v3082
      %v3084 = vrot.slane %v3083, 2
      %v3085 = vmax.f32 %v3083, %v3084
      %v3086 = vrot.slane %v3085, 1
      %v3087 = vmax.f32 %v3085, %v3086
      %v3088 = vsel %vm2555, %v1373, -inf
      %v3089 = vrot.slane %v3088, 4
      %v3090 = vmax.f32 %v3088, %v3089
      %v3091 = vrot.slane %v3090, 2
      %v3092 = vmax.f32 %v3090, %v3091
      %v3093 = vrot.slane %v3092, 1
      %v3094 = vmax.f32 %v3092, %v3093
      %v3095 = vsel %vm2555, %v1381, -inf
      %v3096 = vrot.slane %v3095, 4
      %v3097 = vmax.f32 %v3095, %v3096
      %v3098 = vrot.slane %v3097, 2
      %v3099 = vmax.f32 %v3097, %v3098
      %v3100 = vrot.slane %v3099, 1
      %v3101 = vmax.f32 %v3099, %v3100
      %v3102 = vsel %vm2555, %v1380, -inf
      %v3103 = vrot.slane %v3102, 4
      %v3104 = vmax.f32 %v3102, %v3103
      %v3105 = vrot.slane %v3104, 2
      %v3106 = vmax.f32 %v3104, %v3105
      %v3107 = vrot.slane %v3106, 1
      %v3108 = vmax.f32 %v3106, %v3107
      %v3109 = vsel %vm2555, %v1382, -inf
      %v3110 = vrot.slane %v3109, 4
      %v3111 = vmax.f32 %v3109, %v3110
      %v3112 = vrot.slane %v3111, 2
      %v3113 = vmax.f32 %v3111, %v3112
      %v3114 = vrot.slane %v3113, 1
      %v3115 = vmax.f32 %v3113, %v3114
      %v3116 = vsel %vm2555, %v1390, -inf
      %v3117 = vrot.slane %v3116, 4
      %v3118 = vmax.f32 %v3116, %v3117
      %v3119 = vrot.slane %v3118, 2
      %v3120 = vmax.f32 %v3118, %v3119
      %v3121 = vrot.slane %v3120, 1
      %v3122 = vmax.f32 %v3120, %v3121
      %v3123 = vsel %vm2555, %v1398, -inf
      %v3124 = vrot.slane %v3123, 4
      %v3125 = vmax.f32 %v3123, %v3124
      %v3126 = vrot.slane %v3125, 2
      %v3127 = vmax.f32 %v3125, %v3126
      %v3128 = vrot.slane %v3127, 1
      %v3129 = vmax.f32 %v3127, %v3128
      %v3130 = vsel %vm2555, %v1397, -inf
      %v3131 = vrot.slane %v3130, 4
      %v3132 = vmax.f32 %v3130, %v3131
      %v3133 = vrot.slane %v3132, 2
      %v3134 = vmax.f32 %v3132, %v3133
      %v3135 = vrot.slane %v3134, 1
      %v3136 = vmax.f32 %v3134, %v3135
      %v3137 = vsel %vm2555, %v1399, -inf
      %v3138 = vrot.slane %v3137, 4
      %v3139 = vmax.f32 %v3137, %v3138
      %v3140 = vrot.slane %v3139, 2
      %v3141 = vmax.f32 %v3139, %v3140
      %v3142 = vrot.slane %v3141, 1
      %v3143 = vmax.f32 %v3141, %v3142
      %v3144 = vsel %vm2555, %v1407, -inf
      %v3145 = vrot.slane %v3144, 4
      %v3146 = vmax.f32 %v3144, %v3145
      %v3147 = vrot.slane %v3146, 2
      %v3148 = vmax.f32 %v3146, %v3147
      %v3149 = vrot.slane %v3148, 1
      %v3150 = vmax.f32 %v3148, %v3149
      %v3151 = vsel %vm2555, %v1415, -inf
      %v3152 = vrot.slane %v3151, 4
      %v3153 = vmax.f32 %v3151, %v3152
      %v3154 = vrot.slane %v3153, 2
      %v3155 = vmax.f32 %v3153, %v3154
      %v3156 = vrot.slane %v3155, 1
      %v3157 = vmax.f32 %v3155, %v3156
      %v3158 = vsel %vm2555, %v1414, -inf
      %v3159 = vrot.slane %v3158, 4
      %v3160 = vmax.f32 %v3158, %v3159
      %v3161 = vrot.slane %v3160, 2
      %v3162 = vmax.f32 %v3160, %v3161
      %v3163 = vrot.slane %v3162, 1
      %v3164 = vmax.f32 %v3162, %v3163
      %v3165 = vsel %vm2555, %v1416, -inf
      %v3166 = vrot.slane %v3165, 4
      %v3167 = vmax.f32 %v3165, %v3166
      %v3168 = vrot.slane %v3167, 2
      %v3169 = vmax.f32 %v3167, %v3168
      %v3170 = vrot.slane %v3169, 1
      %v3171 = vmax.f32 %v3169, %v3170
      %v3172 = vsel %vm2555, %v1424, -inf
      %v3173 = vrot.slane %v3172, 4
      %v3174 = vmax.f32 %v3172, %v3173
      %v3175 = vrot.slane %v3174, 2
      %v3176 = vmax.f32 %v3174, %v3175
      %v3177 = vrot.slane %v3176, 1
      %v3178 = vmax.f32 %v3176, %v3177
      %v3179 = vsel %vm2555, %v1432, -inf
      %v3180 = vrot.slane %v3179, 4
      %v3181 = vmax.f32 %v3179, %v3180
      %v3182 = vrot.slane %v3181, 2
      %v3183 = vmax.f32 %v3181, %v3182
      %v3184 = vrot.slane %v3183, 1
      %v3185 = vmax.f32 %v3183, %v3184
      %v3186 = vsel %vm2555, %v1431, -inf
      %v3187 = vrot.slane %v3186, 4
      %v3188 = vmax.f32 %v3186, %v3187
      %v3189 = vrot.slane %v3188, 2
      %v3190 = vmax.f32 %v3188, %v3189
      %v3191 = vrot.slane %v3190, 1
      %v3192 = vmax.f32 %v3190, %v3191
      %v3193 = vsel %vm2555, %v1433, -inf
      %v3194 = vrot.slane %v3193, 4
      %v3195 = vmax.f32 %v3193, %v3194
      %v3196 = vrot.slane %v3195, 2
      %v3197 = vmax.f32 %v3195, %v3196
      %v3198 = vrot.slane %v3197, 1
      %v3199 = vmax.f32 %v3197, %v3198
      %v3200 = vsel %vm2555, %v1441, -inf
      %v3201 = vrot.slane %v3200, 4
      %v3202 = vmax.f32 %v3200, %v3201
      %v3203 = vrot.slane %v3202, 2
      %v3204 = vmax.f32 %v3202, %v3203
      %v3205 = vrot.slane %v3204, 1
      %v3206 = vmax.f32 %v3204, %v3205
      %v3207 = vsel %vm2555, %v1449, -inf
      %v3208 = vrot.slane %v3207, 4
      %v3209 = vmax.f32 %v3207, %v3208
      %v3210 = vrot.slane %v3209, 2
      %v3211 = vmax.f32 %v3209, %v3210
      %v3212 = vrot.slane %v3211, 1
      %v3213 = vmax.f32 %v3211, %v3212
      %v3214 = vsel %vm2555, %v1448, -inf
      %v3215 = vrot.slane %v3214, 4
      %v3216 = vmax.f32 %v3214, %v3215
      %v3217 = vrot.slane %v3216, 2
      %v3218 = vmax.f32 %v3216, %v3217
      %v3219 = vrot.slane %v3218, 1
      %v3220 = vmax.f32 %v3218, %v3219
      %v3221 = vsel %vm2555, %v1450, -inf
      %v3222 = vrot.slane %v3221, 4
      %v3223 = vmax.f32 %v3221, %v3222
      %v3224 = vrot.slane %v3223, 2
      %v3225 = vmax.f32 %v3223, %v3224
      %v3226 = vrot.slane %v3225, 1
      %v3227 = vmax.f32 %v3225, %v3226
      %v3228 = vsel %vm2555, %v1458, -inf
      %v3229 = vrot.slane %v3228, 4
      %v3230 = vmax.f32 %v3228, %v3229
      %v3231 = vrot.slane %v3230, 2
      %v3232 = vmax.f32 %v3230, %v3231
      %v3233 = vrot.slane %v3232, 1
      %v3234 = vmax.f32 %v3232, %v3233
      %v3235 = vsel %vm2555, %v1466, -inf
      %v3236 = vrot.slane %v3235, 4
      %v3237 = vmax.f32 %v3235, %v3236
      %v3238 = vrot.slane %v3237, 2
      %v3239 = vmax.f32 %v3237, %v3238
      %v3240 = vrot.slane %v3239, 1
      %v3241 = vmax.f32 %v3239, %v3240
      %v3242 = vsel %vm2555, %v1465, -inf
      %v3243 = vrot.slane %v3242, 4
      %v3244 = vmax.f32 %v3242, %v3243
      %v3245 = vrot.slane %v3244, 2
      %v3246 = vmax.f32 %v3244, %v3245
      %v3247 = vrot.slane %v3246, 1
      %v3248 = vmax.f32 %v3246, %v3247
      %v3249 = vsel %vm2555, %v1467, -inf
      %v3250 = vrot.slane %v3249, 4
      %v3251 = vmax.f32 %v3249, %v3250
      %v3252 = vrot.slane %v3251, 2
      %v3253 = vmax.f32 %v3251, %v3252
      %v3254 = vrot.slane %v3253, 1
      %v3255 = vmax.f32 %v3253, %v3254
      %v3256 = vsel %vm2555, %v1475, -inf
      %v3257 = vrot.slane %v3256, 4
      %v3258 = vmax.f32 %v3256, %v3257
      %v3259 = vrot.slane %v3258, 2
      %v3260 = vmax.f32 %v3258, %v3259
      %v3261 = vrot.slane %v3260, 1
      %v3262 = vmax.f32 %v3260, %v3261
      %v3263 = vsel %vm2555, %v1483, -inf
      %v3264 = vrot.slane %v3263, 4
      %v3265 = vmax.f32 %v3263, %v3264
      %v3266 = vrot.slane %v3265, 2
      %v3267 = vmax.f32 %v3265, %v3266
      %v3268 = vrot.slane %v3267, 1
      %v3269 = vmax.f32 %v3267, %v3268
      %v3270 = vsel %vm2555, %v1482, -inf
      %v3271 = vrot.slane %v3270, 4
      %v3272 = vmax.f32 %v3270, %v3271
      %v3273 = vrot.slane %v3272, 2
      %v3274 = vmax.f32 %v3272, %v3273
      %v3275 = vrot.slane %v3274, 1
      %v3276 = vmax.f32 %v3274, %v3275
      %v3277 = vsel %vm2555, %v1484, -inf
      %v3278 = vrot.slane %v3277, 4
      %v3279 = vmax.f32 %v3277, %v3278
      %v3280 = vrot.slane %v3279, 2
      %v3281 = vmax.f32 %v3279, %v3280
      %v3282 = vrot.slane %v3281, 1
      %v3283 = vmax.f32 %v3281, %v3282
      %v3284 = vsel %vm2555, %v1492, -inf
      %v3285 = vrot.slane %v3284, 4
      %v3286 = vmax.f32 %v3284, %v3285
      %v3287 = vrot.slane %v3286, 2
      %v3288 = vmax.f32 %v3286, %v3287
      %v3289 = vrot.slane %v3288, 1
      %v3290 = vmax.f32 %v3288, %v3289
      %v3291 = vsel %vm2555, %v1500, -inf
      %v3292 = vrot.slane %v3291, 4
      %v3293 = vmax.f32 %v3291, %v3292
      %v3294 = vrot.slane %v3293, 2
      %v3295 = vmax.f32 %v3293, %v3294
      %v3296 = vrot.slane %v3295, 1
      %v3297 = vmax.f32 %v3295, %v3296
      %v3298 = vsel %vm2555, %v1499, -inf
      %v3299 = vrot.slane %v3298, 4
      %v3300 = vmax.f32 %v3298, %v3299
      %v3301 = vrot.slane %v3300, 2
      %v3302 = vmax.f32 %v3300, %v3301
      %v3303 = vrot.slane %v3302, 1
      %v3304 = vmax.f32 %v3302, %v3303
      %v3305 = vsel %vm2555, %v1501, -inf
      %v3306 = vrot.slane %v3305, 4
      %v3307 = vmax.f32 %v3305, %v3306
      %v3308 = vrot.slane %v3307, 2
      %v3309 = vmax.f32 %v3307, %v3308
      %v3310 = vrot.slane %v3309, 1
      %v3311 = vmax.f32 %v3309, %v3310
      %v3312 = vsel %vm2555, %v1509, -inf
      %v3313 = vrot.slane %v3312, 4
      %v3314 = vmax.f32 %v3312, %v3313
      %v3315 = vrot.slane %v3314, 2
      %v3316 = vmax.f32 %v3314, %v3315
      %v3317 = vrot.slane %v3316, 1
      %v3318 = vmax.f32 %v3316, %v3317
      %v3319 = vsel %vm2555, %v1517, -inf
      %v3320 = vrot.slane %v3319, 4
      %v3321 = vmax.f32 %v3319, %v3320
      %v3322 = vrot.slane %v3321, 2
      %v3323 = vmax.f32 %v3321, %v3322
      %v3324 = vrot.slane %v3323, 1
      %v3325 = vmax.f32 %v3323, %v3324
      %v3326 = vsel %vm2555, %v1516, -inf
      %v3327 = vrot.slane %v3326, 4
      %v3328 = vmax.f32 %v3326, %v3327
      %v3329 = vrot.slane %v3328, 2
      %v3330 = vmax.f32 %v3328, %v3329
      %v3331 = vrot.slane %v3330, 1
      %v3332 = vmax.f32 %v3330, %v3331
      %v3333 = vsel %vm2555, %v1518, -inf
      %v3334 = vrot.slane %v3333, 4
      %v3335 = vmax.f32 %v3333, %v3334
      %v3336 = vrot.slane %v3335, 2
      %v3337 = vmax.f32 %v3335, %v3336
      %v3338 = vrot.slane %v3337, 1
      %v3339 = vmax.f32 %v3337, %v3338
      %v3340 = vsel %vm2555, %v1526, -inf
      %v3341 = vrot.slane %v3340, 4
      %v3342 = vmax.f32 %v3340, %v3341
      %v3343 = vrot.slane %v3342, 2
      %v3344 = vmax.f32 %v3342, %v3343
      %v3345 = vrot.slane %v3344, 1
      %v3346 = vmax.f32 %v3344, %v3345
      %v3347 = vsel %vm2555, %v1534, -inf
      %v3348 = vrot.slane %v3347, 4
      %v3349 = vmax.f32 %v3347, %v3348
      %v3350 = vrot.slane %v3349, 2
      %v3351 = vmax.f32 %v3349, %v3350
      %v3352 = vrot.slane %v3351, 1
      %v3353 = vmax.f32 %v3351, %v3352
      %v3354 = vsel %vm2555, %v1533, -inf
      %v3355 = vrot.slane %v3354, 4
      %v3356 = vmax.f32 %v3354, %v3355
      %v3357 = vrot.slane %v3356, 2
      %v3358 = vmax.f32 %v3356, %v3357
      %v3359 = vrot.slane %v3358, 1
      %v3360 = vmax.f32 %v3358, %v3359
      %v3361 = vsel %vm2555, %v1535, -inf
      %v3362 = vrot.slane %v3361, 4
      %v3363 = vmax.f32 %v3361, %v3362
      %v3364 = vrot.slane %v3363, 2
      %v3365 = vmax.f32 %v3363, %v3364
      %v3366 = vrot.slane %v3365, 1
      %v3367 = vmax.f32 %v3365, %v3366
      %v3368 = vsel %vm2555, %v1543, -inf
      %v3369 = vrot.slane %v3368, 4
      %v3370 = vmax.f32 %v3368, %v3369
      %v3371 = vrot.slane %v3370, 2
      %v3372 = vmax.f32 %v3370, %v3371
      %v3373 = vrot.slane %v3372, 1
      %v3374 = vmax.f32 %v3372, %v3373
      %v3375 = vsel %vm2555, %v1551, -inf
      %v3376 = vrot.slane %v3375, 4
      %v3377 = vmax.f32 %v3375, %v3376
      %v3378 = vrot.slane %v3377, 2
      %v3379 = vmax.f32 %v3377, %v3378
      %v3380 = vrot.slane %v3379, 1
      %v3381 = vmax.f32 %v3379, %v3380
      %v3382 = vsel %vm2555, %v1550, -inf
      %v3383 = vrot.slane %v3382, 4
      %v3384 = vmax.f32 %v3382, %v3383
      %v3385 = vrot.slane %v3384, 2
      %v3386 = vmax.f32 %v3384, %v3385
      %v3387 = vrot.slane %v3386, 1
      %v3388 = vmax.f32 %v3386, %v3387
      %v3389 = vsel %vm2555, %v1552, -inf
      %v3390 = vrot.slane %v3389, 4
      %v3391 = vmax.f32 %v3389, %v3390
      %v3392 = vrot.slane %v3391, 2
      %v3393 = vmax.f32 %v3391, %v3392
      %v3394 = vrot.slane %v3393, 1
      %v3395 = vmax.f32 %v3393, %v3394
      %v3396 = vsel %vm2555, %v1560, -inf
      %v3397 = vrot.slane %v3396, 4
      %v3398 = vmax.f32 %v3396, %v3397
      %v3399 = vrot.slane %v3398, 2
      %v3400 = vmax.f32 %v3398, %v3399
      %v3401 = vrot.slane %v3400, 1
      %v3402 = vmax.f32 %v3400, %v3401
      %v3403 = vsel %vm2555, %v1568, -inf
      %v3404 = vrot.slane %v3403, 4
      %v3405 = vmax.f32 %v3403, %v3404
      %v3406 = vrot.slane %v3405, 2
      %v3407 = vmax.f32 %v3405, %v3406
      %v3408 = vrot.slane %v3407, 1
      %v3409 = vmax.f32 %v3407, %v3408
      %v3410 = vsel %vm2555, %v1567, -inf
      %v3411 = vrot.slane %v3410, 4
      %v3412 = vmax.f32 %v3410, %v3411
      %v3413 = vrot.slane %v3412, 2
      %v3414 = vmax.f32 %v3412, %v3413
      %v3415 = vrot.slane %v3414, 1
      %v3416 = vmax.f32 %v3414, %v3415
      %v3417 = vsel %vm2555, %v1569, -inf
      %v3418 = vrot.slane %v3417, 4
      %v3419 = vmax.f32 %v3417, %v3418
      %v3420 = vrot.slane %v3419, 2
      %v3421 = vmax.f32 %v3419, %v3420
      %v3422 = vrot.slane %v3421, 1
      %v3423 = vmax.f32 %v3421, %v3422
      %v3424 = vsel %vm2555, %v1577, -inf
      %v3425 = vrot.slane %v3424, 4
      %v3426 = vmax.f32 %v3424, %v3425
      %v3427 = vrot.slane %v3426, 2
      %v3428 = vmax.f32 %v3426, %v3427
      %v3429 = vrot.slane %v3428, 1
      %v3430 = vmax.f32 %v3428, %v3429
      %v3431 = vsel %vm2555, %v1585, -inf
      %v3432 = vrot.slane %v3431, 4
      %v3433 = vmax.f32 %v3431, %v3432
      %v3434 = vrot.slane %v3433, 2
      %v3435 = vmax.f32 %v3433, %v3434
      %v3436 = vrot.slane %v3435, 1
      %v3437 = vmax.f32 %v3435, %v3436
      %v3438 = vsel %vm2555, %v1584, -inf
      %v3439 = vrot.slane %v3438, 4
      %v3440 = vmax.f32 %v3438, %v3439
      %v3441 = vrot.slane %v3440, 2
      %v3442 = vmax.f32 %v3440, %v3441
      %v3443 = vrot.slane %v3442, 1
      %v3444 = vmax.f32 %v3442, %v3443
      %v3445 = vsel %vm2555, %v1586, -inf
      %v3446 = vrot.slane %v3445, 4
      %v3447 = vmax.f32 %v3445, %v3446
      %v3448 = vrot.slane %v3447, 2
      %v3449 = vmax.f32 %v3447, %v3448
      %v3450 = vrot.slane %v3449, 1
      %v3451 = vmax.f32 %v3449, %v3450
      %v3452 = vsel %vm2555, %v1594, -inf
      %v3453 = vrot.slane %v3452, 4
      %v3454 = vmax.f32 %v3452, %v3453
      %v3455 = vrot.slane %v3454, 2
      %v3456 = vmax.f32 %v3454, %v3455
      %v3457 = vrot.slane %v3456, 1
      %v3458 = vmax.f32 %v3456, %v3457
      %v3459 = vsel %vm2555, %v1602, -inf
      %v3460 = vrot.slane %v3459, 4
      %v3461 = vmax.f32 %v3459, %v3460
      %v3462 = vrot.slane %v3461, 2
      %v3463 = vmax.f32 %v3461, %v3462
      %v3464 = vrot.slane %v3463, 1
      %v3465 = vmax.f32 %v3463, %v3464
      %v3466 = vsel %vm2555, %v1601, -inf
      %v3467 = vrot.slane %v3466, 4
      %v3468 = vmax.f32 %v3466, %v3467
      %v3469 = vrot.slane %v3468, 2
      %v3470 = vmax.f32 %v3468, %v3469
      %v3471 = vrot.slane %v3470, 1
      %v3472 = vmax.f32 %v3470, %v3471
      %v3473 = vsel %vm2555, %v1603, -inf
      %v3474 = vrot.slane %v3473, 4
      %v3475 = vmax.f32 %v3473, %v3474
      %v3476 = vrot.slane %v3475, 2
      %v3477 = vmax.f32 %v3475, %v3476
      %v3478 = vrot.slane %v3477, 1
      %v3479 = vmax.f32 %v3477, %v3478
      %v3480 = vsel %vm2555, %v1611, -inf
      %v3481 = vrot.slane %v3480, 4
      %v3482 = vmax.f32 %v3480, %v3481
      %v3483 = vrot.slane %v3482, 2
      %v3484 = vmax.f32 %v3482, %v3483
      %v3485 = vrot.slane %v3484, 1
      %v3486 = vmax.f32 %v3484, %v3485
      %v3487 = vsel %vm2555, %v1619, -inf
      %v3488 = vrot.slane %v3487, 4
      %v3489 = vmax.f32 %v3487, %v3488
      %v3490 = vrot.slane %v3489, 2
      %v3491 = vmax.f32 %v3489, %v3490
      %v3492 = vrot.slane %v3491, 1
      %v3493 = vmax.f32 %v3491, %v3492
      %v3494 = vsel %vm2555, %v1618, -inf
      %v3495 = vrot.slane %v3494, 4
      %v3496 = vmax.f32 %v3494, %v3495
      %v3497 = vrot.slane %v3496, 2
      %v3498 = vmax.f32 %v3496, %v3497
      %v3499 = vrot.slane %v3498, 1
      %v3500 = vmax.f32 %v3498, %v3499
      %v3501 = vsel %vm2555, %v1620, -inf
      %v3502 = vrot.slane %v3501, 4
      %v3503 = vmax.f32 %v3501, %v3502
      %v3504 = vrot.slane %v3503, 2
      %v3505 = vmax.f32 %v3503, %v3504
      %v3506 = vrot.slane %v3505, 1
      %v3507 = vmax.f32 %v3505, %v3506
      %v3508 = vsel %vm2555, %v1628, -inf
      %v3509 = vrot.slane %v3508, 4
      %v3510 = vmax.f32 %v3508, %v3509
      %v3511 = vrot.slane %v3510, 2
      %v3512 = vmax.f32 %v3510, %v3511
      %v3513 = vrot.slane %v3512, 1
      %v3514 = vmax.f32 %v3512, %v3513
      %v3515 = vsel %vm2555, %v1636, -inf
      %v3516 = vrot.slane %v3515, 4
      %v3517 = vmax.f32 %v3515, %v3516
      %v3518 = vrot.slane %v3517, 2
      %v3519 = vmax.f32 %v3517, %v3518
      %v3520 = vrot.slane %v3519, 1
      %v3521 = vmax.f32 %v3519, %v3520
      %v3522 = vsel %vm2555, %v1635, -inf
      %v3523 = vrot.slane %v3522, 4
      %v3524 = vmax.f32 %v3522, %v3523
      %v3525 = vrot.slane %v3524, 2
      %v3526 = vmax.f32 %v3524, %v3525
      %v3527 = vrot.slane %v3526, 1
      %v3528 = vmax.f32 %v3526, %v3527
      %v3529 = vsel %vm2555, %v1637, -inf
      %v3530 = vrot.slane %v3529, 4
      %v3531 = vmax.f32 %v3529, %v3530
      %v3532 = vrot.slane %v3531, 2
      %v3533 = vmax.f32 %v3531, %v3532
      %v3534 = vrot.slane %v3533, 1
      %v3535 = vmax.f32 %v3533, %v3534
      %v3536 = vsel %vm2555, %v1645, -inf
      %v3537 = vrot.slane %v3536, 4
      %v3538 = vmax.f32 %v3536, %v3537
      %v3539 = vrot.slane %v3538, 2
      %v3540 = vmax.f32 %v3538, %v3539
      %v3541 = vrot.slane %v3540, 1
      %v3542 = vmax.f32 %v3540, %v3541
      %v3543 = vsel %vm2555, %v1653, -inf
      %v3544 = vrot.slane %v3543, 4
      %v3545 = vmax.f32 %v3543, %v3544
      %v3546 = vrot.slane %v3545, 2
      %v3547 = vmax.f32 %v3545, %v3546
      %v3548 = vrot.slane %v3547, 1
      %v3549 = vmax.f32 %v3547, %v3548
      %v3550 = vsel %vm2555, %v1652, -inf
      %v3551 = vrot.slane %v3550, 4
      %v3552 = vmax.f32 %v3550, %v3551
      %v3553 = vrot.slane %v3552, 2
      %v3554 = vmax.f32 %v3552, %v3553
      %v3555 = vrot.slane %v3554, 1
      %v3556 = vmax.f32 %v3554, %v3555
      %v3557 = vsel %vm2555, %v1654, -inf
      %v3558 = vrot.slane %v3557, 4
      %v3559 = vmax.f32 %v3557, %v3558
      %v3560 = vrot.slane %v3559, 2
      %v3561 = vmax.f32 %v3559, %v3560
      %v3562 = vrot.slane %v3561, 1
      %v3563 = vmax.f32 %v3561, %v3562
      %v3564 = vsel %vm2555, %v1662, -inf
      %v3565 = vrot.slane %v3564, 4
      %v3566 = vmax.f32 %v3564, %v3565
      %v3567 = vrot.slane %v3566, 2
      %v3568 = vmax.f32 %v3566, %v3567
      %v3569 = vrot.slane %v3568, 1
      %v3570 = vmax.f32 %v3568, %v3569
      %v3571 = vsel %vm2555, %v1670, -inf
      %v3572 = vrot.slane %v3571, 4
      %v3573 = vmax.f32 %v3571, %v3572
      %v3574 = vrot.slane %v3573, 2
      %v3575 = vmax.f32 %v3573, %v3574
      %v3576 = vrot.slane %v3575, 1
      %v3577 = vmax.f32 %v3575, %v3576
      %v3578 = vsel %vm2555, %v1669, -inf
      %v3579 = vrot.slane %v3578, 4
      %v3580 = vmax.f32 %v3578, %v3579
      %v3581 = vrot.slane %v3580, 2
      %v3582 = vmax.f32 %v3580, %v3581
      %v3583 = vrot.slane %v3582, 1
      %v3584 = vmax.f32 %v3582, %v3583
      %v3585 = vsel %vm2555, %v1671, -inf
      %v3586 = vrot.slane %v3585, 4
      %v3587 = vmax.f32 %v3585, %v3586
      %v3588 = vrot.slane %v3587, 2
      %v3589 = vmax.f32 %v3587, %v3588
      %v3590 = vrot.slane %v3589, 1
      %v3591 = vmax.f32 %v3589, %v3590
      %v3592 = vsel %vm2555, %v1679, -inf
      %v3593 = vrot.slane %v3592, 4
      %v3594 = vmax.f32 %v3592, %v3593
      %v3595 = vrot.slane %v3594, 2
      %v3596 = vmax.f32 %v3594, %v3595
      %v3597 = vrot.slane %v3596, 1
      %v3598 = vmax.f32 %v3596, %v3597
      %v3599 = vsel %vm2555, %v1687, -inf
      %v3600 = vrot.slane %v3599, 4
      %v3601 = vmax.f32 %v3599, %v3600
      %v3602 = vrot.slane %v3601, 2
      %v3603 = vmax.f32 %v3601, %v3602
      %v3604 = vrot.slane %v3603, 1
      %v3605 = vmax.f32 %v3603, %v3604
      %v3606 = vsel %vm2555, %v1686, -inf
      %v3607 = vrot.slane %v3606, 4
      %v3608 = vmax.f32 %v3606, %v3607
      %v3609 = vrot.slane %v3608, 2
      %v3610 = vmax.f32 %v3608, %v3609
      %v3611 = vrot.slane %v3610, 1
      %v3612 = vmax.f32 %v3610, %v3611
      %v3613 = vsel %vm2555, %v1688, -inf
      %v3614 = vrot.slane %v3613, 4
      %v3615 = vmax.f32 %v3613, %v3614
      %v3616 = vrot.slane %v3615, 2
      %v3617 = vmax.f32 %v3615, %v3616
      %v3618 = vrot.slane %v3617, 1
      %v3619 = vmax.f32 %v3617, %v3618
      %v3620 = vsel %vm2555, %v1696, -inf
      %v3621 = vrot.slane %v3620, 4
      %v3622 = vmax.f32 %v3620, %v3621
      %v3623 = vrot.slane %v3622, 2
      %v3624 = vmax.f32 %v3622, %v3623
      %v3625 = vrot.slane %v3624, 1
      %v3626 = vmax.f32 %v3624, %v3625
      %v3627 = vsel %vm2555, %v1704, -inf
      %v3628 = vrot.slane %v3627, 4
      %v3629 = vmax.f32 %v3627, %v3628
      %v3630 = vrot.slane %v3629, 2
      %v3631 = vmax.f32 %v3629, %v3630
      %v3632 = vrot.slane %v3631, 1
      %v3633 = vmax.f32 %v3631, %v3632
      %v3634 = vsel %vm2555, %v1703, -inf
      %v3635 = vrot.slane %v3634, 4
      %v3636 = vmax.f32 %v3634, %v3635
      %v3637 = vrot.slane %v3636, 2
      %v3638 = vmax.f32 %v3636, %v3637
      %v3639 = vrot.slane %v3638, 1
      %v3640 = vmax.f32 %v3638, %v3639
      %v3641 = vsel %vm2555, %v1705, -inf
      %v3642 = vrot.slane %v3641, 4
      %v3643 = vmax.f32 %v3641, %v3642
      %v3644 = vrot.slane %v3643, 2
      %v3645 = vmax.f32 %v3643, %v3644
      %v3646 = vrot.slane %v3645, 1
      %v3647 = vmax.f32 %v3645, %v3646
      %v3648 = vsel %vm2555, %v1713, -inf
      %v3649 = vrot.slane %v3648, 4
      %v3650 = vmax.f32 %v3648, %v3649
      %v3651 = vrot.slane %v3650, 2
      %v3652 = vmax.f32 %v3650, %v3651
      %v3653 = vrot.slane %v3652, 1
      %v3654 = vmax.f32 %v3652, %v3653
      %v3655 = vsel %vm2555, %v1721, -inf
      %v3656 = vrot.slane %v3655, 4
      %v3657 = vmax.f32 %v3655, %v3656
      %v3658 = vrot.slane %v3657, 2
      %v3659 = vmax.f32 %v3657, %v3658
      %v3660 = vrot.slane %v3659, 1
      %v3661 = vmax.f32 %v3659, %v3660
      %v3662 = vsel %vm2555, %v1720, -inf
      %v3663 = vrot.slane %v3662, 4
      %v3664 = vmax.f32 %v3662, %v3663
      %v3665 = vrot.slane %v3664, 2
      %v3666 = vmax.f32 %v3664, %v3665
      %v3667 = vrot.slane %v3666, 1
      %v3668 = vmax.f32 %v3666, %v3667
      %v3669 = vsel %vm2555, %v1722, -inf
      %v3670 = vrot.slane %v3669, 4
      %v3671 = vmax.f32 %v3669, %v3670
      %v3672 = vrot.slane %v3671, 2
      %v3673 = vmax.f32 %v3671, %v3672
      %v3674 = vrot.slane %v3673, 1
      %v3675 = vmax.f32 %v3673, %v3674
      %v3676 = vsel %vm2555, %v1730, -inf
      %v3677 = vrot.slane %v3676, 4
      %v3678 = vmax.f32 %v3676, %v3677
      %v3679 = vrot.slane %v3678, 2
      %v3680 = vmax.f32 %v3678, %v3679
      %v3681 = vrot.slane %v3680, 1
      %v3682 = vmax.f32 %v3680, %v3681
      %v3683 = vsel %vm2555, %v1738, -inf
      %v3684 = vrot.slane %v3683, 4
      %v3685 = vmax.f32 %v3683, %v3684
      %v3686 = vrot.slane %v3685, 2
      %v3687 = vmax.f32 %v3685, %v3686
      %v3688 = vrot.slane %v3687, 1
      %v3689 = vmax.f32 %v3687, %v3688
      %v3690 = vsel %vm2555, %v1737, -inf
      %v3691 = vrot.slane %v3690, 4
      %v3692 = vmax.f32 %v3690, %v3691
      %v3693 = vrot.slane %v3692, 2
      %v3694 = vmax.f32 %v3692, %v3693
      %v3695 = vrot.slane %v3694, 1
      %v3696 = vmax.f32 %v3694, %v3695
      %v3697 = vsel %vm2555, %v1739, -inf
      %v3698 = vrot.slane %v3697, 4
      %v3699 = vmax.f32 %v3697, %v3698
      %v3700 = vrot.slane %v3699, 2
      %v3701 = vmax.f32 %v3699, %v3700
      %v3702 = vrot.slane %v3701, 1
      %v3703 = vmax.f32 %v3701, %v3702
      %v3704 = vsel %vm2555, %v1747, -inf
      %v3705 = vrot.slane %v3704, 4
      %v3706 = vmax.f32 %v3704, %v3705
      %v3707 = vrot.slane %v3706, 2
      %v3708 = vmax.f32 %v3706, %v3707
      %v3709 = vrot.slane %v3708, 1
      %v3710 = vmax.f32 %v3708, %v3709
      %v3711 = vsel %vm2555, %v1755, -inf
      %v3712 = vrot.slane %v3711, 4
      %v3713 = vmax.f32 %v3711, %v3712
      %v3714 = vrot.slane %v3713, 2
      %v3715 = vmax.f32 %v3713, %v3714
      %v3716 = vrot.slane %v3715, 1
      %v3717 = vmax.f32 %v3715, %v3716
      %v3718 = vsel %vm2555, %v1754, -inf
      %v3719 = vrot.slane %v3718, 4
      %v3720 = vmax.f32 %v3718, %v3719
      %v3721 = vrot.slane %v3720, 2
      %v3722 = vmax.f32 %v3720, %v3721
      %v3723 = vrot.slane %v3722, 1
      %v3724 = vmax.f32 %v3722, %v3723
      %v3725 = vsel %vm2555, %v1756, -inf
      %v3726 = vrot.slane %v3725, 4
      %v3727 = vmax.f32 %v3725, %v3726
      %v3728 = vrot.slane %v3727, 2
      %v3729 = vmax.f32 %v3727, %v3728
      %v3730 = vrot.slane %v3729, 1
      %v3731 = vmax.f32 %v3729, %v3730
      %v3732 = vsel %vm2555, %v1764, -inf
      %v3733 = vrot.slane %v3732, 4
      %v3734 = vmax.f32 %v3732, %v3733
      %v3735 = vrot.slane %v3734, 2
      %v3736 = vmax.f32 %v3734, %v3735
      %v3737 = vrot.slane %v3736, 1
      %v3738 = vmax.f32 %v3736, %v3737
      %v3739 = vsel %vm2555, %v1772, -inf
      %v3740 = vrot.slane %v3739, 4
      %v3741 = vmax.f32 %v3739, %v3740
      %v3742 = vrot.slane %v3741, 2
      %v3743 = vmax.f32 %v3741, %v3742
      %v3744 = vrot.slane %v3743, 1
      %v3745 = vmax.f32 %v3743, %v3744
      %v3746 = vsel %vm2555, %v1771, -inf
      %v3747 = vrot.slane %v3746, 4
      %v3748 = vmax.f32 %v3746, %v3747
      %v3749 = vrot.slane %v3748, 2
      %v3750 = vmax.f32 %v3748, %v3749
      %v3751 = vrot.slane %v3750, 1
      %v3752 = vmax.f32 %v3750, %v3751
      %v3753 = vsel %vm2555, %v1773, -inf
      %v3754 = vrot.slane %v3753, 4
      %v3755 = vmax.f32 %v3753, %v3754
      %v3756 = vrot.slane %v3755, 2
      %v3757 = vmax.f32 %v3755, %v3756
      %v3758 = vrot.slane %v3757, 1
      %v3759 = vmax.f32 %v3757, %v3758
      %v3760 = vsel %vm2555, %v1781, -inf
      %v3761 = vrot.slane %v3760, 4
      %v3762 = vmax.f32 %v3760, %v3761
      %v3763 = vrot.slane %v3762, 2
      %v3764 = vmax.f32 %v3762, %v3763
      %v3765 = vrot.slane %v3764, 1
      %v3766 = vmax.f32 %v3764, %v3765
      %v3767 = vsel %vm2555, %v1789, -inf
      %v3768 = vrot.slane %v3767, 4
      %v3769 = vmax.f32 %v3767, %v3768
      %v3770 = vrot.slane %v3769, 2
      %v3771 = vmax.f32 %v3769, %v3770
      %v3772 = vrot.slane %v3771, 1
      %v3773 = vmax.f32 %v3771, %v3772
      %v3774 = vsel %vm2555, %v1788, -inf
      %v3775 = vrot.slane %v3774, 4
      %v3776 = vmax.f32 %v3774, %v3775
      %v3777 = vrot.slane %v3776, 2
      %v3778 = vmax.f32 %v3776, %v3777
      %v3779 = vrot.slane %v3778, 1
      %v3780 = vmax.f32 %v3778, %v3779
      %v3781 = vsel %vm2555, %v1790, -inf
      %v3782 = vrot.slane %v3781, 4
      %v3783 = vmax.f32 %v3781, %v3782
      %v3784 = vrot.slane %v3783, 2
      %v3785 = vmax.f32 %v3783, %v3784
      %v3786 = vrot.slane %v3785, 1
      %v3787 = vmax.f32 %v3785, %v3786
      %v3788 = vsel %vm2555, %v1798, -inf
      %v3789 = vrot.slane %v3788, 4
      %v3790 = vmax.f32 %v3788, %v3789
      %v3791 = vrot.slane %v3790, 2
      %v3792 = vmax.f32 %v3790, %v3791
      %v3793 = vrot.slane %v3792, 1
      %v3794 = vmax.f32 %v3792, %v3793
      %v3795 = vsel %vm2555, %v1806, -inf
      %v3796 = vrot.slane %v3795, 4
      %v3797 = vmax.f32 %v3795, %v3796
      %v3798 = vrot.slane %v3797, 2
      %v3799 = vmax.f32 %v3797, %v3798
      %v3800 = vrot.slane %v3799, 1
      %v3801 = vmax.f32 %v3799, %v3800
      %v3802 = vsel %vm2555, %v1805, -inf
      %v3803 = vrot.slane %v3802, 4
      %v3804 = vmax.f32 %v3802, %v3803
      %v3805 = vrot.slane %v3804, 2
      %v3806 = vmax.f32 %v3804, %v3805
      %v3807 = vrot.slane %v3806, 1
      %v3808 = vmax.f32 %v3806, %v3807
      %v3809 = vsel %vm2555, %v1807, -inf
      %v3810 = vrot.slane %v3809, 4
      %v3811 = vmax.f32 %v3809, %v3810
      %v3812 = vrot.slane %v3811, 2
      %v3813 = vmax.f32 %v3811, %v3812
      %v3814 = vrot.slane %v3813, 1
      %v3815 = vmax.f32 %v3813, %v3814
      %v3816 = vsel %vm2555, %v1815, -inf
      %v3817 = vrot.slane %v3816, 4
      %v3818 = vmax.f32 %v3816, %v3817
      %v3819 = vrot.slane %v3818, 2
      %v3820 = vmax.f32 %v3818, %v3819
      %v3821 = vrot.slane %v3820, 1
      %v3822 = vmax.f32 %v3820, %v3821
      %v3823 = vsel %vm2555, %v1823, -inf
      %v3824 = vrot.slane %v3823, 4
      %v3825 = vmax.f32 %v3823, %v3824
      %v3826 = vrot.slane %v3825, 2
      %v3827 = vmax.f32 %v3825, %v3826
      %v3828 = vrot.slane %v3827, 1
      %v3829 = vmax.f32 %v3827, %v3828
      %v3830 = vsel %vm2555, %v1822, -inf
      %v3831 = vrot.slane %v3830, 4
      %v3832 = vmax.f32 %v3830, %v3831
      %v3833 = vrot.slane %v3832, 2
      %v3834 = vmax.f32 %v3832, %v3833
      %v3835 = vrot.slane %v3834, 1
      %v3836 = vmax.f32 %v3834, %v3835
      %v3837 = vsel %vm2555, %v1824, -inf
      %v3838 = vrot.slane %v3837, 4
      %v3839 = vmax.f32 %v3837, %v3838
      %v3840 = vrot.slane %v3839, 2
      %v3841 = vmax.f32 %v3839, %v3840
      %v3842 = vrot.slane %v3841, 1
      %v3843 = vmax.f32 %v3841, %v3842
      %v3844 = vsel %vm2555, %v1832, -inf
      %v3845 = vrot.slane %v3844, 4
      %v3846 = vmax.f32 %v3844, %v3845
      %v3847 = vrot.slane %v3846, 2
      %v3848 = vmax.f32 %v3846, %v3847
      %v3849 = vrot.slane %v3848, 1
      %v3850 = vmax.f32 %v3848, %v3849
      %v3851 = vsel %vm2555, %v1840, -inf
      %v3852 = vrot.slane %v3851, 4
      %v3853 = vmax.f32 %v3851, %v3852
      %v3854 = vrot.slane %v3853, 2
      %v3855 = vmax.f32 %v3853, %v3854
      %v3856 = vrot.slane %v3855, 1
      %v3857 = vmax.f32 %v3855, %v3856
      %v3858 = vsel %vm2555, %v1839, -inf
      %v3859 = vrot.slane %v3858, 4
      %v3860 = vmax.f32 %v3858, %v3859
      %v3861 = vrot.slane %v3860, 2
      %v3862 = vmax.f32 %v3860, %v3861
      %v3863 = vrot.slane %v3862, 1
      %v3864 = vmax.f32 %v3862, %v3863
      %v3865 = vsel %vm2555, %v1841, -inf
      %v3866 = vrot.slane %v3865, 4
      %v3867 = vmax.f32 %v3865, %v3866
      %v3868 = vrot.slane %v3867, 2
      %v3869 = vmax.f32 %v3867, %v3868
      %v3870 = vrot.slane %v3869, 1
      %v3871 = vmax.f32 %v3869, %v3870
      %v3872 = vsel %vm2555, %v1849, -inf
      %v3873 = vrot.slane %v3872, 4
      %v3874 = vmax.f32 %v3872, %v3873
      %v3875 = vrot.slane %v3874, 2
      %v3876 = vmax.f32 %v3874, %v3875
      %v3877 = vrot.slane %v3876, 1
      %v3878 = vmax.f32 %v3876, %v3877
      %v3879 = vsel %vm2555, %v1857, -inf
      %v3880 = vrot.slane %v3879, 4
      %v3881 = vmax.f32 %v3879, %v3880
      %v3882 = vrot.slane %v3881, 2
      %v3883 = vmax.f32 %v3881, %v3882
      %v3884 = vrot.slane %v3883, 1
      %v3885 = vmax.f32 %v3883, %v3884
      %v3886 = vsel %vm2555, %v1856, -inf
      %v3887 = vrot.slane %v3886, 4
      %v3888 = vmax.f32 %v3886, %v3887
      %v3889 = vrot.slane %v3888, 2
      %v3890 = vmax.f32 %v3888, %v3889
      %v3891 = vrot.slane %v3890, 1
      %v3892 = vmax.f32 %v3890, %v3891
      %v3893 = vsel %vm2555, %v1858, -inf
      %v3894 = vrot.slane %v3893, 4
      %v3895 = vmax.f32 %v3893, %v3894
      %v3896 = vrot.slane %v3895, 2
      %v3897 = vmax.f32 %v3895, %v3896
      %v3898 = vrot.slane %v3897, 1
      %v3899 = vmax.f32 %v3897, %v3898
      %v3900 = vsel %vm2555, %v1866, -inf
      %v3901 = vrot.slane %v3900, 4
      %v3902 = vmax.f32 %v3900, %v3901
      %v3903 = vrot.slane %v3902, 2
      %v3904 = vmax.f32 %v3902, %v3903
      %v3905 = vrot.slane %v3904, 1
      %v3906 = vmax.f32 %v3904, %v3905
      %v3907 = vsel %vm2555, %v1874, -inf
      %v3908 = vrot.slane %v3907, 4
      %v3909 = vmax.f32 %v3907, %v3908
      %v3910 = vrot.slane %v3909, 2
      %v3911 = vmax.f32 %v3909, %v3910
      %v3912 = vrot.slane %v3911, 1
      %v3913 = vmax.f32 %v3911, %v3912
      %v3914 = vsel %vm2555, %v1873, -inf
      %v3915 = vrot.slane %v3914, 4
      %v3916 = vmax.f32 %v3914, %v3915
      %v3917 = vrot.slane %v3916, 2
      %v3918 = vmax.f32 %v3916, %v3917
      %v3919 = vrot.slane %v3918, 1
      %v3920 = vmax.f32 %v3918, %v3919
      %v3921 = vsel %vm2555, %v1875, -inf
      %v3922 = vrot.slane %v3921, 4
      %v3923 = vmax.f32 %v3921, %v3922
      %v3924 = vrot.slane %v3923, 2
      %v3925 = vmax.f32 %v3923, %v3924
      %v3926 = vrot.slane %v3925, 1
      %v3927 = vmax.f32 %v3925, %v3926
      %v3928 = vsel %vm2555, %v1883, -inf
      %v3929 = vrot.slane %v3928, 4
      %v3930 = vmax.f32 %v3928, %v3929
      %v3931 = vrot.slane %v3930, 2
      %v3932 = vmax.f32 %v3930, %v3931
      %v3933 = vrot.slane %v3932, 1
      %v3934 = vmax.f32 %v3932, %v3933
      %v3935 = vsel %vm2555, %v1891, -inf
      %v3936 = vrot.slane %v3935, 4
      %v3937 = vmax.f32 %v3935, %v3936
      %v3938 = vrot.slane %v3937, 2
      %v3939 = vmax.f32 %v3937, %v3938
      %v3940 = vrot.slane %v3939, 1
      %v3941 = vmax.f32 %v3939, %v3940
      %v3942 = vsel %vm2555, %v1890, -inf
      %v3943 = vrot.slane %v3942, 4
      %v3944 = vmax.f32 %v3942, %v3943
      %v3945 = vrot.slane %v3944, 2
      %v3946 = vmax.f32 %v3944, %v3945
      %v3947 = vrot.slane %v3946, 1
      %v3948 = vmax.f32 %v3946, %v3947
      %v3949 = vsel %vm2555, %v1892, -inf
      %v3950 = vrot.slane %v3949, 4
      %v3951 = vmax.f32 %v3949, %v3950
      %v3952 = vrot.slane %v3951, 2
      %v3953 = vmax.f32 %v3951, %v3952
      %v3954 = vrot.slane %v3953, 1
      %v3955 = vmax.f32 %v3953, %v3954
      %v3956 = vsel %vm2555, %v1900, -inf
      %v3957 = vrot.slane %v3956, 4
      %v3958 = vmax.f32 %v3956, %v3957
      %v3959 = vrot.slane %v3958, 2
      %v3960 = vmax.f32 %v3958, %v3959
      %v3961 = vrot.slane %v3960, 1
      %v3962 = vmax.f32 %v3960, %v3961
      %v3963 = vsel %vm2555, %v1908, -inf
      %v3964 = vrot.slane %v3963, 4
      %v3965 = vmax.f32 %v3963, %v3964
      %v3966 = vrot.slane %v3965, 2
      %v3967 = vmax.f32 %v3965, %v3966
      %v3968 = vrot.slane %v3967, 1
      %v3969 = vmax.f32 %v3967, %v3968
      %v3970 = vsel %vm2555, %v1907, -inf
      %v3971 = vrot.slane %v3970, 4
      %v3972 = vmax.f32 %v3970, %v3971
      %v3973 = vrot.slane %v3972, 2
      %v3974 = vmax.f32 %v3972, %v3973
      %v3975 = vrot.slane %v3974, 1
      %v3976 = vmax.f32 %v3974, %v3975
      %v3977 = vsel %vm2555, %v1909, -inf
      %v3978 = vrot.slane %v3977, 4
      %v3979 = vmax.f32 %v3977, %v3978
      %v3980 = vrot.slane %v3979, 2
      %v3981 = vmax.f32 %v3979, %v3980
      %v3982 = vrot.slane %v3981, 1
      %v3983 = vmax.f32 %v3981, %v3982
      %v3984 = vsel %vm2555, %v1917, -inf
      %v3985 = vrot.slane %v3984, 4
      %v3986 = vmax.f32 %v3984, %v3985
      %v3987 = vrot.slane %v3986, 2
      %v3988 = vmax.f32 %v3986, %v3987
      %v3989 = vrot.slane %v3988, 1
      %v3990 = vmax.f32 %v3988, %v3989
      %v3991 = vsel %vm2555, %v1925, -inf
      %v3992 = vrot.slane %v3991, 4
      %v3993 = vmax.f32 %v3991, %v3992
      %v3994 = vrot.slane %v3993, 2
      %v3995 = vmax.f32 %v3993, %v3994
      %v3996 = vrot.slane %v3995, 1
      %v3997 = vmax.f32 %v3995, %v3996
      %v3998 = vsel %vm2555, %v1924, -inf
      %v3999 = vrot.slane %v3998, 4
      %v4000 = vmax.f32 %v3998, %v3999
      %v4001 = vrot.slane %v4000, 2
      %v4002 = vmax.f32 %v4000, %v4001
      %v4003 = vrot.slane %v4002, 1
      %v4004 = vmax.f32 %v4002, %v4003
      %v4005 = vsel %vm2555, %v1926, -inf
      %v4006 = vrot.slane %v4005, 4
      %v4007 = vmax.f32 %v4005, %v4006
      %v4008 = vrot.slane %v4007, 2
      %v4009 = vmax.f32 %v4007, %v4008
      %v4010 = vrot.slane %v4009, 1
      %v4011 = vmax.f32 %v4009, %v4010
      %v4012 = vsel %vm2555, %v1934, -inf
      %v4013 = vrot.slane %v4012, 4
      %v4014 = vmax.f32 %v4012, %v4013
      %v4015 = vrot.slane %v4014, 2
      %v4016 = vmax.f32 %v4014, %v4015
      %v4017 = vrot.slane %v4016, 1
      %v4018 = vmax.f32 %v4016, %v4017
      %v4019 = vsel %vm2555, %v1942, -inf
      %v4020 = vrot.slane %v4019, 4
      %v4021 = vmax.f32 %v4019, %v4020
      %v4022 = vrot.slane %v4021, 2
      %v4023 = vmax.f32 %v4021, %v4022
      %v4024 = vrot.slane %v4023, 1
      %v4025 = vmax.f32 %v4023, %v4024
      %v4026 = vsel %vm2555, %v1941, -inf
      %v4027 = vrot.slane %v4026, 4
      %v4028 = vmax.f32 %v4026, %v4027
      %v4029 = vrot.slane %v4028, 2
      %v4030 = vmax.f32 %v4028, %v4029
      %v4031 = vrot.slane %v4030, 1
      %v4032 = vmax.f32 %v4030, %v4031
      %v4033 = vsel %vm2555, %v1943, -inf
      %v4034 = vrot.slane %v4033, 4
      %v4035 = vmax.f32 %v4033, %v4034
      %v4036 = vrot.slane %v4035, 2
      %v4037 = vmax.f32 %v4035, %v4036
      %v4038 = vrot.slane %v4037, 1
      %v4039 = vmax.f32 %v4037, %v4038
      %v4040 = vsel %vm2555, %v1951, -inf
      %v4041 = vrot.slane %v4040, 4
      %v4042 = vmax.f32 %v4040, %v4041
      %v4043 = vrot.slane %v4042, 2
      %v4044 = vmax.f32 %v4042, %v4043
      %v4045 = vrot.slane %v4044, 1
      %v4046 = vmax.f32 %v4044, %v4045
      %v4047 = vsel %vm2555, %v1959, -inf
      %v4048 = vrot.slane %v4047, 4
      %v4049 = vmax.f32 %v4047, %v4048
      %v4050 = vrot.slane %v4049, 2
      %v4051 = vmax.f32 %v4049, %v4050
      %v4052 = vrot.slane %v4051, 1
      %v4053 = vmax.f32 %v4051, %v4052
      %v4054 = vsel %vm2555, %v1958, -inf
      %v4055 = vrot.slane %v4054, 4
      %v4056 = vmax.f32 %v4054, %v4055
      %v4057 = vrot.slane %v4056, 2
      %v4058 = vmax.f32 %v4056, %v4057
      %v4059 = vrot.slane %v4058, 1
      %v4060 = vmax.f32 %v4058, %v4059
      %v4061 = vsel %vm2555, %v1960, -inf
      %v4062 = vrot.slane %v4061, 4
      %v4063 = vmax.f32 %v4061, %v4062
      %v4064 = vrot.slane %v4063, 2
      %v4065 = vmax.f32 %v4063, %v4064
      %v4066 = vrot.slane %v4065, 1
      %v4067 = vmax.f32 %v4065, %v4066
      %v4068 = vsel %vm2555, %v1968, -inf
      %v4069 = vrot.slane %v4068, 4
      %v4070 = vmax.f32 %v4068, %v4069
      %v4071 = vrot.slane %v4070, 2
      %v4072 = vmax.f32 %v4070, %v4071
      %v4073 = vrot.slane %v4072, 1
      %v4074 = vmax.f32 %v4072, %v4073
      %v4075 = vsel %vm2555, %v1976, -inf
      %v4076 = vrot.slane %v4075, 4
      %v4077 = vmax.f32 %v4075, %v4076
      %v4078 = vrot.slane %v4077, 2
      %v4079 = vmax.f32 %v4077, %v4078
      %v4080 = vrot.slane %v4079, 1
      %v4081 = vmax.f32 %v4079, %v4080
      %v4082 = vsel %vm2555, %v1975, -inf
      %v4083 = vrot.slane %v4082, 4
      %v4084 = vmax.f32 %v4082, %v4083
      %v4085 = vrot.slane %v4084, 2
      %v4086 = vmax.f32 %v4084, %v4085
      %v4087 = vrot.slane %v4086, 1
      %v4088 = vmax.f32 %v4086, %v4087
      %v4089 = vsel %vm2555, %v1977, -inf
      %v4090 = vrot.slane %v4089, 4
      %v4091 = vmax.f32 %v4089, %v4090
      %v4092 = vrot.slane %v4091, 2
      %v4093 = vmax.f32 %v4091, %v4092
      %v4094 = vrot.slane %v4093, 1
      %v4095 = vmax.f32 %v4093, %v4094
      %v4096 = vsel %vm2555, %v1985, -inf
      %v4097 = vrot.slane %v4096, 4
      %v4098 = vmax.f32 %v4096, %v4097
      %v4099 = vrot.slane %v4098, 2
      %v4100 = vmax.f32 %v4098, %v4099
      %v4101 = vrot.slane %v4100, 1
      %v4102 = vmax.f32 %v4100, %v4101
      %v4103 = vsel %vm2555, %v1993, -inf
      %v4104 = vrot.slane %v4103, 4
      %v4105 = vmax.f32 %v4103, %v4104
      %v4106 = vrot.slane %v4105, 2
      %v4107 = vmax.f32 %v4105, %v4106
      %v4108 = vrot.slane %v4107, 1
      %v4109 = vmax.f32 %v4107, %v4108
      %v4110 = vsel %vm2555, %v1992, -inf
      %v4111 = vrot.slane %v4110, 4
      %v4112 = vmax.f32 %v4110, %v4111
      %v4113 = vrot.slane %v4112, 2
      %v4114 = vmax.f32 %v4112, %v4113
      %v4115 = vrot.slane %v4114, 1
      %v4116 = vmax.f32 %v4114, %v4115
      %v4117 = vsel %vm2555, %v1994, -inf
      %v4118 = vrot.slane %v4117, 4
      %v4119 = vmax.f32 %v4117, %v4118
      %v4120 = vrot.slane %v4119, 2
      %v4121 = vmax.f32 %v4119, %v4120
      %v4122 = vrot.slane %v4121, 1
      %v4123 = vmax.f32 %v4121, %v4122
      %v4124 = vsel %vm2555, %v2002, -inf
      %v4125 = vrot.slane %v4124, 4
      %v4126 = vmax.f32 %v4124, %v4125
      %v4127 = vrot.slane %v4126, 2
      %v4128 = vmax.f32 %v4126, %v4127
      %v4129 = vrot.slane %v4128, 1
      %v4130 = vmax.f32 %v4128, %v4129
      %v4131 = vsel %vm2555, %v2010, -inf
      %v4132 = vrot.slane %v4131, 4
      %v4133 = vmax.f32 %v4131, %v4132
      %v4134 = vrot.slane %v4133, 2
      %v4135 = vmax.f32 %v4133, %v4134
      %v4136 = vrot.slane %v4135, 1
      %v4137 = vmax.f32 %v4135, %v4136
      %v4138 = vsel %vm2555, %v2009, -inf
      %v4139 = vrot.slane %v4138, 4
      %v4140 = vmax.f32 %v4138, %v4139
      %v4141 = vrot.slane %v4140, 2
      %v4142 = vmax.f32 %v4140, %v4141
      %v4143 = vrot.slane %v4142, 1
      %v4144 = vmax.f32 %v4142, %v4143
      %v4145 = vsel %vm2555, %v2011, -inf
      %v4146 = vrot.slane %v4145, 4
      %v4147 = vmax.f32 %v4145, %v4146
      %v4148 = vrot.slane %v4147, 2
      %v4149 = vmax.f32 %v4147, %v4148
      %v4150 = vrot.slane %v4149, 1
      %v4151 = vmax.f32 %v4149, %v4150
      %v4152 = vsel %vm2555, %v2019, -inf
      %v4153 = vrot.slane %v4152, 4
      %v4154 = vmax.f32 %v4152, %v4153
      %v4155 = vrot.slane %v4154, 2
      %v4156 = vmax.f32 %v4154, %v4155
      %v4157 = vrot.slane %v4156, 1
      %v4158 = vmax.f32 %v4156, %v4157
      %v4159 = vsel %vm2555, %v2027, -inf
      %v4160 = vrot.slane %v4159, 4
      %v4161 = vmax.f32 %v4159, %v4160
      %v4162 = vrot.slane %v4161, 2
      %v4163 = vmax.f32 %v4161, %v4162
      %v4164 = vrot.slane %v4163, 1
      %v4165 = vmax.f32 %v4163, %v4164
      %v4166 = vsel %vm2555, %v2026, -inf
      %v4167 = vrot.slane %v4166, 4
      %v4168 = vmax.f32 %v4166, %v4167
      %v4169 = vrot.slane %v4168, 2
      %v4170 = vmax.f32 %v4168, %v4169
      %v4171 = vrot.slane %v4170, 1
      %v4172 = vmax.f32 %v4170, %v4171
      %v4173 = vsel %vm2555, %v2028, -inf
      %v4174 = vrot.slane %v4173, 4
      %v4175 = vmax.f32 %v4173, %v4174
      %v4176 = vrot.slane %v4175, 2
      %v4177 = vmax.f32 %v4175, %v4176
      %v4178 = vrot.slane %v4177, 1
      %v4179 = vmax.f32 %v4177, %v4178
      %v4180 = vsel %vm2555, %v2036, -inf
      %v4181 = vrot.slane %v4180, 4
      %v4182 = vmax.f32 %v4180, %v4181
      %v4183 = vrot.slane %v4182, 2
      %v4184 = vmax.f32 %v4182, %v4183
      %v4185 = vrot.slane %v4184, 1
      %v4186 = vmax.f32 %v4184, %v4185
      %v4187 = vsel %vm2555, %v2044, -inf
      %v4188 = vrot.slane %v4187, 4
      %v4189 = vmax.f32 %v4187, %v4188
      %v4190 = vrot.slane %v4189, 2
      %v4191 = vmax.f32 %v4189, %v4190
      %v4192 = vrot.slane %v4191, 1
      %v4193 = vmax.f32 %v4191, %v4192
      %v4194 = vsel %vm2555, %v2043, -inf
      %v4195 = vrot.slane %v4194, 4
      %v4196 = vmax.f32 %v4194, %v4195
      %v4197 = vrot.slane %v4196, 2
      %v4198 = vmax.f32 %v4196, %v4197
      %v4199 = vrot.slane %v4198, 1
      %v4200 = vmax.f32 %v4198, %v4199
      %v4201 = vsel %vm2555, %v2045, -inf
      %v4202 = vrot.slane %v4201, 4
      %v4203 = vmax.f32 %v4201, %v4202
      %v4204 = vrot.slane %v4203, 2
      %v4205 = vmax.f32 %v4203, %v4204
      %v4206 = vrot.slane %v4205, 1
      %v4207 = vmax.f32 %v4205, %v4206
      %v4208 = vsel %vm2555, %v2053, -inf
      %v4209 = vrot.slane %v4208, 4
      %v4210 = vmax.f32 %v4208, %v4209
      %v4211 = vrot.slane %v4210, 2
      %v4212 = vmax.f32 %v4210, %v4211
      %v4213 = vrot.slane %v4212, 1
      %v4214 = vmax.f32 %v4212, %v4213
      %v4215 = vsel %vm2555, %v2061, -inf
      %v4216 = vrot.slane %v4215, 4
      %v4217 = vmax.f32 %v4215, %v4216
      %v4218 = vrot.slane %v4217, 2
      %v4219 = vmax.f32 %v4217, %v4218
      %v4220 = vrot.slane %v4219, 1
      %v4221 = vmax.f32 %v4219, %v4220
      %v4222 = vsel %vm2555, %v2060, -inf
      %v4223 = vrot.slane %v4222, 4
      %v4224 = vmax.f32 %v4222, %v4223
      %v4225 = vrot.slane %v4224, 2
      %v4226 = vmax.f32 %v4224, %v4225
      %v4227 = vrot.slane %v4226, 1
      %v4228 = vmax.f32 %v4226, %v4227
      %v4229 = vsel %vm2555, %v2062, -inf
      %v4230 = vrot.slane %v4229, 4
      %v4231 = vmax.f32 %v4229, %v4230
      %v4232 = vrot.slane %v4231, 2
      %v4233 = vmax.f32 %v4231, %v4232
      %v4234 = vrot.slane %v4233, 1
      %v4235 = vmax.f32 %v4233, %v4234
      %v4236 = vsel %vm2555, %v2070, -inf
      %v4237 = vrot.slane %v4236, 4
      %v4238 = vmax.f32 %v4236, %v4237
      %v4239 = vrot.slane %v4238, 2
      %v4240 = vmax.f32 %v4238, %v4239
      %v4241 = vrot.slane %v4240, 1
      %v4242 = vmax.f32 %v4240, %v4241
      %v4243 = vsel %vm2555, %v2078, -inf
      %v4244 = vrot.slane %v4243, 4
      %v4245 = vmax.f32 %v4243, %v4244
      %v4246 = vrot.slane %v4245, 2
      %v4247 = vmax.f32 %v4245, %v4246
      %v4248 = vrot.slane %v4247, 1
      %v4249 = vmax.f32 %v4247, %v4248
      %v4250 = vsel %vm2555, %v2077, -inf
      %v4251 = vrot.slane %v4250, 4
      %v4252 = vmax.f32 %v4250, %v4251
      %v4253 = vrot.slane %v4252, 2
      %v4254 = vmax.f32 %v4252, %v4253
      %v4255 = vrot.slane %v4254, 1
      %v4256 = vmax.f32 %v4254, %v4255
      %v4257 = vsel %vm2555, %v2079, -inf
      %v4258 = vrot.slane %v4257, 4
      %v4259 = vmax.f32 %v4257, %v4258
      %v4260 = vrot.slane %v4259, 2
      %v4261 = vmax.f32 %v4259, %v4260
      %v4262 = vrot.slane %v4261, 1
      %v4263 = vmax.f32 %v4261, %v4262
      %v4264 = vsel %vm2555, %v2087, -inf
      %v4265 = vrot.slane %v4264, 4
      %v4266 = vmax.f32 %v4264, %v4265
      %v4267 = vrot.slane %v4266, 2
      %v4268 = vmax.f32 %v4266, %v4267
      %v4269 = vrot.slane %v4268, 1
      %v4270 = vmax.f32 %v4268, %v4269
      %v4271 = vsel %vm2555, %v2095, -inf
      %v4272 = vrot.slane %v4271, 4
      %v4273 = vmax.f32 %v4271, %v4272
      %v4274 = vrot.slane %v4273, 2
      %v4275 = vmax.f32 %v4273, %v4274
      %v4276 = vrot.slane %v4275, 1
      %v4277 = vmax.f32 %v4275, %v4276
      %v4278 = vsel %vm2555, %v2094, -inf
      %v4279 = vrot.slane %v4278, 4
      %v4280 = vmax.f32 %v4278, %v4279
      %v4281 = vrot.slane %v4280, 2
      %v4282 = vmax.f32 %v4280, %v4281
      %v4283 = vrot.slane %v4282, 1
      %v4284 = vmax.f32 %v4282, %v4283
      %v4285 = vsel %vm2555, %v2096, -inf
      %v4286 = vrot.slane %v4285, 4
      %v4287 = vmax.f32 %v4285, %v4286
      %v4288 = vrot.slane %v4287, 2
      %v4289 = vmax.f32 %v4287, %v4288
      %v4290 = vrot.slane %v4289, 1
      %v4291 = vmax.f32 %v4289, %v4290
      %v4292 = vsel %vm2555, %v2104, -inf
      %v4293 = vrot.slane %v4292, 4
      %v4294 = vmax.f32 %v4292, %v4293
      %v4295 = vrot.slane %v4294, 2
      %v4296 = vmax.f32 %v4294, %v4295
      %v4297 = vrot.slane %v4296, 1
      %v4298 = vmax.f32 %v4296, %v4297
      %v4299 = vsel %vm2555, %v2112, -inf
      %v4300 = vrot.slane %v4299, 4
      %v4301 = vmax.f32 %v4299, %v4300
      %v4302 = vrot.slane %v4301, 2
      %v4303 = vmax.f32 %v4301, %v4302
      %v4304 = vrot.slane %v4303, 1
      %v4305 = vmax.f32 %v4303, %v4304
      %v4306 = vsel %vm2555, %v2111, -inf
      %v4307 = vrot.slane %v4306, 4
      %v4308 = vmax.f32 %v4306, %v4307
      %v4309 = vrot.slane %v4308, 2
      %v4310 = vmax.f32 %v4308, %v4309
      %v4311 = vrot.slane %v4310, 1
      %v4312 = vmax.f32 %v4310, %v4311
      %v4313 = vsel %vm2555, %v2113, -inf
      %v4314 = vrot.slane %v4313, 4
      %v4315 = vmax.f32 %v4313, %v4314
      %v4316 = vrot.slane %v4315, 2
      %v4317 = vmax.f32 %v4315, %v4316
      %v4318 = vrot.slane %v4317, 1
      %v4319 = vmax.f32 %v4317, %v4318
      %v4320 = vsel %vm2555, %v2121, -inf
      %v4321 = vrot.slane %v4320, 4
      %v4322 = vmax.f32 %v4320, %v4321
      %v4323 = vrot.slane %v4322, 2
      %v4324 = vmax.f32 %v4322, %v4323
      %v4325 = vrot.slane %v4324, 1
      %v4326 = vmax.f32 %v4324, %v4325
      %v4327 = vsel %vm2555, %v2129, -inf
      %v4328 = vrot.slane %v4327, 4
      %v4329 = vmax.f32 %v4327, %v4328
      %v4330 = vrot.slane %v4329, 2
      %v4331 = vmax.f32 %v4329, %v4330
      %v4332 = vrot.slane %v4331, 1
      %v4333 = vmax.f32 %v4331, %v4332
      %v4334 = vsel %vm2555, %v2128, -inf
      %v4335 = vrot.slane %v4334, 4
      %v4336 = vmax.f32 %v4334, %v4335
      %v4337 = vrot.slane %v4336, 2
      %v4338 = vmax.f32 %v4336, %v4337
      %v4339 = vrot.slane %v4338, 1
      %v4340 = vmax.f32 %v4338, %v4339
      %v4341 = vsel %vm2555, %v2130, -inf
      %v4342 = vrot.slane %v4341, 4
      %v4343 = vmax.f32 %v4341, %v4342
      %v4344 = vrot.slane %v4343, 2
      %v4345 = vmax.f32 %v4343, %v4344
      %v4346 = vrot.slane %v4345, 1
      %v4347 = vmax.f32 %v4345, %v4346
      %v4348 = vsel %vm2555, %v2138, -inf
      %v4349 = vrot.slane %v4348, 4
      %v4350 = vmax.f32 %v4348, %v4349
      %v4351 = vrot.slane %v4350, 2
      %v4352 = vmax.f32 %v4350, %v4351
      %v4353 = vrot.slane %v4352, 1
      %v4354 = vmax.f32 %v4352, %v4353
      %v4355 = vsel %vm2555, %v2146, -inf
      %v4356 = vrot.slane %v4355, 4
      %v4357 = vmax.f32 %v4355, %v4356
      %v4358 = vrot.slane %v4357, 2
      %v4359 = vmax.f32 %v4357, %v4358
      %v4360 = vrot.slane %v4359, 1
      %v4361 = vmax.f32 %v4359, %v4360
      %v4362 = vsel %vm2555, %v2145, -inf
      %v4363 = vrot.slane %v4362, 4
      %v4364 = vmax.f32 %v4362, %v4363
      %v4365 = vrot.slane %v4364, 2
      %v4366 = vmax.f32 %v4364, %v4365
      %v4367 = vrot.slane %v4366, 1
      %v4368 = vmax.f32 %v4366, %v4367
      %v4369 = vsel %vm2555, %v2147, -inf
      %v4370 = vrot.slane %v4369, 4
      %v4371 = vmax.f32 %v4369, %v4370
      %v4372 = vrot.slane %v4371, 2
      %v4373 = vmax.f32 %v4371, %v4372
      %v4374 = vrot.slane %v4373, 1
      %v4375 = vmax.f32 %v4373, %v4374
      %v4376 = vsel %vm2555, %v2155, -inf
      %v4377 = vrot.slane %v4376, 4
      %v4378 = vmax.f32 %v4376, %v4377
      %v4379 = vrot.slane %v4378, 2
      %v4380 = vmax.f32 %v4378, %v4379
      %v4381 = vrot.slane %v4380, 1
      %v4382 = vmax.f32 %v4380, %v4381
      %v4383 = vsel %vm2555, %v2163, -inf
      %v4384 = vrot.slane %v4383, 4
      %v4385 = vmax.f32 %v4383, %v4384
      %v4386 = vrot.slane %v4385, 2
      %v4387 = vmax.f32 %v4385, %v4386
      %v4388 = vrot.slane %v4387, 1
      %v4389 = vmax.f32 %v4387, %v4388
      %v4390 = vsel %vm2555, %v2162, -inf
      %v4391 = vrot.slane %v4390, 4
      %v4392 = vmax.f32 %v4390, %v4391
      %v4393 = vrot.slane %v4392, 2
      %v4394 = vmax.f32 %v4392, %v4393
      %v4395 = vrot.slane %v4394, 1
      %v4396 = vmax.f32 %v4394, %v4395
      %v4397 = vsel %vm2555, %v2164, -inf
      %v4398 = vrot.slane %v4397, 4
      %v4399 = vmax.f32 %v4397, %v4398
      %v4400 = vrot.slane %v4399, 2
      %v4401 = vmax.f32 %v4399, %v4400
      %v4402 = vrot.slane %v4401, 1
      %v4403 = vmax.f32 %v4401, %v4402
      %v4404 = vsel %vm2555, %v2172, -inf
      %v4405 = vrot.slane %v4404, 4
      %v4406 = vmax.f32 %v4404, %v4405
      %v4407 = vrot.slane %v4406, 2
      %v4408 = vmax.f32 %v4406, %v4407
      %v4409 = vrot.slane %v4408, 1
      %v4410 = vmax.f32 %v4408, %v4409
      %v4411 = vsel %vm2555, %v2180, -inf
      %v4412 = vrot.slane %v4411, 4
      %v4413 = vmax.f32 %v4411, %v4412
      %v4414 = vrot.slane %v4413, 2
      %v4415 = vmax.f32 %v4413, %v4414
      %v4416 = vrot.slane %v4415, 1
      %v4417 = vmax.f32 %v4415, %v4416
      %v4418 = vsel %vm2555, %v2179, -inf
      %v4419 = vrot.slane %v4418, 4
      %v4420 = vmax.f32 %v4418, %v4419
      %v4421 = vrot.slane %v4420, 2
      %v4422 = vmax.f32 %v4420, %v4421
      %v4423 = vrot.slane %v4422, 1
      %v4424 = vmax.f32 %v4422, %v4423
      %v4425 = vsel %vm2555, %v2181, -inf
      %v4426 = vrot.slane %v4425, 4
      %v4427 = vmax.f32 %v4425, %v4426
      %v4428 = vrot.slane %v4427, 2
      %v4429 = vmax.f32 %v4427, %v4428
      %v4430 = vrot.slane %v4429, 1
      %v4431 = vmax.f32 %v4429, %v4430
      %v4432 = vsel %vm2555, %v2189, -inf
      %v4433 = vrot.slane %v4432, 4
      %v4434 = vmax.f32 %v4432, %v4433
      %v4435 = vrot.slane %v4434, 2
      %v4436 = vmax.f32 %v4434, %v4435
      %v4437 = vrot.slane %v4436, 1
      %v4438 = vmax.f32 %v4436, %v4437
      %v4439 = vsel %vm2555, %v2197, -inf
      %v4440 = vrot.slane %v4439, 4
      %v4441 = vmax.f32 %v4439, %v4440
      %v4442 = vrot.slane %v4441, 2
      %v4443 = vmax.f32 %v4441, %v4442
      %v4444 = vrot.slane %v4443, 1
      %v4445 = vmax.f32 %v4443, %v4444
      %v4446 = vsel %vm2555, %v2196, -inf
      %v4447 = vrot.slane %v4446, 4
      %v4448 = vmax.f32 %v4446, %v4447
      %v4449 = vrot.slane %v4448, 2
      %v4450 = vmax.f32 %v4448, %v4449
      %v4451 = vrot.slane %v4450, 1
      %v4452 = vmax.f32 %v4450, %v4451
      %v4453 = vsel %vm2555, %v2198, -inf
      %v4454 = vrot.slane %v4453, 4
      %v4455 = vmax.f32 %v4453, %v4454
      %v4456 = vrot.slane %v4455, 2
      %v4457 = vmax.f32 %v4455, %v4456
      %v4458 = vrot.slane %v4457, 1
      %v4459 = vmax.f32 %v4457, %v4458
      %v4460 = vsel %vm2555, %v2206, -inf
      %v4461 = vrot.slane %v4460, 4
      %v4462 = vmax.f32 %v4460, %v4461
      %v4463 = vrot.slane %v4462, 2
      %v4464 = vmax.f32 %v4462, %v4463
      %v4465 = vrot.slane %v4464, 1
      %v4466 = vmax.f32 %v4464, %v4465
      %v4467 = vsel %vm2555, %v2214, -inf
      %v4468 = vrot.slane %v4467, 4
      %v4469 = vmax.f32 %v4467, %v4468
      %v4470 = vrot.slane %v4469, 2
      %v4471 = vmax.f32 %v4469, %v4470
      %v4472 = vrot.slane %v4471, 1
      %v4473 = vmax.f32 %v4471, %v4472
      %v4474 = vsel %vm2555, %v2213, -inf
      %v4475 = vrot.slane %v4474, 4
      %v4476 = vmax.f32 %v4474, %v4475
      %v4477 = vrot.slane %v4476, 2
      %v4478 = vmax.f32 %v4476, %v4477
      %v4479 = vrot.slane %v4478, 1
      %v4480 = vmax.f32 %v4478, %v4479
      %v4481 = vsel %vm2555, %v2215, -inf
      %v4482 = vrot.slane %v4481, 4
      %v4483 = vmax.f32 %v4481, %v4482
      %v4484 = vrot.slane %v4483, 2
      %v4485 = vmax.f32 %v4483, %v4484
      %v4486 = vrot.slane %v4485, 1
      %v4487 = vmax.f32 %v4485, %v4486
      %v4488 = vsel %vm2555, %v2223, -inf
      %v4489 = vrot.slane %v4488, 4
      %v4490 = vmax.f32 %v4488, %v4489
      %v4491 = vrot.slane %v4490, 2
      %v4492 = vmax.f32 %v4490, %v4491
      %v4493 = vrot.slane %v4492, 1
      %v4494 = vmax.f32 %v4492, %v4493
      %v4495 = vsel %vm2555, %v2231, -inf
      %v4496 = vrot.slane %v4495, 4
      %v4497 = vmax.f32 %v4495, %v4496
      %v4498 = vrot.slane %v4497, 2
      %v4499 = vmax.f32 %v4497, %v4498
      %v4500 = vrot.slane %v4499, 1
      %v4501 = vmax.f32 %v4499, %v4500
      %v4502 = vsel %vm2555, %v2230, -inf
      %v4503 = vrot.slane %v4502, 4
      %v4504 = vmax.f32 %v4502, %v4503
      %v4505 = vrot.slane %v4504, 2
      %v4506 = vmax.f32 %v4504, %v4505
      %v4507 = vrot.slane %v4506, 1
      %v4508 = vmax.f32 %v4506, %v4507
      %v4509 = vsel %vm2555, %v2232, -inf
      %v4510 = vrot.slane %v4509, 4
      %v4511 = vmax.f32 %v4509, %v4510
      %v4512 = vrot.slane %v4511, 2
      %v4513 = vmax.f32 %v4511, %v4512
      %v4514 = vrot.slane %v4513, 1
      %v4515 = vmax.f32 %v4513, %v4514
      %v4516 = vsel %vm2555, %v2240, -inf
      %v4517 = vrot.slane %v4516, 4
      %v4518 = vmax.f32 %v4516, %v4517
      %v4519 = vrot.slane %v4518, 2
      %v4520 = vmax.f32 %v4518, %v4519
      %v4521 = vrot.slane %v4520, 1
      %v4522 = vmax.f32 %v4520, %v4521
      %v4523 = vsel %vm2555, %v2248, -inf
      %v4524 = vrot.slane %v4523, 4
      %v4525 = vmax.f32 %v4523, %v4524
      %v4526 = vrot.slane %v4525, 2
      %v4527 = vmax.f32 %v4525, %v4526
      %v4528 = vrot.slane %v4527, 1
      %v4529 = vmax.f32 %v4527, %v4528
      %v4530 = vsel %vm2555, %v2247, -inf
      %v4531 = vrot.slane %v4530, 4
      %v4532 = vmax.f32 %v4530, %v4531
      %v4533 = vrot.slane %v4532, 2
      %v4534 = vmax.f32 %v4532, %v4533
      %v4535 = vrot.slane %v4534, 1
      %v4536 = vmax.f32 %v4534, %v4535
      %v4537 = vsel %vm2555, %v2249, -inf
      %v4538 = vrot.slane %v4537, 4
      %v4539 = vmax.f32 %v4537, %v4538
      %v4540 = vrot.slane %v4539, 2
      %v4541 = vmax.f32 %v4539, %v4540
      %v4542 = vrot.slane %v4541, 1
      %v4543 = vmax.f32 %v4541, %v4542
      %v4544 = vsel %vm2555, %v2257, -inf
      %v4545 = vrot.slane %v4544, 4
      %v4546 = vmax.f32 %v4544, %v4545
      %v4547 = vrot.slane %v4546, 2
      %v4548 = vmax.f32 %v4546, %v4547
      %v4549 = vrot.slane %v4548, 1
      %v4550 = vmax.f32 %v4548, %v4549
      %v4551 = vsel %vm2555, %v2265, -inf
      %v4552 = vrot.slane %v4551, 4
      %v4553 = vmax.f32 %v4551, %v4552
      %v4554 = vrot.slane %v4553, 2
      %v4555 = vmax.f32 %v4553, %v4554
      %v4556 = vrot.slane %v4555, 1
      %v4557 = vmax.f32 %v4555, %v4556
      %v4558 = vsel %vm2555, %v2264, -inf
      %v4559 = vrot.slane %v4558, 4
      %v4560 = vmax.f32 %v4558, %v4559
      %v4561 = vrot.slane %v4560, 2
      %v4562 = vmax.f32 %v4560, %v4561
      %v4563 = vrot.slane %v4562, 1
      %v4564 = vmax.f32 %v4562, %v4563
      %v4565 = vsel %vm2555, %v2266, -inf
      %v4566 = vrot.slane %v4565, 4
      %v4567 = vmax.f32 %v4565, %v4566
      %v4568 = vrot.slane %v4567, 2
      %v4569 = vmax.f32 %v4567, %v4568
      %v4570 = vrot.slane %v4569, 1
      %v4571 = vmax.f32 %v4569, %v4570
      %v4572 = vmax.f32 %v2562, %v2646
      %v4573 = vmax.f32 %v2569, %v2653
      %v4574 = vmax.f32 %v2576, %v2660
      %v4575 = vmax.f32 %v2583, %v2667
      %v4576 = vmax.f32 %v2590, %v2674
      %v4577 = vmax.f32 %v2597, %v2681
      %v4578 = vmax.f32 %v2604, %v2688
      %v4579 = vmax.f32 %v2611, %v2695
      %v4580 = vmax.f32 %v2618, %v2702
      %v4581 = vmax.f32 %v2625, %v2709
      %v4582 = vmax.f32 %v2632, %v2716
      %v4583 = vmax.f32 %v2639, %v2723
      %v4584 = vmax.f32 %v2730, %v2814
      %v4585 = vmax.f32 %v2737, %v2821
      %v4586 = vmax.f32 %v2744, %v2828
      %v4587 = vmax.f32 %v2751, %v2835
      %v4588 = vmax.f32 %v2758, %v2842
      %v4589 = vmax.f32 %v2765, %v2849
      %v4590 = vmax.f32 %v2772, %v2856
      %v4591 = vmax.f32 %v2779, %v2863
      %v4592 = vmax.f32 %v2786, %v2870
      %v4593 = vmax.f32 %v2793, %v2877
      %v4594 = vmax.f32 %v2800, %v2884
      %v4595 = vmax.f32 %v2807, %v2891
      %v4596 = vmax.f32 %v2898, %v2982
      %v4597 = vmax.f32 %v2905, %v2989
      %v4598 = vmax.f32 %v2912, %v2996
      %v4599 = vmax.f32 %v2919, %v3003
      %v4600 = vmax.f32 %v2926, %v3010
      %v4601 = vmax.f32 %v2933, %v3017
      %v4602 = vmax.f32 %v2940, %v3024
      %v4603 = vmax.f32 %v2947, %v3031
      %v4604 = vmax.f32 %v2954, %v3038
      %v4605 = vmax.f32 %v2961, %v3045
      %v4606 = vmax.f32 %v2968, %v3052
      %v4607 = vmax.f32 %v2975, %v3059
      %v4608 = vmax.f32 %v3066, %v3150
      %v4609 = vmax.f32 %v3073, %v3157
      %v4610 = vmax.f32 %v3080, %v3164
      %v4611 = vmax.f32 %v3087, %v3171
      %v4612 = vmax.f32 %v3094, %v3178
      %v4613 = vmax.f32 %v3101, %v3185
      %v4614 = vmax.f32 %v3108, %v3192
      %v4615 = vmax.f32 %v3115, %v3199
      %v4616 = vmax.f32 %v3122, %v3206
      %v4617 = vmax.f32 %v3129, %v3213
      %v4618 = vmax.f32 %v3136, %v3220
      %v4619 = vmax.f32 %v3143, %v3227
      %v4620 = vmax.f32 %v3234, %v3318
      %v4621 = vmax.f32 %v3241, %v3325
      %v4622 = vmax.f32 %v3248, %v3332
      %v4623 = vmax.f32 %v3255, %v3339
      %v4624 = vmax.f32 %v3262, %v3346
      %v4625 = vmax.f32 %v3269, %v3353
      %v4626 = vmax.f32 %v3276, %v3360
      %v4627 = vmax.f32 %v3283, %v3367
      %v4628 = vmax.f32 %v3290, %v3374
      %v4629 = vmax.f32 %v3297, %v3381
      %v4630 = vmax.f32 %v3304, %v3388
      %v4631 = vmax.f32 %v3311, %v3395
      %v4632 = vmax.f32 %v3402, %v3486
      %v4633 = vmax.f32 %v3409, %v3493
      %v4634 = vmax.f32 %v3416, %v3500
      %v4635 = vmax.f32 %v3423, %v3507
      %v4636 = vmax.f32 %v3430, %v3514
      %v4637 = vmax.f32 %v3437, %v3521
      %v4638 = vmax.f32 %v3444, %v3528
      %v4639 = vmax.f32 %v3451, %v3535
      %v4640 = vmax.f32 %v3458, %v3542
      %v4641 = vmax.f32 %v3465, %v3549
      %v4642 = vmax.f32 %v3472, %v3556
      %v4643 = vmax.f32 %v3479, %v3563
      %v4644 = vmax.f32 %v3570, %v3654
      %v4645 = vmax.f32 %v3577, %v3661
      %v4646 = vmax.f32 %v3584, %v3668
      %v4647 = vmax.f32 %v3591, %v3675
      %v4648 = vmax.f32 %v3598, %v3682
      %v4649 = vmax.f32 %v3605, %v3689
      %v4650 = vmax.f32 %v3612, %v3696
      %v4651 = vmax.f32 %v3619, %v3703
      %v4652 = vmax.f32 %v3626, %v3710
      %v4653 = vmax.f32 %v3633, %v3717
      %v4654 = vmax.f32 %v3640, %v3724
      %v4655 = vmax.f32 %v3647, %v3731
      %v4656 = vmax.f32 %v3738, %v3822
      %v4657 = vmax.f32 %v3745, %v3829
      %v4658 = vmax.f32 %v3752, %v3836
      %v4659 = vmax.f32 %v3759, %v3843
      %v4660 = vmax.f32 %v3766, %v3850
      %v4661 = vmax.f32 %v3773, %v3857
      %v4662 = vmax.f32 %v3780, %v3864
      %v4663 = vmax.f32 %v3787, %v3871
      %v4664 = vmax.f32 %v3794, %v3878
      %v4665 = vmax.f32 %v3801, %v3885
      %v4666 = vmax.f32 %v3808, %v3892
      %v4667 = vmax.f32 %v3815, %v3899
      %v4668 = vmax.f32 %v3906, %v3990
      %v4669 = vmax.f32 %v3913, %v3997
      %v4670 = vmax.f32 %v3920, %v4004
      %v4671 = vmax.f32 %v3927, %v4011
      %v4672 = vmax.f32 %v3934, %v4018
      %v4673 = vmax.f32 %v3941, %v4025
      %v4674 = vmax.f32 %v3948, %v4032
      %v4675 = vmax.f32 %v3955, %v4039
      %v4676 = vmax.f32 %v3962, %v4046
      %v4677 = vmax.f32 %v3969, %v4053
      %v4678 = vmax.f32 %v3976, %v4060
      %v4679 = vmax.f32 %v3983, %v4067
      %v4680 = vmax.f32 %v4074, %v4158
      %v4681 = vmax.f32 %v4081, %v4165
      %v4682 = vmax.f32 %v4088, %v4172
      %v4683 = vmax.f32 %v4095, %v4179
      %v4684 = vmax.f32 %v4102, %v4186
      %v4685 = vmax.f32 %v4109, %v4193
      %v4686 = vmax.f32 %v4116, %v4200
      %v4687 = vmax.f32 %v4123, %v4207
      %v4688 = vmax.f32 %v4130, %v4214
      %v4689 = vmax.f32 %v4137, %v4221
      %v4690 = vmax.f32 %v4144, %v4228
      %v4691 = vmax.f32 %v4151, %v4235
      %v4692 = vmax.f32 %v4242, %v4326
      %v4693 = vmax.f32 %v4249, %v4333
      %v4694 = vmax.f32 %v4256, %v4340
      %v4695 = vmax.f32 %v4263, %v4347
      %v4696 = vmax.f32 %v4270, %v4354
      %v4697 = vmax.f32 %v4277, %v4361
      %v4698 = vmax.f32 %v4284, %v4368
      %v4699 = vmax.f32 %v4291, %v4375
      %v4700 = vmax.f32 %v4298, %v4382
      %v4701 = vmax.f32 %v4305, %v4389
      %v4702 = vmax.f32 %v4312, %v4396
      %v4703 = vmax.f32 %v4319, %v4403
      %v4704 = vmax.f32 %v4410, %v4494
      %v4705 = vmax.f32 %v4417, %v4501
      %v4706 = vmax.f32 %v4424, %v4508
      %v4707 = vmax.f32 %v4431, %v4515
      %v4708 = vmax.f32 %v4438, %v4522
      %v4709 = vmax.f32 %v4445, %v4529
      %v4710 = vmax.f32 %v4452, %v4536
      %v4711 = vmax.f32 %v4459, %v4543
      %v4712 = vmax.f32 %v4466, %v4550
      %v4713 = vmax.f32 %v4473, %v4557
      %v4714 = vmax.f32 %v4480, %v4564
      %v4715 = vmax.f32 %v4487, %v4571
      %vm4860 = vcmask 1041409
      %v4861 = vsel %vm4860, %v4573, %v4572
      %vm4862 = vcmask 1042434
      %v4863 = vsel %vm4862, %v4574, %v4861
      %vm4864 = vcmask 1043459
      %v4865 = vsel %vm4864, %v4575, %v4863
      %vm4866 = vcmask 1044484
      %v4867 = vsel %vm4866, %v4576, %v4865
      %vm4868 = vcmask 1045509
      %v4869 = vsel %vm4868, %v4577, %v4867
      %vm4870 = vcmask 1046534
      %v4871 = vsel %vm4870, %v4578, %v4869
      %vm4872 = vcmask 1047559
      %v4873 = vsel %vm4872, %v4579, %v4871
      %v4874 = vsel %vm4860, %v4581, %v4580
      %v4875 = vsel %vm4862, %v4582, %v4874
      %v4876 = vsel %vm4864, %v4583, %v4875
      %v4877 = vsel %vm4866, %v4584, %v4876
      %v4878 = vsel %vm4868, %v4585, %v4877
      %v4879 = vsel %vm4870, %v4586, %v4878
      %v4880 = vsel %vm4872, %v4587, %v4879
      %v4881 = vsel %vm4860, %v4589, %v4588
      %v4882 = vsel %vm4862, %v4590, %v4881
      %v4883 = vsel %vm4864, %v4591, %v4882
      %v4884 = vsel %vm4866, %v4592, %v4883
      %v4885 = vsel %vm4868, %v4593, %v4884
      %v4886 = vsel %vm4870, %v4594, %v4885
      %v4887 = vsel %vm4872, %v4595, %v4886
      %v4888 = vsel %vm4860, %v4597, %v4596
      %v4889 = vsel %vm4862, %v4598, %v4888
      %v4890 = vsel %vm4864, %v4599, %v4889
      %v4891 = vsel %vm4866, %v4600, %v4890
      %v4892 = vsel %vm4868, %v4601, %v4891
      %v4893 = vsel %vm4870, %v4602, %v4892
      %v4894 = vsel %vm4872, %v4603, %v4893
      %v4895 = vsel %vm4860, %v4605, %v4604
      %v4896 = vsel %vm4862, %v4606, %v4895
      %v4897 = vsel %vm4864, %v4607, %v4896
      %v4898 = vsel %vm4866, %v4608, %v4897
      %v4899 = vsel %vm4868, %v4609, %v4898
      %v4900 = vsel %vm4870, %v4610, %v4899
      %v4901 = vsel %vm4872, %v4611, %v4900
      %v4902 = vsel %vm4860, %v4613, %v4612
      %v4903 = vsel %vm4862, %v4614, %v4902
      %v4904 = vsel %vm4864, %v4615, %v4903
      %v4905 = vsel %vm4866, %v4616, %v4904
      %v4906 = vsel %vm4868, %v4617, %v4905
      %v4907 = vsel %vm4870, %v4618, %v4906
      %v4908 = vsel %vm4872, %v4619, %v4907
      %v4909 = vsel %vm4860, %v4621, %v4620
      %v4910 = vsel %vm4862, %v4622, %v4909
      %v4911 = vsel %vm4864, %v4623, %v4910
      %v4912 = vsel %vm4866, %v4624, %v4911
      %v4913 = vsel %vm4868, %v4625, %v4912
      %v4914 = vsel %vm4870, %v4626, %v4913
      %v4915 = vsel %vm4872, %v4627, %v4914
      %v4916 = vsel %vm4860, %v4629, %v4628
      %v4917 = vsel %vm4862, %v4630, %v4916
      %v4918 = vsel %vm4864, %v4631, %v4917
      %v4919 = vsel %vm4866, %v4632, %v4918
      %v4920 = vsel %vm4868, %v4633, %v4919
      %v4921 = vsel %vm4870, %v4634, %v4920
      %v4922 = vsel %vm4872, %v4635, %v4921
      %v4923 = vsel %vm4860, %v4637, %v4636
      %v4924 = vsel %vm4862, %v4638, %v4923
      %v4925 = vsel %vm4864, %v4639, %v4924
      %v4926 = vsel %vm4866, %v4640, %v4925
      %v4927 = vsel %vm4868, %v4641, %v4926
      %v4928 = vsel %vm4870, %v4642, %v4927
      %v4929 = vsel %vm4872, %v4643, %v4928
      %v4930 = vsel %vm4860, %v4645, %v4644
      %v4931 = vsel %vm4862, %v4646, %v4930
      %v4932 = vsel %vm4864, %v4647, %v4931
      %v4933 = vsel %vm4866, %v4648, %v4932
      %v4934 = vsel %vm4868, %v4649, %v4933
      %v4935 = vsel %vm4870, %v4650, %v4934
      %v4936 = vsel %vm4872, %v4651, %v4935
      %v4937 = vsel %vm4860, %v4653, %v4652
      %v4938 = vsel %vm4862, %v4654, %v4937
      %v4939 = vsel %vm4864, %v4655, %v4938
      %v4940 = vsel %vm4866, %v4656, %v4939
      %v4941 = vsel %vm4868, %v4657, %v4940
      %v4942 = vsel %vm4870, %v4658, %v4941
      %v4943 = vsel %vm4872, %v4659, %v4942
      %v4944 = vsel %vm4860, %v4661, %v4660
      %v4945 = vsel %vm4862, %v4662, %v4944
      %v4946 = vsel %vm4864, %v4663, %v4945
      %v4947 = vsel %vm4866, %v4664, %v4946
      %v4948 = vsel %vm4868, %v4665, %v4947
      %v4949 = vsel %vm4870, %v4666, %v4948
      %v4950 = vsel %vm4872, %v4667, %v4949
      %v4951 = vsel %vm4860, %v4669, %v4668
      %v4952 = vsel %vm4862, %v4670, %v4951
      %v4953 = vsel %vm4864, %v4671, %v4952
      %v4954 = vsel %vm4866, %v4672, %v4953
      %v4955 = vsel %vm4868, %v4673, %v4954
      %v4956 = vsel %vm4870, %v4674, %v4955
      %v4957 = vsel %vm4872, %v4675, %v4956
      %v4958 = vsel %vm4860, %v4677, %v4676
      %v4959 = vsel %vm4862, %v4678, %v4958
      %v4960 = vsel %vm4864, %v4679, %v4959
      %v4961 = vsel %vm4866, %v4680, %v4960
      %v4962 = vsel %vm4868, %v4681, %v4961
      %v4963 = vsel %vm4870, %v4682, %v4962
      %v4964 = vsel %vm4872, %v4683, %v4963
      %v4965 = vsel %vm4860, %v4685, %v4684
      %v4966 = vsel %vm4862, %v4686, %v4965
      %v4967 = vsel %vm4864, %v4687, %v4966
      %v4968 = vsel %vm4866, %v4688, %v4967
      %v4969 = vsel %vm4868, %v4689, %v4968
      %v4970 = vsel %vm4870, %v4690, %v4969
      %v4971 = vsel %vm4872, %v4691, %v4970
      %v4972 = vsel %vm4860, %v4693, %v4692
      %v4973 = vsel %vm4862, %v4694, %v4972
      %v4974 = vsel %vm4864, %v4695, %v4973
      %v4975 = vsel %vm4866, %v4696, %v4974
      %v4976 = vsel %vm4868, %v4697, %v4975
      %v4977 = vsel %vm4870, %v4698, %v4976
      %v4978 = vsel %vm4872, %v4699, %v4977
      %v4979 = vsel %vm4860, %v4701, %v4700
      %v4980 = vsel %vm4862, %v4702, %v4979
      %v4981 = vsel %vm4864, %v4703, %v4980
      %v4982 = vsel %vm4866, %v4704, %v4981
      %v4983 = vsel %vm4868, %v4705, %v4982
      %v4984 = vsel %vm4870, %v4706, %v4983
      %v4985 = vsel %vm4872, %v4707, %v4984
      %v4986 = vsel %vm4860, %v4709, %v4708
      %v4987 = vsel %vm4862, %v4710, %v4986
      %v4988 = vsel %vm4864, %v4711, %v4987
      %v4989 = vsel %vm4866, %v4712, %v4988
      %v4990 = vsel %vm4868, %v4713, %v4989
      %v4991 = vsel %vm4870, %v4714, %v4990
      %v4992 = vsel %vm4872, %v4715, %v4991
      %5011 = vst [vmem:[%s172] sm:$0xff] %v4873
      %5012 = vst [vmem:[%s172 + $0x8] sm:$0xff] %v4880
      %5013 = vst [vmem:[%s172 + $0x10] sm:$0xff] %v4887
      %5014 = vst [vmem:[%s172 + $0x18] sm:$0xff] %v4894
      %5015 = vst [vmem:[%s172 + $0x20] sm:$0xff] %v4901
      %5016 = vst [vmem:[%s172 + $0x28] sm:$0xff] %v4908
      %5017 = vst [vmem:[%s172 + $0x30] sm:$0xff] %v4915
      %5018 = vst [vmem:[%s172 + $0x38] sm:$0xff] %v4922
      %5019 = vst [vmem:[%s172 + $0x40] sm:$0xff] %v4929
      %5020 = vst [vmem:[%s172 + $0x48] sm:$0xff] %v4936
      %5021 = vst [vmem:[%s172 + $0x50] sm:$0xff] %v4943
      %5022 = vst [vmem:[%s172 + $0x58] sm:$0xff] %v4950
      %5023 = vst [vmem:[%s172 + $0x60] sm:$0xff] %v4957
      %5024 = vst [vmem:[%s172 + $0x68] sm:$0xff] %v4964
      %5025 = vst [vmem:[%s172 + $0x70] sm:$0xff] %v4971
      %5026 = vst [vmem:[%s172 + $0x78] sm:$0xff] %v4978
      %5027 = vst [vmem:[%s172 + $0x80] sm:$0xff] %v4985
      %5028 = vst [vmem:[%s172 + $0x88] sm:$0xff] %v4992
      %s5029 = smul.u32 18, %s14
      %p5030 = scmp.lt.s32.totalorder %s5029, 35
      %s5031 = scalar_select %p5030, %s5029, 35
      %s5032 = smul.addr %s5031, 8
      %s5033 = scalar_lea.vmem %s3, %s5032
      // Predicated region
      $region33: #{net_forward.3} parent=31 // pred_check
        %p5034 = pneg %p100
      $region34: #{net_forward.3} parent=31 // pred_check_branch
        %5036 = sbr.rel (%p5034) target = $region36
      $region35: #{net_forward.3} parent=31 // pred_region
        %s5037 = smul.u32 18, %s14
      $region36: #{net_forward.3} parent=31 // pred_fallthru
        _
    $region32: #{net_forward.3} parent=5 // pred_fallthru
      _
    %p5038 = scmp.le.s32.totalorder 2, %s9
    // Predicated region
    $region37: #{net_forward.3} parent=5 // pred_check
      %p5039 = pneg %p5038
    $region38: #{net_forward.3} parent=5 // pred_check_branch
      %5041 = sbr.rel (%p5039) target = $region40
    $region39: #{net_forward.3} parent=5 // pred_region
      %s5042 = ssub.s32 %s9, 2
      // Predicated region
      $region41: #{net_forward.3} parent=39 // pred_check
        %p5043 = pneg %p106
      $region42: #{net_forward.3} parent=39 // pred_check_branch
        %5045 = sbr.rel (%p5043) target = $region44
      $region43: #{net_forward.3} parent=39 // pred_region
        %s5046 = smul.u32 18, %s15
        %p5047 = scmp.lt.s32.totalorder %s5046, 35
        %s5048 = scalar_select %p5047, %s5046, 35
        %s5049 = smul.addr %s5048, 8
        %s5050 = scalar_lea.vmem %s3, %s5049
      $region44: #{net_forward.3} parent=39 // pred_fallthru
        _
    $region40: #{net_forward.3} parent=5 // pred_fallthru
      _
  $region6: #{net_forward.3} parent=0 // loop_footer
    %s13 = sadd.s32 1, %s9
  $region7: #{net_forward.3} parent=0 // loop_footer_branch
    %8 = sbr.rel target = $region3
  $region8: #{net_forward.3} parent=0 // loop_exit
    _

// kernel: net_forward.4
$region0: #{net_forward.4}
  #allocation0 [shape = 'u32[]', space=smem, size = 0x4, offset = 0x4, fixed_abs, tag = 'smem constant byte address 0x4 - core index']
  #allocation1 [shape = 'u32[144,128]{1,0:T(1,128)}', space=vmem, size = 0x12000, scoped, tag = 'internal scratch']
  %s0 = inlined_call_operand.vmem [shape: f32[128,512], index: 0, kind: input, shape index: {}]
  %s1 = inlined_call_operand.vmem [shape: f32[512,128], index: 1, kind: input, shape index: {}]
  %s2 = inlined_call_operand.vmem [shape: f32[1,128], index: 2, kind: input, shape index: {}]
  %s3 = inlined_call_operand.vmem [shape: f32[32,128], index: 3, kind: output, shape index: {}]
  %s4 = sld [smem:[#allocation0]]
  $region22: #{net_forward.4} parent=0
    _
  %s6 = ssub.s32 1, %s4
  %s7 = scalar_select 0, %s6, %s4
  // Predicated region
  $region2: #{net_forward.4} parent=0 // pred_check
    _
  $region3: #{net_forward.4} parent=0 // pred_check_branch
    %9 = sbr.rel (0) target = $region5
  $region4: #{net_forward.4} parent=0 // pred_region
    _
  $region5: #{net_forward.4} parent=0 // pred_fallthru
    _
  // Predicated region
  $region6: #{net_forward.4} parent=0 // pred_check
    _
  $region7: #{net_forward.4} parent=0 // pred_check_branch
    %11 = sbr.rel (0) target = $region9
  $region8: #{net_forward.4} parent=0 // pred_region
    _
  $region9: #{net_forward.4} parent=0 // pred_fallthru
    _
  // Predicated region
  $region10: #{net_forward.4} parent=0 // pred_check
    _
  $region11: #{net_forward.4} parent=0 // pred_check_branch
    %13 = sbr.rel (0) target = $region13
  $region12: #{net_forward.4} parent=0 // pred_region
    _
  $region13: #{net_forward.4} parent=0 // pred_fallthru
    _
  %v14 = vld [vmem:[%s0] sm:$0xff]
  %v15 = vld [vmem:[%s0 + $0x8] sm:$0xff]
  %v16 = vld [vmem:[%s0 + $0x10] sm:$0xff]
  %v17 = vld [vmem:[%s0 + $0x18] sm:$0xff]
  %v18 = vld [vmem:[%s0 + $0x20] sm:$0xff]
  %v19 = vld [vmem:[%s0 + $0x28] sm:$0xff]
  %v20 = vld [vmem:[%s0 + $0x30] sm:$0xff]
  %v21 = vld [vmem:[%s0 + $0x38] sm:$0xff]
  %v22 = vld [vmem:[%s0 + $0x40] sm:$0xff]
  %v23 = vld [vmem:[%s0 + $0x48] sm:$0xff]
  %v24 = vld [vmem:[%s0 + $0x50] sm:$0xff]
  %v25 = vld [vmem:[%s0 + $0x58] sm:$0xff]
  %v26 = vld [vmem:[%s0 + $0x60] sm:$0xff]
  %v27 = vld [vmem:[%s0 + $0x68] sm:$0xff]
  %v28 = vld [vmem:[%s0 + $0x70] sm:$0xff]
  %v29 = vld [vmem:[%s0 + $0x78] sm:$0xff]
  %v30 = vld [vmem:[%s0 + $0x80] sm:$0xff]
  %v31 = vld [vmem:[%s0 + $0x88] sm:$0xff]
  %v32 = vld [vmem:[%s0 + $0x90] sm:$0xff]
  %v33 = vld [vmem:[%s0 + $0x98] sm:$0xff]
  %v34 = vld [vmem:[%s0 + $0xa0] sm:$0xff]
  %v35 = vld [vmem:[%s0 + $0xa8] sm:$0xff]
  %v36 = vld [vmem:[%s0 + $0xb0] sm:$0xff]
  %v37 = vld [vmem:[%s0 + $0xb8] sm:$0xff]
  %v38 = vld [vmem:[%s0 + $0xc0] sm:$0xff]
  %v39 = vld [vmem:[%s0 + $0xc8] sm:$0xff]
  %v40 = vld [vmem:[%s0 + $0xd0] sm:$0xff]
  %v41 = vld [vmem:[%s0 + $0xd8] sm:$0xff]
  %v42 = vld [vmem:[%s0 + $0xe0] sm:$0xff]
  %v43 = vld [vmem:[%s0 + $0xe8] sm:$0xff]
  %v44 = vld [vmem:[%s0 + $0xf0] sm:$0xff]
  %v45 = vld [vmem:[%s0 + $0xf8] sm:$0xff]
  %v46 = vld [vmem:[%s0 + $0x100] sm:$0xff]
  %v47 = vld [vmem:[%s0 + $0x108] sm:$0xff]
  %v48 = vld [vmem:[%s0 + $0x110] sm:$0xff]
  %v49 = vld [vmem:[%s0 + $0x118] sm:$0xff]
  %v50 = vld [vmem:[%s0 + $0x120] sm:$0xff]
  %v51 = vld [vmem:[%s0 + $0x128] sm:$0xff]
  %v52 = vld [vmem:[%s0 + $0x130] sm:$0xff]
  %v53 = vld [vmem:[%s0 + $0x138] sm:$0xff]
  %v54 = vld [vmem:[%s0 + $0x140] sm:$0xff]
  %v55 = vld [vmem:[%s0 + $0x148] sm:$0xff]
  %v56 = vld [vmem:[%s0 + $0x150] sm:$0xff]
  %v57 = vld [vmem:[%s0 + $0x158] sm:$0xff]
  %v58 = vld [vmem:[%s0 + $0x160] sm:$0xff]
  %v59 = vld [vmem:[%s0 + $0x168] sm:$0xff]
  %v60 = vld [vmem:[%s0 + $0x170] sm:$0xff]
  %v61 = vld [vmem:[%s0 + $0x178] sm:$0xff]
  %v62 = vld [vmem:[%s0 + $0x180] sm:$0xff]
  %v63 = vld [vmem:[%s0 + $0x188] sm:$0xff]
  %v64 = vld [vmem:[%s0 + $0x190] sm:$0xff]
  %v65 = vld [vmem:[%s0 + $0x198] sm:$0xff]
  %v66 = vld [vmem:[%s0 + $0x1a0] sm:$0xff]
  %v67 = vld [vmem:[%s0 + $0x1a8] sm:$0xff]
  %v68 = vld [vmem:[%s0 + $0x1b0] sm:$0xff]
  %v69 = vld [vmem:[%s0 + $0x1b8] sm:$0xff]
  %v70 = vld [vmem:[%s0 + $0x1c0] sm:$0xff]
  %v71 = vld [vmem:[%s0 + $0x1c8] sm:$0xff]
  %v72 = vld [vmem:[%s0 + $0x1d0] sm:$0xff]
  %v73 = vld [vmem:[%s0 + $0x1d8] sm:$0xff]
  %v74 = vld [vmem:[%s0 + $0x1e0] sm:$0xff]
  %v75 = vld [vmem:[%s0 + $0x1e8] sm:$0xff]
  %v76 = vld [vmem:[%s0 + $0x1f0] sm:$0xff]
  %v77 = vld [vmem:[%s0 + $0x1f8] sm:$0xff]
  %v78 = vld [vmem:[%s1] sm:$0xff]
  %v79 = vld [vmem:[%s1 + $0x8] sm:$0xff]
  %v80 = vld [vmem:[%s1 + $0x10] sm:$0xff]
  %v81 = vld [vmem:[%s1 + $0x18] sm:$0xff]
  %v82 = vld [vmem:[%s1 + $0x20] sm:$0xff]
  %v83 = vld [vmem:[%s1 + $0x28] sm:$0xff]
  %v84 = vld [vmem:[%s1 + $0x30] sm:$0xff]
  %v85 = vld [vmem:[%s1 + $0x38] sm:$0xff]
  %v86 = vld [vmem:[%s1 + $0x40] sm:$0xff]
  %v87 = vld [vmem:[%s1 + $0x48] sm:$0xff]
  %v88 = vld [vmem:[%s1 + $0x50] sm:$0xff]
  %v89 = vld [vmem:[%s1 + $0x58] sm:$0xff]
  %v90 = vld [vmem:[%s1 + $0x60] sm:$0xff]
  %v91 = vld [vmem:[%s1 + $0x68] sm:$0xff]
  %v92 = vld [vmem:[%s1 + $0x70] sm:$0xff]
  %v93 = vld [vmem:[%s1 + $0x78] sm:$0xff]
  %v94 = vld [vmem:[%s1 + $0x80] sm:$0xff]
  %v95 = vld [vmem:[%s1 + $0x88] sm:$0xff]
  %v96 = vld [vmem:[%s1 + $0x90] sm:$0xff]
  %v97 = vld [vmem:[%s1 + $0x98] sm:$0xff]
  %v98 = vld [vmem:[%s1 + $0xa0] sm:$0xff]
  %v99 = vld [vmem:[%s1 + $0xa8] sm:$0xff]
  %v100 = vld [vmem:[%s1 + $0xb0] sm:$0xff]
  %v101 = vld [vmem:[%s1 + $0xb8] sm:$0xff]
  %v102 = vld [vmem:[%s1 + $0xc0] sm:$0xff]
  %v103 = vld [vmem:[%s1 + $0xc8] sm:$0xff]
  %v104 = vld [vmem:[%s1 + $0xd0] sm:$0xff]
  %v105 = vld [vmem:[%s1 + $0xd8] sm:$0xff]
  %v106 = vld [vmem:[%s1 + $0xe0] sm:$0xff]
  %v107 = vld [vmem:[%s1 + $0xe8] sm:$0xff]
  %v108 = vld [vmem:[%s1 + $0xf0] sm:$0xff]
  %v109 = vld [vmem:[%s1 + $0xf8] sm:$0xff]
  %v110 = vld [vmem:[%s1 + $0x100] sm:$0xff]
  %v111 = vld [vmem:[%s1 + $0x108] sm:$0xff]
  %v112 = vld [vmem:[%s1 + $0x110] sm:$0xff]
  %v113 = vld [vmem:[%s1 + $0x118] sm:$0xff]
  %v114 = vld [vmem:[%s1 + $0x120] sm:$0xff]
  %v115 = vld [vmem:[%s1 + $0x128] sm:$0xff]
  %v116 = vld [vmem:[%s1 + $0x130] sm:$0xff]
  %v117 = vld [vmem:[%s1 + $0x138] sm:$0xff]
  %v118 = vld [vmem:[%s1 + $0x140] sm:$0xff]
  %v119 = vld [vmem:[%s1 + $0x148] sm:$0xff]
  %v120 = vld [vmem:[%s1 + $0x150] sm:$0xff]
  %v121 = vld [vmem:[%s1 + $0x158] sm:$0xff]
  %v122 = vld [vmem:[%s1 + $0x160] sm:$0xff]
  %v123 = vld [vmem:[%s1 + $0x168] sm:$0xff]
  %v124 = vld [vmem:[%s1 + $0x170] sm:$0xff]
  %v125 = vld [vmem:[%s1 + $0x178] sm:$0xff]
  %v126 = vld [vmem:[%s1 + $0x180] sm:$0xff]
  %v127 = vld [vmem:[%s1 + $0x188] sm:$0xff]
  %v128 = vld [vmem:[%s1 + $0x190] sm:$0xff]
  %v129 = vld [vmem:[%s1 + $0x198] sm:$0xff]
  %v130 = vld [vmem:[%s1 + $0x1a0] sm:$0xff]
  %v131 = vld [vmem:[%s1 + $0x1a8] sm:$0xff]
  %v132 = vld [vmem:[%s1 + $0x1b0] sm:$0xff]
  %v133 = vld [vmem:[%s1 + $0x1b8] sm:$0xff]
  %v134 = vld [vmem:[%s1 + $0x1c0] sm:$0xff]
  %v135 = vld [vmem:[%s1 + $0x1c8] sm:$0xff]
  %v136 = vld [vmem:[%s1 + $0x1d0] sm:$0xff]
  %v137 = vld [vmem:[%s1 + $0x1d8] sm:$0xff]
  %v138 = vld [vmem:[%s1 + $0x1e0] sm:$0xff]
  %v139 = vld [vmem:[%s1 + $0x1e8] sm:$0xff]
  %v140 = vld [vmem:[%s1 + $0x1f0] sm:$0xff]
  %v141 = vld [vmem:[%s1 + $0x1f8] sm:$0xff]
  %v142 = vld [vmem:[%s2] sm:$0x1]
  %v144 = vlaneseq
  %v145 = vshrl.u32 %v144, 7
  %v146 = vsub.s32 0, %v145
  %v147 = vrot.slane %v142, %v146
  %149 = vmatprep.subr.mxu0 0.0
  %150 = vmatpush1.msra.mxu0 %v78
  %151 = vmatprep.subr.mxu0 0.0
  %152 = vmatpush1.msra.mxu0 %v79
  %153 = vmatprep.subr.mxu0 0.0
  %154 = vmatpush1.msra.mxu0 %v80
  %155 = vmatprep.subr.mxu0 0.0
  %156 = vmatpush1.msra.mxu0 %v81
  %157 = vmatprep.subr.mxu0 0.0
  %158 = vmatpush1.msra.mxu0 %v82
  %159 = vmatprep.subr.mxu0 0.0
  %160 = vmatpush1.msra.mxu0 %v83
  %161 = vmatprep.subr.mxu0 0.0
  %162 = vmatpush1.msra.mxu0 %v84
  %163 = vmatprep.subr.mxu0 0.0
  %164 = vmatpush1.msra.mxu0 %v85
  %165 = vmatprep.subr.mxu0 0.0
  %166 = vmatpush1.msra.mxu0 %v86
  %167 = vmatprep.subr.mxu0 0.0
  %168 = vmatpush1.msra.mxu0 %v87
  %169 = vmatprep.subr.mxu0 0.0
  %170 = vmatpush1.msra.mxu0 %v88
  %171 = vmatprep.subr.mxu0 0.0
  %172 = vmatpush1.msra.mxu0 %v89
  %173 = vmatprep.subr.mxu0 0.0
  %174 = vmatpush1.msra.mxu0 %v90
  %175 = vmatprep.subr.mxu0 0.0
  %176 = vmatpush1.msra.mxu0 %v91
  %177 = vmatprep.subr.mxu0 0.0
  %178 = vmatpush1.msra.mxu0 %v92
  %179 = vmatprep.subr.mxu0 0.0
  %180 = vmatpush1.msra.mxu0 %v93
  %181 = vmatprep.subr.mxu0 0.0
  %182 = vmatpush1.msra.mxu0 %v94
  %183 = vmatprep.subr.mxu0 0.0
  %184 = vmatpush1.msra.mxu0 %v95
  %185 = vmatprep.subr.mxu0 0.0
  %186 = vmatpush1.msra.mxu0 %v96
  %187 = vmatprep.subr.mxu0 0.0
  %188 = vmatpush1.msra.mxu0 %v97
  %189 = vmatprep.subr.mxu0 0.0
  %190 = vmatpush1.msra.mxu0 %v98
  %191 = vmatprep.subr.mxu0 0.0
  %192 = vmatpush1.msra.mxu0 %v99
  %193 = vmatprep.subr.mxu0 0.0
  %194 = vmatpush1.msra.mxu0 %v100
  %195 = vmatprep.subr.mxu0 0.0
  %196 = vmatpush1.msra.mxu0 %v101
  %197 = vmatprep.subr.mxu0 0.0
  %198 = vmatpush1.msra.mxu0 %v102
  %199 = vmatprep.subr.mxu0 0.0
  %200 = vmatpush1.msra.mxu0 %v103
  %201 = vmatprep.subr.mxu0 0.0
  %202 = vmatpush1.msra.mxu0 %v104
  %203 = vmatprep.subr.mxu0 0.0
  %204 = vmatpush1.msra.mxu0 %v105
  %205 = vmatprep.subr.mxu0 0.0
  %206 = vmatpush1.msra.mxu0 %v106
  %207 = vmatprep.subr.mxu0 0.0
  %208 = vmatpush1.msra.mxu0 %v107
  %209 = vmatprep.subr.mxu0 0.0
  %210 = vmatpush1.msra.mxu0 %v108
  %211 = vmatprep.subr.mxu0 0.0
  %212 = vmatpush1.msra.mxu0 %v109
  %213 = vmatprep.mubr.f32.mxu0 %v15
  %214 = vmatmul.mubr.f32.gmra.mrb[0].mxu0 %v14
  %v215 = vpop.f32.mrb[0].mxu0
  %v216 = vadd.f32 %v147, %v215
  %v217 = vpop.f32.mrb[0].mxu0
  %218 = vmatprep.mubr.f32.mxu0 %v19
  %219 = vmatmul.mubr.f32.gmra.mrb[0].mxu0 %v18
  %v220 = vpop.f32.mrb[0].mxu0
  %v221 = vadd.f32 %v147, %v220
  %v222 = vpop.f32.mrb[0].mxu0
  %223 = vmatprep.mubr.f32.mxu0 %v23
  %224 = vmatmul.mubr.f32.gmra.mrb[0].mxu0 %v22
  %v225 = vpop.f32.mrb[0].mxu0
  %v226 = vadd.f32 %v147, %v225
  %v227 = vpop.f32.mrb[0].mxu0
  %228 = vmatprep.mubr.f32.mxu0 %v27
  %229 = vmatmul.mubr.f32.gmra.mrb[0].mxu0 %v26
  %v230 = vpop.f32.mrb[0].mxu0
  %v231 = vadd.f32 %v147, %v230
  %v232 = vpop.f32.mrb[0].mxu0
  %233 = vmatprep.mubr.f32.mxu0 %v31
  %234 = vmatmul.mubr.f32.gmra.mrb[0].mxu0 %v30
  %v235 = vpop.f32.mrb[0].mxu0
  %v236 = vadd.f32 %v147, %v235
  %v237 = vpop.f32.mrb[0].mxu0
  %238 = vmatprep.mubr.f32.mxu0 %v35
  %239 = vmatmul.mubr.f32.gmra.mrb[0].mxu0 %v34
  %v240 = vpop.f32.mrb[0].mxu0
  %v241 = vadd.f32 %v147, %v240
  %v242 = vpop.f32.mrb[0].mxu0
  %243 = vmatprep.mubr.f32.mxu0 %v39
  %244 = vmatmul.mubr.f32.gmra.mrb[0].mxu0 %v38
  %v245 = vpop.f32.mrb[0].mxu0
  %v246 = vadd.f32 %v147, %v245
  %v247 = vpop.f32.mrb[0].mxu0
  %248 = vmatprep.mubr.f32.mxu0 %v43
  %249 = vmatmul.mubr.f32.gmra.mrb[0].mxu0 %v42
  %v250 = vpop.f32.mrb[0].mxu0
  %v251 = vadd.f32 %v147, %v250
  %v252 = vpop.f32.mrb[0].mxu0
  %253 = vmatprep.mubr.f32.mxu0 %v47
  %254 = vmatmul.mubr.f32.gmra.mrb[0].mxu0 %v46
  %v255 = vpop.f32.mrb[0].mxu0
  %v256 = vadd.f32 %v147, %v255
  %v257 = vpop.f32.mrb[0].mxu0
  %258 = vmatprep.mubr.f32.mxu0 %v51
  %259 = vmatmul.mubr.f32.gmra.mrb[0].mxu0 %v50
  %v260 = vpop.f32.mrb[0].mxu0
  %v261 = vadd.f32 %v147, %v260
  %v262 = vpop.f32.mrb[0].mxu0
  %263 = vmatprep.mubr.f32.mxu0 %v55
  %264 = vmatmul.mubr.f32.gmra.mrb[0].mxu0 %v54
  %v265 = vpop.f32.mrb[0].mxu0
  %v266 = vadd.f32 %v147, %v265
  %v267 = vpop.f32.mrb[0].mxu0
  %268 = vmatprep.mubr.f32.mxu0 %v59
  %269 = vmatmul.mubr.f32.gmra.mrb[0].mxu0 %v58
  %v270 = vpop.f32.mrb[0].mxu0
  %v271 = vadd.f32 %v147, %v270
  %v272 = vpop.f32.mrb[0].mxu0
  %273 = vmatprep.mubr.f32.mxu0 %v63
  %274 = vmatmul.mubr.f32.gmra.mrb[0].mxu0 %v62
  %v275 = vpop.f32.mrb[0].mxu0
  %v276 = vadd.f32 %v147, %v275
  %v277 = vpop.f32.mrb[0].mxu0
  %278 = vmatprep.mubr.f32.mxu0 %v67
  %279 = vmatmul.mubr.f32.gmra.mrb[0].mxu0 %v66
  %v280 = vpop.f32.mrb[0].mxu0
  %v281 = vadd.f32 %v147, %v280
  %v282 = vpop.f32.mrb[0].mxu0
  %283 = vmatprep.mubr.f32.mxu0 %v71
  %284 = vmatmul.mubr.f32.gmra.mrb[0].mxu0 %v70
  %v285 = vpop.f32.mrb[0].mxu0
  %v286 = vadd.f32 %v147, %v285
  %v287 = vpop.f32.mrb[0].mxu0
  %288 = vmatprep.mubr.f32.mxu0 %v75
  %289 = vmatmul.mubr.f32.gmra.mrb[0].mxu0 %v74
  %v290 = vpop.f32.mrb[0].mxu0
  %v291 = vadd.f32 %v147, %v290
  %v292 = vpop.f32.mrb[0].mxu0
  %293 = vdwg.mxu0
  %294 = vmatprep.subr.mxu0 0.0
  %295 = vmatpush1.msra.mxu0 %v110
  %296 = vmatprep.subr.mxu0 0.0
  %297 = vmatpush1.msra.mxu0 %v111
  %298 = vmatprep.subr.mxu0 0.0
  %299 = vmatpush1.msra.mxu0 %v112
  %300 = vmatprep.subr.mxu0 0.0
  %301 = vmatpush1.msra.mxu0 %v113
  %302 = vmatprep.subr.mxu0 0.0
  %303 = vmatpush1.msra.mxu0 %v114
  %304 = vmatprep.subr.mxu0 0.0
  %305 = vmatpush1.msra.mxu0 %v115
  %306 = vmatprep.subr.mxu0 0.0
  %307 = vmatpush1.msra.mxu0 %v116
  %308 = vmatprep.subr.mxu0 0.0
  %309 = vmatpush1.msra.mxu0 %v117
  %310 = vmatprep.subr.mxu0 0.0
  %311 = vmatpush1.msra.mxu0 %v118
  %312 = vmatprep.subr.mxu0 0.0
  %313 = vmatpush1.msra.mxu0 %v119
  %314 = vmatprep.subr.mxu0 0.0
  %315 = vmatpush1.msra.mxu0 %v120
  %316 = vmatprep.subr.mxu0 0.0
  %317 = vmatpush1.msra.mxu0 %v121
  %318 = vmatprep.subr.mxu0 0.0
  %319 = vmatpush1.msra.mxu0 %v122
  %320 = vmatprep.subr.mxu0 0.0
  %321 = vmatpush1.msra.mxu0 %v123
  %322 = vmatprep.subr.mxu0 0.0
  %323 = vmatpush1.msra.mxu0 %v124
  %324 = vmatprep.subr.mxu0 0.0
  %325 = vmatpush1.msra.mxu0 %v125
  %326 = vmatprep.subr.mxu0 0.0
  %327 = vmatpush1.msra.mxu0 %v126
  %328 = vmatprep.subr.mxu0 0.0
  %329 = vmatpush1.msra.mxu0 %v127
  %330 = vmatprep.subr.mxu0 0.0
  %331 = vmatpush1.msra.mxu0 %v128
  %332 = vmatprep.subr.mxu0 0.0
  %333 = vmatpush1.msra.mxu0 %v129
  %334 = vmatprep.subr.mxu0 0.0
  %335 = vmatpush1.msra.mxu0 %v130
  %336 = vmatprep.subr.mxu0 0.0
  %337 = vmatpush1.msra.mxu0 %v131
  %338 = vmatprep.subr.mxu0 0.0
  %339 = vmatpush1.msra.mxu0 %v132
  %340 = vmatprep.subr.mxu0 0.0
  %341 = vmatpush1.msra.mxu0 %v133
  %342 = vmatprep.subr.mxu0 0.0
  %343 = vmatpush1.msra.mxu0 %v134
  %344 = vmatprep.subr.mxu0 0.0
  %345 = vmatpush1.msra.mxu0 %v135
  %346 = vmatprep.subr.mxu0 0.0
  %347 = vmatpush1.msra.mxu0 %v136
  %348 = vmatprep.subr.mxu0 0.0
  %349 = vmatpush1.msra.mxu0 %v137
  %350 = vmatprep.subr.mxu0 0.0
  %351 = vmatpush1.msra.mxu0 %v138
  %352 = vmatprep.subr.mxu0 0.0
  %353 = vmatpush1.msra.mxu0 %v139
  %354 = vmatprep.subr.mxu0 0.0
  %355 = vmatpush1.msra.mxu0 %v140
  %356 = vmatprep.subr.mxu0 0.0
  %357 = vmatpush1.msra.mxu0 %v141
  %358 = vmatprep.mubr.f32.mxu0 %v17
  %359 = vmatmul.mubr.f32.gmra.mrb[0].mxu0 %v16
  %v360 = vpop.f32.mrb[0].mxu0
  %v361 = vadd.f32 %v216, %v360
  %v362 = vpop.f32.mrb[0].mxu0
  %363 = vmatprep.mubr.f32.mxu0 %v21
  %364 = vmatmul.mubr.f32.gmra.mrb[0].mxu0 %v20
  %v365 = vpop.f32.mrb[0].mxu0
  %v366 = vadd.f32 %v221, %v365
  %v367 = vpop.f32.mrb[0].mxu0
  %368 = vmatprep.mubr.f32.mxu0 %v25
  %369 = vmatmul.mubr.f32.gmra.mrb[0].mxu0 %v24
  %v370 = vpop.f32.mrb[0].mxu0
  %v371 = vadd.f32 %v226, %v370
  %v372 = vpop.f32.mrb[0].mxu0
  %373 = vmatprep.mubr.f32.mxu0 %v29
  %374 = vmatmul.mubr.f32.gmra.mrb[0].mxu0 %v28
  %v375 = vpop.f32.mrb[0].mxu0
  %v376 = vadd.f32 %v231, %v375
  %v377 = vpop.f32.mrb[0].mxu0
  %378 = vmatprep.mubr.f32.mxu0 %v33
  %379 = vmatmul.mubr.f32.gmra.mrb[0].mxu0 %v32
  %v380 = vpop.f32.mrb[0].mxu0
  %v381 = vadd.f32 %v236, %v380
  %v382 = vpop.f32.mrb[0].mxu0
  %383 = vmatprep.mubr.f32.mxu0 %v37
  %384 = vmatmul.mubr.f32.gmra.mrb[0].mxu0 %v36
  %v385 = vpop.f32.mrb[0].mxu0
  %v386 = vadd.f32 %v241, %v385
  %v387 = vpop.f32.mrb[0].mxu0
  %388 = vmatprep.mubr.f32.mxu0 %v41
  %389 = vmatmul.mubr.f32.gmra.mrb[0].mxu0 %v40
  %v390 = vpop.f32.mrb[0].mxu0
  %v391 = vadd.f32 %v246, %v390
  %v392 = vpop.f32.mrb[0].mxu0
  %393 = vmatprep.mubr.f32.mxu0 %v45
  %394 = vmatmul.mubr.f32.gmra.mrb[0].mxu0 %v44
  %v395 = vpop.f32.mrb[0].mxu0
  %v396 = vadd.f32 %v251, %v395
  %v397 = vpop.f32.mrb[0].mxu0
  %398 = vmatprep.mubr.f32.mxu0 %v49
  %399 = vmatmul.mubr.f32.gmra.mrb[0].mxu0 %v48
  %v400 = vpop.f32.mrb[0].mxu0
  %v401 = vadd.f32 %v256, %v400
  %v402 = vpop.f32.mrb[0].mxu0
  %403 = vmatprep.mubr.f32.mxu0 %v53
  %404 = vmatmul.mubr.f32.gmra.mrb[0].mxu0 %v52
  %v405 = vpop.f32.mrb[0].mxu0
  %v406 = vadd.f32 %v261, %v405
  %v407 = vpop.f32.mrb[0].mxu0
  %408 = vmatprep.mubr.f32.mxu0 %v57
  %409 = vmatmul.mubr.f32.gmra.mrb[0].mxu0 %v56
  %v410 = vpop.f32.mrb[0].mxu0
  %v411 = vadd.f32 %v266, %v410
  %v412 = vpop.f32.mrb[0].mxu0
  %413 = vmatprep.mubr.f32.mxu0 %v61
  %414 = vmatmul.mubr.f32.gmra.mrb[0].mxu0 %v60
  %v415 = vpop.f32.mrb[0].mxu0
  %v416 = vadd.f32 %v271, %v415
  %v417 = vpop.f32.mrb[0].mxu0
  %418 = vmatprep.mubr.f32.mxu0 %v65
  %419 = vmatmul.mubr.f32.gmra.mrb[0].mxu0 %v64
  %v420 = vpop.f32.mrb[0].mxu0
  %v421 = vadd.f32 %v276, %v420
  %v422 = vpop.f32.mrb[0].mxu0
  %423 = vmatprep.mubr.f32.mxu0 %v69
  %424 = vmatmul.mubr.f32.gmra.mrb[0].mxu0 %v68
  %v425 = vpop.f32.mrb[0].mxu0
  %v426 = vadd.f32 %v281, %v425
  %v427 = vpop.f32.mrb[0].mxu0
  %428 = vmatprep.mubr.f32.mxu0 %v73
  %429 = vmatmul.mubr.f32.gmra.mrb[0].mxu0 %v72
  %v430 = vpop.f32.mrb[0].mxu0
  %v431 = vadd.f32 %v286, %v430
  %v432 = vpop.f32.mrb[0].mxu0
  %433 = vmatprep.mubr.f32.mxu0 %v77
  %434 = vmatmul.mubr.f32.gmra.mrb[0].mxu0 %v76
  %v435 = vpop.f32.mrb[0].mxu0
  %v436 = vadd.f32 %v291, %v435
  %v437 = vpop.f32.mrb[0].mxu0
  %438 = vdwg.mxu0
  %v439 = vmax.f32 %v361, 0.0
  %v440 = vmax.f32 %v366, 0.0
  %v441 = vmax.f32 %v371, 0.0
  %v442 = vmax.f32 %v376, 0.0
  %v443 = vmax.f32 %v381, 0.0
  %v444 = vmax.f32 %v386, 0.0
  %v445 = vmax.f32 %v391, 0.0
  %v446 = vmax.f32 %v396, 0.0
  %v447 = vmax.f32 %v401, 0.0
  %v448 = vmax.f32 %v406, 0.0
  %v449 = vmax.f32 %v411, 0.0
  %v450 = vmax.f32 %v416, 0.0
  %v451 = vmax.f32 %v421, 0.0
  %v452 = vmax.f32 %v426, 0.0
  %v453 = vmax.f32 %v431, 0.0
  %v454 = vmax.f32 %v436, 0.0
  %v471 = vcombine.high %v439, %v439
  %v473 = vunpack.c.l.s4 1983009808
  %v474 = vunpack.c.0.s8 %v473
  %v475 = vlaneseq
  %v476 = vshrl.u32 %v475, 7
  %v477 = vsub.s32 %v474, %v476
  %v478 = vrot.slane %v439, %v477
  %v480 = vunpack.c.l.s4 1983009808
  %v481 = vunpack.c.0.s8 %v480
  %v482 = vlaneseq
  %v483 = vshrl.u32 %v482, 7
  %v484 = vsub.s32 %v481, %v483
  %v485 = vrot.slane %v471, %v484
  %v486 = vcombine.high %v478, %v478
  %v487 = vcombine.high %v485, %v485
  %v488 = vcombine.high %v440, %v440
  %v490 = vunpack.c.l.s4 1983009808
  %v491 = vunpack.c.0.s8 %v490
  %v492 = vlaneseq
  %v493 = vshrl.u32 %v492, 7
  %v494 = vsub.s32 %v491, %v493
  %v495 = vrot.slane %v440, %v494
  %v497 = vunpack.c.l.s4 1983009808
  %v498 = vunpack.c.0.s8 %v497
  %v499 = vlaneseq
  %v500 = vshrl.u32 %v499, 7
  %v501 = vsub.s32 %v498, %v500
  %v502 = vrot.slane %v488, %v501
  %v503 = vcombine.high %v495, %v495
  %v504 = vcombine.high %v502, %v502
  %v505 = vcombine.high %v441, %v441
  %v507 = vunpack.c.l.s4 1983009808
  %v508 = vunpack.c.0.s8 %v507
  %v509 = vlaneseq
  %v510 = vshrl.u32 %v509, 7
  %v511 = vsub.s32 %v508, %v510
  %v512 = vrot.slane %v441, %v511
  %v514 = vunpack.c.l.s4 1983009808
  %v515 = vunpack.c.0.s8 %v514
  %v516 = vlaneseq
  %v517 = vshrl.u32 %v516, 7
  %v518 = vsub.s32 %v515, %v517
  %v519 = vrot.slane %v505, %v518
  %v520 = vcombine.high %v512, %v512
  %v521 = vcombine.high %v519, %v519
  %v522 = vcombine.high %v442, %v442
  %v524 = vunpack.c.l.s4 1983009808
  %v525 = vunpack.c.0.s8 %v524
  %v526 = vlaneseq
  %v527 = vshrl.u32 %v526, 7
  %v528 = vsub.s32 %v525, %v527
  %v529 = vrot.slane %v442, %v528
  %v531 = vunpack.c.l.s4 1983009808
  %v532 = vunpack.c.0.s8 %v531
  %v533 = vlaneseq
  %v534 = vshrl.u32 %v533, 7
  %v535 = vsub.s32 %v532, %v534
  %v536 = vrot.slane %v522, %v535
  %v537 = vcombine.high %v529, %v529
  %v538 = vcombine.high %v536, %v536
  %v539 = vcombine.high %v443, %v443
  %v541 = vunpack.c.l.s4 1983009808
  %v542 = vunpack.c.0.s8 %v541
  %v543 = vlaneseq
  %v544 = vshrl.u32 %v543, 7
  %v545 = vsub.s32 %v542, %v544
  %v546 = vrot.slane %v443, %v545
  %v548 = vunpack.c.l.s4 1983009808
  %v549 = vunpack.c.0.s8 %v548
  %v550 = vlaneseq
  %v551 = vshrl.u32 %v550, 7
  %v552 = vsub.s32 %v549, %v551
  %v553 = vrot.slane %v539, %v552
  %v554 = vcombine.high %v546, %v546
  %v555 = vcombine.high %v553, %v553
  %v556 = vcombine.high %v444, %v444
  %v558 = vunpack.c.l.s4 1983009808
  %v559 = vunpack.c.0.s8 %v558
  %v560 = vlaneseq
  %v561 = vshrl.u32 %v560, 7
  %v562 = vsub.s32 %v559, %v561
  %v563 = vrot.slane %v444, %v562
  %v565 = vunpack.c.l.s4 1983009808
  %v566 = vunpack.c.0.s8 %v565
  %v567 = vlaneseq
  %v568 = vshrl.u32 %v567, 7
  %v569 = vsub.s32 %v566, %v568
  %v570 = vrot.slane %v556, %v569
  %v571 = vcombine.high %v563, %v563
  %v572 = vcombine.high %v570, %v570
  %v573 = vcombine.high %v445, %v445
  %v575 = vunpack.c.l.s4 1983009808
  %v576 = vunpack.c.0.s8 %v575
  %v577 = vlaneseq
  %v578 = vshrl.u32 %v577, 7
  %v579 = vsub.s32 %v576, %v578
  %v580 = vrot.slane %v445, %v579
  %v582 = vunpack.c.l.s4 1983009808
  %v583 = vunpack.c.0.s8 %v582
  %v584 = vlaneseq
  %v585 = vshrl.u32 %v584, 7
  %v586 = vsub.s32 %v583, %v585
  %v587 = vrot.slane %v573, %v586
  %v588 = vcombine.high %v580, %v580
  %v589 = vcombine.high %v587, %v587
  %v590 = vcombine.high %v446, %v446
  %v592 = vunpack.c.l.s4 1983009808
  %v593 = vunpack.c.0.s8 %v592
  %v594 = vlaneseq
  %v595 = vshrl.u32 %v594, 7
  %v596 = vsub.s32 %v593, %v595
  %v597 = vrot.slane %v446, %v596
  %v599 = vunpack.c.l.s4 1983009808
  %v600 = vunpack.c.0.s8 %v599
  %v601 = vlaneseq
  %v602 = vshrl.u32 %v601, 7
  %v603 = vsub.s32 %v600, %v602
  %v604 = vrot.slane %v590, %v603
  %v605 = vcombine.high %v597, %v597
  %v606 = vcombine.high %v604, %v604
  %v607 = vcombine.high %v447, %v447
  %v609 = vunpack.c.l.s4 1983009808
  %v610 = vunpack.c.0.s8 %v609
  %v611 = vlaneseq
  %v612 = vshrl.u32 %v611, 7
  %v613 = vsub.s32 %v610, %v612
  %v614 = vrot.slane %v447, %v613
  %v616 = vunpack.c.l.s4 1983009808
  %v617 = vunpack.c.0.s8 %v616
  %v618 = vlaneseq
  %v619 = vshrl.u32 %v618, 7
  %v620 = vsub.s32 %v617, %v619
  %v621 = vrot.slane %v607, %v620
  %v622 = vcombine.high %v614, %v614
  %v623 = vcombine.high %v621, %v621
  %v624 = vcombine.high %v448, %v448
  %v626 = vunpack.c.l.s4 1983009808
  %v627 = vunpack.c.0.s8 %v626
  %v628 = vlaneseq
  %v629 = vshrl.u32 %v628, 7
  %v630 = vsub.s32 %v627, %v629
  %v631 = vrot.slane %v448, %v630
  %v633 = vunpack.c.l.s4 1983009808
  %v634 = vunpack.c.0.s8 %v633
  %v635 = vlaneseq
  %v636 = vshrl.u32 %v635, 7
  %v637 = vsub.s32 %v634, %v636
  %v638 = vrot.slane %v624, %v637
  %v639 = vcombine.high %v631, %v631
  %v640 = vcombine.high %v638, %v638
  %v641 = vcombine.high %v449, %v449
  %v643 = vunpack.c.l.s4 1983009808
  %v644 = vunpack.c.0.s8 %v643
  %v645 = vlaneseq
  %v646 = vshrl.u32 %v645, 7
  %v647 = vsub.s32 %v644, %v646
  %v648 = vrot.slane %v449, %v647
  %v650 = vunpack.c.l.s4 1983009808
  %v651 = vunpack.c.0.s8 %v650
  %v652 = vlaneseq
  %v653 = vshrl.u32 %v652, 7
  %v654 = vsub.s32 %v651, %v653
  %v655 = vrot.slane %v641, %v654
  %v656 = vcombine.high %v648, %v648
  %v657 = vcombine.high %v655, %v655
  %v658 = vcombine.high %v450, %v450
  %v660 = vunpack.c.l.s4 1983009808
  %v661 = vunpack.c.0.s8 %v660
  %v662 = vlaneseq
  %v663 = vshrl.u32 %v662, 7
  %v664 = vsub.s32 %v661, %v663
  %v665 = vrot.slane %v450, %v664
  %v667 = vunpack.c.l.s4 1983009808
  %v668 = vunpack.c.0.s8 %v667
  %v669 = vlaneseq
  %v670 = vshrl.u32 %v669, 7
  %v671 = vsub.s32 %v668, %v670
  %v672 = vrot.slane %v658, %v671
  %v673 = vcombine.high %v665, %v665
  %v674 = vcombine.high %v672, %v672
  %v675 = vcombine.high %v451, %v451
  %v677 = vunpack.c.l.s4 1983009808
  %v678 = vunpack.c.0.s8 %v677
  %v679 = vlaneseq
  %v680 = vshrl.u32 %v679, 7
  %v681 = vsub.s32 %v678, %v680
  %v682 = vrot.slane %v451, %v681
  %v684 = vunpack.c.l.s4 1983009808
  %v685 = vunpack.c.0.s8 %v684
  %v686 = vlaneseq
  %v687 = vshrl.u32 %v686, 7
  %v688 = vsub.s32 %v685, %v687
  %v689 = vrot.slane %v675, %v688
  %v690 = vcombine.high %v682, %v682
  %v691 = vcombine.high %v689, %v689
  %v692 = vcombine.high %v452, %v452
  %v694 = vunpack.c.l.s4 1983009808
  %v695 = vunpack.c.0.s8 %v694
  %v696 = vlaneseq
  %v697 = vshrl.u32 %v696, 7
  %v698 = vsub.s32 %v695, %v697
  %v699 = vrot.slane %v452, %v698
  %v701 = vunpack.c.l.s4 1983009808
  %v702 = vunpack.c.0.s8 %v701
  %v703 = vlaneseq
  %v704 = vshrl.u32 %v703, 7
  %v705 = vsub.s32 %v702, %v704
  %v706 = vrot.slane %v692, %v705
  %v707 = vcombine.high %v699, %v699
  %v708 = vcombine.high %v706, %v706
  %v709 = vcombine.high %v453, %v453
  %v711 = vunpack.c.l.s4 1983009808
  %v712 = vunpack.c.0.s8 %v711
  %v713 = vlaneseq
  %v714 = vshrl.u32 %v713, 7
  %v715 = vsub.s32 %v712, %v714
  %v716 = vrot.slane %v453, %v715
  %v718 = vunpack.c.l.s4 1983009808
  %v719 = vunpack.c.0.s8 %v718
  %v720 = vlaneseq
  %v721 = vshrl.u32 %v720, 7
  %v722 = vsub.s32 %v719, %v721
  %v723 = vrot.slane %v709, %v722
  %v724 = vcombine.high %v716, %v716
  %v725 = vcombine.high %v723, %v723
  %v726 = vcombine.high %v454, %v454
  %v728 = vunpack.c.l.s4 1983009808
  %v729 = vunpack.c.0.s8 %v728
  %v730 = vlaneseq
  %v731 = vshrl.u32 %v730, 7
  %v732 = vsub.s32 %v729, %v731
  %v733 = vrot.slane %v454, %v732
  %v735 = vunpack.c.l.s4 1983009808
  %v736 = vunpack.c.0.s8 %v735
  %v737 = vlaneseq
  %v738 = vshrl.u32 %v737, 7
  %v739 = vsub.s32 %v736, %v738
  %v740 = vrot.slane %v726, %v739
  %v741 = vcombine.high %v733, %v733
  %v742 = vcombine.high %v740, %v740
  %vm807 = vcmask 1041408
  %v808 = vsel %vm807, %v478, -inf
  %v809 = vrot.slane %v808, 4
  %v810 = vmax.f32 %v808, %v809
  %v811 = vrot.slane %v810, 2
  %v812 = vmax.f32 %v810, %v811
  %v813 = vrot.slane %v812, 1
  %v814 = vmax.f32 %v812, %v813
  %v815 = vsel %vm807, %v486, -inf
  %v816 = vrot.slane %v815, 4
  %v817 = vmax.f32 %v815, %v816
  %v818 = vrot.slane %v817, 2
  %v819 = vmax.f32 %v817, %v818
  %v820 = vrot.slane %v819, 1
  %v821 = vmax.f32 %v819, %v820
  %v822 = vsel %vm807, %v485, -inf
  %v823 = vrot.slane %v822, 4
  %v824 = vmax.f32 %v822, %v823
  %v825 = vrot.slane %v824, 2
  %v826 = vmax.f32 %v824, %v825
  %v827 = vrot.slane %v826, 1
  %v828 = vmax.f32 %v826, %v827
  %v829 = vsel %vm807, %v487, -inf
  %v830 = vrot.slane %v829, 4
  %v831 = vmax.f32 %v829, %v830
  %v832 = vrot.slane %v831, 2
  %v833 = vmax.f32 %v831, %v832
  %v834 = vrot.slane %v833, 1
  %v835 = vmax.f32 %v833, %v834
  %v836 = vsel %vm807, %v495, -inf
  %v837 = vrot.slane %v836, 4
  %v838 = vmax.f32 %v836, %v837
  %v839 = vrot.slane %v838, 2
  %v840 = vmax.f32 %v838, %v839
  %v841 = vrot.slane %v840, 1
  %v842 = vmax.f32 %v840, %v841
  %v843 = vsel %vm807, %v503, -inf
  %v844 = vrot.slane %v843, 4
  %v845 = vmax.f32 %v843, %v844
  %v846 = vrot.slane %v845, 2
  %v847 = vmax.f32 %v845, %v846
  %v848 = vrot.slane %v847, 1
  %v849 = vmax.f32 %v847, %v848
  %v850 = vsel %vm807, %v502, -inf
  %v851 = vrot.slane %v850, 4
  %v852 = vmax.f32 %v850, %v851
  %v853 = vrot.slane %v852, 2
  %v854 = vmax.f32 %v852, %v853
  %v855 = vrot.slane %v854, 1
  %v856 = vmax.f32 %v854, %v855
  %v857 = vsel %vm807, %v504, -inf
  %v858 = vrot.slane %v857, 4
  %v859 = vmax.f32 %v857, %v858
  %v860 = vrot.slane %v859, 2
  %v861 = vmax.f32 %v859, %v860
  %v862 = vrot.slane %v861, 1
  %v863 = vmax.f32 %v861, %v862
  %v864 = vsel %vm807, %v512, -inf
  %v865 = vrot.slane %v864, 4
  %v866 = vmax.f32 %v864, %v865
  %v867 = vrot.slane %v866, 2
  %v868 = vmax.f32 %v866, %v867
  %v869 = vrot.slane %v868, 1
  %v870 = vmax.f32 %v868, %v869
  %v871 = vsel %vm807, %v520, -inf
  %v872 = vrot.slane %v871, 4
  %v873 = vmax.f32 %v871, %v872
  %v874 = vrot.slane %v873, 2
  %v875 = vmax.f32 %v873, %v874
  %v876 = vrot.slane %v875, 1
  %v877 = vmax.f32 %v875, %v876
  %v878 = vsel %vm807, %v519, -inf
  %v879 = vrot.slane %v878, 4
  %v880 = vmax.f32 %v878, %v879
  %v881 = vrot.slane %v880, 2
  %v882 = vmax.f32 %v880, %v881
  %v883 = vrot.slane %v882, 1
  %v884 = vmax.f32 %v882, %v883
  %v885 = vsel %vm807, %v521, -inf
  %v886 = vrot.slane %v885, 4
  %v887 = vmax.f32 %v885, %v886
  %v888 = vrot.slane %v887, 2
  %v889 = vmax.f32 %v887, %v888
  %v890 = vrot.slane %v889, 1
  %v891 = vmax.f32 %v889, %v890
  %v892 = vsel %vm807, %v529, -inf
  %v893 = vrot.slane %v892, 4
  %v894 = vmax.f32 %v892, %v893
  %v895 = vrot.slane %v894, 2
  %v896 = vmax.f32 %v894, %v895
  %v897 = vrot.slane %v896, 1
  %v898 = vmax.f32 %v896, %v897
  %v899 = vsel %vm807, %v537, -inf
  %v900 = vrot.slane %v899, 4
  %v901 = vmax.f32 %v899, %v900
  %v902 = vrot.slane %v901, 2
  %v903 = vmax.f32 %v901, %v902
  %v904 = vrot.slane %v903, 1
  %v905 = vmax.f32 %v903, %v904
  %v906 = vsel %vm807, %v536, -inf
  %v907 = vrot.slane %v906, 4
  %v908 = vmax.f32 %v906, %v907
  %v909 = vrot.slane %v908, 2
  %v910 = vmax.f32 %v908, %v909
  %v911 = vrot.slane %v910, 1
  %v912 = vmax.f32 %v910, %v911
  %v913 = vsel %vm807, %v538, -inf
  %v914 = vrot.slane %v913, 4
  %v915 = vmax.f32 %v913, %v914
  %v916 = vrot.slane %v915, 2
  %v917 = vmax.f32 %v915, %v916
  %v918 = vrot.slane %v917, 1
  %v919 = vmax.f32 %v917, %v918
  %v920 = vsel %vm807, %v546, -inf
  %v921 = vrot.slane %v920, 4
  %v922 = vmax.f32 %v920, %v921
  %v923 = vrot.slane %v922, 2
  %v924 = vmax.f32 %v922, %v923
  %v925 = vrot.slane %v924, 1
  %v926 = vmax.f32 %v924, %v925
  %v927 = vsel %vm807, %v554, -inf
  %v928 = vrot.slane %v927, 4
  %v929 = vmax.f32 %v927, %v928
  %v930 = vrot.slane %v929, 2
  %v931 = vmax.f32 %v929, %v930
  %v932 = vrot.slane %v931, 1
  %v933 = vmax.f32 %v931, %v932
  %v934 = vsel %vm807, %v553, -inf
  %v935 = vrot.slane %v934, 4
  %v936 = vmax.f32 %v934, %v935
  %v937 = vrot.slane %v936, 2
  %v938 = vmax.f32 %v936, %v937
  %v939 = vrot.slane %v938, 1
  %v940 = vmax.f32 %v938, %v939
  %v941 = vsel %vm807, %v555, -inf
  %v942 = vrot.slane %v941, 4
  %v943 = vmax.f32 %v941, %v942
  %v944 = vrot.slane %v943, 2
  %v945 = vmax.f32 %v943, %v944
  %v946 = vrot.slane %v945, 1
  %v947 = vmax.f32 %v945, %v946
  %v948 = vsel %vm807, %v563, -inf
  %v949 = vrot.slane %v948, 4
  %v950 = vmax.f32 %v948, %v949
  %v951 = vrot.slane %v950, 2
  %v952 = vmax.f32 %v950, %v951
  %v953 = vrot.slane %v952, 1
  %v954 = vmax.f32 %v952, %v953
  %v955 = vsel %vm807, %v571, -inf
  %v956 = vrot.slane %v955, 4
  %v957 = vmax.f32 %v955, %v956
  %v958 = vrot.slane %v957, 2
  %v959 = vmax.f32 %v957, %v958
  %v960 = vrot.slane %v959, 1
  %v961 = vmax.f32 %v959, %v960
  %v962 = vsel %vm807, %v570, -inf
  %v963 = vrot.slane %v962, 4
  %v964 = vmax.f32 %v962, %v963
  %v965 = vrot.slane %v964, 2
  %v966 = vmax.f32 %v964, %v965
  %v967 = vrot.slane %v966, 1
  %v968 = vmax.f32 %v966, %v967
  %v969 = vsel %vm807, %v572, -inf
  %v970 = vrot.slane %v969, 4
  %v971 = vmax.f32 %v969, %v970
  %v972 = vrot.slane %v971, 2
  %v973 = vmax.f32 %v971, %v972
  %v974 = vrot.slane %v973, 1
  %v975 = vmax.f32 %v973, %v974
  %v976 = vsel %vm807, %v580, -inf
  %v977 = vrot.slane %v976, 4
  %v978 = vmax.f32 %v976, %v977
  %v979 = vrot.slane %v978, 2
  %v980 = vmax.f32 %v978, %v979
  %v981 = vrot.slane %v980, 1
  %v982 = vmax.f32 %v980, %v981
  %v983 = vsel %vm807, %v588, -inf
  %v984 = vrot.slane %v983, 4
  %v985 = vmax.f32 %v983, %v984
  %v986 = vrot.slane %v985, 2
  %v987 = vmax.f32 %v985, %v986
  %v988 = vrot.slane %v987, 1
  %v989 = vmax.f32 %v987, %v988
  %v990 = vsel %vm807, %v587, -inf
  %v991 = vrot.slane %v990, 4
  %v992 = vmax.f32 %v990, %v991
  %v993 = vrot.slane %v992, 2
  %v994 = vmax.f32 %v992, %v993
  %v995 = vrot.slane %v994, 1
  %v996 = vmax.f32 %v994, %v995
  %v997 = vsel %vm807, %v589, -inf
  %v998 = vrot.slane %v997, 4
  %v999 = vmax.f32 %v997, %v998
  %v1000 = vrot.slane %v999, 2
  %v1001 = vmax.f32 %v999, %v1000
  %v1002 = vrot.slane %v1001, 1
  %v1003 = vmax.f32 %v1001, %v1002
  %v1004 = vsel %vm807, %v597, -inf
  %v1005 = vrot.slane %v1004, 4
  %v1006 = vmax.f32 %v1004, %v1005
  %v1007 = vrot.slane %v1006, 2
  %v1008 = vmax.f32 %v1006, %v1007
  %v1009 = vrot.slane %v1008, 1
  %v1010 = vmax.f32 %v1008, %v1009
  %v1011 = vsel %vm807, %v605, -inf
  %v1012 = vrot.slane %v1011, 4
  %v1013 = vmax.f32 %v1011, %v1012
  %v1014 = vrot.slane %v1013, 2
  %v1015 = vmax.f32 %v1013, %v1014
  %v1016 = vrot.slane %v1015, 1
  %v1017 = vmax.f32 %v1015, %v1016
  %v1018 = vsel %vm807, %v604, -inf
  %v1019 = vrot.slane %v1018, 4
  %v1020 = vmax.f32 %v1018, %v1019
  %v1021 = vrot.slane %v1020, 2
  %v1022 = vmax.f32 %v1020, %v1021
  %v1023 = vrot.slane %v1022, 1
  %v1024 = vmax.f32 %v1022, %v1023
  %v1025 = vsel %vm807, %v606, -inf
  %v1026 = vrot.slane %v1025, 4
  %v1027 = vmax.f32 %v1025, %v1026
  %v1028 = vrot.slane %v1027, 2
  %v1029 = vmax.f32 %v1027, %v1028
  %v1030 = vrot.slane %v1029, 1
  %v1031 = vmax.f32 %v1029, %v1030
  %v1032 = vsel %vm807, %v614, -inf
  %v1033 = vrot.slane %v1032, 4
  %v1034 = vmax.f32 %v1032, %v1033
  %v1035 = vrot.slane %v1034, 2
  %v1036 = vmax.f32 %v1034, %v1035
  %v1037 = vrot.slane %v1036, 1
  %v1038 = vmax.f32 %v1036, %v1037
  %v1039 = vsel %vm807, %v622, -inf
  %v1040 = vrot.slane %v1039, 4
  %v1041 = vmax.f32 %v1039, %v1040
  %v1042 = vrot.slane %v1041, 2
  %v1043 = vmax.f32 %v1041, %v1042
  %v1044 = vrot.slane %v1043, 1
  %v1045 = vmax.f32 %v1043, %v1044
  %v1046 = vsel %vm807, %v621, -inf
  %v1047 = vrot.slane %v1046, 4
  %v1048 = vmax.f32 %v1046, %v1047
  %v1049 = vrot.slane %v1048, 2
  %v1050 = vmax.f32 %v1048, %v1049
  %v1051 = vrot.slane %v1050, 1
  %v1052 = vmax.f32 %v1050, %v1051
  %v1053 = vsel %vm807, %v623, -inf
  %v1054 = vrot.slane %v1053, 4
  %v1055 = vmax.f32 %v1053, %v1054
  %v1056 = vrot.slane %v1055, 2
  %v1057 = vmax.f32 %v1055, %v1056
  %v1058 = vrot.slane %v1057, 1
  %v1059 = vmax.f32 %v1057, %v1058
  %v1060 = vsel %vm807, %v631, -inf
  %v1061 = vrot.slane %v1060, 4
  %v1062 = vmax.f32 %v1060, %v1061
  %v1063 = vrot.slane %v1062, 2
  %v1064 = vmax.f32 %v1062, %v1063
  %v1065 = vrot.slane %v1064, 1
  %v1066 = vmax.f32 %v1064, %v1065
  %v1067 = vsel %vm807, %v639, -inf
  %v1068 = vrot.slane %v1067, 4
  %v1069 = vmax.f32 %v1067, %v1068
  %v1070 = vrot.slane %v1069, 2
  %v1071 = vmax.f32 %v1069, %v1070
  %v1072 = vrot.slane %v1071, 1
  %v1073 = vmax.f32 %v1071, %v1072
  %v1074 = vsel %vm807, %v638, -inf
  %v1075 = vrot.slane %v1074, 4
  %v1076 = vmax.f32 %v1074, %v1075
  %v1077 = vrot.slane %v1076, 2
  %v1078 = vmax.f32 %v1076, %v1077
  %v1079 = vrot.slane %v1078, 1
  %v1080 = vmax.f32 %v1078, %v1079
  %v1081 = vsel %vm807, %v640, -inf
  %v1082 = vrot.slane %v1081, 4
  %v1083 = vmax.f32 %v1081, %v1082
  %v1084 = vrot.slane %v1083, 2
  %v1085 = vmax.f32 %v1083, %v1084
  %v1086 = vrot.slane %v1085, 1
  %v1087 = vmax.f32 %v1085, %v1086
  %v1088 = vsel %vm807, %v648, -inf
  %v1089 = vrot.slane %v1088, 4
  %v1090 = vmax.f32 %v1088, %v1089
  %v1091 = vrot.slane %v1090, 2
  %v1092 = vmax.f32 %v1090, %v1091
  %v1093 = vrot.slane %v1092, 1
  %v1094 = vmax.f32 %v1092, %v1093
  %v1095 = vsel %vm807, %v656, -inf
  %v1096 = vrot.slane %v1095, 4
  %v1097 = vmax.f32 %v1095, %v1096
  %v1098 = vrot.slane %v1097, 2
  %v1099 = vmax.f32 %v1097, %v1098
  %v1100 = vrot.slane %v1099, 1
  %v1101 = vmax.f32 %v1099, %v1100
  %v1102 = vsel %vm807, %v655, -inf
  %v1103 = vrot.slane %v1102, 4
  %v1104 = vmax.f32 %v1102, %v1103
  %v1105 = vrot.slane %v1104, 2
  %v1106 = vmax.f32 %v1104, %v1105
  %v1107 = vrot.slane %v1106, 1
  %v1108 = vmax.f32 %v1106, %v1107
  %v1109 = vsel %vm807, %v657, -inf
  %v1110 = vrot.slane %v1109, 4
  %v1111 = vmax.f32 %v1109, %v1110
  %v1112 = vrot.slane %v1111, 2
  %v1113 = vmax.f32 %v1111, %v1112
  %v1114 = vrot.slane %v1113, 1
  %v1115 = vmax.f32 %v1113, %v1114
  %v1116 = vsel %vm807, %v665, -inf
  %v1117 = vrot.slane %v1116, 4
  %v1118 = vmax.f32 %v1116, %v1117
  %v1119 = vrot.slane %v1118, 2
  %v1120 = vmax.f32 %v1118, %v1119
  %v1121 = vrot.slane %v1120, 1
  %v1122 = vmax.f32 %v1120, %v1121
  %v1123 = vsel %vm807, %v673, -inf
  %v1124 = vrot.slane %v1123, 4
  %v1125 = vmax.f32 %v1123, %v1124
  %v1126 = vrot.slane %v1125, 2
  %v1127 = vmax.f32 %v1125, %v1126
  %v1128 = vrot.slane %v1127, 1
  %v1129 = vmax.f32 %v1127, %v1128
  %v1130 = vsel %vm807, %v672, -inf
  %v1131 = vrot.slane %v1130, 4
  %v1132 = vmax.f32 %v1130, %v1131
  %v1133 = vrot.slane %v1132, 2
  %v1134 = vmax.f32 %v1132, %v1133
  %v1135 = vrot.slane %v1134, 1
  %v1136 = vmax.f32 %v1134, %v1135
  %v1137 = vsel %vm807, %v674, -inf
  %v1138 = vrot.slane %v1137, 4
  %v1139 = vmax.f32 %v1137, %v1138
  %v1140 = vrot.slane %v1139, 2
  %v1141 = vmax.f32 %v1139, %v1140
  %v1142 = vrot.slane %v1141, 1
  %v1143 = vmax.f32 %v1141, %v1142
  %v1144 = vsel %vm807, %v682, -inf
  %v1145 = vrot.slane %v1144, 4
  %v1146 = vmax.f32 %v1144, %v1145
  %v1147 = vrot.slane %v1146, 2
  %v1148 = vmax.f32 %v1146, %v1147
  %v1149 = vrot.slane %v1148, 1
  %v1150 = vmax.f32 %v1148, %v1149
  %v1151 = vsel %vm807, %v690, -inf
  %v1152 = vrot.slane %v1151, 4
  %v1153 = vmax.f32 %v1151, %v1152
  %v1154 = vrot.slane %v1153, 2
  %v1155 = vmax.f32 %v1153, %v1154
  %v1156 = vrot.slane %v1155, 1
  %v1157 = vmax.f32 %v1155, %v1156
  %v1158 = vsel %vm807, %v689, -inf
  %v1159 = vrot.slane %v1158, 4
  %v1160 = vmax.f32 %v1158, %v1159
  %v1161 = vrot.slane %v1160, 2
  %v1162 = vmax.f32 %v1160, %v1161
  %v1163 = vrot.slane %v1162, 1
  %v1164 = vmax.f32 %v1162, %v1163
  %v1165 = vsel %vm807, %v691, -inf
  %v1166 = vrot.slane %v1165, 4
  %v1167 = vmax.f32 %v1165, %v1166
  %v1168 = vrot.slane %v1167, 2
  %v1169 = vmax.f32 %v1167, %v1168
  %v1170 = vrot.slane %v1169, 1
  %v1171 = vmax.f32 %v1169, %v1170
  %v1172 = vsel %vm807, %v699, -inf
  %v1173 = vrot.slane %v1172, 4
  %v1174 = vmax.f32 %v1172, %v1173
  %v1175 = vrot.slane %v1174, 2
  %v1176 = vmax.f32 %v1174, %v1175
  %v1177 = vrot.slane %v1176, 1
  %v1178 = vmax.f32 %v1176, %v1177
  %v1179 = vsel %vm807, %v707, -inf
  %v1180 = vrot.slane %v1179, 4
  %v1181 = vmax.f32 %v1179, %v1180
  %v1182 = vrot.slane %v1181, 2
  %v1183 = vmax.f32 %v1181, %v1182
  %v1184 = vrot.slane %v1183, 1
  %v1185 = vmax.f32 %v1183, %v1184
  %v1186 = vsel %vm807, %v706, -inf
  %v1187 = vrot.slane %v1186, 4
  %v1188 = vmax.f32 %v1186, %v1187
  %v1189 = vrot.slane %v1188, 2
  %v1190 = vmax.f32 %v1188, %v1189
  %v1191 = vrot.slane %v1190, 1
  %v1192 = vmax.f32 %v1190, %v1191
  %v1193 = vsel %vm807, %v708, -inf
  %v1194 = vrot.slane %v1193, 4
  %v1195 = vmax.f32 %v1193, %v1194
  %v1196 = vrot.slane %v1195, 2
  %v1197 = vmax.f32 %v1195, %v1196
  %v1198 = vrot.slane %v1197, 1
  %v1199 = vmax.f32 %v1197, %v1198
  %v1200 = vsel %vm807, %v716, -inf
  %v1201 = vrot.slane %v1200, 4
  %v1202 = vmax.f32 %v1200, %v1201
  %v1203 = vrot.slane %v1202, 2
  %v1204 = vmax.f32 %v1202, %v1203
  %v1205 = vrot.slane %v1204, 1
  %v1206 = vmax.f32 %v1204, %v1205
  %v1207 = vsel %vm807, %v724, -inf
  %v1208 = vrot.slane %v1207, 4
  %v1209 = vmax.f32 %v1207, %v1208
  %v1210 = vrot.slane %v1209, 2
  %v1211 = vmax.f32 %v1209, %v1210
  %v1212 = vrot.slane %v1211, 1
  %v1213 = vmax.f32 %v1211, %v1212
  %v1214 = vsel %vm807, %v723, -inf
  %v1215 = vrot.slane %v1214, 4
  %v1216 = vmax.f32 %v1214, %v1215
  %v1217 = vrot.slane %v1216, 2
  %v1218 = vmax.f32 %v1216, %v1217
  %v1219 = vrot.slane %v1218, 1
  %v1220 = vmax.f32 %v1218, %v1219
  %v1221 = vsel %vm807, %v725, -inf
  %v1222 = vrot.slane %v1221, 4
  %v1223 = vmax.f32 %v1221, %v1222
  %v1224 = vrot.slane %v1223, 2
  %v1225 = vmax.f32 %v1223, %v1224
  %v1226 = vrot.slane %v1225, 1
  %v1227 = vmax.f32 %v1225, %v1226
  %v1228 = vsel %vm807, %v733, -inf
  %v1229 = vrot.slane %v1228, 4
  %v1230 = vmax.f32 %v1228, %v1229
  %v1231 = vrot.slane %v1230, 2
  %v1232 = vmax.f32 %v1230, %v1231
  %v1233 = vrot.slane %v1232, 1
  %v1234 = vmax.f32 %v1232, %v1233
  %v1235 = vsel %vm807, %v741, -inf
  %v1236 = vrot.slane %v1235, 4
  %v1237 = vmax.f32 %v1235, %v1236
  %v1238 = vrot.slane %v1237, 2
  %v1239 = vmax.f32 %v1237, %v1238
  %v1240 = vrot.slane %v1239, 1
  %v1241 = vmax.f32 %v1239, %v1240
  %v1242 = vsel %vm807, %v740, -inf
  %v1243 = vrot.slane %v1242, 4
  %v1244 = vmax.f32 %v1242, %v1243
  %v1245 = vrot.slane %v1244, 2
  %v1246 = vmax.f32 %v1244, %v1245
  %v1247 = vrot.slane %v1246, 1
  %v1248 = vmax.f32 %v1246, %v1247
  %v1249 = vsel %vm807, %v742, -inf
  %v1250 = vrot.slane %v1249, 4
  %v1251 = vmax.f32 %v1249, %v1250
  %v1252 = vrot.slane %v1251, 2
  %v1253 = vmax.f32 %v1251, %v1252
  %v1254 = vrot.slane %v1253, 1
  %v1255 = vmax.f32 %v1253, %v1254
  %v1256 = vmax.f32 %v814, %v842
  %v1257 = vmax.f32 %v821, %v849
  %v1258 = vmax.f32 %v828, %v856
  %v1259 = vmax.f32 %v835, %v863
  %v1260 = vmax.f32 %v870, %v898
  %v1261 = vmax.f32 %v877, %v905
  %v1262 = vmax.f32 %v884, %v912
  %v1263 = vmax.f32 %v891, %v919
  %v1264 = vmax.f32 %v926, %v954
  %v1265 = vmax.f32 %v933, %v961
  %v1266 = vmax.f32 %v940, %v968
  %v1267 = vmax.f32 %v947, %v975
  %v1268 = vmax.f32 %v982, %v1010
  %v1269 = vmax.f32 %v989, %v1017
  %v1270 = vmax.f32 %v996, %v1024
  %v1271 = vmax.f32 %v1003, %v1031
  %v1272 = vmax.f32 %v1038, %v1066
  %v1273 = vmax.f32 %v1045, %v1073
  %v1274 = vmax.f32 %v1052, %v1080
  %v1275 = vmax.f32 %v1059, %v1087
  %v1276 = vmax.f32 %v1094, %v1122
  %v1277 = vmax.f32 %v1101, %v1129
  %v1278 = vmax.f32 %v1108, %v1136
  %v1279 = vmax.f32 %v1115, %v1143
  %v1280 = vmax.f32 %v1150, %v1178
  %v1281 = vmax.f32 %v1157, %v1185
  %v1282 = vmax.f32 %v1164, %v1192
  %v1283 = vmax.f32 %v1171, %v1199
  %v1284 = vmax.f32 %v1206, %v1234
  %v1285 = vmax.f32 %v1213, %v1241
  %v1286 = vmax.f32 %v1220, %v1248
  %v1287 = vmax.f32 %v1227, %v1255
  %vm1320 = vcmask 1041409
  %v1321 = vsel %vm1320, %v1257, %v1256
  %vm1322 = vcmask 1042434
  %v1323 = vsel %vm1322, %v1258, %v1321
  %vm1324 = vcmask 1043459
  %v1325 = vsel %vm1324, %v1259, %v1323
  %vm1326 = vcmask 1044484
  %v1327 = vsel %vm1326, %v1260, %v1325
  %vm1328 = vcmask 1045509
  %v1329 = vsel %vm1328, %v1261, %v1327
  %vm1330 = vcmask 1046534
  %v1331 = vsel %vm1330, %v1262, %v1329
  %vm1332 = vcmask 1047559
  %v1333 = vsel %vm1332, %v1263, %v1331
  %v1334 = vsel %vm1320, %v1265, %v1264
  %v1335 = vsel %vm1322, %v1266, %v1334
  %v1336 = vsel %vm1324, %v1267, %v1335
  %v1337 = vsel %vm1326, %v1268, %v1336
  %v1338 = vsel %vm1328, %v1269, %v1337
  %v1339 = vsel %vm1330, %v1270, %v1338
  %v1340 = vsel %vm1332, %v1271, %v1339
  %v1341 = vsel %vm1320, %v1273, %v1272
  %v1342 = vsel %vm1322, %v1274, %v1341
  %v1343 = vsel %vm1324, %v1275, %v1342
  %v1344 = vsel %vm1326, %v1276, %v1343
  %v1345 = vsel %vm1328, %v1277, %v1344
  %v1346 = vsel %vm1330, %v1278, %v1345
  %v1347 = vsel %vm1332, %v1279, %v1346
  %v1348 = vsel %vm1320, %v1281, %v1280
  %v1349 = vsel %vm1322, %v1282, %v1348
  %v1350 = vsel %vm1324, %v1283, %v1349
  %v1351 = vsel %vm1326, %v1284, %v1350
  %v1352 = vsel %vm1328, %v1285, %v1351
  %v1353 = vsel %vm1330, %v1286, %v1352
  %v1354 = vsel %vm1332, %v1287, %v1353
  %1359 = vst [vmem:[%s3] sm:$0xff] %v1333
  %1360 = vst [vmem:[%s3 + $0x8] sm:$0xff] %v1340
  %1361 = vst [vmem:[%s3 + $0x10] sm:$0xff] %v1347
  %1362 = vst [vmem:[%s3 + $0x18] sm:$0xff] %v1354
  // Predicated region
  $region14: #{net_forward.4} parent=0 // pred_check
    _
  $region15: #{net_forward.4} parent=0 // pred_check_branch
    %1364 = sbr.rel (0) target = $region17
  $region16: #{net_forward.4} parent=0 // pred_region
    _
  $region17: #{net_forward.4} parent=0 // pred_fallthru
    _
  // Predicated region
  $region18: #{net_forward.4} parent=0 // pred_check
    _
  $region19: #{net_forward.4} parent=0 // pred_check_branch
    %1366 = sbr.rel (0) target = $region21
  $region20: #{net_forward.4} parent=0 // pred_region
    _
  $region21: #{net_forward.4} parent=0 // pred_fallthru
    _

// kernel: net_forward.5
$region0: #{net_forward.5}
  #allocation0 [shape = 'u32[]', space=smem, size = 0x4, offset = 0x4, fixed_abs, tag = 'smem constant byte address 0x4 - core index']
  #allocation1 [shape = 'u32[144,128]{1,0:T(1,128)}', space=vmem, size = 0x12000, scoped, tag = 'internal scratch']
  %s0 = inlined_call_operand.vmem [shape: f32[2,2048], index: 0, kind: input, shape index: {}]
  %s1 = inlined_call_operand.vmem [shape: f32[2048,512], index: 1, kind: input, shape index: {}]
  %s2 = inlined_call_operand.vmem [shape: f32[1,512], index: 2, kind: input, shape index: {}]
  %s3 = inlined_call_operand.vmem [shape: f32[512,128], index: 3, kind: input, shape index: {}]
  %s4 = inlined_call_operand.vmem [shape: f32[1,128], index: 4, kind: input, shape index: {}]
  %s5 = inlined_call_operand.hbm [shape: f32[2,128], index: 5, kind: output, shape index: {}]
  %s6 = sld [smem:[#allocation0]]
  $region30: #{net_forward.5} parent=0
    _
  %s8 = ssub.s32 1, %s6
  %s9 = scalar_select 0, %s8, %s6
  $region1: #{net_forward.5} parent=0
    #allocation2 [shape = 'u8[1024]{0}', space=vmem, size = 0x400, scoped, tag = 'output window, operand 0, single buffered']
    #allocation3 [shape = 's32[1]{0}', space=sflag, size = 0x4, scoped, tag = 'scoped memory for net_forward.5']
    %10 = vsyncpa [#allocation3], 0
    // Predicated region
    $region2: #{net_forward.5} parent=1 // pred_check
      _
    $region3: #{net_forward.5} parent=1 // pred_check_branch
      %12 = sbr.rel (0) target = $region5
    $region4: #{net_forward.5} parent=1 // pred_region
      _
    $region5: #{net_forward.5} parent=1 // pred_fallthru
      _
    // Predicated region
    $region6: #{net_forward.5} parent=1 // pred_check
      _
    $region7: #{net_forward.5} parent=1 // pred_check_branch
      %14 = sbr.rel (0) target = $region9
    $region8: #{net_forward.5} parent=1 // pred_region
      _
    $region9: #{net_forward.5} parent=1 // pred_fallthru
      _
    // Predicated region
    $region10: #{net_forward.5} parent=1 // pred_check
      _
    $region11: #{net_forward.5} parent=1 // pred_check_branch
      %16 = sbr.rel (0) target = $region13
    $region12: #{net_forward.5} parent=1 // pred_region
      _
    $region13: #{net_forward.5} parent=1 // pred_fallthru
      _
    // Predicated region
    $region14: #{net_forward.5} parent=1 // pred_check
      _
    $region15: #{net_forward.5} parent=1 // pred_check_branch
      %18 = sbr.rel (0) target = $region17
    $region16: #{net_forward.5} parent=1 // pred_region
      _
    $region17: #{net_forward.5} parent=1 // pred_fallthru
      _
    // Predicated region
    $region18: #{net_forward.5} parent=1 // pred_check
      _
    $region19: #{net_forward.5} parent=1 // pred_check_branch
      %20 = sbr.rel (0) target = $region21
    $region20: #{net_forward.5} parent=1 // pred_region
      _
    $region21: #{net_forward.5} parent=1 // pred_fallthru
      _
    %v21 = vld [vmem:[%s0] sm:$0xff]
    %v22 = vld [vmem:[%s0 + $0x8] sm:$0xff]
    %v23 = vld [vmem:[%s0 + $0x10] sm:$0xff]
    %v24 = vld [vmem:[%s0 + $0x18] sm:$0xff]
    %v25 = vld [vmem:[%s1] sm:$0xff]
    %v26 = vld [vmem:[%s1 + $0x8] sm:$0xff]
    %v27 = vld [vmem:[%s1 + $0x10] sm:$0xff]
    %v28 = vld [vmem:[%s1 + $0x18] sm:$0xff]
    %v29 = vld [vmem:[%s1 + $0x20] sm:$0xff]
    %v30 = vld [vmem:[%s1 + $0x28] sm:$0xff]
    %v31 = vld [vmem:[%s1 + $0x30] sm:$0xff]
    %v32 = vld [vmem:[%s1 + $0x38] sm:$0xff]
    %v33 = vld [vmem:[%s1 + $0x40] sm:$0xff]
    %v34 = vld [vmem:[%s1 + $0x48] sm:$0xff]
    %v35 = vld [vmem:[%s1 + $0x50] sm:$0xff]
    %v36 = vld [vmem:[%s1 + $0x58] sm:$0xff]
    %v37 = vld [vmem:[%s1 + $0x60] sm:$0xff]
    %v38 = vld [vmem:[%s1 + $0x68] sm:$0xff]
    %v39 = vld [vmem:[%s1 + $0x70] sm:$0xff]
    %v40 = vld [vmem:[%s1 + $0x78] sm:$0xff]
    %v41 = vld [vmem:[%s1 + $0x80] sm:$0xff]
    %v42 = vld [vmem:[%s1 + $0x88] sm:$0xff]
    %v43 = vld [vmem:[%s1 + $0x90] sm:$0xff]
    %v44 = vld [vmem:[%s1 + $0x98] sm:$0xff]
    %v45 = vld [vmem:[%s1 + $0xa0] sm:$0xff]
    %v46 = vld [vmem:[%s1 + $0xa8] sm:$0xff]
    %v47 = vld [vmem:[%s1 + $0xb0] sm:$0xff]
    %v48 = vld [vmem:[%s1 + $0xb8] sm:$0xff]
    %v49 = vld [vmem:[%s1 + $0xc0] sm:$0xff]
    %v50 = vld [vmem:[%s1 + $0xc8] sm:$0xff]
    %v51 = vld [vmem:[%s1 + $0xd0] sm:$0xff]
    %v52 = vld [vmem:[%s1 + $0xd8] sm:$0xff]
    %v53 = vld [vmem:[%s1 + $0xe0] sm:$0xff]
    %v54 = vld [vmem:[%s1 + $0xe8] sm:$0xff]
    %v55 = vld [vmem:[%s1 + $0xf0] sm:$0xff]
    %v56 = vld [vmem:[%s1 + $0xf8] sm:$0xff]
    %v57 = vld [vmem:[%s1 + $0x100] sm:$0xff]
    %v58 = vld [vmem:[%s1 + $0x108] sm:$0xff]
    %v59 = vld [vmem:[%s1 + $0x110] sm:$0xff]
    %v60 = vld [vmem:[%s1 + $0x118] sm:$0xff]
    %v61 = vld [vmem:[%s1 + $0x120] sm:$0xff]
    %v62 = vld [vmem:[%s1 + $0x128] sm:$0xff]
    %v63 = vld [vmem:[%s1 + $0x130] sm:$0xff]
    %v64 = vld [vmem:[%s1 + $0x138] sm:$0xff]
    %v65 = vld [vmem:[%s1 + $0x140] sm:$0xff]
    %v66 = vld [vmem:[%s1 + $0x148] sm:$0xff]
    %v67 = vld [vmem:[%s1 + $0x150] sm:$0xff]
    %v68 = vld [vmem:[%s1 + $0x158] sm:$0xff]
    %v69 = vld [vmem:[%s1 + $0x160] sm:$0xff]
    %v70 = vld [vmem:[%s1 + $0x168] sm:$0xff]
    %v71 = vld [vmem:[%s1 + $0x170] sm:$0xff]
    %v72 = vld [vmem:[%s1 + $0x178] sm:$0xff]
    %v73 = vld [vmem:[%s1 + $0x180] sm:$0xff]
    %v74 = vld [vmem:[%s1 + $0x188] sm:$0xff]
    %v75 = vld [vmem:[%s1 + $0x190] sm:$0xff]
    %v76 = vld [vmem:[%s1 + $0x198] sm:$0xff]
    %v77 = vld [vmem:[%s1 + $0x1a0] sm:$0xff]
    %v78 = vld [vmem:[%s1 + $0x1a8] sm:$0xff]
    %v79 = vld [vmem:[%s1 + $0x1b0] sm:$0xff]
    %v80 = vld [vmem:[%s1 + $0x1b8] sm:$0xff]
    %v81 = vld [vmem:[%s1 + $0x1c0] sm:$0xff]
    %v82 = vld [vmem:[%s1 + $0x1c8] sm:$0xff]
    %v83 = vld [vmem:[%s1 + $0x1d0] sm:$0xff]
    %v84 = vld [vmem:[%s1 + $0x1d8] sm:$0xff]
    %v85 = vld [vmem:[%s1 + $0x1e0] sm:$0xff]
    %v86 = vld [vmem:[%s1 + $0x1e8] sm:$0xff]
    %v87 = vld [vmem:[%s1 + $0x1f0] sm:$0xff]
    %v88 = vld [vmem:[%s1 + $0x1f8] sm:$0xff]
    %v89 = vld [vmem:[%s1 + $0x200] sm:$0xff]
    %v90 = vld [vmem:[%s1 + $0x208] sm:$0xff]
    %v91 = vld [vmem:[%s1 + $0x210] sm:$0xff]
    %v92 = vld [vmem:[%s1 + $0x218] sm:$0xff]
    %v93 = vld [vmem:[%s1 + $0x220] sm:$0xff]
    %v94 = vld [vmem:[%s1 + $0x228] sm:$0xff]
    %v95 = vld [vmem:[%s1 + $0x230] sm:$0xff]
    %v96 = vld [vmem:[%s1 + $0x238] sm:$0xff]
    %v97 = vld [vmem:[%s1 + $0x240] sm:$0xff]
    %v98 = vld [vmem:[%s1 + $0x248] sm:$0xff]
    %v99 = vld [vmem:[%s1 + $0x250] sm:$0xff]
    %v100 = vld [vmem:[%s1 + $0x258] sm:$0xff]
    %v101 = vld [vmem:[%s1 + $0x260] sm:$0xff]
    %v102 = vld [vmem:[%s1 + $0x268] sm:$0xff]
    %v103 = vld [vmem:[%s1 + $0x270] sm:$0xff]
    %v104 = vld [vmem:[%s1 + $0x278] sm:$0xff]
    %v105 = vld [vmem:[%s1 + $0x280] sm:$0xff]
    %v106 = vld [vmem:[%s1 + $0x288] sm:$0xff]
    %v107 = vld [vmem:[%s1 + $0x290] sm:$0xff]
    %v108 = vld [vmem:[%s1 + $0x298] sm:$0xff]
    %v109 = vld [vmem:[%s1 + $0x2a0] sm:$0xff]
    %v110 = vld [vmem:[%s1 + $0x2a8] sm:$0xff]
    %v111 = vld [vmem:[%s1 + $0x2b0] sm:$0xff]
    %v112 = vld [vmem:[%s1 + $0x2b8] sm:$0xff]
    %v113 = vld [vmem:[%s1 + $0x2c0] sm:$0xff]
    %v114 = vld [vmem:[%s1 + $0x2c8] sm:$0xff]
    %v115 = vld [vmem:[%s1 + $0x2d0] sm:$0xff]
    %v116 = vld [vmem:[%s1 + $0x2d8] sm:$0xff]
    %v117 = vld [vmem:[%s1 + $0x2e0] sm:$0xff]
    %v118 = vld [vmem:[%s1 + $0x2e8] sm:$0xff]
    %v119 = vld [vmem:[%s1 + $0x2f0] sm:$0xff]
    %v120 = vld [vmem:[%s1 + $0x2f8] sm:$0xff]
    %v121 = vld [vmem:[%s1 + $0x300] sm:$0xff]
    %v122 = vld [vmem:[%s1 + $0x308] sm:$0xff]
    %v123 = vld [vmem:[%s1 + $0x310] sm:$0xff]
    %v124 = vld [vmem:[%s1 + $0x318] sm:$0xff]
    %v125 = vld [vmem:[%s1 + $0x320] sm:$0xff]
    %v126 = vld [vmem:[%s1 + $0x328] sm:$0xff]
    %v127 = vld [vmem:[%s1 + $0x330] sm:$0xff]
    %v128 = vld [vmem:[%s1 + $0x338] sm:$0xff]
    %v129 = vld [vmem:[%s1 + $0x340] sm:$0xff]
    %v130 = vld [vmem:[%s1 + $0x348] sm:$0xff]
    %v131 = vld [vmem:[%s1 + $0x350] sm:$0xff]
    %v132 = vld [vmem:[%s1 + $0x358] sm:$0xff]
    %v133 = vld [vmem:[%s1 + $0x360] sm:$0xff]
    %v134 = vld [vmem:[%s1 + $0x368] sm:$0xff]
    %v135 = vld [vmem:[%s1 + $0x370] sm:$0xff]
    %v136 = vld [vmem:[%s1 + $0x378] sm:$0xff]
    %v137 = vld [vmem:[%s1 + $0x380] sm:$0xff]
    %v138 = vld [vmem:[%s1 + $0x388] sm:$0xff]
    %v139 = vld [vmem:[%s1 + $0x390] sm:$0xff]
    %v140 = vld [vmem:[%s1 + $0x398] sm:$0xff]
    %v141 = vld [vmem:[%s1 + $0x3a0] sm:$0xff]
    %v142 = vld [vmem:[%s1 + $0x3a8] sm:$0xff]
    %v143 = vld [vmem:[%s1 + $0x3b0] sm:$0xff]
    %v144 = vld [vmem:[%s1 + $0x3b8] sm:$0xff]
    %v145 = vld [vmem:[%s1 + $0x3c0] sm:$0xff]
    %v146 = vld [vmem:[%s1 + $0x3c8] sm:$0xff]
    %v147 = vld [vmem:[%s1 + $0x3d0] sm:$0xff]
    %v148 = vld [vmem:[%s1 + $0x3d8] sm:$0xff]
    %v149 = vld [vmem:[%s1 + $0x3e0] sm:$0xff]
    %v150 = vld [vmem:[%s1 + $0x3e8] sm:$0xff]
    %v151 = vld [vmem:[%s1 + $0x3f0] sm:$0xff]
    %v152 = vld [vmem:[%s1 + $0x3f8] sm:$0xff]
    %v153 = vld [vmem:[%s1 + $0x400] sm:$0xff]
    %v154 = vld [vmem:[%s1 + $0x408] sm:$0xff]
    %v155 = vld [vmem:[%s1 + $0x410] sm:$0xff]
    %v156 = vld [vmem:[%s1 + $0x418] sm:$0xff]
    %v157 = vld [vmem:[%s1 + $0x420] sm:$0xff]
    %v158 = vld [vmem:[%s1 + $0x428] sm:$0xff]
    %v159 = vld [vmem:[%s1 + $0x430] sm:$0xff]
    %v160 = vld [vmem:[%s1 + $0x438] sm:$0xff]
    %v161 = vld [vmem:[%s1 + $0x440] sm:$0xff]
    %v162 = vld [vmem:[%s1 + $0x448] sm:$0xff]
    %v163 = vld [vmem:[%s1 + $0x450] sm:$0xff]
    %v164 = vld [vmem:[%s1 + $0x458] sm:$0xff]
    %v165 = vld [vmem:[%s1 + $0x460] sm:$0xff]
    %v166 = vld [vmem:[%s1 + $0x468] sm:$0xff]
    %v167 = vld [vmem:[%s1 + $0x470] sm:$0xff]
    %v168 = vld [vmem:[%s1 + $0x478] sm:$0xff]
    %v169 = vld [vmem:[%s1 + $0x480] sm:$0xff]
    %v170 = vld [vmem:[%s1 + $0x488] sm:$0xff]
    %v171 = vld [vmem:[%s1 + $0x490] sm:$0xff]
    %v172 = vld [vmem:[%s1 + $0x498] sm:$0xff]
    %v173 = vld [vmem:[%s1 + $0x4a0] sm:$0xff]
    %v174 = vld [vmem:[%s1 + $0x4a8] sm:$0xff]
    %v175 = vld [vmem:[%s1 + $0x4b0] sm:$0xff]
    %v176 = vld [vmem:[%s1 + $0x4b8] sm:$0xff]
    %v177 = vld [vmem:[%s1 + $0x4c0] sm:$0xff]
    %v178 = vld [vmem:[%s1 + $0x4c8] sm:$0xff]
    %v179 = vld [vmem:[%s1 + $0x4d0] sm:$0xff]
    %v180 = vld [vmem:[%s1 + $0x4d8] sm:$0xff]
    %v181 = vld [vmem:[%s1 + $0x4e0] sm:$0xff]
    %v182 = vld [vmem:[%s1 + $0x4e8] sm:$0xff]
    %v183 = vld [vmem:[%s1 + $0x4f0] sm:$0xff]
    %v184 = vld [vmem:[%s1 + $0x4f8] sm:$0xff]
    %v185 = vld [vmem:[%s1 + $0x500] sm:$0xff]
    %v186 = vld [vmem:[%s1 + $0x508] sm:$0xff]
    %v187 = vld [vmem:[%s1 + $0x510] sm:$0xff]
    %v188 = vld [vmem:[%s1 + $0x518] sm:$0xff]
    %v189 = vld [vmem:[%s1 + $0x520] sm:$0xff]
    %v190 = vld [vmem:[%s1 + $0x528] sm:$0xff]
    %v191 = vld [vmem:[%s1 + $0x530] sm:$0xff]
    %v192 = vld [vmem:[%s1 + $0x538] sm:$0xff]
    %v193 = vld [vmem:[%s1 + $0x540] sm:$0xff]
    %v194 = vld [vmem:[%s1 + $0x548] sm:$0xff]
    %v195 = vld [vmem:[%s1 + $0x550] sm:$0xff]
    %v196 = vld [vmem:[%s1 + $0x558] sm:$0xff]
    %v197 = vld [vmem:[%s1 + $0x560] sm:$0xff]
    %v198 = vld [vmem:[%s1 + $0x568] sm:$0xff]
    %v199 = vld [vmem:[%s1 + $0x570] sm:$0xff]
    %v200 = vld [vmem:[%s1 + $0x578] sm:$0xff]
    %v201 = vld [vmem:[%s1 + $0x580] sm:$0xff]
    %v202 = vld [vmem:[%s1 + $0x588] sm:$0xff]
    %v203 = vld [vmem:[%s1 + $0x590] sm:$0xff]
    %v204 = vld [vmem:[%s1 + $0x598] sm:$0xff]
    %v205 = vld [vmem:[%s1 + $0x5a0] sm:$0xff]
    %v206 = vld [vmem:[%s1 + $0x5a8] sm:$0xff]
    %v207 = vld [vmem:[%s1 + $0x5b0] sm:$0xff]
    %v208 = vld [vmem:[%s1 + $0x5b8] sm:$0xff]
    %v209 = vld [vmem:[%s1 + $0x5c0] sm:$0xff]
    %v210 = vld [vmem:[%s1 + $0x5c8] sm:$0xff]
    %v211 = vld [vmem:[%s1 + $0x5d0] sm:$0xff]
    %v212 = vld [vmem:[%s1 + $0x5d8] sm:$0xff]
    %v213 = vld [vmem:[%s1 + $0x5e0] sm:$0xff]
    %v214 = vld [vmem:[%s1 + $0x5e8] sm:$0xff]
    %v215 = vld [vmem:[%s1 + $0x5f0] sm:$0xff]
    %v216 = vld [vmem:[%s1 + $0x5f8] sm:$0xff]
    %v217 = vld [vmem:[%s1 + $0x600] sm:$0xff]
    %v218 = vld [vmem:[%s1 + $0x608] sm:$0xff]
    %v219 = vld [vmem:[%s1 + $0x610] sm:$0xff]
    %v220 = vld [vmem:[%s1 + $0x618] sm:$0xff]
    %v221 = vld [vmem:[%s1 + $0x620] sm:$0xff]
    %v222 = vld [vmem:[%s1 + $0x628] sm:$0xff]
    %v223 = vld [vmem:[%s1 + $0x630] sm:$0xff]
    %v224 = vld [vmem:[%s1 + $0x638] sm:$0xff]
    %v225 = vld [vmem:[%s1 + $0x640] sm:$0xff]
    %v226 = vld [vmem:[%s1 + $0x648] sm:$0xff]
    %v227 = vld [vmem:[%s1 + $0x650] sm:$0xff]
    %v228 = vld [vmem:[%s1 + $0x658] sm:$0xff]
    %v229 = vld [vmem:[%s1 + $0x660] sm:$0xff]
    %v230 = vld [vmem:[%s1 + $0x668] sm:$0xff]
    %v231 = vld [vmem:[%s1 + $0x670] sm:$0xff]
    %v232 = vld [vmem:[%s1 + $0x678] sm:$0xff]
    %v233 = vld [vmem:[%s1 + $0x680] sm:$0xff]
    %v234 = vld [vmem:[%s1 + $0x688] sm:$0xff]
    %v235 = vld [vmem:[%s1 + $0x690] sm:$0xff]
    %v236 = vld [vmem:[%s1 + $0x698] sm:$0xff]
    %v237 = vld [vmem:[%s1 + $0x6a0] sm:$0xff]
    %v238 = vld [vmem:[%s1 + $0x6a8] sm:$0xff]
    %v239 = vld [vmem:[%s1 + $0x6b0] sm:$0xff]
    %v240 = vld [vmem:[%s1 + $0x6b8] sm:$0xff]
    %v241 = vld [vmem:[%s1 + $0x6c0] sm:$0xff]
    %v242 = vld [vmem:[%s1 + $0x6c8] sm:$0xff]
    %v243 = vld [vmem:[%s1 + $0x6d0] sm:$0xff]
    %v244 = vld [vmem:[%s1 + $0x6d8] sm:$0xff]
    %v245 = vld [vmem:[%s1 + $0x6e0] sm:$0xff]
    %v246 = vld [vmem:[%s1 + $0x6e8] sm:$0xff]
    %v247 = vld [vmem:[%s1 + $0x6f0] sm:$0xff]
    %v248 = vld [vmem:[%s1 + $0x6f8] sm:$0xff]
    %v249 = vld [vmem:[%s1 + $0x700] sm:$0xff]
    %v250 = vld [vmem:[%s1 + $0x708] sm:$0xff]
    %v251 = vld [vmem:[%s1 + $0x710] sm:$0xff]
    %v252 = vld [vmem:[%s1 + $0x718] sm:$0xff]
    %v253 = vld [vmem:[%s1 + $0x720] sm:$0xff]
    %v254 = vld [vmem:[%s1 + $0x728] sm:$0xff]
    %v255 = vld [vmem:[%s1 + $0x730] sm:$0xff]
    %v256 = vld [vmem:[%s1 + $0x738] sm:$0xff]
    %v257 = vld [vmem:[%s1 + $0x740] sm:$0xff]
    %v258 = vld [vmem:[%s1 + $0x748] sm:$0xff]
    %v259 = vld [vmem:[%s1 + $0x750] sm:$0xff]
    %v260 = vld [vmem:[%s1 + $0x758] sm:$0xff]
    %v261 = vld [vmem:[%s1 + $0x760] sm:$0xff]
    %v262 = vld [vmem:[%s1 + $0x768] sm:$0xff]
    %v263 = vld [vmem:[%s1 + $0x770] sm:$0xff]
    %v264 = vld [vmem:[%s1 + $0x778] sm:$0xff]
    %v265 = vld [vmem:[%s1 + $0x780] sm:$0xff]
    %v266 = vld [vmem:[%s1 + $0x788] sm:$0xff]
    %v267 = vld [vmem:[%s1 + $0x790] sm:$0xff]
    %v268 = vld [vmem:[%s1 + $0x798] sm:$0xff]
    %v269 = vld [vmem:[%s1 + $0x7a0] sm:$0xff]
    %v270 = vld [vmem:[%s1 + $0x7a8] sm:$0xff]
    %v271 = vld [vmem:[%s1 + $0x7b0] sm:$0xff]
    %v272 = vld [vmem:[%s1 + $0x7b8] sm:$0xff]
    %v273 = vld [vmem:[%s1 + $0x7c0] sm:$0xff]
    %v274 = vld [vmem:[%s1 + $0x7c8] sm:$0xff]
    %v275 = vld [vmem:[%s1 + $0x7d0] sm:$0xff]
    %v276 = vld [vmem:[%s1 + $0x7d8] sm:$0xff]
    %v277 = vld [vmem:[%s1 + $0x7e0] sm:$0xff]
    %v278 = vld [vmem:[%s1 + $0x7e8] sm:$0xff]
    %v279 = vld [vmem:[%s1 + $0x7f0] sm:$0xff]
    %v280 = vld [vmem:[%s1 + $0x7f8] sm:$0xff]
    %v281 = vld [vmem:[%s1 + $0x800] sm:$0xff]
    %v282 = vld [vmem:[%s1 + $0x808] sm:$0xff]
    %v283 = vld [vmem:[%s1 + $0x810] sm:$0xff]
    %v284 = vld [vmem:[%s1 + $0x818] sm:$0xff]
    %v285 = vld [vmem:[%s1 + $0x820] sm:$0xff]
    %v286 = vld [vmem:[%s1 + $0x828] sm:$0xff]
    %v287 = vld [vmem:[%s1 + $0x830] sm:$0xff]
    %v288 = vld [vmem:[%s1 + $0x838] sm:$0xff]
    %v289 = vld [vmem:[%s1 + $0x840] sm:$0xff]
    %v290 = vld [vmem:[%s1 + $0x848] sm:$0xff]
    %v291 = vld [vmem:[%s1 + $0x850] sm:$0xff]
    %v292 = vld [vmem:[%s1 + $0x858] sm:$0xff]
    %v293 = vld [vmem:[%s1 + $0x860] sm:$0xff]
    %v294 = vld [vmem:[%s1 + $0x868] sm:$0xff]
    %v295 = vld [vmem:[%s1 + $0x870] sm:$0xff]
    %v296 = vld [vmem:[%s1 + $0x878] sm:$0xff]
    %v297 = vld [vmem:[%s1 + $0x880] sm:$0xff]
    %v298 = vld [vmem:[%s1 + $0x888] sm:$0xff]
    %v299 = vld [vmem:[%s1 + $0x890] sm:$0xff]
    %v300 = vld [vmem:[%s1 + $0x898] sm:$0xff]
    %v301 = vld [vmem:[%s1 + $0x8a0] sm:$0xff]
    %v302 = vld [vmem:[%s1 + $0x8a8] sm:$0xff]
    %v303 = vld [vmem:[%s1 + $0x8b0] sm:$0xff]
    %v304 = vld [vmem:[%s1 + $0x8b8] sm:$0xff]
    %v305 = vld [vmem:[%s1 + $0x8c0] sm:$0xff]
    %v306 = vld [vmem:[%s1 + $0x8c8] sm:$0xff]
    %v307 = vld [vmem:[%s1 + $0x8d0] sm:$0xff]
    %v308 = vld [vmem:[%s1 + $0x8d8] sm:$0xff]
    %v309 = vld [vmem:[%s1 + $0x8e0] sm:$0xff]
    %v310 = vld [vmem:[%s1 + $0x8e8] sm:$0xff]
    %v311 = vld [vmem:[%s1 + $0x8f0] sm:$0xff]
    %v312 = vld [vmem:[%s1 + $0x8f8] sm:$0xff]
    %v313 = vld [vmem:[%s1 + $0x900] sm:$0xff]
    %v314 = vld [vmem:[%s1 + $0x908] sm:$0xff]
    %v315 = vld [vmem:[%s1 + $0x910] sm:$0xff]
    %v316 = vld [vmem:[%s1 + $0x918] sm:$0xff]
    %v317 = vld [vmem:[%s1 + $0x920] sm:$0xff]
    %v318 = vld [vmem:[%s1 + $0x928] sm:$0xff]
    %v319 = vld [vmem:[%s1 + $0x930] sm:$0xff]
    %v320 = vld [vmem:[%s1 + $0x938] sm:$0xff]
    %v321 = vld [vmem:[%s1 + $0x940] sm:$0xff]
    %v322 = vld [vmem:[%s1 + $0x948] sm:$0xff]
    %v323 = vld [vmem:[%s1 + $0x950] sm:$0xff]
    %v324 = vld [vmem:[%s1 + $0x958] sm:$0xff]
    %v325 = vld [vmem:[%s1 + $0x960] sm:$0xff]
    %v326 = vld [vmem:[%s1 + $0x968] sm:$0xff]
    %v327 = vld [vmem:[%s1 + $0x970] sm:$0xff]
    %v328 = vld [vmem:[%s1 + $0x978] sm:$0xff]
    %v329 = vld [vmem:[%s1 + $0x980] sm:$0xff]
    %v330 = vld [vmem:[%s1 + $0x988] sm:$0xff]
    %v331 = vld [vmem:[%s1 + $0x990] sm:$0xff]
    %v332 = vld [vmem:[%s1 + $0x998] sm:$0xff]
    %v333 = vld [vmem:[%s1 + $0x9a0] sm:$0xff]
    %v334 = vld [vmem:[%s1 + $0x9a8] sm:$0xff]
    %v335 = vld [vmem:[%s1 + $0x9b0] sm:$0xff]
    %v336 = vld [vmem:[%s1 + $0x9b8] sm:$0xff]
    %v337 = vld [vmem:[%s1 + $0x9c0] sm:$0xff]
    %v338 = vld [vmem:[%s1 + $0x9c8] sm:$0xff]
    %v339 = vld [vmem:[%s1 + $0x9d0] sm:$0xff]
    %v340 = vld [vmem:[%s1 + $0x9d8] sm:$0xff]
    %v341 = vld [vmem:[%s1 + $0x9e0] sm:$0xff]
    %v342 = vld [vmem:[%s1 + $0x9e8] sm:$0xff]
    %v343 = vld [vmem:[%s1 + $0x9f0] sm:$0xff]
    %v344 = vld [vmem:[%s1 + $0x9f8] sm:$0xff]
    %v345 = vld [vmem:[%s1 + $0xa00] sm:$0xff]
    %v346 = vld [vmem:[%s1 + $0xa08] sm:$0xff]
    %v347 = vld [vmem:[%s1 + $0xa10] sm:$0xff]
    %v348 = vld [vmem:[%s1 + $0xa18] sm:$0xff]
    %v349 = vld [vmem:[%s1 + $0xa20] sm:$0xff]
    %v350 = vld [vmem:[%s1 + $0xa28] sm:$0xff]
    %v351 = vld [vmem:[%s1 + $0xa30] sm:$0xff]
    %v352 = vld [vmem:[%s1 + $0xa38] sm:$0xff]
    %v353 = vld [vmem:[%s1 + $0xa40] sm:$0xff]
    %v354 = vld [vmem:[%s1 + $0xa48] sm:$0xff]
    %v355 = vld [vmem:[%s1 + $0xa50] sm:$0xff]
    %v356 = vld [vmem:[%s1 + $0xa58] sm:$0xff]
    %v357 = vld [vmem:[%s1 + $0xa60] sm:$0xff]
    %v358 = vld [vmem:[%s1 + $0xa68] sm:$0xff]
    %v359 = vld [vmem:[%s1 + $0xa70] sm:$0xff]
    %v360 = vld [vmem:[%s1 + $0xa78] sm:$0xff]
    %v361 = vld [vmem:[%s1 + $0xa80] sm:$0xff]
    %v362 = vld [vmem:[%s1 + $0xa88] sm:$0xff]
    %v363 = vld [vmem:[%s1 + $0xa90] sm:$0xff]
    %v364 = vld [vmem:[%s1 + $0xa98] sm:$0xff]
    %v365 = vld [vmem:[%s1 + $0xaa0] sm:$0xff]
    %v366 = vld [vmem:[%s1 + $0xaa8] sm:$0xff]
    %v367 = vld [vmem:[%s1 + $0xab0] sm:$0xff]
    %v368 = vld [vmem:[%s1 + $0xab8] sm:$0xff]
    %v369 = vld [vmem:[%s1 + $0xac0] sm:$0xff]
    %v370 = vld [vmem:[%s1 + $0xac8] sm:$0xff]
    %v371 = vld [vmem:[%s1 + $0xad0] sm:$0xff]
    %v372 = vld [vmem:[%s1 + $0xad8] sm:$0xff]
    %v373 = vld [vmem:[%s1 + $0xae0] sm:$0xff]
    %v374 = vld [vmem:[%s1 + $0xae8] sm:$0xff]
    %v375 = vld [vmem:[%s1 + $0xaf0] sm:$0xff]
    %v376 = vld [vmem:[%s1 + $0xaf8] sm:$0xff]
    %v377 = vld [vmem:[%s1 + $0xb00] sm:$0xff]
    %v378 = vld [vmem:[%s1 + $0xb08] sm:$0xff]
    %v379 = vld [vmem:[%s1 + $0xb10] sm:$0xff]
    %v380 = vld [vmem:[%s1 + $0xb18] sm:$0xff]
    %v381 = vld [vmem:[%s1 + $0xb20] sm:$0xff]
    %v382 = vld [vmem:[%s1 + $0xb28] sm:$0xff]
    %v383 = vld [vmem:[%s1 + $0xb30] sm:$0xff]
    %v384 = vld [vmem:[%s1 + $0xb38] sm:$0xff]
    %v385 = vld [vmem:[%s1 + $0xb40] sm:$0xff]
    %v386 = vld [vmem:[%s1 + $0xb48] sm:$0xff]
    %v387 = vld [vmem:[%s1 + $0xb50] sm:$0xff]
    %v388 = vld [vmem:[%s1 + $0xb58] sm:$0xff]
    %v389 = vld [vmem:[%s1 + $0xb60] sm:$0xff]
    %v390 = vld [vmem:[%s1 + $0xb68] sm:$0xff]
    %v391 = vld [vmem:[%s1 + $0xb70] sm:$0xff]
    %v392 = vld [vmem:[%s1 + $0xb78] sm:$0xff]
    %v393 = vld [vmem:[%s1 + $0xb80] sm:$0xff]
    %v394 = vld [vmem:[%s1 + $0xb88] sm:$0xff]
    %v395 = vld [vmem:[%s1 + $0xb90] sm:$0xff]
    %v396 = vld [vmem:[%s1 + $0xb98] sm:$0xff]
    %v397 = vld [vmem:[%s1 + $0xba0] sm:$0xff]
    %v398 = vld [vmem:[%s1 + $0xba8] sm:$0xff]
    %v399 = vld [vmem:[%s1 + $0xbb0] sm:$0xff]
    %v400 = vld [vmem:[%s1 + $0xbb8] sm:$0xff]
    %v401 = vld [vmem:[%s1 + $0xbc0] sm:$0xff]
    %v402 = vld [vmem:[%s1 + $0xbc8] sm:$0xff]
    %v403 = vld [vmem:[%s1 + $0xbd0] sm:$0xff]
    %v404 = vld [vmem:[%s1 + $0xbd8] sm:$0xff]
    %v405 = vld [vmem:[%s1 + $0xbe0] sm:$0xff]
    %v406 = vld [vmem:[%s1 + $0xbe8] sm:$0xff]
    %v407 = vld [vmem:[%s1 + $0xbf0] sm:$0xff]
    %v408 = vld [vmem:[%s1 + $0xbf8] sm:$0xff]
    %v409 = vld [vmem:[%s1 + $0xc00] sm:$0xff]
    %v410 = vld [vmem:[%s1 + $0xc08] sm:$0xff]
    %v411 = vld [vmem:[%s1 + $0xc10] sm:$0xff]
    %v412 = vld [vmem:[%s1 + $0xc18] sm:$0xff]
    %v413 = vld [vmem:[%s1 + $0xc20] sm:$0xff]
    %v414 = vld [vmem:[%s1 + $0xc28] sm:$0xff]
    %v415 = vld [vmem:[%s1 + $0xc30] sm:$0xff]
    %v416 = vld [vmem:[%s1 + $0xc38] sm:$0xff]
    %v417 = vld [vmem:[%s1 + $0xc40] sm:$0xff]
    %v418 = vld [vmem:[%s1 + $0xc48] sm:$0xff]
    %v419 = vld [vmem:[%s1 + $0xc50] sm:$0xff]
    %v420 = vld [vmem:[%s1 + $0xc58] sm:$0xff]
    %v421 = vld [vmem:[%s1 + $0xc60] sm:$0xff]
    %v422 = vld [vmem:[%s1 + $0xc68] sm:$0xff]
    %v423 = vld [vmem:[%s1 + $0xc70] sm:$0xff]
    %v424 = vld [vmem:[%s1 + $0xc78] sm:$0xff]
    %v425 = vld [vmem:[%s1 + $0xc80] sm:$0xff]
    %v426 = vld [vmem:[%s1 + $0xc88] sm:$0xff]
    %v427 = vld [vmem:[%s1 + $0xc90] sm:$0xff]
    %v428 = vld [vmem:[%s1 + $0xc98] sm:$0xff]
    %v429 = vld [vmem:[%s1 + $0xca0] sm:$0xff]
    %v430 = vld [vmem:[%s1 + $0xca8] sm:$0xff]
    %v431 = vld [vmem:[%s1 + $0xcb0] sm:$0xff]
    %v432 = vld [vmem:[%s1 + $0xcb8] sm:$0xff]
    %v433 = vld [vmem:[%s1 + $0xcc0] sm:$0xff]
    %v434 = vld [vmem:[%s1 + $0xcc8] sm:$0xff]
    %v435 = vld [vmem:[%s1 + $0xcd0] sm:$0xff]
    %v436 = vld [vmem:[%s1 + $0xcd8] sm:$0xff]
    %v437 = vld [vmem:[%s1 + $0xce0] sm:$0xff]
    %v438 = vld [vmem:[%s1 + $0xce8] sm:$0xff]
    %v439 = vld [vmem:[%s1 + $0xcf0] sm:$0xff]
    %v440 = vld [vmem:[%s1 + $0xcf8] sm:$0xff]
    %v441 = vld [vmem:[%s1 + $0xd00] sm:$0xff]
    %v442 = vld [vmem:[%s1 + $0xd08] sm:$0xff]
    %v443 = vld [vmem:[%s1 + $0xd10] sm:$0xff]
    %v444 = vld [vmem:[%s1 + $0xd18] sm:$0xff]
    %v445 = vld [vmem:[%s1 + $0xd20] sm:$0xff]
    %v446 = vld [vmem:[%s1 + $0xd28] sm:$0xff]
    %v447 = vld [vmem:[%s1 + $0xd30] sm:$0xff]
    %v448 = vld [vmem:[%s1 + $0xd38] sm:$0xff]
    %v449 = vld [vmem:[%s1 + $0xd40] sm:$0xff]
    %v450 = vld [vmem:[%s1 + $0xd48] sm:$0xff]
    %v451 = vld [vmem:[%s1 + $0xd50] sm:$0xff]
    %v452 = vld [vmem:[%s1 + $0xd58] sm:$0xff]
    %v453 = vld [vmem:[%s1 + $0xd60] sm:$0xff]
    %v454 = vld [vmem:[%s1 + $0xd68] sm:$0xff]
    %v455 = vld [vmem:[%s1 + $0xd70] sm:$0xff]
    %v456 = vld [vmem:[%s1 + $0xd78] sm:$0xff]
    %v457 = vld [vmem:[%s1 + $0xd80] sm:$0xff]
    %v458 = vld [vmem:[%s1 + $0xd88] sm:$0xff]
    %v459 = vld [vmem:[%s1 + $0xd90] sm:$0xff]
    %v460 = vld [vmem:[%s1 + $0xd98] sm:$0xff]
    %v461 = vld [vmem:[%s1 + $0xda0] sm:$0xff]
    %v462 = vld [vmem:[%s1 + $0xda8] sm:$0xff]
    %v463 = vld [vmem:[%s1 + $0xdb0] sm:$0xff]
    %v464 = vld [vmem:[%s1 + $0xdb8] sm:$0xff]
    %v465 = vld [vmem:[%s1 + $0xdc0] sm:$0xff]
    %v466 = vld [vmem:[%s1 + $0xdc8] sm:$0xff]
    %v467 = vld [vmem:[%s1 + $0xdd0] sm:$0xff]
    %v468 = vld [vmem:[%s1 + $0xdd8] sm:$0xff]
    %v469 = vld [vmem:[%s1 + $0xde0] sm:$0xff]
    %v470 = vld [vmem:[%s1 + $0xde8] sm:$0xff]
    %v471 = vld [vmem:[%s1 + $0xdf0] sm:$0xff]
    %v472 = vld [vmem:[%s1 + $0xdf8] sm:$0xff]
    %v473 = vld [vmem:[%s1 + $0xe00] sm:$0xff]
    %v474 = vld [vmem:[%s1 + $0xe08] sm:$0xff]
    %v475 = vld [vmem:[%s1 + $0xe10] sm:$0xff]
    %v476 = vld [vmem:[%s1 + $0xe18] sm:$0xff]
    %v477 = vld [vmem:[%s1 + $0xe20] sm:$0xff]
    %v478 = vld [vmem:[%s1 + $0xe28] sm:$0xff]
    %v479 = vld [vmem:[%s1 + $0xe30] sm:$0xff]
    %v480 = vld [vmem:[%s1 + $0xe38] sm:$0xff]
    %v481 = vld [vmem:[%s1 + $0xe40] sm:$0xff]
    %v482 = vld [vmem:[%s1 + $0xe48] sm:$0xff]
    %v483 = vld [vmem:[%s1 + $0xe50] sm:$0xff]
    %v484 = vld [vmem:[%s1 + $0xe58] sm:$0xff]
    %v485 = vld [vmem:[%s1 + $0xe60] sm:$0xff]
    %v486 = vld [vmem:[%s1 + $0xe68] sm:$0xff]
    %v487 = vld [vmem:[%s1 + $0xe70] sm:$0xff]
    %v488 = vld [vmem:[%s1 + $0xe78] sm:$0xff]
    %v489 = vld [vmem:[%s1 + $0xe80] sm:$0xff]
    %v490 = vld [vmem:[%s1 + $0xe88] sm:$0xff]
    %v491 = vld [vmem:[%s1 + $0xe90] sm:$0xff]
    %v492 = vld [vmem:[%s1 + $0xe98] sm:$0xff]
    %v493 = vld [vmem:[%s1 + $0xea0] sm:$0xff]
    %v494 = vld [vmem:[%s1 + $0xea8] sm:$0xff]
    %v495 = vld [vmem:[%s1 + $0xeb0] sm:$0xff]
    %v496 = vld [vmem:[%s1 + $0xeb8] sm:$0xff]
    %v497 = vld [vmem:[%s1 + $0xec0] sm:$0xff]
    %v498 = vld [vmem:[%s1 + $0xec8] sm:$0xff]
    %v499 = vld [vmem:[%s1 + $0xed0] sm:$0xff]
    %v500 = vld [vmem:[%s1 + $0xed8] sm:$0xff]
    %v501 = vld [vmem:[%s1 + $0xee0] sm:$0xff]
    %v502 = vld [vmem:[%s1 + $0xee8] sm:$0xff]
    %v503 = vld [vmem:[%s1 + $0xef0] sm:$0xff]
    %v504 = vld [vmem:[%s1 + $0xef8] sm:$0xff]
    %v505 = vld [vmem:[%s1 + $0xf00] sm:$0xff]
    %v506 = vld [vmem:[%s1 + $0xf08] sm:$0xff]
    %v507 = vld [vmem:[%s1 + $0xf10] sm:$0xff]
    %v508 = vld [vmem:[%s1 + $0xf18] sm:$0xff]
    %v509 = vld [vmem:[%s1 + $0xf20] sm:$0xff]
    %v510 = vld [vmem:[%s1 + $0xf28] sm:$0xff]
    %v511 = vld [vmem:[%s1 + $0xf30] sm:$0xff]
    %v512 = vld [vmem:[%s1 + $0xf38] sm:$0xff]
    %v513 = vld [vmem:[%s1 + $0xf40] sm:$0xff]
    %v514 = vld [vmem:[%s1 + $0xf48] sm:$0xff]
    %v515 = vld [vmem:[%s1 + $0xf50] sm:$0xff]
    %v516 = vld [vmem:[%s1 + $0xf58] sm:$0xff]
    %v517 = vld [vmem:[%s1 + $0xf60] sm:$0xff]
    %v518 = vld [vmem:[%s1 + $0xf68] sm:$0xff]
    %v519 = vld [vmem:[%s1 + $0xf70] sm:$0xff]
    %v520 = vld [vmem:[%s1 + $0xf78] sm:$0xff]
    %v521 = vld [vmem:[%s1 + $0xf80] sm:$0xff]
    %v522 = vld [vmem:[%s1 + $0xf88] sm:$0xff]
    %v523 = vld [vmem:[%s1 + $0xf90] sm:$0xff]
    %v524 = vld [vmem:[%s1 + $0xf98] sm:$0xff]
    %v525 = vld [vmem:[%s1 + $0xfa0] sm:$0xff]
    %v526 = vld [vmem:[%s1 + $0xfa8] sm:$0xff]
    %v527 = vld [vmem:[%s1 + $0xfb0] sm:$0xff]
    %v528 = vld [vmem:[%s1 + $0xfb8] sm:$0xff]
    %v529 = vld [vmem:[%s1 + $0xfc0] sm:$0xff]
    %v530 = vld [vmem:[%s1 + $0xfc8] sm:$0xff]
    %v531 = vld [vmem:[%s1 + $0xfd0] sm:$0xff]
    %v532 = vld [vmem:[%s1 + $0xfd8] sm:$0xff]
    %v533 = vld [vmem:[%s1 + $0xfe0] sm:$0xff]
    %v534 = vld [vmem:[%s1 + $0xfe8] sm:$0xff]
    %v535 = vld [vmem:[%s1 + $0xff0] sm:$0xff]
    %v536 = vld [vmem:[%s1 + $0xff8] sm:$0xff]
    %v537 = vld [vmem:[%s1 + $0x1000] sm:$0xff]
    %v538 = vld [vmem:[%s1 + $0x1008] sm:$0xff]
    %v539 = vld [vmem:[%s1 + $0x1010] sm:$0xff]
    %v540 = vld [vmem:[%s1 + $0x1018] sm:$0xff]
    %v541 = vld [vmem:[%s1 + $0x1020] sm:$0xff]
    %v542 = vld [vmem:[%s1 + $0x1028] sm:$0xff]
    %v543 = vld [vmem:[%s1 + $0x1030] sm:$0xff]
    %v544 = vld [vmem:[%s1 + $0x1038] sm:$0xff]
    %v545 = vld [vmem:[%s1 + $0x1040] sm:$0xff]
    %v546 = vld [vmem:[%s1 + $0x1048] sm:$0xff]
    %v547 = vld [vmem:[%s1 + $0x1050] sm:$0xff]
    %v548 = vld [vmem:[%s1 + $0x1058] sm:$0xff]
    %v549 = vld [vmem:[%s1 + $0x1060] sm:$0xff]
    %v550 = vld [vmem:[%s1 + $0x1068] sm:$0xff]
    %v551 = vld [vmem:[%s1 + $0x1070] sm:$0xff]
    %v552 = vld [vmem:[%s1 + $0x1078] sm:$0xff]
    %v553 = vld [vmem:[%s1 + $0x1080] sm:$0xff]
    %v554 = vld [vmem:[%s1 + $0x1088] sm:$0xff]
    %v555 = vld [vmem:[%s1 + $0x1090] sm:$0xff]
    %v556 = vld [vmem:[%s1 + $0x1098] sm:$0xff]
    %v557 = vld [vmem:[%s1 + $0x10a0] sm:$0xff]
    %v558 = vld [vmem:[%s1 + $0x10a8] sm:$0xff]
    %v559 = vld [vmem:[%s1 + $0x10b0] sm:$0xff]
    %v560 = vld [vmem:[%s1 + $0x10b8] sm:$0xff]
    %v561 = vld [vmem:[%s1 + $0x10c0] sm:$0xff]
    %v562 = vld [vmem:[%s1 + $0x10c8] sm:$0xff]
    %v563 = vld [vmem:[%s1 + $0x10d0] sm:$0xff]
    %v564 = vld [vmem:[%s1 + $0x10d8] sm:$0xff]
    %v565 = vld [vmem:[%s1 + $0x10e0] sm:$0xff]
    %v566 = vld [vmem:[%s1 + $0x10e8] sm:$0xff]
    %v567 = vld [vmem:[%s1 + $0x10f0] sm:$0xff]
    %v568 = vld [vmem:[%s1 + $0x10f8] sm:$0xff]
    %v569 = vld [vmem:[%s1 + $0x1100] sm:$0xff]
    %v570 = vld [vmem:[%s1 + $0x1108] sm:$0xff]
    %v571 = vld [vmem:[%s1 + $0x1110] sm:$0xff]
    %v572 = vld [vmem:[%s1 + $0x1118] sm:$0xff]
    %v573 = vld [vmem:[%s1 + $0x1120] sm:$0xff]
    %v574 = vld [vmem:[%s1 + $0x1128] sm:$0xff]
    %v575 = vld [vmem:[%s1 + $0x1130] sm:$0xff]
    %v576 = vld [vmem:[%s1 + $0x1138] sm:$0xff]
    %v577 = vld [vmem:[%s1 + $0x1140] sm:$0xff]
    %v578 = vld [vmem:[%s1 + $0x1148] sm:$0xff]
    %v579 = vld [vmem:[%s1 + $0x1150] sm:$0xff]
    %v580 = vld [vmem:[%s1 + $0x1158] sm:$0xff]
    %v581 = vld [vmem:[%s1 + $0x1160] sm:$0xff]
    %v582 = vld [vmem:[%s1 + $0x1168] sm:$0xff]
    %v583 = vld [vmem:[%s1 + $0x1170] sm:$0xff]
    %v584 = vld [vmem:[%s1 + $0x1178] sm:$0xff]
    %v585 = vld [vmem:[%s1 + $0x1180] sm:$0xff]
    %v586 = vld [vmem:[%s1 + $0x1188] sm:$0xff]
    %v587 = vld [vmem:[%s1 + $0x1190] sm:$0xff]
    %v588 = vld [vmem:[%s1 + $0x1198] sm:$0xff]
    %v589 = vld [vmem:[%s1 + $0x11a0] sm:$0xff]
    %v590 = vld [vmem:[%s1 + $0x11a8] sm:$0xff]
    %v591 = vld [vmem:[%s1 + $0x11b0] sm:$0xff]
    %v592 = vld [vmem:[%s1 + $0x11b8] sm:$0xff]
    %v593 = vld [vmem:[%s1 + $0x11c0] sm:$0xff]
    %v594 = vld [vmem:[%s1 + $0x11c8] sm:$0xff]
    %v595 = vld [vmem:[%s1 + $0x11d0] sm:$0xff]
    %v596 = vld [vmem:[%s1 + $0x11d8] sm:$0xff]
    %v597 = vld [vmem:[%s1 + $0x11e0] sm:$0xff]
    %v598 = vld [vmem:[%s1 + $0x11e8] sm:$0xff]
    %v599 = vld [vmem:[%s1 + $0x11f0] sm:$0xff]
    %v600 = vld [vmem:[%s1 + $0x11f8] sm:$0xff]
    %v601 = vld [vmem:[%s1 + $0x1200] sm:$0xff]
    %v602 = vld [vmem:[%s1 + $0x1208] sm:$0xff]
    %v603 = vld [vmem:[%s1 + $0x1210] sm:$0xff]
    %v604 = vld [vmem:[%s1 + $0x1218] sm:$0xff]
    %v605 = vld [vmem:[%s1 + $0x1220] sm:$0xff]
    %v606 = vld [vmem:[%s1 + $0x1228] sm:$0xff]
    %v607 = vld [vmem:[%s1 + $0x1230] sm:$0xff]
    %v608 = vld [vmem:[%s1 + $0x1238] sm:$0xff]
    %v609 = vld [vmem:[%s1 + $0x1240] sm:$0xff]
    %v610 = vld [vmem:[%s1 + $0x1248] sm:$0xff]
    %v611 = vld [vmem:[%s1 + $0x1250] sm:$0xff]
    %v612 = vld [vmem:[%s1 + $0x1258] sm:$0xff]
    %v613 = vld [vmem:[%s1 + $0x1260] sm:$0xff]
    %v614 = vld [vmem:[%s1 + $0x1268] sm:$0xff]
    %v615 = vld [vmem:[%s1 + $0x1270] sm:$0xff]
    %v616 = vld [vmem:[%s1 + $0x1278] sm:$0xff]
    %v617 = vld [vmem:[%s1 + $0x1280] sm:$0xff]
    %v618 = vld [vmem:[%s1 + $0x1288] sm:$0xff]
    %v619 = vld [vmem:[%s1 + $0x1290] sm:$0xff]
    %v620 = vld [vmem:[%s1 + $0x1298] sm:$0xff]
    %v621 = vld [vmem:[%s1 + $0x12a0] sm:$0xff]
    %v622 = vld [vmem:[%s1 + $0x12a8] sm:$0xff]
    %v623 = vld [vmem:[%s1 + $0x12b0] sm:$0xff]
    %v624 = vld [vmem:[%s1 + $0x12b8] sm:$0xff]
    %v625 = vld [vmem:[%s1 + $0x12c0] sm:$0xff]
    %v626 = vld [vmem:[%s1 + $0x12c8] sm:$0xff]
    %v627 = vld [vmem:[%s1 + $0x12d0] sm:$0xff]
    %v628 = vld [vmem:[%s1 + $0x12d8] sm:$0xff]
    %v629 = vld [vmem:[%s1 + $0x12e0] sm:$0xff]
    %v630 = vld [vmem:[%s1 + $0x12e8] sm:$0xff]
    %v631 = vld [vmem:[%s1 + $0x12f0] sm:$0xff]
    %v632 = vld [vmem:[%s1 + $0x12f8] sm:$0xff]
    %v633 = vld [vmem:[%s1 + $0x1300] sm:$0xff]
    %v634 = vld [vmem:[%s1 + $0x1308] sm:$0xff]
    %v635 = vld [vmem:[%s1 + $0x1310] sm:$0xff]
    %v636 = vld [vmem:[%s1 + $0x1318] sm:$0xff]
    %v637 = vld [vmem:[%s1 + $0x1320] sm:$0xff]
    %v638 = vld [vmem:[%s1 + $0x1328] sm:$0xff]
    %v639 = vld [vmem:[%s1 + $0x1330] sm:$0xff]
    %v640 = vld [vmem:[%s1 + $0x1338] sm:$0xff]
    %v641 = vld [vmem:[%s1 + $0x1340] sm:$0xff]
    %v642 = vld [vmem:[%s1 + $0x1348] sm:$0xff]
    %v643 = vld [vmem:[%s1 + $0x1350] sm:$0xff]
    %v644 = vld [vmem:[%s1 + $0x1358] sm:$0xff]
    %v645 = vld [vmem:[%s1 + $0x1360] sm:$0xff]
    %v646 = vld [vmem:[%s1 + $0x1368] sm:$0xff]
    %v647 = vld [vmem:[%s1 + $0x1370] sm:$0xff]
    %v648 = vld [vmem:[%s1 + $0x1378] sm:$0xff]
    %v649 = vld [vmem:[%s1 + $0x1380] sm:$0xff]
    %v650 = vld [vmem:[%s1 + $0x1388] sm:$0xff]
    %v651 = vld [vmem:[%s1 + $0x1390] sm:$0xff]
    %v652 = vld [vmem:[%s1 + $0x1398] sm:$0xff]
    %v653 = vld [vmem:[%s1 + $0x13a0] sm:$0xff]
    %v654 = vld [vmem:[%s1 + $0x13a8] sm:$0xff]
    %v655 = vld [vmem:[%s1 + $0x13b0] sm:$0xff]
    %v656 = vld [vmem:[%s1 + $0x13b8] sm:$0xff]
    %v657 = vld [vmem:[%s1 + $0x13c0] sm:$0xff]
    %v658 = vld [vmem:[%s1 + $0x13c8] sm:$0xff]
    %v659 = vld [vmem:[%s1 + $0x13d0] sm:$0xff]
    %v660 = vld [vmem:[%s1 + $0x13d8] sm:$0xff]
    %v661 = vld [vmem:[%s1 + $0x13e0] sm:$0xff]
    %v662 = vld [vmem:[%s1 + $0x13e8] sm:$0xff]
    %v663 = vld [vmem:[%s1 + $0x13f0] sm:$0xff]
    %v664 = vld [vmem:[%s1 + $0x13f8] sm:$0xff]
    %v665 = vld [vmem:[%s1 + $0x1400] sm:$0xff]
    %v666 = vld [vmem:[%s1 + $0x1408] sm:$0xff]
    %v667 = vld [vmem:[%s1 + $0x1410] sm:$0xff]
    %v668 = vld [vmem:[%s1 + $0x1418] sm:$0xff]
    %v669 = vld [vmem:[%s1 + $0x1420] sm:$0xff]
    %v670 = vld [vmem:[%s1 + $0x1428] sm:$0xff]
    %v671 = vld [vmem:[%s1 + $0x1430] sm:$0xff]
    %v672 = vld [vmem:[%s1 + $0x1438] sm:$0xff]
    %v673 = vld [vmem:[%s1 + $0x1440] sm:$0xff]
    %v674 = vld [vmem:[%s1 + $0x1448] sm:$0xff]
    %v675 = vld [vmem:[%s1 + $0x1450] sm:$0xff]
    %v676 = vld [vmem:[%s1 + $0x1458] sm:$0xff]
    %v677 = vld [vmem:[%s1 + $0x1460] sm:$0xff]
    %v678 = vld [vmem:[%s1 + $0x1468] sm:$0xff]
    %v679 = vld [vmem:[%s1 + $0x1470] sm:$0xff]
    %v680 = vld [vmem:[%s1 + $0x1478] sm:$0xff]
    %v681 = vld [vmem:[%s1 + $0x1480] sm:$0xff]
    %v682 = vld [vmem:[%s1 + $0x1488] sm:$0xff]
    %v683 = vld [vmem:[%s1 + $0x1490] sm:$0xff]
    %v684 = vld [vmem:[%s1 + $0x1498] sm:$0xff]
    %v685 = vld [vmem:[%s1 + $0x14a0] sm:$0xff]
    %v686 = vld [vmem:[%s1 + $0x14a8] sm:$0xff]
    %v687 = vld [vmem:[%s1 + $0x14b0] sm:$0xff]
    %v688 = vld [vmem:[%s1 + $0x14b8] sm:$0xff]
    %v689 = vld [vmem:[%s1 + $0x14c0] sm:$0xff]
    %v690 = vld [vmem:[%s1 + $0x14c8] sm:$0xff]
    %v691 = vld [vmem:[%s1 + $0x14d0] sm:$0xff]
    %v692 = vld [vmem:[%s1 + $0x14d8] sm:$0xff]
    %v693 = vld [vmem:[%s1 + $0x14e0] sm:$0xff]
    %v694 = vld [vmem:[%s1 + $0x14e8] sm:$0xff]
    %v695 = vld [vmem:[%s1 + $0x14f0] sm:$0xff]
    %v696 = vld [vmem:[%s1 + $0x14f8] sm:$0xff]
    %v697 = vld [vmem:[%s1 + $0x1500] sm:$0xff]
    %v698 = vld [vmem:[%s1 + $0x1508] sm:$0xff]
    %v699 = vld [vmem:[%s1 + $0x1510] sm:$0xff]
    %v700 = vld [vmem:[%s1 + $0x1518] sm:$0xff]
    %v701 = vld [vmem:[%s1 + $0x1520] sm:$0xff]
    %v702 = vld [vmem:[%s1 + $0x1528] sm:$0xff]
    %v703 = vld [vmem:[%s1 + $0x1530] sm:$0xff]
    %v704 = vld [vmem:[%s1 + $0x1538] sm:$0xff]
    %v705 = vld [vmem:[%s1 + $0x1540] sm:$0xff]
    %v706 = vld [vmem:[%s1 + $0x1548] sm:$0xff]
    %v707 = vld [vmem:[%s1 + $0x1550] sm:$0xff]
    %v708 = vld [vmem:[%s1 + $0x1558] sm:$0xff]
    %v709 = vld [vmem:[%s1 + $0x1560] sm:$0xff]
    %v710 = vld [vmem:[%s1 + $0x1568] sm:$0xff]
    %v711 = vld [vmem:[%s1 + $0x1570] sm:$0xff]
    %v712 = vld [vmem:[%s1 + $0x1578] sm:$0xff]
    %v713 = vld [vmem:[%s1 + $0x1580] sm:$0xff]
    %v714 = vld [vmem:[%s1 + $0x1588] sm:$0xff]
    %v715 = vld [vmem:[%s1 + $0x1590] sm:$0xff]
    %v716 = vld [vmem:[%s1 + $0x1598] sm:$0xff]
    %v717 = vld [vmem:[%s1 + $0x15a0] sm:$0xff]
    %v718 = vld [vmem:[%s1 + $0x15a8] sm:$0xff]
    %v719 = vld [vmem:[%s1 + $0x15b0] sm:$0xff]
    %v720 = vld [vmem:[%s1 + $0x15b8] sm:$0xff]
    %v721 = vld [vmem:[%s1 + $0x15c0] sm:$0xff]
    %v722 = vld [vmem:[%s1 + $0x15c8] sm:$0xff]
    %v723 = vld [vmem:[%s1 + $0x15d0] sm:$0xff]
    %v724 = vld [vmem:[%s1 + $0x15d8] sm:$0xff]
    %v725 = vld [vmem:[%s1 + $0x15e0] sm:$0xff]
    %v726 = vld [vmem:[%s1 + $0x15e8] sm:$0xff]
    %v727 = vld [vmem:[%s1 + $0x15f0] sm:$0xff]
    %v728 = vld [vmem:[%s1 + $0x15f8] sm:$0xff]
    %v729 = vld [vmem:[%s1 + $0x1600] sm:$0xff]
    %v730 = vld [vmem:[%s1 + $0x1608] sm:$0xff]
    %v731 = vld [vmem:[%s1 + $0x1610] sm:$0xff]
    %v732 = vld [vmem:[%s1 + $0x1618] sm:$0xff]
    %v733 = vld [vmem:[%s1 + $0x1620] sm:$0xff]
    %v734 = vld [vmem:[%s1 + $0x1628] sm:$0xff]
    %v735 = vld [vmem:[%s1 + $0x1630] sm:$0xff]
    %v736 = vld [vmem:[%s1 + $0x1638] sm:$0xff]
    %v737 = vld [vmem:[%s1 + $0x1640] sm:$0xff]
    %v738 = vld [vmem:[%s1 + $0x1648] sm:$0xff]
    %v739 = vld [vmem:[%s1 + $0x1650] sm:$0xff]
    %v740 = vld [vmem:[%s1 + $0x1658] sm:$0xff]
    %v741 = vld [vmem:[%s1 + $0x1660] sm:$0xff]
    %v742 = vld [vmem:[%s1 + $0x1668] sm:$0xff]
    %v743 = vld [vmem:[%s1 + $0x1670] sm:$0xff]
    %v744 = vld [vmem:[%s1 + $0x1678] sm:$0xff]
    %v745 = vld [vmem:[%s1 + $0x1680] sm:$0xff]
    %v746 = vld [vmem:[%s1 + $0x1688] sm:$0xff]
    %v747 = vld [vmem:[%s1 + $0x1690] sm:$0xff]
    %v748 = vld [vmem:[%s1 + $0x1698] sm:$0xff]
    %v749 = vld [vmem:[%s1 + $0x16a0] sm:$0xff]
    %v750 = vld [vmem:[%s1 + $0x16a8] sm:$0xff]
    %v751 = vld [vmem:[%s1 + $0x16b0] sm:$0xff]
    %v752 = vld [vmem:[%s1 + $0x16b8] sm:$0xff]
    %v753 = vld [vmem:[%s1 + $0x16c0] sm:$0xff]
    %v754 = vld [vmem:[%s1 + $0x16c8] sm:$0xff]
    %v755 = vld [vmem:[%s1 + $0x16d0] sm:$0xff]
    %v756 = vld [vmem:[%s1 + $0x16d8] sm:$0xff]
    %v757 = vld [vmem:[%s1 + $0x16e0] sm:$0xff]
    %v758 = vld [vmem:[%s1 + $0x16e8] sm:$0xff]
    %v759 = vld [vmem:[%s1 + $0x16f0] sm:$0xff]
    %v760 = vld [vmem:[%s1 + $0x16f8] sm:$0xff]
    %v761 = vld [vmem:[%s1 + $0x1700] sm:$0xff]
    %v762 = vld [vmem:[%s1 + $0x1708] sm:$0xff]
    %v763 = vld [vmem:[%s1 + $0x1710] sm:$0xff]
    %v764 = vld [vmem:[%s1 + $0x1718] sm:$0xff]
    %v765 = vld [vmem:[%s1 + $0x1720] sm:$0xff]
    %v766 = vld [vmem:[%s1 + $0x1728] sm:$0xff]
    %v767 = vld [vmem:[%s1 + $0x1730] sm:$0xff]
    %v768 = vld [vmem:[%s1 + $0x1738] sm:$0xff]
    %v769 = vld [vmem:[%s1 + $0x1740] sm:$0xff]
    %v770 = vld [vmem:[%s1 + $0x1748] sm:$0xff]
    %v771 = vld [vmem:[%s1 + $0x1750] sm:$0xff]
    %v772 = vld [vmem:[%s1 + $0x1758] sm:$0xff]
    %v773 = vld [vmem:[%s1 + $0x1760] sm:$0xff]
    %v774 = vld [vmem:[%s1 + $0x1768] sm:$0xff]
    %v775 = vld [vmem:[%s1 + $0x1770] sm:$0xff]
    %v776 = vld [vmem:[%s1 + $0x1778] sm:$0xff]
    %v777 = vld [vmem:[%s1 + $0x1780] sm:$0xff]
    %v778 = vld [vmem:[%s1 + $0x1788] sm:$0xff]
    %v779 = vld [vmem:[%s1 + $0x1790] sm:$0xff]
    %v780 = vld [vmem:[%s1 + $0x1798] sm:$0xff]
    %v781 = vld [vmem:[%s1 + $0x17a0] sm:$0xff]
    %v782 = vld [vmem:[%s1 + $0x17a8] sm:$0xff]
    %v783 = vld [vmem:[%s1 + $0x17b0] sm:$0xff]
    %v784 = vld [vmem:[%s1 + $0x17b8] sm:$0xff]
    %v785 = vld [vmem:[%s1 + $0x17c0] sm:$0xff]
    %v786 = vld [vmem:[%s1 + $0x17c8] sm:$0xff]
    %v787 = vld [vmem:[%s1 + $0x17d0] sm:$0xff]
    %v788 = vld [vmem:[%s1 + $0x17d8] sm:$0xff]
    %v789 = vld [vmem:[%s1 + $0x17e0] sm:$0xff]
    %v790 = vld [vmem:[%s1 + $0x17e8] sm:$0xff]
    %v791 = vld [vmem:[%s1 + $0x17f0] sm:$0xff]
    %v792 = vld [vmem:[%s1 + $0x17f8] sm:$0xff]
    %v793 = vld [vmem:[%s1 + $0x1800] sm:$0xff]
    %v794 = vld [vmem:[%s1 + $0x1808] sm:$0xff]
    %v795 = vld [vmem:[%s1 + $0x1810] sm:$0xff]
    %v796 = vld [vmem:[%s1 + $0x1818] sm:$0xff]
    %v797 = vld [vmem:[%s1 + $0x1820] sm:$0xff]
    %v798 = vld [vmem:[%s1 + $0x1828] sm:$0xff]
    %v799 = vld [vmem:[%s1 + $0x1830] sm:$0xff]
    %v800 = vld [vmem:[%s1 + $0x1838] sm:$0xff]
    %v801 = vld [vmem:[%s1 + $0x1840] sm:$0xff]
    %v802 = vld [vmem:[%s1 + $0x1848] sm:$0xff]
    %v803 = vld [vmem:[%s1 + $0x1850] sm:$0xff]
    %v804 = vld [vmem:[%s1 + $0x1858] sm:$0xff]
    %v805 = vld [vmem:[%s1 + $0x1860] sm:$0xff]
    %v806 = vld [vmem:[%s1 + $0x1868] sm:$0xff]
    %v807 = vld [vmem:[%s1 + $0x1870] sm:$0xff]
    %v808 = vld [vmem:[%s1 + $0x1878] sm:$0xff]
    %v809 = vld [vmem:[%s1 + $0x1880] sm:$0xff]
    %v810 = vld [vmem:[%s1 + $0x1888] sm:$0xff]
    %v811 = vld [vmem:[%s1 + $0x1890] sm:$0xff]
    %v812 = vld [vmem:[%s1 + $0x1898] sm:$0xff]
    %v813 = vld [vmem:[%s1 + $0x18a0] sm:$0xff]
    %v814 = vld [vmem:[%s1 + $0x18a8] sm:$0xff]
    %v815 = vld [vmem:[%s1 + $0x18b0] sm:$0xff]
    %v816 = vld [vmem:[%s1 + $0x18b8] sm:$0xff]
    %v817 = vld [vmem:[%s1 + $0x18c0] sm:$0xff]
    %v818 = vld [vmem:[%s1 + $0x18c8] sm:$0xff]
    %v819 = vld [vmem:[%s1 + $0x18d0] sm:$0xff]
    %v820 = vld [vmem:[%s1 + $0x18d8] sm:$0xff]
    %v821 = vld [vmem:[%s1 + $0x18e0] sm:$0xff]
    %v822 = vld [vmem:[%s1 + $0x18e8] sm:$0xff]
    %v823 = vld [vmem:[%s1 + $0x18f0] sm:$0xff]
    %v824 = vld [vmem:[%s1 + $0x18f8] sm:$0xff]
    %v825 = vld [vmem:[%s1 + $0x1900] sm:$0xff]
    %v826 = vld [vmem:[%s1 + $0x1908] sm:$0xff]
    %v827 = vld [vmem:[%s1 + $0x1910] sm:$0xff]
    %v828 = vld [vmem:[%s1 + $0x1918] sm:$0xff]
    %v829 = vld [vmem:[%s1 + $0x1920] sm:$0xff]
    %v830 = vld [vmem:[%s1 + $0x1928] sm:$0xff]
    %v831 = vld [vmem:[%s1 + $0x1930] sm:$0xff]
    %v832 = vld [vmem:[%s1 + $0x1938] sm:$0xff]
    %v833 = vld [vmem:[%s1 + $0x1940] sm:$0xff]
    %v834 = vld [vmem:[%s1 + $0x1948] sm:$0xff]
    %v835 = vld [vmem:[%s1 + $0x1950] sm:$0xff]
    %v836 = vld [vmem:[%s1 + $0x1958] sm:$0xff]
    %v837 = vld [vmem:[%s1 + $0x1960] sm:$0xff]
    %v838 = vld [vmem:[%s1 + $0x1968] sm:$0xff]
    %v839 = vld [vmem:[%s1 + $0x1970] sm:$0xff]
    %v840 = vld [vmem:[%s1 + $0x1978] sm:$0xff]
    %v841 = vld [vmem:[%s1 + $0x1980] sm:$0xff]
    %v842 = vld [vmem:[%s1 + $0x1988] sm:$0xff]
    %v843 = vld [vmem:[%s1 + $0x1990] sm:$0xff]
    %v844 = vld [vmem:[%s1 + $0x1998] sm:$0xff]
    %v845 = vld [vmem:[%s1 + $0x19a0] sm:$0xff]
    %v846 = vld [vmem:[%s1 + $0x19a8] sm:$0xff]
    %v847 = vld [vmem:[%s1 + $0x19b0] sm:$0xff]
    %v848 = vld [vmem:[%s1 + $0x19b8] sm:$0xff]
    %v849 = vld [vmem:[%s1 + $0x19c0] sm:$0xff]
    %v850 = vld [vmem:[%s1 + $0x19c8] sm:$0xff]
    %v851 = vld [vmem:[%s1 + $0x19d0] sm:$0xff]
    %v852 = vld [vmem:[%s1 + $0x19d8] sm:$0xff]
    %v853 = vld [vmem:[%s1 + $0x19e0] sm:$0xff]
    %v854 = vld [vmem:[%s1 + $0x19e8] sm:$0xff]
    %v855 = vld [vmem:[%s1 + $0x19f0] sm:$0xff]
    %v856 = vld [vmem:[%s1 + $0x19f8] sm:$0xff]
    %v857 = vld [vmem:[%s1 + $0x1a00] sm:$0xff]
    %v858 = vld [vmem:[%s1 + $0x1a08] sm:$0xff]
    %v859 = vld [vmem:[%s1 + $0x1a10] sm:$0xff]
    %v860 = vld [vmem:[%s1 + $0x1a18] sm:$0xff]
    %v861 = vld [vmem:[%s1 + $0x1a20] sm:$0xff]
    %v862 = vld [vmem:[%s1 + $0x1a28] sm:$0xff]
    %v863 = vld [vmem:[%s1 + $0x1a30] sm:$0xff]
    %v864 = vld [vmem:[%s1 + $0x1a38] sm:$0xff]
    %v865 = vld [vmem:[%s1 + $0x1a40] sm:$0xff]
    %v866 = vld [vmem:[%s1 + $0x1a48] sm:$0xff]
    %v867 = vld [vmem:[%s1 + $0x1a50] sm:$0xff]
    %v868 = vld [vmem:[%s1 + $0x1a58] sm:$0xff]
    %v869 = vld [vmem:[%s1 + $0x1a60] sm:$0xff]
    %v870 = vld [vmem:[%s1 + $0x1a68] sm:$0xff]
    %v871 = vld [vmem:[%s1 + $0x1a70] sm:$0xff]
    %v872 = vld [vmem:[%s1 + $0x1a78] sm:$0xff]
    %v873 = vld [vmem:[%s1 + $0x1a80] sm:$0xff]
    %v874 = vld [vmem:[%s1 + $0x1a88] sm:$0xff]
    %v875 = vld [vmem:[%s1 + $0x1a90] sm:$0xff]
    %v876 = vld [vmem:[%s1 + $0x1a98] sm:$0xff]
    %v877 = vld [vmem:[%s1 + $0x1aa0] sm:$0xff]
    %v878 = vld [vmem:[%s1 + $0x1aa8] sm:$0xff]
    %v879 = vld [vmem:[%s1 + $0x1ab0] sm:$0xff]
    %v880 = vld [vmem:[%s1 + $0x1ab8] sm:$0xff]
    %v881 = vld [vmem:[%s1 + $0x1ac0] sm:$0xff]
    %v882 = vld [vmem:[%s1 + $0x1ac8] sm:$0xff]
    %v883 = vld [vmem:[%s1 + $0x1ad0] sm:$0xff]
    %v884 = vld [vmem:[%s1 + $0x1ad8] sm:$0xff]
    %v885 = vld [vmem:[%s1 + $0x1ae0] sm:$0xff]
    %v886 = vld [vmem:[%s1 + $0x1ae8] sm:$0xff]
    %v887 = vld [vmem:[%s1 + $0x1af0] sm:$0xff]
    %v888 = vld [vmem:[%s1 + $0x1af8] sm:$0xff]
    %v889 = vld [vmem:[%s1 + $0x1b00] sm:$0xff]
    %v890 = vld [vmem:[%s1 + $0x1b08] sm:$0xff]
    %v891 = vld [vmem:[%s1 + $0x1b10] sm:$0xff]
    %v892 = vld [vmem:[%s1 + $0x1b18] sm:$0xff]
    %v893 = vld [vmem:[%s1 + $0x1b20] sm:$0xff]
    %v894 = vld [vmem:[%s1 + $0x1b28] sm:$0xff]
    %v895 = vld [vmem:[%s1 + $0x1b30] sm:$0xff]
    %v896 = vld [vmem:[%s1 + $0x1b38] sm:$0xff]
    %v897 = vld [vmem:[%s1 + $0x1b40] sm:$0xff]
    %v898 = vld [vmem:[%s1 + $0x1b48] sm:$0xff]
    %v899 = vld [vmem:[%s1 + $0x1b50] sm:$0xff]
    %v900 = vld [vmem:[%s1 + $0x1b58] sm:$0xff]
    %v901 = vld [vmem:[%s1 + $0x1b60] sm:$0xff]
    %v902 = vld [vmem:[%s1 + $0x1b68] sm:$0xff]
    %v903 = vld [vmem:[%s1 + $0x1b70] sm:$0xff]
    %v904 = vld [vmem:[%s1 + $0x1b78] sm:$0xff]
    %v905 = vld [vmem:[%s1 + $0x1b80] sm:$0xff]
    %v906 = vld [vmem:[%s1 + $0x1b88] sm:$0xff]
    %v907 = vld [vmem:[%s1 + $0x1b90] sm:$0xff]
    %v908 = vld [vmem:[%s1 + $0x1b98] sm:$0xff]
    %v909 = vld [vmem:[%s1 + $0x1ba0] sm:$0xff]
    %v910 = vld [vmem:[%s1 + $0x1ba8] sm:$0xff]
    %v911 = vld [vmem:[%s1 + $0x1bb0] sm:$0xff]
    %v912 = vld [vmem:[%s1 + $0x1bb8] sm:$0xff]
    %v913 = vld [vmem:[%s1 + $0x1bc0] sm:$0xff]
    %v914 = vld [vmem:[%s1 + $0x1bc8] sm:$0xff]
    %v915 = vld [vmem:[%s1 + $0x1bd0] sm:$0xff]
    %v916 = vld [vmem:[%s1 + $0x1bd8] sm:$0xff]
    %v917 = vld [vmem:[%s1 + $0x1be0] sm:$0xff]
    %v918 = vld [vmem:[%s1 + $0x1be8] sm:$0xff]
    %v919 = vld [vmem:[%s1 + $0x1bf0] sm:$0xff]
    %v920 = vld [vmem:[%s1 + $0x1bf8] sm:$0xff]
    %v921 = vld [vmem:[%s1 + $0x1c00] sm:$0xff]
    %v922 = vld [vmem:[%s1 + $0x1c08] sm:$0xff]
    %v923 = vld [vmem:[%s1 + $0x1c10] sm:$0xff]
    %v924 = vld [vmem:[%s1 + $0x1c18] sm:$0xff]
    %v925 = vld [vmem:[%s1 + $0x1c20] sm:$0xff]
    %v926 = vld [vmem:[%s1 + $0x1c28] sm:$0xff]
    %v927 = vld [vmem:[%s1 + $0x1c30] sm:$0xff]
    %v928 = vld [vmem:[%s1 + $0x1c38] sm:$0xff]
    %v929 = vld [vmem:[%s1 + $0x1c40] sm:$0xff]
    %v930 = vld [vmem:[%s1 + $0x1c48] sm:$0xff]
    %v931 = vld [vmem:[%s1 + $0x1c50] sm:$0xff]
    %v932 = vld [vmem:[%s1 + $0x1c58] sm:$0xff]
    %v933 = vld [vmem:[%s1 + $0x1c60] sm:$0xff]
    %v934 = vld [vmem:[%s1 + $0x1c68] sm:$0xff]
    %v935 = vld [vmem:[%s1 + $0x1c70] sm:$0xff]
    %v936 = vld [vmem:[%s1 + $0x1c78] sm:$0xff]
    %v937 = vld [vmem:[%s1 + $0x1c80] sm:$0xff]
    %v938 = vld [vmem:[%s1 + $0x1c88] sm:$0xff]
    %v939 = vld [vmem:[%s1 + $0x1c90] sm:$0xff]
    %v940 = vld [vmem:[%s1 + $0x1c98] sm:$0xff]
    %v941 = vld [vmem:[%s1 + $0x1ca0] sm:$0xff]
    %v942 = vld [vmem:[%s1 + $0x1ca8] sm:$0xff]
    %v943 = vld [vmem:[%s1 + $0x1cb0] sm:$0xff]
    %v944 = vld [vmem:[%s1 + $0x1cb8] sm:$0xff]
    %v945 = vld [vmem:[%s1 + $0x1cc0] sm:$0xff]
    %v946 = vld [vmem:[%s1 + $0x1cc8] sm:$0xff]
    %v947 = vld [vmem:[%s1 + $0x1cd0] sm:$0xff]
    %v948 = vld [vmem:[%s1 + $0x1cd8] sm:$0xff]
    %v949 = vld [vmem:[%s1 + $0x1ce0] sm:$0xff]
    %v950 = vld [vmem:[%s1 + $0x1ce8] sm:$0xff]
    %v951 = vld [vmem:[%s1 + $0x1cf0] sm:$0xff]
    %v952 = vld [vmem:[%s1 + $0x1cf8] sm:$0xff]
    %v953 = vld [vmem:[%s1 + $0x1d00] sm:$0xff]
    %v954 = vld [vmem:[%s1 + $0x1d08] sm:$0xff]
    %v955 = vld [vmem:[%s1 + $0x1d10] sm:$0xff]
    %v956 = vld [vmem:[%s1 + $0x1d18] sm:$0xff]
    %v957 = vld [vmem:[%s1 + $0x1d20] sm:$0xff]
    %v958 = vld [vmem:[%s1 + $0x1d28] sm:$0xff]
    %v959 = vld [vmem:[%s1 + $0x1d30] sm:$0xff]
    %v960 = vld [vmem:[%s1 + $0x1d38] sm:$0xff]
    %v961 = vld [vmem:[%s1 + $0x1d40] sm:$0xff]
    %v962 = vld [vmem:[%s1 + $0x1d48] sm:$0xff]
    %v963 = vld [vmem:[%s1 + $0x1d50] sm:$0xff]
    %v964 = vld [vmem:[%s1 + $0x1d58] sm:$0xff]
    %v965 = vld [vmem:[%s1 + $0x1d60] sm:$0xff]
    %v966 = vld [vmem:[%s1 + $0x1d68] sm:$0xff]
    %v967 = vld [vmem:[%s1 + $0x1d70] sm:$0xff]
    %v968 = vld [vmem:[%s1 + $0x1d78] sm:$0xff]
    %v969 = vld [vmem:[%s1 + $0x1d80] sm:$0xff]
    %v970 = vld [vmem:[%s1 + $0x1d88] sm:$0xff]
    %v971 = vld [vmem:[%s1 + $0x1d90] sm:$0xff]
    %v972 = vld [vmem:[%s1 + $0x1d98] sm:$0xff]
    %v973 = vld [vmem:[%s1 + $0x1da0] sm:$0xff]
    %v974 = vld [vmem:[%s1 + $0x1da8] sm:$0xff]
    %v975 = vld [vmem:[%s1 + $0x1db0] sm:$0xff]
    %v976 = vld [vmem:[%s1 + $0x1db8] sm:$0xff]
    %v977 = vld [vmem:[%s1 + $0x1dc0] sm:$0xff]
    %v978 = vld [vmem:[%s1 + $0x1dc8] sm:$0xff]
    %v979 = vld [vmem:[%s1 + $0x1dd0] sm:$0xff]
    %v980 = vld [vmem:[%s1 + $0x1dd8] sm:$0xff]
    %v981 = vld [vmem:[%s1 + $0x1de0] sm:$0xff]
    %v982 = vld [vmem:[%s1 + $0x1de8] sm:$0xff]
    %v983 = vld [vmem:[%s1 + $0x1df0] sm:$0xff]
    %v984 = vld [vmem:[%s1 + $0x1df8] sm:$0xff]
    %v985 = vld [vmem:[%s1 + $0x1e00] sm:$0xff]
    %v986 = vld [vmem:[%s1 + $0x1e08] sm:$0xff]
    %v987 = vld [vmem:[%s1 + $0x1e10] sm:$0xff]
    %v988 = vld [vmem:[%s1 + $0x1e18] sm:$0xff]
    %v989 = vld [vmem:[%s1 + $0x1e20] sm:$0xff]
    %v990 = vld [vmem:[%s1 + $0x1e28] sm:$0xff]
    %v991 = vld [vmem:[%s1 + $0x1e30] sm:$0xff]
    %v992 = vld [vmem:[%s1 + $0x1e38] sm:$0xff]
    %v993 = vld [vmem:[%s1 + $0x1e40] sm:$0xff]
    %v994 = vld [vmem:[%s1 + $0x1e48] sm:$0xff]
    %v995 = vld [vmem:[%s1 + $0x1e50] sm:$0xff]
    %v996 = vld [vmem:[%s1 + $0x1e58] sm:$0xff]
    %v997 = vld [vmem:[%s1 + $0x1e60] sm:$0xff]
    %v998 = vld [vmem:[%s1 + $0x1e68] sm:$0xff]
    %v999 = vld [vmem:[%s1 + $0x1e70] sm:$0xff]
    %v1000 = vld [vmem:[%s1 + $0x1e78] sm:$0xff]
    %v1001 = vld [vmem:[%s1 + $0x1e80] sm:$0xff]
    %v1002 = vld [vmem:[%s1 + $0x1e88] sm:$0xff]
    %v1003 = vld [vmem:[%s1 + $0x1e90] sm:$0xff]
    %v1004 = vld [vmem:[%s1 + $0x1e98] sm:$0xff]
    %v1005 = vld [vmem:[%s1 + $0x1ea0] sm:$0xff]
    %v1006 = vld [vmem:[%s1 + $0x1ea8] sm:$0xff]
    %v1007 = vld [vmem:[%s1 + $0x1eb0] sm:$0xff]
    %v1008 = vld [vmem:[%s1 + $0x1eb8] sm:$0xff]
    %v1009 = vld [vmem:[%s1 + $0x1ec0] sm:$0xff]
    %v1010 = vld [vmem:[%s1 + $0x1ec8] sm:$0xff]
    %v1011 = vld [vmem:[%s1 + $0x1ed0] sm:$0xff]
    %v1012 = vld [vmem:[%s1 + $0x1ed8] sm:$0xff]
    %v1013 = vld [vmem:[%s1 + $0x1ee0] sm:$0xff]
    %v1014 = vld [vmem:[%s1 + $0x1ee8] sm:$0xff]
    %v1015 = vld [vmem:[%s1 + $0x1ef0] sm:$0xff]
    %v1016 = vld [vmem:[%s1 + $0x1ef8] sm:$0xff]
    %v1017 = vld [vmem:[%s1 + $0x1f00] sm:$0xff]
    %v1018 = vld [vmem:[%s1 + $0x1f08] sm:$0xff]
    %v1019 = vld [vmem:[%s1 + $0x1f10] sm:$0xff]
    %v1020 = vld [vmem:[%s1 + $0x1f18] sm:$0xff]
    %v1021 = vld [vmem:[%s1 + $0x1f20] sm:$0xff]
    %v1022 = vld [vmem:[%s1 + $0x1f28] sm:$0xff]
    %v1023 = vld [vmem:[%s1 + $0x1f30] sm:$0xff]
    %v1024 = vld [vmem:[%s1 + $0x1f38] sm:$0xff]
    %v1025 = vld [vmem:[%s1 + $0x1f40] sm:$0xff]
    %v1026 = vld [vmem:[%s1 + $0x1f48] sm:$0xff]
    %v1027 = vld [vmem:[%s1 + $0x1f50] sm:$0xff]
    %v1028 = vld [vmem:[%s1 + $0x1f58] sm:$0xff]
    %v1029 = vld [vmem:[%s1 + $0x1f60] sm:$0xff]
    %v1030 = vld [vmem:[%s1 + $0x1f68] sm:$0xff]
    %v1031 = vld [vmem:[%s1 + $0x1f70] sm:$0xff]
    %v1032 = vld [vmem:[%s1 + $0x1f78] sm:$0xff]
    %v1033 = vld [vmem:[%s1 + $0x1f80] sm:$0xff]
    %v1034 = vld [vmem:[%s1 + $0x1f88] sm:$0xff]
    %v1035 = vld [vmem:[%s1 + $0x1f90] sm:$0xff]
    %v1036 = vld [vmem:[%s1 + $0x1f98] sm:$0xff]
    %v1037 = vld [vmem:[%s1 + $0x1fa0] sm:$0xff]
    %v1038 = vld [vmem:[%s1 + $0x1fa8] sm:$0xff]
    %v1039 = vld [vmem:[%s1 + $0x1fb0] sm:$0xff]
    %v1040 = vld [vmem:[%s1 + $0x1fb8] sm:$0xff]
    %v1041 = vld [vmem:[%s1 + $0x1fc0] sm:$0xff]
    %v1042 = vld [vmem:[%s1 + $0x1fc8] sm:$0xff]
    %v1043 = vld [vmem:[%s1 + $0x1fd0] sm:$0xff]
    %v1044 = vld [vmem:[%s1 + $0x1fd8] sm:$0xff]
    %v1045 = vld [vmem:[%s1 + $0x1fe0] sm:$0xff]
    %v1046 = vld [vmem:[%s1 + $0x1fe8] sm:$0xff]
    %v1047 = vld [vmem:[%s1 + $0x1ff0] sm:$0xff]
    %v1048 = vld [vmem:[%s1 + $0x1ff8] sm:$0xff]
    %v1049 = vld [vmem:[%s2] sm:$0xf]
    %v1051 = vlaneseq
    %v1052 = vshrl.u32 %v1051, 7
    %v1053 = vsub.s32 0, %v1052
    %v1054 = vrot.slane %v1049, %v1053
    %v1055 = vlaneseq
    %v1056 = vshrl.u32 %v1055, 7
    %v1057 = vsub.s32 1, %v1056
    %v1058 = vrot.slane %v1049, %v1057
    %v1059 = vlaneseq
    %v1060 = vshrl.u32 %v1059, 7
    %v1061 = vsub.s32 2, %v1060
    %v1062 = vrot.slane %v1049, %v1061
    %v1063 = vlaneseq
    %v1064 = vshrl.u32 %v1063, 7
    %v1065 = vsub.s32 3, %v1064
    %v1066 = vrot.slane %v1049, %v1065
    %v1075 = vcombine.high %v21, %v21
    %v1077 = vunpack.c.l.s4 1983009808
    %v1078 = vunpack.c.0.s8 %v1077
    %v1079 = vlaneseq
    %v1080 = vshrl.u32 %v1079, 7
    %v1081 = vsub.s32 %v1078, %v1080
    %v1082 = vrot.slane %v21, %v1081
    %v1084 = vunpack.c.l.s4 1983009808
    %v1085 = vunpack.c.0.s8 %v1084
    %v1086 = vlaneseq
    %v1087 = vshrl.u32 %v1086, 7
    %v1088 = vsub.s32 %v1085, %v1087
    %v1089 = vrot.slane %v1075, %v1088
    %v1090 = vcombine.high %v1082, %v1082
    %v1091 = vcombine.high %v1089, %v1089
    %v1092 = vcombine.high %v22, %v22
    %v1094 = vunpack.c.l.s4 1983009808
    %v1095 = vunpack.c.0.s8 %v1094
    %v1096 = vlaneseq
    %v1097 = vshrl.u32 %v1096, 7
    %v1098 = vsub.s32 %v1095, %v1097
    %v1099 = vrot.slane %v22, %v1098
    %v1101 = vunpack.c.l.s4 1983009808
    %v1102 = vunpack.c.0.s8 %v1101
    %v1103 = vlaneseq
    %v1104 = vshrl.u32 %v1103, 7
    %v1105 = vsub.s32 %v1102, %v1104
    %v1106 = vrot.slane %v1092, %v1105
    %v1107 = vcombine.high %v1099, %v1099
    %v1108 = vcombine.high %v1106, %v1106
    %v1109 = vcombine.high %v23, %v23
    %v1111 = vunpack.c.l.s4 1983009808
    %v1112 = vunpack.c.0.s8 %v1111
    %v1113 = vlaneseq
    %v1114 = vshrl.u32 %v1113, 7
    %v1115 = vsub.s32 %v1112, %v1114
    %v1116 = vrot.slane %v23, %v1115
    %v1118 = vunpack.c.l.s4 1983009808
    %v1119 = vunpack.c.0.s8 %v1118
    %v1120 = vlaneseq
    %v1121 = vshrl.u32 %v1120, 7
    %v1122 = vsub.s32 %v1119, %v1121
    %v1123 = vrot.slane %v1109, %v1122
    %v1124 = vcombine.high %v1116, %v1116
    %v1125 = vcombine.high %v1123, %v1123
    %v1126 = vcombine.high %v24, %v24
    %v1128 = vunpack.c.l.s4 1983009808
    %v1129 = vunpack.c.0.s8 %v1128
    %v1130 = vlaneseq
    %v1131 = vshrl.u32 %v1130, 7
    %v1132 = vsub.s32 %v1129, %v1131
    %v1133 = vrot.slane %v24, %v1132
    %v1135 = vunpack.c.l.s4 1983009808
    %v1136 = vunpack.c.0.s8 %v1135
    %v1137 = vlaneseq
    %v1138 = vshrl.u32 %v1137, 7
    %v1139 = vsub.s32 %v1136, %v1138
    %v1140 = vrot.slane %v1126, %v1139
    %v1141 = vcombine.high %v1133, %v1133
    %v1142 = vcombine.high %v1140, %v1140
    %1159 = vmatprep.subr.mxu0 %v26
    %1160 = vmatpush1.msra.mxu0 %v25
    %1161 = vmatprep.subr.mxu0 %v30
    %1162 = vmatpush1.msra.mxu0 %v29
    %1163 = vmatprep.subr.mxu0 %v34
    %1164 = vmatpush1.msra.mxu0 %v33
    %1165 = vmatprep.subr.mxu0 %v38
    %1166 = vmatpush1.msra.mxu0 %v37
    %1167 = vmatprep.subr.mxu0 %v42
    %1168 = vmatpush1.msra.mxu0 %v41
    %1169 = vmatprep.subr.mxu0 %v46
    %1170 = vmatpush1.msra.mxu0 %v45
    %1171 = vmatprep.subr.mxu0 %v50
    %1172 = vmatpush1.msra.mxu0 %v49
    %1173 = vmatprep.subr.mxu0 %v54
    %1174 = vmatpush1.msra.mxu0 %v53
    %1175 = vmatprep.subr.mxu0 %v58
    %1176 = vmatpush1.msra.mxu0 %v57
    %1177 = vmatprep.subr.mxu0 %v62
    %1178 = vmatpush1.msra.mxu0 %v61
    %1179 = vmatprep.subr.mxu0 %v66
    %1180 = vmatpush1.msra.mxu0 %v65
    %1181 = vmatprep.subr.mxu0 %v70
    %1182 = vmatpush1.msra.mxu0 %v69
    %1183 = vmatprep.subr.mxu0 %v74
    %1184 = vmatpush1.msra.mxu0 %v73
    %1185 = vmatprep.subr.mxu0 %v78
    %1186 = vmatpush1.msra.mxu0 %v77
    %1187 = vmatprep.subr.mxu0 %v82
    %1188 = vmatpush1.msra.mxu0 %v81
    %1189 = vmatprep.subr.mxu0 %v86
    %1190 = vmatpush1.msra.mxu0 %v85
    %1191 = vmatprep.subr.mxu0 %v90
    %1192 = vmatpush1.msra.mxu0 %v89
    %1193 = vmatprep.subr.mxu0 %v94
    %1194 = vmatpush1.msra.mxu0 %v93
    %1195 = vmatprep.subr.mxu0 %v98
    %1196 = vmatpush1.msra.mxu0 %v97
    %1197 = vmatprep.subr.mxu0 %v102
    %1198 = vmatpush1.msra.mxu0 %v101
    %1199 = vmatprep.subr.mxu0 %v106
    %1200 = vmatpush1.msra.mxu0 %v105
    %1201 = vmatprep.subr.mxu0 %v110
    %1202 = vmatpush1.msra.mxu0 %v109
    %1203 = vmatprep.subr.mxu0 %v114
    %1204 = vmatpush1.msra.mxu0 %v113
    %1205 = vmatprep.subr.mxu0 %v118
    %1206 = vmatpush1.msra.mxu0 %v117
    %1207 = vmatprep.subr.mxu0 %v122
    %1208 = vmatpush1.msra.mxu0 %v121
    %1209 = vmatprep.subr.mxu0 %v126
    %1210 = vmatpush1.msra.mxu0 %v125
    %1211 = vmatprep.subr.mxu0 %v130
    %1212 = vmatpush1.msra.mxu0 %v129
    %1213 = vmatprep.subr.mxu0 %v134
    %1214 = vmatpush1.msra.mxu0 %v133
    %1215 = vmatprep.subr.mxu0 %v138
    %1216 = vmatpush1.msra.mxu0 %v137
    %1217 = vmatprep.subr.mxu0 %v142
    %1218 = vmatpush1.msra.mxu0 %v141
    %1219 = vmatprep.subr.mxu0 %v146
    %1220 = vmatpush1.msra.mxu0 %v145
    %1221 = vmatprep.subr.mxu0 %v150
    %1222 = vmatpush1.msra.mxu0 %v149
    %1223 = vmatprep.mubr.f32.mxu0 %v1090
    %1224 = vmatmul.mubr.f32.gmra.mrb[0].mxu0 %v1082
    %v1225 = vpop.f32.mrb[0].mxu0
    %v1226 = vadd.f32 %v1054, %v1225
    %v1227 = vpop.f32.mrb[0].mxu0
    %v1228 = vadd.f32 %v1058, %v1227
    %1229 = vdwg.mxu0
    %1230 = vmatprep.subr.mxu0 %v154
    %1231 = vmatpush1.msra.mxu0 %v153
    %1232 = vmatprep.subr.mxu0 %v158
    %1233 = vmatpush1.msra.mxu0 %v157
    %1234 = vmatprep.subr.mxu0 %v162
    %1235 = vmatpush1.msra.mxu0 %v161
    %1236 = vmatprep.subr.mxu0 %v166
    %1237 = vmatpush1.msra.mxu0 %v165
    %1238 = vmatprep.subr.mxu0 %v170
    %1239 = vmatpush1.msra.mxu0 %v169
    %1240 = vmatprep.subr.mxu0 %v174
    %1241 = vmatpush1.msra.mxu0 %v173
    %1242 = vmatprep.subr.mxu0 %v178
    %1243 = vmatpush1.msra.mxu0 %v177
    %1244 = vmatprep.subr.mxu0 %v182
    %1245 = vmatpush1.msra.mxu0 %v181
    %1246 = vmatprep.subr.mxu0 %v186
    %1247 = vmatpush1.msra.mxu0 %v185
    %1248 = vmatprep.subr.mxu0 %v190
    %1249 = vmatpush1.msra.mxu0 %v189
    %1250 = vmatprep.subr.mxu0 %v194
    %1251 = vmatpush1.msra.mxu0 %v193
    %1252 = vmatprep.subr.mxu0 %v198
    %1253 = vmatpush1.msra.mxu0 %v197
    %1254 = vmatprep.subr.mxu0 %v202
    %1255 = vmatpush1.msra.mxu0 %v201
    %1256 = vmatprep.subr.mxu0 %v206
    %1257 = vmatpush1.msra.mxu0 %v205
    %1258 = vmatprep.subr.mxu0 %v210
    %1259 = vmatpush1.msra.mxu0 %v209
    %1260 = vmatprep.subr.mxu0 %v214
    %1261 = vmatpush1.msra.mxu0 %v213
    %1262 = vmatprep.subr.mxu0 %v218
    %1263 = vmatpush1.msra.mxu0 %v217
    %1264 = vmatprep.subr.mxu0 %v222
    %1265 = vmatpush1.msra.mxu0 %v221
    %1266 = vmatprep.subr.mxu0 %v226
    %1267 = vmatpush1.msra.mxu0 %v225
    %1268 = vmatprep.subr.mxu0 %v230
    %1269 = vmatpush1.msra.mxu0 %v229
    %1270 = vmatprep.subr.mxu0 %v234
    %1271 = vmatpush1.msra.mxu0 %v233
    %1272 = vmatprep.subr.mxu0 %v238
    %1273 = vmatpush1.msra.mxu0 %v237
    %1274 = vmatprep.subr.mxu0 %v242
    %1275 = vmatpush1.msra.mxu0 %v241
    %1276 = vmatprep.subr.mxu0 %v246
    %1277 = vmatpush1.msra.mxu0 %v245
    %1278 = vmatprep.subr.mxu0 %v250
    %1279 = vmatpush1.msra.mxu0 %v249
    %1280 = vmatprep.subr.mxu0 %v254
    %1281 = vmatpush1.msra.mxu0 %v253
    %1282 = vmatprep.subr.mxu0 %v258
    %1283 = vmatpush1.msra.mxu0 %v257
    %1284 = vmatprep.subr.mxu0 %v262
    %1285 = vmatpush1.msra.mxu0 %v261
    %1286 = vmatprep.subr.mxu0 %v266
    %1287 = vmatpush1.msra.mxu0 %v265
    %1288 = vmatprep.subr.mxu0 %v270
    %1289 = vmatpush1.msra.mxu0 %v269
    %1290 = vmatprep.subr.mxu0 %v274
    %1291 = vmatpush1.msra.mxu0 %v273
    %1292 = vmatprep.subr.mxu0 %v278
    %1293 = vmatpush1.msra.mxu0 %v277
    %1294 = vmatprep.mubr.f32.mxu0 %v1091
    %1295 = vmatmul.mubr.f32.gmra.mrb[0].mxu0 %v1089
    %v1296 = vpop.f32.mrb[0].mxu0
    %v1297 = vadd.f32 %v1226, %v1296
    %v1298 = vpop.f32.mrb[0].mxu0
    %v1299 = vadd.f32 %v1228, %v1298
    %1300 = vdwg.mxu0
    %1301 = vmatprep.subr.mxu0 %v282
    %1302 = vmatpush1.msra.mxu0 %v281
    %1303 = vmatprep.subr.mxu0 %v286
    %1304 = vmatpush1.msra.mxu0 %v285
    %1305 = vmatprep.subr.mxu0 %v290
    %1306 = vmatpush1.msra.mxu0 %v289
    %1307 = vmatprep.subr.mxu0 %v294
    %1308 = vmatpush1.msra.mxu0 %v293
    %1309 = vmatprep.subr.mxu0 %v298
    %1310 = vmatpush1.msra.mxu0 %v297
    %1311 = vmatprep.subr.mxu0 %v302
    %1312 = vmatpush1.msra.mxu0 %v301
    %1313 = vmatprep.subr.mxu0 %v306
    %1314 = vmatpush1.msra.mxu0 %v305
    %1315 = vmatprep.subr.mxu0 %v310
    %1316 = vmatpush1.msra.mxu0 %v309
    %1317 = vmatprep.subr.mxu0 %v314
    %1318 = vmatpush1.msra.mxu0 %v313
    %1319 = vmatprep.subr.mxu0 %v318
    %1320 = vmatpush1.msra.mxu0 %v317
    %1321 = vmatprep.subr.mxu0 %v322
    %1322 = vmatpush1.msra.mxu0 %v321
    %1323 = vmatprep.subr.mxu0 %v326
    %1324 = vmatpush1.msra.mxu0 %v325
    %1325 = vmatprep.subr.mxu0 %v330
    %1326 = vmatpush1.msra.mxu0 %v329
    %1327 = vmatprep.subr.mxu0 %v334
    %1328 = vmatpush1.msra.mxu0 %v333
    %1329 = vmatprep.subr.mxu0 %v338
    %1330 = vmatpush1.msra.mxu0 %v337
    %1331 = vmatprep.subr.mxu0 %v342
    %1332 = vmatpush1.msra.mxu0 %v341
    %1333 = vmatprep.subr.mxu0 %v346
    %1334 = vmatpush1.msra.mxu0 %v345
    %1335 = vmatprep.subr.mxu0 %v350
    %1336 = vmatpush1.msra.mxu0 %v349
    %1337 = vmatprep.subr.mxu0 %v354
    %1338 = vmatpush1.msra.mxu0 %v353
    %1339 = vmatprep.subr.mxu0 %v358
    %1340 = vmatpush1.msra.mxu0 %v357
    %1341 = vmatprep.subr.mxu0 %v362
    %1342 = vmatpush1.msra.mxu0 %v361
    %1343 = vmatprep.subr.mxu0 %v366
    %1344 = vmatpush1.msra.mxu0 %v365
    %1345 = vmatprep.subr.mxu0 %v370
    %1346 = vmatpush1.msra.mxu0 %v369
    %1347 = vmatprep.subr.mxu0 %v374
    %1348 = vmatpush1.msra.mxu0 %v373
    %1349 = vmatprep.subr.mxu0 %v378
    %1350 = vmatpush1.msra.mxu0 %v377
    %1351 = vmatprep.subr.mxu0 %v382
    %1352 = vmatpush1.msra.mxu0 %v381
    %1353 = vmatprep.subr.mxu0 %v386
    %1354 = vmatpush1.msra.mxu0 %v385
    %1355 = vmatprep.subr.mxu0 %v390
    %1356 = vmatpush1.msra.mxu0 %v389
    %1357 = vmatprep.subr.mxu0 %v394
    %1358 = vmatpush1.msra.mxu0 %v393
    %1359 = vmatprep.subr.mxu0 %v398
    %1360 = vmatpush1.msra.mxu0 %v397
    %1361 = vmatprep.subr.mxu0 %v402
    %1362 = vmatpush1.msra.mxu0 %v401
    %1363 = vmatprep.subr.mxu0 %v406
    %1364 = vmatpush1.msra.mxu0 %v405
    %1365 = vmatprep.mubr.f32.mxu0 %v1107
    %1366 = vmatmul.mubr.f32.gmra.mrb[0].mxu0 %v1099
    %v1367 = vpop.f32.mrb[0].mxu0
    %v1368 = vadd.f32 %v1297, %v1367
    %v1369 = vpop.f32.mrb[0].mxu0
    %v1370 = vadd.f32 %v1299, %v1369
    %1371 = vdwg.mxu0
    %1372 = vmatprep.subr.mxu0 %v410
    %1373 = vmatpush1.msra.mxu0 %v409
    %1374 = vmatprep.subr.mxu0 %v414
    %1375 = vmatpush1.msra.mxu0 %v413
    %1376 = vmatprep.subr.mxu0 %v418
    %1377 = vmatpush1.msra.mxu0 %v417
    %1378 = vmatprep.subr.mxu0 %v422
    %1379 = vmatpush1.msra.mxu0 %v421
    %1380 = vmatprep.subr.mxu0 %v426
    %1381 = vmatpush1.msra.mxu0 %v425
    %1382 = vmatprep.subr.mxu0 %v430
    %1383 = vmatpush1.msra.mxu0 %v429
    %1384 = vmatprep.subr.mxu0 %v434
    %1385 = vmatpush1.msra.mxu0 %v433
    %1386 = vmatprep.subr.mxu0 %v438
    %1387 = vmatpush1.msra.mxu0 %v437
    %1388 = vmatprep.subr.mxu0 %v442
    %1389 = vmatpush1.msra.mxu0 %v441
    %1390 = vmatprep.subr.mxu0 %v446
    %1391 = vmatpush1.msra.mxu0 %v445
    %1392 = vmatprep.subr.mxu0 %v450
    %1393 = vmatpush1.msra.mxu0 %v449
    %1394 = vmatprep.subr.mxu0 %v454
    %1395 = vmatpush1.msra.mxu0 %v453
    %1396 = vmatprep.subr.mxu0 %v458
    %1397 = vmatpush1.msra.mxu0 %v457
    %1398 = vmatprep.subr.mxu0 %v462
    %1399 = vmatpush1.msra.mxu0 %v461
    %1400 = vmatprep.subr.mxu0 %v466
    %1401 = vmatpush1.msra.mxu0 %v465
    %1402 = vmatprep.subr.mxu0 %v470
    %1403 = vmatpush1.msra.mxu0 %v469
    %1404 = vmatprep.subr.mxu0 %v474
    %1405 = vmatpush1.msra.mxu0 %v473
    %1406 = vmatprep.subr.mxu0 %v478
    %1407 = vmatpush1.msra.mxu0 %v477
    %1408 = vmatprep.subr.mxu0 %v482
    %1409 = vmatpush1.msra.mxu0 %v481
    %1410 = vmatprep.subr.mxu0 %v486
    %1411 = vmatpush1.msra.mxu0 %v485
    %1412 = vmatprep.subr.mxu0 %v490
    %1413 = vmatpush1.msra.mxu0 %v489
    %1414 = vmatprep.subr.mxu0 %v494
    %1415 = vmatpush1.msra.mxu0 %v493
    %1416 = vmatprep.subr.mxu0 %v498
    %1417 = vmatpush1.msra.mxu0 %v497
    %1418 = vmatprep.subr.mxu0 %v502
    %1419 = vmatpush1.msra.mxu0 %v501
    %1420 = vmatprep.subr.mxu0 %v506
    %1421 = vmatpush1.msra.mxu0 %v505
    %1422 = vmatprep.subr.mxu0 %v510
    %1423 = vmatpush1.msra.mxu0 %v509
    %1424 = vmatprep.subr.mxu0 %v514
    %1425 = vmatpush1.msra.mxu0 %v513
    %1426 = vmatprep.subr.mxu0 %v518
    %1427 = vmatpush1.msra.mxu0 %v517
    %1428 = vmatprep.subr.mxu0 %v522
    %1429 = vmatpush1.msra.mxu0 %v521
    %1430 = vmatprep.subr.mxu0 %v526
    %1431 = vmatpush1.msra.mxu0 %v525
    %1432 = vmatprep.subr.mxu0 %v530
    %1433 = vmatpush1.msra.mxu0 %v529
    %1434 = vmatprep.subr.mxu0 %v534
    %1435 = vmatpush1.msra.mxu0 %v533
    %1436 = vmatprep.mubr.f32.mxu0 %v1108
    %1437 = vmatmul.mubr.f32.gmra.mrb[0].mxu0 %v1106
    %v1438 = vpop.f32.mrb[0].mxu0
    %v1439 = vadd.f32 %v1368, %v1438
    %v1440 = vpop.f32.mrb[0].mxu0
    %v1441 = vadd.f32 %v1370, %v1440
    %1442 = vdwg.mxu0
    %1443 = vmatprep.subr.mxu0 %v538
    %1444 = vmatpush1.msra.mxu0 %v537
    %1445 = vmatprep.subr.mxu0 %v542
    %1446 = vmatpush1.msra.mxu0 %v541
    %1447 = vmatprep.subr.mxu0 %v546
    %1448 = vmatpush1.msra.mxu0 %v545
    %1449 = vmatprep.subr.mxu0 %v550
    %1450 = vmatpush1.msra.mxu0 %v549
    %1451 = vmatprep.subr.mxu0 %v554
    %1452 = vmatpush1.msra.mxu0 %v553
    %1453 = vmatprep.subr.mxu0 %v558
    %1454 = vmatpush1.msra.mxu0 %v557
    %1455 = vmatprep.subr.mxu0 %v562
    %1456 = vmatpush1.msra.mxu0 %v561
    %1457 = vmatprep.subr.mxu0 %v566
    %1458 = vmatpush1.msra.mxu0 %v565
    %1459 = vmatprep.subr.mxu0 %v570
    %1460 = vmatpush1.msra.mxu0 %v569
    %1461 = vmatprep.subr.mxu0 %v574
    %1462 = vmatpush1.msra.mxu0 %v573
    %1463 = vmatprep.subr.mxu0 %v578
    %1464 = vmatpush1.msra.mxu0 %v577
    %1465 = vmatprep.subr.mxu0 %v582
    %1466 = vmatpush1.msra.mxu0 %v581
    %1467 = vmatprep.subr.mxu0 %v586
    %1468 = vmatpush1.msra.mxu0 %v585
    %1469 = vmatprep.subr.mxu0 %v590
    %1470 = vmatpush1.msra.mxu0 %v589
    %1471 = vmatprep.subr.mxu0 %v594
    %1472 = vmatpush1.msra.mxu0 %v593
    %1473 = vmatprep.subr.mxu0 %v598
    %1474 = vmatpush1.msra.mxu0 %v597
    %1475 = vmatprep.subr.mxu0 %v602
    %1476 = vmatpush1.msra.mxu0 %v601
    %1477 = vmatprep.subr.mxu0 %v606
    %1478 = vmatpush1.msra.mxu0 %v605
    %1479 = vmatprep.subr.mxu0 %v610
    %1480 = vmatpush1.msra.mxu0 %v609
    %1481 = vmatprep.subr.mxu0 %v614
    %1482 = vmatpush1.msra.mxu0 %v613
    %1483 = vmatprep.subr.mxu0 %v618
    %1484 = vmatpush1.msra.mxu0 %v617
    %1485 = vmatprep.subr.mxu0 %v622
    %1486 = vmatpush1.msra.mxu0 %v621
    %1487 = vmatprep.subr.mxu0 %v626
    %1488 = vmatpush1.msra.mxu0 %v625
    %1489 = vmatprep.subr.mxu0 %v630
    %1490 = vmatpush1.msra.mxu0 %v629
    %1491 = vmatprep.subr.mxu0 %v634
    %1492 = vmatpush1.msra.mxu0 %v633
    %1493 = vmatprep.subr.mxu0 %v638
    %1494 = vmatpush1.msra.mxu0 %v637
    %1495 = vmatprep.subr.mxu0 %v642
    %1496 = vmatpush1.msra.mxu0 %v641
    %1497 = vmatprep.subr.mxu0 %v646
    %1498 = vmatpush1.msra.mxu0 %v645
    %1499 = vmatprep.subr.mxu0 %v650
    %1500 = vmatpush1.msra.mxu0 %v649
    %1501 = vmatprep.subr.mxu0 %v654
    %1502 = vmatpush1.msra.mxu0 %v653
    %1503 = vmatprep.subr.mxu0 %v658
    %1504 = vmatpush1.msra.mxu0 %v657
    %1505 = vmatprep.subr.mxu0 %v662
    %1506 = vmatpush1.msra.mxu0 %v661
    %1507 = vmatprep.mubr.f32.mxu0 %v1124
    %1508 = vmatmul.mubr.f32.gmra.mrb[0].mxu0 %v1116
    %v1509 = vpop.f32.mrb[0].mxu0
    %v1510 = vadd.f32 %v1439, %v1509
    %v1511 = vpop.f32.mrb[0].mxu0
    %v1512 = vadd.f32 %v1441, %v1511
    %1513 = vdwg.mxu0
    %1514 = vmatprep.subr.mxu0 %v666
    %1515 = vmatpush1.msra.mxu0 %v665
    %1516 = vmatprep.subr.mxu0 %v670
    %1517 = vmatpush1.msra.mxu0 %v669
    %1518 = vmatprep.subr.mxu0 %v674
    %1519 = vmatpush1.msra.mxu0 %v673
    %1520 = vmatprep.subr.mxu0 %v678
    %1521 = vmatpush1.msra.mxu0 %v677
    %1522 = vmatprep.subr.mxu0 %v682
    %1523 = vmatpush1.msra.mxu0 %v681
    %1524 = vmatprep.subr.mxu0 %v686
    %1525 = vmatpush1.msra.mxu0 %v685
    %1526 = vmatprep.subr.mxu0 %v690
    %1527 = vmatpush1.msra.mxu0 %v689
    %1528 = vmatprep.subr.mxu0 %v694
    %1529 = vmatpush1.msra.mxu0 %v693
    %1530 = vmatprep.subr.mxu0 %v698
    %1531 = vmatpush1.msra.mxu0 %v697
    %1532 = vmatprep.subr.mxu0 %v702
    %1533 = vmatpush1.msra.mxu0 %v701
    %1534 = vmatprep.subr.mxu0 %v706
    %1535 = vmatpush1.msra.mxu0 %v705
    %1536 = vmatprep.subr.mxu0 %v710
    %1537 = vmatpush1.msra.mxu0 %v709
    %1538 = vmatprep.subr.mxu0 %v714
    %1539 = vmatpush1.msra.mxu0 %v713
    %1540 = vmatprep.subr.mxu0 %v718
    %1541 = vmatpush1.msra.mxu0 %v717
    %1542 = vmatprep.subr.mxu0 %v722
    %1543 = vmatpush1.msra.mxu0 %v721
    %1544 = vmatprep.subr.mxu0 %v726
    %1545 = vmatpush1.msra.mxu0 %v725
    %1546 = vmatprep.subr.mxu0 %v730
    %1547 = vmatpush1.msra.mxu0 %v729
    %1548 = vmatprep.subr.mxu0 %v734
    %1549 = vmatpush1.msra.mxu0 %v733
    %1550 = vmatprep.subr.mxu0 %v738
    %1551 = vmatpush1.msra.mxu0 %v737
    %1552 = vmatprep.subr.mxu0 %v742
    %1553 = vmatpush1.msra.mxu0 %v741
    %1554 = vmatprep.subr.mxu0 %v746
    %1555 = vmatpush1.msra.mxu0 %v745
    %1556 = vmatprep.subr.mxu0 %v750
    %1557 = vmatpush1.msra.mxu0 %v749
    %1558 = vmatprep.subr.mxu0 %v754
    %1559 = vmatpush1.msra.mxu0 %v753
    %1560 = vmatprep.subr.mxu0 %v758
    %1561 = vmatpush1.msra.mxu0 %v757
    %1562 = vmatprep.subr.mxu0 %v762
    %1563 = vmatpush1.msra.mxu0 %v761
    %1564 = vmatprep.subr.mxu0 %v766
    %1565 = vmatpush1.msra.mxu0 %v765
    %1566 = vmatprep.subr.mxu0 %v770
    %1567 = vmatpush1.msra.mxu0 %v769
    %1568 = vmatprep.subr.mxu0 %v774
    %1569 = vmatpush1.msra.mxu0 %v773
    %1570 = vmatprep.subr.mxu0 %v778
    %1571 = vmatpush1.msra.mxu0 %v777
    %1572 = vmatprep.subr.mxu0 %v782
    %1573 = vmatpush1.msra.mxu0 %v781
    %1574 = vmatprep.subr.mxu0 %v786
    %1575 = vmatpush1.msra.mxu0 %v785
    %1576 = vmatprep.subr.mxu0 %v790
    %1577 = vmatpush1.msra.mxu0 %v789
    %1578 = vmatprep.mubr.f32.mxu0 %v1125
    %1579 = vmatmul.mubr.f32.gmra.mrb[0].mxu0 %v1123
    %v1580 = vpop.f32.mrb[0].mxu0
    %v1581 = vadd.f32 %v1510, %v1580
    %v1582 = vpop.f32.mrb[0].mxu0
    %v1583 = vadd.f32 %v1512, %v1582
    %1584 = vdwg.mxu0
    %1585 = vmatprep.subr.mxu0 %v794
    %1586 = vmatpush1.msra.mxu0 %v793
    %1587 = vmatprep.subr.mxu0 %v798
    %1588 = vmatpush1.msra.mxu0 %v797
    %1589 = vmatprep.subr.mxu0 %v802
    %1590 = vmatpush1.msra.mxu0 %v801
    %1591 = vmatprep.subr.mxu0 %v806
    %1592 = vmatpush1.msra.mxu0 %v805
    %1593 = vmatprep.subr.mxu0 %v810
    %1594 = vmatpush1.msra.mxu0 %v809
    %1595 = vmatprep.subr.mxu0 %v814
    %1596 = vmatpush1.msra.mxu0 %v813
    %1597 = vmatprep.subr.mxu0 %v818
    %1598 = vmatpush1.msra.mxu0 %v817
    %1599 = vmatprep.subr.mxu0 %v822
    %1600 = vmatpush1.msra.mxu0 %v821
    %1601 = vmatprep.subr.mxu0 %v826
    %1602 = vmatpush1.msra.mxu0 %v825
    %1603 = vmatprep.subr.mxu0 %v830
    %1604 = vmatpush1.msra.mxu0 %v829
    %1605 = vmatprep.subr.mxu0 %v834
    %1606 = vmatpush1.msra.mxu0 %v833
    %1607 = vmatprep.subr.mxu0 %v838
    %1608 = vmatpush1.msra.mxu0 %v837
    %1609 = vmatprep.subr.mxu0 %v842
    %1610 = vmatpush1.msra.mxu0 %v841
    %1611 = vmatprep.subr.mxu0 %v846
    %1612 = vmatpush1.msra.mxu0 %v845
    %1613 = vmatprep.subr.mxu0 %v850
    %1614 = vmatpush1.msra.mxu0 %v849
    %1615 = vmatprep.subr.mxu0 %v854
    %1616 = vmatpush1.msra.mxu0 %v853
    %1617 = vmatprep.subr.mxu0 %v858
    %1618 = vmatpush1.msra.mxu0 %v857
    %1619 = vmatprep.subr.mxu0 %v862
    %1620 = vmatpush1.msra.mxu0 %v861
    %1621 = vmatprep.subr.mxu0 %v866
    %1622 = vmatpush1.msra.mxu0 %v865
    %1623 = vmatprep.subr.mxu0 %v870
    %1624 = vmatpush1.msra.mxu0 %v869
    %1625 = vmatprep.subr.mxu0 %v874
    %1626 = vmatpush1.msra.mxu0 %v873
    %1627 = vmatprep.subr.mxu0 %v878
    %1628 = vmatpush1.msra.mxu0 %v877
    %1629 = vmatprep.subr.mxu0 %v882
    %1630 = vmatpush1.msra.mxu0 %v881
    %1631 = vmatprep.subr.mxu0 %v886
    %1632 = vmatpush1.msra.mxu0 %v885
    %1633 = vmatprep.subr.mxu0 %v890
    %1634 = vmatpush1.msra.mxu0 %v889
    %1635 = vmatprep.subr.mxu0 %v894
    %1636 = vmatpush1.msra.mxu0 %v893
    %1637 = vmatprep.subr.mxu0 %v898
    %1638 = vmatpush1.msra.mxu0 %v897
    %1639 = vmatprep.subr.mxu0 %v902
    %1640 = vmatpush1.msra.mxu0 %v901
    %1641 = vmatprep.subr.mxu0 %v906
    %1642 = vmatpush1.msra.mxu0 %v905
    %1643 = vmatprep.subr.mxu0 %v910
    %1644 = vmatpush1.msra.mxu0 %v909
    %1645 = vmatprep.subr.mxu0 %v914
    %1646 = vmatpush1.msra.mxu0 %v913
    %1647 = vmatprep.subr.mxu0 %v918
    %1648 = vmatpush1.msra.mxu0 %v917
    %1649 = vmatprep.mubr.f32.mxu0 %v1141
    %1650 = vmatmul.mubr.f32.gmra.mrb[0].mxu0 %v1133
    %v1651 = vpop.f32.mrb[0].mxu0
    %v1652 = vadd.f32 %v1581, %v1651
    %v1653 = vpop.f32.mrb[0].mxu0
    %v1654 = vadd.f32 %v1583, %v1653
    %1655 = vdwg.mxu0
    %1656 = vmatprep.subr.mxu0 %v922
    %1657 = vmatpush1.msra.mxu0 %v921
    %1658 = vmatprep.subr.mxu0 %v926
    %1659 = vmatpush1.msra.mxu0 %v925
    %1660 = vmatprep.subr.mxu0 %v930
    %1661 = vmatpush1.msra.mxu0 %v929
    %1662 = vmatprep.subr.mxu0 %v934
    %1663 = vmatpush1.msra.mxu0 %v933
    %1664 = vmatprep.subr.mxu0 %v938
    %1665 = vmatpush1.msra.mxu0 %v937
    %1666 = vmatprep.subr.mxu0 %v942
    %1667 = vmatpush1.msra.mxu0 %v941
    %1668 = vmatprep.subr.mxu0 %v946
    %1669 = vmatpush1.msra.mxu0 %v945
    %1670 = vmatprep.subr.mxu0 %v950
    %1671 = vmatpush1.msra.mxu0 %v949
    %1672 = vmatprep.subr.mxu0 %v954
    %1673 = vmatpush1.msra.mxu0 %v953
    %1674 = vmatprep.subr.mxu0 %v958
    %1675 = vmatpush1.msra.mxu0 %v957
    %1676 = vmatprep.subr.mxu0 %v962
    %1677 = vmatpush1.msra.mxu0 %v961
    %1678 = vmatprep.subr.mxu0 %v966
    %1679 = vmatpush1.msra.mxu0 %v965
    %1680 = vmatprep.subr.mxu0 %v970
    %1681 = vmatpush1.msra.mxu0 %v969
    %1682 = vmatprep.subr.mxu0 %v974
    %1683 = vmatpush1.msra.mxu0 %v973
    %1684 = vmatprep.subr.mxu0 %v978
    %1685 = vmatpush1.msra.mxu0 %v977
    %1686 = vmatprep.subr.mxu0 %v982
    %1687 = vmatpush1.msra.mxu0 %v981
    %1688 = vmatprep.subr.mxu0 %v986
    %1689 = vmatpush1.msra.mxu0 %v985
    %1690 = vmatprep.subr.mxu0 %v990
    %1691 = vmatpush1.msra.mxu0 %v989
    %1692 = vmatprep.subr.mxu0 %v994
    %1693 = vmatpush1.msra.mxu0 %v993
    %1694 = vmatprep.subr.mxu0 %v998
    %1695 = vmatpush1.msra.mxu0 %v997
    %1696 = vmatprep.subr.mxu0 %v1002
    %1697 = vmatpush1.msra.mxu0 %v1001
    %1698 = vmatprep.subr.mxu0 %v1006
    %1699 = vmatpush1.msra.mxu0 %v1005
    %1700 = vmatprep.subr.mxu0 %v1010
    %1701 = vmatpush1.msra.mxu0 %v1009
    %1702 = vmatprep.subr.mxu0 %v1014
    %1703 = vmatpush1.msra.mxu0 %v1013
    %1704 = vmatprep.subr.mxu0 %v1018
    %1705 = vmatpush1.msra.mxu0 %v1017
    %1706 = vmatprep.subr.mxu0 %v1022
    %1707 = vmatpush1.msra.mxu0 %v1021
    %1708 = vmatprep.subr.mxu0 %v1026
    %1709 = vmatpush1.msra.mxu0 %v1025
    %1710 = vmatprep.subr.mxu0 %v1030
    %1711 = vmatpush1.msra.mxu0 %v1029
    %1712 = vmatprep.subr.mxu0 %v1034
    %1713 = vmatpush1.msra.mxu0 %v1033
    %1714 = vmatprep.subr.mxu0 %v1038
    %1715 = vmatpush1.msra.mxu0 %v1037
    %1716 = vmatprep.subr.mxu0 %v1042
    %1717 = vmatpush1.msra.mxu0 %v1041
    %1718 = vmatprep.subr.mxu0 %v1046
    %1719 = vmatpush1.msra.mxu0 %v1045
    %1720 = vmatprep.mubr.f32.mxu0 %v1142
    %1721 = vmatmul.mubr.f32.gmra.mrb[0].mxu0 %v1140
    %v1722 = vpop.f32.mrb[0].mxu0
    %v1723 = vadd.f32 %v1652, %v1722
    %v1724 = vpop.f32.mrb[0].mxu0
    %v1725 = vadd.f32 %v1654, %v1724
    %1726 = vdwg.mxu0
    %1727 = vmatprep.subr.mxu0 %v28
    %1728 = vmatpush1.msra.mxu0 %v27
    %1729 = vmatprep.subr.mxu0 %v32
    %1730 = vmatpush1.msra.mxu0 %v31
    %1731 = vmatprep.subr.mxu0 %v36
    %1732 = vmatpush1.msra.mxu0 %v35
    %1733 = vmatprep.subr.mxu0 %v40
    %1734 = vmatpush1.msra.mxu0 %v39
    %1735 = vmatprep.subr.mxu0 %v44
    %1736 = vmatpush1.msra.mxu0 %v43
    %1737 = vmatprep.subr.mxu0 %v48
    %1738 = vmatpush1.msra.mxu0 %v47
    %1739 = vmatprep.subr.mxu0 %v52
    %1740 = vmatpush1.msra.mxu0 %v51
    %1741 = vmatprep.subr.mxu0 %v56
    %1742 = vmatpush1.msra.mxu0 %v55
    %1743 = vmatprep.subr.mxu0 %v60
    %1744 = vmatpush1.msra.mxu0 %v59
    %1745 = vmatprep.subr.mxu0 %v64
    %1746 = vmatpush1.msra.mxu0 %v63
    %1747 = vmatprep.subr.mxu0 %v68
    %1748 = vmatpush1.msra.mxu0 %v67
    %1749 = vmatprep.subr.mxu0 %v72
    %1750 = vmatpush1.msra.mxu0 %v71
    %1751 = vmatprep.subr.mxu0 %v76
    %1752 = vmatpush1.msra.mxu0 %v75
    %1753 = vmatprep.subr.mxu0 %v80
    %1754 = vmatpush1.msra.mxu0 %v79
    %1755 = vmatprep.subr.mxu0 %v84
    %1756 = vmatpush1.msra.mxu0 %v83
    %1757 = vmatprep.subr.mxu0 %v88
    %1758 = vmatpush1.msra.mxu0 %v87
    %1759 = vmatprep.subr.mxu0 %v92
    %1760 = vmatpush1.msra.mxu0 %v91
    %1761 = vmatprep.subr.mxu0 %v96
    %1762 = vmatpush1.msra.mxu0 %v95
    %1763 = vmatprep.subr.mxu0 %v100
    %1764 = vmatpush1.msra.mxu0 %v99
    %1765 = vmatprep.subr.mxu0 %v104
    %1766 = vmatpush1.msra.mxu0 %v103
    %1767 = vmatprep.subr.mxu0 %v108
    %1768 = vmatpush1.msra.mxu0 %v107
    %1769 = vmatprep.subr.mxu0 %v112
    %1770 = vmatpush1.msra.mxu0 %v111
    %1771 = vmatprep.subr.mxu0 %v116
    %1772 = vmatpush1.msra.mxu0 %v115
    %1773 = vmatprep.subr.mxu0 %v120
    %1774 = vmatpush1.msra.mxu0 %v119
    %1775 = vmatprep.subr.mxu0 %v124
    %1776 = vmatpush1.msra.mxu0 %v123
    %1777 = vmatprep.subr.mxu0 %v128
    %1778 = vmatpush1.msra.mxu0 %v127
    %1779 = vmatprep.subr.mxu0 %v132
    %1780 = vmatpush1.msra.mxu0 %v131
    %1781 = vmatprep.subr.mxu0 %v136
    %1782 = vmatpush1.msra.mxu0 %v135
    %1783 = vmatprep.subr.mxu0 %v140
    %1784 = vmatpush1.msra.mxu0 %v139
    %1785 = vmatprep.subr.mxu0 %v144
    %1786 = vmatpush1.msra.mxu0 %v143
    %1787 = vmatprep.subr.mxu0 %v148
    %1788 = vmatpush1.msra.mxu0 %v147
    %1789 = vmatprep.subr.mxu0 %v152
    %1790 = vmatpush1.msra.mxu0 %v151
    %1791 = vmatprep.mubr.f32.mxu0 %v1090
    %1792 = vmatmul.mubr.f32.gmra.mrb[0].mxu0 %v1082
    %v1793 = vpop.f32.mrb[0].mxu0
    %v1794 = vadd.f32 %v1062, %v1793
    %v1795 = vpop.f32.mrb[0].mxu0
    %v1796 = vadd.f32 %v1066, %v1795
    %1797 = vdwg.mxu0
    %1798 = vmatprep.subr.mxu0 %v156
    %1799 = vmatpush1.msra.mxu0 %v155
    %1800 = vmatprep.subr.mxu0 %v160
    %1801 = vmatpush1.msra.mxu0 %v159
    %1802 = vmatprep.subr.mxu0 %v164
    %1803 = vmatpush1.msra.mxu0 %v163
    %1804 = vmatprep.subr.mxu0 %v168
    %1805 = vmatpush1.msra.mxu0 %v167
    %1806 = vmatprep.subr.mxu0 %v172
    %1807 = vmatpush1.msra.mxu0 %v171
    %1808 = vmatprep.subr.mxu0 %v176
    %1809 = vmatpush1.msra.mxu0 %v175
    %1810 = vmatprep.subr.mxu0 %v180
    %1811 = vmatpush1.msra.mxu0 %v179
    %1812 = vmatprep.subr.mxu0 %v184
    %1813 = vmatpush1.msra.mxu0 %v183
    %1814 = vmatprep.subr.mxu0 %v188
    %1815 = vmatpush1.msra.mxu0 %v187
    %1816 = vmatprep.subr.mxu0 %v192
    %1817 = vmatpush1.msra.mxu0 %v191
    %1818 = vmatprep.subr.mxu0 %v196
    %1819 = vmatpush1.msra.mxu0 %v195
    %1820 = vmatprep.subr.mxu0 %v200
    %1821 = vmatpush1.msra.mxu0 %v199
    %1822 = vmatprep.subr.mxu0 %v204
    %1823 = vmatpush1.msra.mxu0 %v203
    %1824 = vmatprep.subr.mxu0 %v208
    %1825 = vmatpush1.msra.mxu0 %v207
    %1826 = vmatprep.subr.mxu0 %v212
    %1827 = vmatpush1.msra.mxu0 %v211
    %1828 = vmatprep.subr.mxu0 %v216
    %1829 = vmatpush1.msra.mxu0 %v215
    %1830 = vmatprep.subr.mxu0 %v220
    %1831 = vmatpush1.msra.mxu0 %v219
    %1832 = vmatprep.subr.mxu0 %v224
    %1833 = vmatpush1.msra.mxu0 %v223
    %1834 = vmatprep.subr.mxu0 %v228
    %1835 = vmatpush1.msra.mxu0 %v227
    %1836 = vmatprep.subr.mxu0 %v232
    %1837 = vmatpush1.msra.mxu0 %v231
    %1838 = vmatprep.subr.mxu0 %v236
    %1839 = vmatpush1.msra.mxu0 %v235
    %1840 = vmatprep.subr.mxu0 %v240
    %1841 = vmatpush1.msra.mxu0 %v239
    %1842 = vmatprep.subr.mxu0 %v244
    %1843 = vmatpush1.msra.mxu0 %v243
    %1844 = vmatprep.subr.mxu0 %v248
    %1845 = vmatpush1.msra.mxu0 %v247
    %1846 = vmatprep.subr.mxu0 %v252
    %1847 = vmatpush1.msra.mxu0 %v251
    %1848 = vmatprep.subr.mxu0 %v256
    %1849 = vmatpush1.msra.mxu0 %v255
    %1850 = vmatprep.subr.mxu0 %v260
    %1851 = vmatpush1.msra.mxu0 %v259
    %1852 = vmatprep.subr.mxu0 %v264
    %1853 = vmatpush1.msra.mxu0 %v263
    %1854 = vmatprep.subr.mxu0 %v268
    %1855 = vmatpush1.msra.mxu0 %v267
    %1856 = vmatprep.subr.mxu0 %v272
    %1857 = vmatpush1.msra.mxu0 %v271
    %1858 = vmatprep.subr.mxu0 %v276
    %1859 = vmatpush1.msra.mxu0 %v275
    %1860 = vmatprep.subr.mxu0 %v280
    %1861 = vmatpush1.msra.mxu0 %v279
    %1862 = vmatprep.mubr.f32.mxu0 %v1091
    %1863 = vmatmul.mubr.f32.gmra.mrb[0].mxu0 %v1089
    %v1864 = vpop.f32.mrb[0].mxu0
    %v1865 = vadd.f32 %v1794, %v1864
    %v1866 = vpop.f32.mrb[0].mxu0
    %v1867 = vadd.f32 %v1796, %v1866
    %1868 = vdwg.mxu0
    %1869 = vmatprep.subr.mxu0 %v284
    %1870 = vmatpush1.msra.mxu0 %v283
    %1871 = vmatprep.subr.mxu0 %v288
    %1872 = vmatpush1.msra.mxu0 %v287
    %1873 = vmatprep.subr.mxu0 %v292
    %1874 = vmatpush1.msra.mxu0 %v291
    %1875 = vmatprep.subr.mxu0 %v296
    %1876 = vmatpush1.msra.mxu0 %v295
    %1877 = vmatprep.subr.mxu0 %v300
    %1878 = vmatpush1.msra.mxu0 %v299
    %1879 = vmatprep.subr.mxu0 %v304
    %1880 = vmatpush1.msra.mxu0 %v303
    %1881 = vmatprep.subr.mxu0 %v308
    %1882 = vmatpush1.msra.mxu0 %v307
    %1883 = vmatprep.subr.mxu0 %v312
    %1884 = vmatpush1.msra.mxu0 %v311
    %1885 = vmatprep.subr.mxu0 %v316
    %1886 = vmatpush1.msra.mxu0 %v315
    %1887 = vmatprep.subr.mxu0 %v320
    %1888 = vmatpush1.msra.mxu0 %v319
    %1889 = vmatprep.subr.mxu0 %v324
    %1890 = vmatpush1.msra.mxu0 %v323
    %1891 = vmatprep.subr.mxu0 %v328
    %1892 = vmatpush1.msra.mxu0 %v327
    %1893 = vmatprep.subr.mxu0 %v332
    %1894 = vmatpush1.msra.mxu0 %v331
    %1895 = vmatprep.subr.mxu0 %v336
    %1896 = vmatpush1.msra.mxu0 %v335
    %1897 = vmatprep.subr.mxu0 %v340
    %1898 = vmatpush1.msra.mxu0 %v339
    %1899 = vmatprep.subr.mxu0 %v344
    %1900 = vmatpush1.msra.mxu0 %v343
    %1901 = vmatprep.subr.mxu0 %v348
    %1902 = vmatpush1.msra.mxu0 %v347
    %1903 = vmatprep.subr.mxu0 %v352
    %1904 = vmatpush1.msra.mxu0 %v351
    %1905 = vmatprep.subr.mxu0 %v356
    %1906 = vmatpush1.msra.mxu0 %v355
    %1907 = vmatprep.subr.mxu0 %v360
    %1908 = vmatpush1.msra.mxu0 %v359
    %1909 = vmatprep.subr.mxu0 %v364
    %1910 = vmatpush1.msra.mxu0 %v363
    %1911 = vmatprep.subr.mxu0 %v368
    %1912 = vmatpush1.msra.mxu0 %v367
    %1913 = vmatprep.subr.mxu0 %v372
    %1914 = vmatpush1.msra.mxu0 %v371
    %1915 = vmatprep.subr.mxu0 %v376
    %1916 = vmatpush1.msra.mxu0 %v375
    %1917 = vmatprep.subr.mxu0 %v380
    %1918 = vmatpush1.msra.mxu0 %v379
    %1919 = vmatprep.subr.mxu0 %v384
    %1920 = vmatpush1.msra.mxu0 %v383
    %1921 = vmatprep.subr.mxu0 %v388
    %1922 = vmatpush1.msra.mxu0 %v387
    %1923 = vmatprep.subr.mxu0 %v392
    %1924 = vmatpush1.msra.mxu0 %v391
    %1925 = vmatprep.subr.mxu0 %v396
    %1926 = vmatpush1.msra.mxu0 %v395
    %1927 = vmatprep.subr.mxu0 %v400
    %1928 = vmatpush1.msra.mxu0 %v399
    %1929 = vmatprep.subr.mxu0 %v404
    %1930 = vmatpush1.msra.mxu0 %v403
    %1931 = vmatprep.subr.mxu0 %v408
    %1932 = vmatpush1.msra.mxu0 %v407
    %1933 = vmatprep.mubr.f32.mxu0 %v1107
    %1934 = vmatmul.mubr.f32.gmra.mrb[0].mxu0 %v1099
    %v1935 = vpop.f32.mrb[0].mxu0
    %v1936 = vadd.f32 %v1865, %v1935
    %v1937 = vpop.f32.mrb[0].mxu0
    %v1938 = vadd.f32 %v1867, %v1937
    %1939 = vdwg.mxu0
    %1940 = vmatprep.subr.mxu0 %v412
    %1941 = vmatpush1.msra.mxu0 %v411
    %1942 = vmatprep.subr.mxu0 %v416
    %1943 = vmatpush1.msra.mxu0 %v415
    %1944 = vmatprep.subr.mxu0 %v420
    %1945 = vmatpush1.msra.mxu0 %v419
    %1946 = vmatprep.subr.mxu0 %v424
    %1947 = vmatpush1.msra.mxu0 %v423
    %1948 = vmatprep.subr.mxu0 %v428
    %1949 = vmatpush1.msra.mxu0 %v427
    %1950 = vmatprep.subr.mxu0 %v432
    %1951 = vmatpush1.msra.mxu0 %v431
    %1952 = vmatprep.subr.mxu0 %v436
    %1953 = vmatpush1.msra.mxu0 %v435
    %1954 = vmatprep.subr.mxu0 %v440
    %1955 = vmatpush1.msra.mxu0 %v439
    %1956 = vmatprep.subr.mxu0 %v444
    %1957 = vmatpush1.msra.mxu0 %v443
    %1958 = vmatprep.subr.mxu0 %v448
    %1959 = vmatpush1.msra.mxu0 %v447
    %1960 = vmatprep.subr.mxu0 %v452
    %1961 = vmatpush1.msra.mxu0 %v451
    %1962 = vmatprep.subr.mxu0 %v456
    %1963 = vmatpush1.msra.mxu0 %v455
    %1964 = vmatprep.subr.mxu0 %v460
    %1965 = vmatpush1.msra.mxu0 %v459
    %1966 = vmatprep.subr.mxu0 %v464
    %1967 = vmatpush1.msra.mxu0 %v463
    %1968 = vmatprep.subr.mxu0 %v468
    %1969 = vmatpush1.msra.mxu0 %v467
    %1970 = vmatprep.subr.mxu0 %v472
    %1971 = vmatpush1.msra.mxu0 %v471
    %1972 = vmatprep.subr.mxu0 %v476
    %1973 = vmatpush1.msra.mxu0 %v475
    %1974 = vmatprep.subr.mxu0 %v480
    %1975 = vmatpush1.msra.mxu0 %v479
    %1976 = vmatprep.subr.mxu0 %v484
    %1977 = vmatpush1.msra.mxu0 %v483
    %1978 = vmatprep.subr.mxu0 %v488
    %1979 = vmatpush1.msra.mxu0 %v487
    %1980 = vmatprep.subr.mxu0 %v492
    %1981 = vmatpush1.msra.mxu0 %v491
    %1982 = vmatprep.subr.mxu0 %v496
    %1983 = vmatpush1.msra.mxu0 %v495
    %1984 = vmatprep.subr.mxu0 %v500
    %1985 = vmatpush1.msra.mxu0 %v499
    %1986 = vmatprep.subr.mxu0 %v504
    %1987 = vmatpush1.msra.mxu0 %v503
    %1988 = vmatprep.subr.mxu0 %v508
    %1989 = vmatpush1.msra.mxu0 %v507
    %1990 = vmatprep.subr.mxu0 %v512
    %1991 = vmatpush1.msra.mxu0 %v511
    %1992 = vmatprep.subr.mxu0 %v516
    %1993 = vmatpush1.msra.mxu0 %v515
    %1994 = vmatprep.subr.mxu0 %v520
    %1995 = vmatpush1.msra.mxu0 %v519
    %1996 = vmatprep.subr.mxu0 %v524
    %1997 = vmatpush1.msra.mxu0 %v523
    %1998 = vmatprep.subr.mxu0 %v528
    %1999 = vmatpush1.msra.mxu0 %v527
    %2000 = vmatprep.subr.mxu0 %v532
    %2001 = vmatpush1.msra.mxu0 %v531
    %2002 = vmatprep.subr.mxu0 %v536
    %2003 = vmatpush1.msra.mxu0 %v535
    %2004 = vmatprep.mubr.f32.mxu0 %v1108
    %2005 = vmatmul.mubr.f32.gmra.mrb[0].mxu0 %v1106
    %v2006 = vpop.f32.mrb[0].mxu0
    %v2007 = vadd.f32 %v1936, %v2006
    %v2008 = vpop.f32.mrb[0].mxu0
    %v2009 = vadd.f32 %v1938, %v2008
    %2010 = vdwg.mxu0
    %2011 = vmatprep.subr.mxu0 %v540
    %2012 = vmatpush1.msra.mxu0 %v539
    %2013 = vmatprep.subr.mxu0 %v544
    %2014 = vmatpush1.msra.mxu0 %v543
    %2015 = vmatprep.subr.mxu0 %v548
    %2016 = vmatpush1.msra.mxu0 %v547
    %2017 = vmatprep.subr.mxu0 %v552
    %2018 = vmatpush1.msra.mxu0 %v551
    %2019 = vmatprep.subr.mxu0 %v556
    %2020 = vmatpush1.msra.mxu0 %v555
    %2021 = vmatprep.subr.mxu0 %v560
    %2022 = vmatpush1.msra.mxu0 %v559
    %2023 = vmatprep.subr.mxu0 %v564
    %2024 = vmatpush1.msra.mxu0 %v563
    %2025 = vmatprep.subr.mxu0 %v568
    %2026 = vmatpush1.msra.mxu0 %v567
    %2027 = vmatprep.subr.mxu0 %v572
    %2028 = vmatpush1.msra.mxu0 %v571
    %2029 = vmatprep.subr.mxu0 %v576
    %2030 = vmatpush1.msra.mxu0 %v575
    %2031 = vmatprep.subr.mxu0 %v580
    %2032 = vmatpush1.msra.mxu0 %v579
    %2033 = vmatprep.subr.mxu0 %v584
    %2034 = vmatpush1.msra.mxu0 %v583
    %2035 = vmatprep.subr.mxu0 %v588
    %2036 = vmatpush1.msra.mxu0 %v587
    %2037 = vmatprep.subr.mxu0 %v592
    %2038 = vmatpush1.msra.mxu0 %v591
    %2039 = vmatprep.subr.mxu0 %v596
    %2040 = vmatpush1.msra.mxu0 %v595
    %2041 = vmatprep.subr.mxu0 %v600
    %2042 = vmatpush1.msra.mxu0 %v599
    %2043 = vmatprep.subr.mxu0 %v604
    %2044 = vmatpush1.msra.mxu0 %v603
    %2045 = vmatprep.subr.mxu0 %v608
    %2046 = vmatpush1.msra.mxu0 %v607
    %2047 = vmatprep.subr.mxu0 %v612
    %2048 = vmatpush1.msra.mxu0 %v611
    %2049 = vmatprep.subr.mxu0 %v616
    %2050 = vmatpush1.msra.mxu0 %v615
    %2051 = vmatprep.subr.mxu0 %v620
    %2052 = vmatpush1.msra.mxu0 %v619
    %2053 = vmatprep.subr.mxu0 %v624
    %2054 = vmatpush1.msra.mxu0 %v623
    %2055 = vmatprep.subr.mxu0 %v628
    %2056 = vmatpush1.msra.mxu0 %v627
    %2057 = vmatprep.subr.mxu0 %v632
    %2058 = vmatpush1.msra.mxu0 %v631
    %2059 = vmatprep.subr.mxu0 %v636
    %2060 = vmatpush1.msra.mxu0 %v635
    %2061 = vmatprep.subr.mxu0 %v640
    %2062 = vmatpush1.msra.mxu0 %v639
    %2063 = vmatprep.subr.mxu0 %v644
    %2064 = vmatpush1.msra.mxu0 %v643
    %2065 = vmatprep.subr.mxu0 %v648
    %2066 = vmatpush1.msra.mxu0 %v647
    %2067 = vmatprep.subr.mxu0 %v652
    %2068 = vmatpush1.msra.mxu0 %v651
    %2069 = vmatprep.subr.mxu0 %v656
    %2070 = vmatpush1.msra.mxu0 %v655
    %2071 = vmatprep.subr.mxu0 %v660
    %2072 = vmatpush1.msra.mxu0 %v659
    %2073 = vmatprep.subr.mxu0 %v664
    %2074 = vmatpush1.msra.mxu0 %v663
    %2075 = vmatprep.mubr.f32.mxu0 %v1124
    %2076 = vmatmul.mubr.f32.gmra.mrb[0].mxu0 %v1116
    %v2077 = vpop.f32.mrb[0].mxu0
    %v2078 = vadd.f32 %v2007, %v2077
    %v2079 = vpop.f32.mrb[0].mxu0
    %v2080 = vadd.f32 %v2009, %v2079
    %2081 = vdwg.mxu0
    %2082 = vmatprep.subr.mxu0 %v668
    %2083 = vmatpush1.msra.mxu0 %v667
    %2084 = vmatprep.subr.mxu0 %v672
    %2085 = vmatpush1.msra.mxu0 %v671
    %2086 = vmatprep.subr.mxu0 %v676
    %2087 = vmatpush1.msra.mxu0 %v675
    %2088 = vmatprep.subr.mxu0 %v680
    %2089 = vmatpush1.msra.mxu0 %v679
    %2090 = vmatprep.subr.mxu0 %v684
    %2091 = vmatpush1.msra.mxu0 %v683
    %2092 = vmatprep.subr.mxu0 %v688
    %2093 = vmatpush1.msra.mxu0 %v687
    %2094 = vmatprep.subr.mxu0 %v692
    %2095 = vmatpush1.msra.mxu0 %v691
    %2096 = vmatprep.subr.mxu0 %v696
    %2097 = vmatpush1.msra.mxu0 %v695
    %2098 = vmatprep.subr.mxu0 %v700
    %2099 = vmatpush1.msra.mxu0 %v699
    %2100 = vmatprep.subr.mxu0 %v704
    %2101 = vmatpush1.msra.mxu0 %v703
    %2102 = vmatprep.subr.mxu0 %v708
    %2103 = vmatpush1.msra.mxu0 %v707
    %2104 = vmatprep.subr.mxu0 %v712
    %2105 = vmatpush1.msra.mxu0 %v711
    %2106 = vmatprep.subr.mxu0 %v716
    %2107 = vmatpush1.msra.mxu0 %v715
    %2108 = vmatprep.subr.mxu0 %v720
    %2109 = vmatpush1.msra.mxu0 %v719
    %2110 = vmatprep.subr.mxu0 %v724
    %2111 = vmatpush1.msra.mxu0 %v723
    %2112 = vmatprep.subr.mxu0 %v728
    %2113 = vmatpush1.msra.mxu0 %v727
    %2114 = vmatprep.subr.mxu0 %v732
    %2115 = vmatpush1.msra.mxu0 %v731
    %2116 = vmatprep.subr.mxu0 %v736
    %2117 = vmatpush1.msra.mxu0 %v735
    %2118 = vmatprep.subr.mxu0 %v740
    %2119 = vmatpush1.msra.mxu0 %v739
    %2120 = vmatprep.subr.mxu0 %v744
    %2121 = vmatpush1.msra.mxu0 %v743
    %2122 = vmatprep.subr.mxu0 %v748
    %2123 = vmatpush1.msra.mxu0 %v747
    %2124 = vmatprep.subr.mxu0 %v752
    %2125 = vmatpush1.msra.mxu0 %v751
    %2126 = vmatprep.subr.mxu0 %v756
    %2127 = vmatpush1.msra.mxu0 %v755
    %2128 = vmatprep.subr.mxu0 %v760
    %2129 = vmatpush1.msra.mxu0 %v759
    %2130 = vmatprep.subr.mxu0 %v764
    %2131 = vmatpush1.msra.mxu0 %v763
    %2132 = vmatprep.subr.mxu0 %v768
    %2133 = vmatpush1.msra.mxu0 %v767
    %2134 = vmatprep.subr.mxu0 %v772
    %2135 = vmatpush1.msra.mxu0 %v771
    %2136 = vmatprep.subr.mxu0 %v776
    %2137 = vmatpush1.msra.mxu0 %v775
    %2138 = vmatprep.subr.mxu0 %v780
    %2139 = vmatpush1.msra.mxu0 %v779
    %2140 = vmatprep.subr.mxu0 %v784
    %2141 = vmatpush1.msra.mxu0 %v783
    %2142 = vmatprep.subr.mxu0 %v788
    %2143 = vmatpush1.msra.mxu0 %v787
    %2144 = vmatprep.subr.mxu0 %v792
    %2145 = vmatpush1.msra.mxu0 %v791
    %2146 = vmatprep.mubr.f32.mxu0 %v1125
    %2147 = vmatmul.mubr.f32.gmra.mrb[0].mxu0 %v1123
    %v2148 = vpop.f32.mrb[0].mxu0
    %v2149 = vadd.f32 %v2078, %v2148
    %v2150 = vpop.f32.mrb[0].mxu0
    %v2151 = vadd.f32 %v2080, %v2150
    %2152 = vdwg.mxu0
    %2153 = vmatprep.subr.mxu0 %v796
    %2154 = vmatpush1.msra.mxu0 %v795
    %2155 = vmatprep.subr.mxu0 %v800
    %2156 = vmatpush1.msra.mxu0 %v799
    %2157 = vmatprep.subr.mxu0 %v804
    %2158 = vmatpush1.msra.mxu0 %v803
    %2159 = vmatprep.subr.mxu0 %v808
    %2160 = vmatpush1.msra.mxu0 %v807
    %2161 = vmatprep.subr.mxu0 %v812
    %2162 = vmatpush1.msra.mxu0 %v811
    %2163 = vmatprep.subr.mxu0 %v816
    %2164 = vmatpush1.msra.mxu0 %v815
    %2165 = vmatprep.subr.mxu0 %v820
    %2166 = vmatpush1.msra.mxu0 %v819
    %2167 = vmatprep.subr.mxu0 %v824
    %2168 = vmatpush1.msra.mxu0 %v823
    %2169 = vmatprep.subr.mxu0 %v828
    %2170 = vmatpush1.msra.mxu0 %v827
    %2171 = vmatprep.subr.mxu0 %v832
    %2172 = vmatpush1.msra.mxu0 %v831
    %2173 = vmatprep.subr.mxu0 %v836
    %2174 = vmatpush1.msra.mxu0 %v835
    %2175 = vmatprep.subr.mxu0 %v840
    %2176 = vmatpush1.msra.mxu0 %v839
    %2177 = vmatprep.subr.mxu0 %v844
    %2178 = vmatpush1.msra.mxu0 %v843
    %2179 = vmatprep.subr.mxu0 %v848
    %2180 = vmatpush1.msra.mxu0 %v847
    %2181 = vmatprep.subr.mxu0 %v852
    %2182 = vmatpush1.msra.mxu0 %v851
    %2183 = vmatprep.subr.mxu0 %v856
    %2184 = vmatpush1.msra.mxu0 %v855
    %2185 = vmatprep.subr.mxu0 %v860
    %2186 = vmatpush1.msra.mxu0 %v859
    %2187 = vmatprep.subr.mxu0 %v864
    %2188 = vmatpush1.msra.mxu0 %v863
    %2189 = vmatprep.subr.mxu0 %v868
    %2190 = vmatpush1.msra.mxu0 %v867
    %2191 = vmatprep.subr.mxu0 %v872
    %2192 = vmatpush1.msra.mxu0 %v871
    %2193 = vmatprep.subr.mxu0 %v876
    %2194 = vmatpush1.msra.mxu0 %v875
    %2195 = vmatprep.subr.mxu0 %v880
    %2196 = vmatpush1.msra.mxu0 %v879
    %2197 = vmatprep.subr.mxu0 %v884
    %2198 = vmatpush1.msra.mxu0 %v883
    %2199 = vmatprep.subr.mxu0 %v888
    %2200 = vmatpush1.msra.mxu0 %v887
    %2201 = vmatprep.subr.mxu0 %v892
    %2202 = vmatpush1.msra.mxu0 %v891
    %2203 = vmatprep.subr.mxu0 %v896
    %2204 = vmatpush1.msra.mxu0 %v895
    %2205 = vmatprep.subr.mxu0 %v900
    %2206 = vmatpush1.msra.mxu0 %v899
    %2207 = vmatprep.subr.mxu0 %v904
    %2208 = vmatpush1.msra.mxu0 %v903
    %2209 = vmatprep.subr.mxu0 %v908
    %2210 = vmatpush1.msra.mxu0 %v907
    %2211 = vmatprep.subr.mxu0 %v912
    %2212 = vmatpush1.msra.mxu0 %v911
    %2213 = vmatprep.subr.mxu0 %v916
    %2214 = vmatpush1.msra.mxu0 %v915
    %2215 = vmatprep.subr.mxu0 %v920
    %2216 = vmatpush1.msra.mxu0 %v919
    %2217 = vmatprep.mubr.f32.mxu0 %v1141
    %2218 = vmatmul.mubr.f32.gmra.mrb[0].mxu0 %v1133
    %v2219 = vpop.f32.mrb[0].mxu0
    %v2220 = vadd.f32 %v2149, %v2219
    %v2221 = vpop.f32.mrb[0].mxu0
    %v2222 = vadd.f32 %v2151, %v2221
    %2223 = vdwg.mxu0
    %2224 = vmatprep.subr.mxu0 %v924
    %2225 = vmatpush1.msra.mxu0 %v923
    %2226 = vmatprep.subr.mxu0 %v928
    %2227 = vmatpush1.msra.mxu0 %v927
    %2228 = vmatprep.subr.mxu0 %v932
    %2229 = vmatpush1.msra.mxu0 %v931
    %2230 = vmatprep.subr.mxu0 %v936
    %2231 = vmatpush1.msra.mxu0 %v935
    %2232 = vmatprep.subr.mxu0 %v940
    %2233 = vmatpush1.msra.mxu0 %v939
    %2234 = vmatprep.subr.mxu0 %v944
    %2235 = vmatpush1.msra.mxu0 %v943
    %2236 = vmatprep.subr.mxu0 %v948
    %2237 = vmatpush1.msra.mxu0 %v947
    %2238 = vmatprep.subr.mxu0 %v952
    %2239 = vmatpush1.msra.mxu0 %v951
    %2240 = vmatprep.subr.mxu0 %v956
    %2241 = vmatpush1.msra.mxu0 %v955
    %2242 = vmatprep.subr.mxu0 %v960
    %2243 = vmatpush1.msra.mxu0 %v959
    %2244 = vmatprep.subr.mxu0 %v964
    %2245 = vmatpush1.msra.mxu0 %v963
    %2246 = vmatprep.subr.mxu0 %v968
    %2247 = vmatpush1.msra.mxu0 %v967
    %2248 = vmatprep.subr.mxu0 %v972
    %2249 = vmatpush1.msra.mxu0 %v971
    %2250 = vmatprep.subr.mxu0 %v976
    %2251 = vmatpush1.msra.mxu0 %v975
    %2252 = vmatprep.subr.mxu0 %v980
    %2253 = vmatpush1.msra.mxu0 %v979
    %2254 = vmatprep.subr.mxu0 %v984
    %2255 = vmatpush1.msra.mxu0 %v983
    %2256 = vmatprep.subr.mxu0 %v988
    %2257 = vmatpush1.msra.mxu0 %v987
    %2258 = vmatprep.subr.mxu0 %v992
    %2259 = vmatpush1.msra.mxu0 %v991
    %2260 = vmatprep.subr.mxu0 %v996
    %2261 = vmatpush1.msra.mxu0 %v995
    %2262 = vmatprep.subr.mxu0 %v1000
    %2263 = vmatpush1.msra.mxu0 %v999
    %2264 = vmatprep.subr.mxu0 %v1004
    %2265 = vmatpush1.msra.mxu0 %v1003
    %2266 = vmatprep.subr.mxu0 %v1008
    %2267 = vmatpush1.msra.mxu0 %v1007
    %2268 = vmatprep.subr.mxu0 %v1012
    %2269 = vmatpush1.msra.mxu0 %v1011
    %2270 = vmatprep.subr.mxu0 %v1016
    %2271 = vmatpush1.msra.mxu0 %v1015
    %2272 = vmatprep.subr.mxu0 %v1020
    %2273 = vmatpush1.msra.mxu0 %v1019
    %2274 = vmatprep.subr.mxu0 %v1024
    %2275 = vmatpush1.msra.mxu0 %v1023
    %2276 = vmatprep.subr.mxu0 %v1028
    %2277 = vmatpush1.msra.mxu0 %v1027
    %2278 = vmatprep.subr.mxu0 %v1032
    %2279 = vmatpush1.msra.mxu0 %v1031
    %2280 = vmatprep.subr.mxu0 %v1036
    %2281 = vmatpush1.msra.mxu0 %v1035
    %2282 = vmatprep.subr.mxu0 %v1040
    %2283 = vmatpush1.msra.mxu0 %v1039
    %2284 = vmatprep.subr.mxu0 %v1044
    %2285 = vmatpush1.msra.mxu0 %v1043
    %2286 = vmatprep.subr.mxu0 %v1048
    %2287 = vmatpush1.msra.mxu0 %v1047
    %2288 = vmatprep.mubr.f32.mxu0 %v1142
    %2289 = vmatmul.mubr.f32.gmra.mrb[0].mxu0 %v1140
    %v2290 = vpop.f32.mrb[0].mxu0
    %v2291 = vadd.f32 %v2220, %v2290
    %v2292 = vpop.f32.mrb[0].mxu0
    %v2293 = vadd.f32 %v2222, %v2292
    %2294 = vdwg.mxu0
    %v2295 = vmax.f32 %v1723, 0.0
    %v2296 = vmax.f32 %v1725, 0.0
    %v2297 = vmax.f32 %v2291, 0.0
    %v2298 = vmax.f32 %v2293, 0.0
    %v2299 = vld [vmem:[%s3] sm:$0xff]
    %v2300 = vld [vmem:[%s3 + $0x8] sm:$0xff]
    %v2301 = vld [vmem:[%s3 + $0x10] sm:$0xff]
    %v2302 = vld [vmem:[%s3 + $0x18] sm:$0xff]
    %v2303 = vld [vmem:[%s3 + $0x20] sm:$0xff]
    %v2304 = vld [vmem:[%s3 + $0x28] sm:$0xff]
    %v2305 = vld [vmem:[%s3 + $0x30] sm:$0xff]
    %v2306 = vld [vmem:[%s3 + $0x38] sm:$0xff]
    %v2307 = vld [vmem:[%s3 + $0x40] sm:$0xff]
    %v2308 = vld [vmem:[%s3 + $0x48] sm:$0xff]
    %v2309 = vld [vmem:[%s3 + $0x50] sm:$0xff]
    %v2310 = vld [vmem:[%s3 + $0x58] sm:$0xff]
    %v2311 = vld [vmem:[%s3 + $0x60] sm:$0xff]
    %v2312 = vld [vmem:[%s3 + $0x68] sm:$0xff]
    %v2313 = vld [vmem:[%s3 + $0x70] sm:$0xff]
    %v2314 = vld [vmem:[%s3 + $0x78] sm:$0xff]
    %v2315 = vld [vmem:[%s3 + $0x80] sm:$0xff]
    %v2316 = vld [vmem:[%s3 + $0x88] sm:$0xff]
    %v2317 = vld [vmem:[%s3 + $0x90] sm:$0xff]
    %v2318 = vld [vmem:[%s3 + $0x98] sm:$0xff]
    %v2319 = vld [vmem:[%s3 + $0xa0] sm:$0xff]
    %v2320 = vld [vmem:[%s3 + $0xa8] sm:$0xff]
    %v2321 = vld [vmem:[%s3 + $0xb0] sm:$0xff]
    %v2322 = vld [vmem:[%s3 + $0xb8] sm:$0xff]
    %v2323 = vld [vmem:[%s3 + $0xc0] sm:$0xff]
    %v2324 = vld [vmem:[%s3 + $0xc8] sm:$0xff]
    %v2325 = vld [vmem:[%s3 + $0xd0] sm:$0xff]
    %v2326 = vld [vmem:[%s3 + $0xd8] sm:$0xff]
    %v2327 = vld [vmem:[%s3 + $0xe0] sm:$0xff]
    %v2328 = vld [vmem:[%s3 + $0xe8] sm:$0xff]
    %v2329 = vld [vmem:[%s3 + $0xf0] sm:$0xff]
    %v2330 = vld [vmem:[%s3 + $0xf8] sm:$0xff]
    %v2331 = vld [vmem:[%s3 + $0x100] sm:$0xff]
    %v2332 = vld [vmem:[%s3 + $0x108] sm:$0xff]
    %v2333 = vld [vmem:[%s3 + $0x110] sm:$0xff]
    %v2334 = vld [vmem:[%s3 + $0x118] sm:$0xff]
    %v2335 = vld [vmem:[%s3 + $0x120] sm:$0xff]
    %v2336 = vld [vmem:[%s3 + $0x128] sm:$0xff]
    %v2337 = vld [vmem:[%s3 + $0x130] sm:$0xff]
    %v2338 = vld [vmem:[%s3 + $0x138] sm:$0xff]
    %v2339 = vld [vmem:[%s3 + $0x140] sm:$0xff]
    %v2340 = vld [vmem:[%s3 + $0x148] sm:$0xff]
    %v2341 = vld [vmem:[%s3 + $0x150] sm:$0xff]
    %v2342 = vld [vmem:[%s3 + $0x158] sm:$0xff]
    %v2343 = vld [vmem:[%s3 + $0x160] sm:$0xff]
    %v2344 = vld [vmem:[%s3 + $0x168] sm:$0xff]
    %v2345 = vld [vmem:[%s3 + $0x170] sm:$0xff]
    %v2346 = vld [vmem:[%s3 + $0x178] sm:$0xff]
    %v2347 = vld [vmem:[%s3 + $0x180] sm:$0xff]
    %v2348 = vld [vmem:[%s3 + $0x188] sm:$0xff]
    %v2349 = vld [vmem:[%s3 + $0x190] sm:$0xff]
    %v2350 = vld [vmem:[%s3 + $0x198] sm:$0xff]
    %v2351 = vld [vmem:[%s3 + $0x1a0] sm:$0xff]
    %v2352 = vld [vmem:[%s3 + $0x1a8] sm:$0xff]
    %v2353 = vld [vmem:[%s3 + $0x1b0] sm:$0xff]
    %v2354 = vld [vmem:[%s3 + $0x1b8] sm:$0xff]
    %v2355 = vld [vmem:[%s3 + $0x1c0] sm:$0xff]
    %v2356 = vld [vmem:[%s3 + $0x1c8] sm:$0xff]
    %v2357 = vld [vmem:[%s3 + $0x1d0] sm:$0xff]
    %v2358 = vld [vmem:[%s3 + $0x1d8] sm:$0xff]
    %v2359 = vld [vmem:[%s3 + $0x1e0] sm:$0xff]
    %v2360 = vld [vmem:[%s3 + $0x1e8] sm:$0xff]
    %v2361 = vld [vmem:[%s3 + $0x1f0] sm:$0xff]
    %v2362 = vld [vmem:[%s3 + $0x1f8] sm:$0xff]
    %v2363 = vld [vmem:[%s4] sm:$0x1]
    %v2365 = vlaneseq
    %v2366 = vshrl.u32 %v2365, 7
    %v2367 = vsub.s32 0, %v2366
    %v2368 = vrot.slane %v2363, %v2367
    %2370 = vmatprep.subr.mxu0 0.0
    %2371 = vmatpush1.msra.mxu0 %v2299
    %2372 = vmatprep.subr.mxu0 0.0
    %2373 = vmatpush1.msra.mxu0 %v2300
    %2374 = vmatprep.subr.mxu0 0.0
    %2375 = vmatpush1.msra.mxu0 %v2301
    %2376 = vmatprep.subr.mxu0 0.0
    %2377 = vmatpush1.msra.mxu0 %v2302
    %2378 = vmatprep.subr.mxu0 0.0
    %2379 = vmatpush1.msra.mxu0 %v2303
    %2380 = vmatprep.subr.mxu0 0.0
    %2381 = vmatpush1.msra.mxu0 %v2304
    %2382 = vmatprep.subr.mxu0 0.0
    %2383 = vmatpush1.msra.mxu0 %v2305
    %2384 = vmatprep.subr.mxu0 0.0
    %2385 = vmatpush1.msra.mxu0 %v2306
    %2386 = vmatprep.subr.mxu0 0.0
    %2387 = vmatpush1.msra.mxu0 %v2307
    %2388 = vmatprep.subr.mxu0 0.0
    %2389 = vmatpush1.msra.mxu0 %v2308
    %2390 = vmatprep.subr.mxu0 0.0
    %2391 = vmatpush1.msra.mxu0 %v2309
    %2392 = vmatprep.subr.mxu0 0.0
    %2393 = vmatpush1.msra.mxu0 %v2310
    %2394 = vmatprep.subr.mxu0 0.0
    %2395 = vmatpush1.msra.mxu0 %v2311
    %2396 = vmatprep.subr.mxu0 0.0
    %2397 = vmatpush1.msra.mxu0 %v2312
    %2398 = vmatprep.subr.mxu0 0.0
    %2399 = vmatpush1.msra.mxu0 %v2313
    %2400 = vmatprep.subr.mxu0 0.0
    %2401 = vmatpush1.msra.mxu0 %v2314
    %2402 = vmatprep.subr.mxu0 0.0
    %2403 = vmatpush1.msra.mxu0 %v2315
    %2404 = vmatprep.subr.mxu0 0.0
    %2405 = vmatpush1.msra.mxu0 %v2316
    %2406 = vmatprep.subr.mxu0 0.0
    %2407 = vmatpush1.msra.mxu0 %v2317
    %2408 = vmatprep.subr.mxu0 0.0
    %2409 = vmatpush1.msra.mxu0 %v2318
    %2410 = vmatprep.subr.mxu0 0.0
    %2411 = vmatpush1.msra.mxu0 %v2319
    %2412 = vmatprep.subr.mxu0 0.0
    %2413 = vmatpush1.msra.mxu0 %v2320
    %2414 = vmatprep.subr.mxu0 0.0
    %2415 = vmatpush1.msra.mxu0 %v2321
    %2416 = vmatprep.subr.mxu0 0.0
    %2417 = vmatpush1.msra.mxu0 %v2322
    %2418 = vmatprep.subr.mxu0 0.0
    %2419 = vmatpush1.msra.mxu0 %v2323
    %2420 = vmatprep.subr.mxu0 0.0
    %2421 = vmatpush1.msra.mxu0 %v2324
    %2422 = vmatprep.subr.mxu0 0.0
    %2423 = vmatpush1.msra.mxu0 %v2325
    %2424 = vmatprep.subr.mxu0 0.0
    %2425 = vmatpush1.msra.mxu0 %v2326
    %2426 = vmatprep.subr.mxu0 0.0
    %2427 = vmatpush1.msra.mxu0 %v2327
    %2428 = vmatprep.subr.mxu0 0.0
    %2429 = vmatpush1.msra.mxu0 %v2328
    %2430 = vmatprep.subr.mxu0 0.0
    %2431 = vmatpush1.msra.mxu0 %v2329
    %2432 = vmatprep.subr.mxu0 0.0
    %2433 = vmatpush1.msra.mxu0 %v2330
    %2434 = vmatprep.mubr.f32.mxu0 %v2296
    %2435 = vmatmul.mubr.f32.gmra.mrb[0].mxu0 %v2295
    %v2436 = vpop.f32.mrb[0].mxu0
    %v2437 = vadd.f32 %v2368, %v2436
    %v2438 = vpop.f32.mrb[0].mxu0
    %2439 = vdwg.mxu0
    %2440 = vmatprep.subr.mxu0 0.0
    %2441 = vmatpush1.msra.mxu0 %v2331
    %2442 = vmatprep.subr.mxu0 0.0
    %2443 = vmatpush1.msra.mxu0 %v2332
    %2444 = vmatprep.subr.mxu0 0.0
    %2445 = vmatpush1.msra.mxu0 %v2333
    %2446 = vmatprep.subr.mxu0 0.0
    %2447 = vmatpush1.msra.mxu0 %v2334
    %2448 = vmatprep.subr.mxu0 0.0
    %2449 = vmatpush1.msra.mxu0 %v2335
    %2450 = vmatprep.subr.mxu0 0.0
    %2451 = vmatpush1.msra.mxu0 %v2336
    %2452 = vmatprep.subr.mxu0 0.0
    %2453 = vmatpush1.msra.mxu0 %v2337
    %2454 = vmatprep.subr.mxu0 0.0
    %2455 = vmatpush1.msra.mxu0 %v2338
    %2456 = vmatprep.subr.mxu0 0.0
    %2457 = vmatpush1.msra.mxu0 %v2339
    %2458 = vmatprep.subr.mxu0 0.0
    %2459 = vmatpush1.msra.mxu0 %v2340
    %2460 = vmatprep.subr.mxu0 0.0
    %2461 = vmatpush1.msra.mxu0 %v2341
    %2462 = vmatprep.subr.mxu0 0.0
    %2463 = vmatpush1.msra.mxu0 %v2342
    %2464 = vmatprep.subr.mxu0 0.0
    %2465 = vmatpush1.msra.mxu0 %v2343
    %2466 = vmatprep.subr.mxu0 0.0
    %2467 = vmatpush1.msra.mxu0 %v2344
    %2468 = vmatprep.subr.mxu0 0.0
    %2469 = vmatpush1.msra.mxu0 %v2345
    %2470 = vmatprep.subr.mxu0 0.0
    %2471 = vmatpush1.msra.mxu0 %v2346
    %2472 = vmatprep.subr.mxu0 0.0
    %2473 = vmatpush1.msra.mxu0 %v2347
    %2474 = vmatprep.subr.mxu0 0.0
    %2475 = vmatpush1.msra.mxu0 %v2348
    %2476 = vmatprep.subr.mxu0 0.0
    %2477 = vmatpush1.msra.mxu0 %v2349
    %2478 = vmatprep.subr.mxu0 0.0
    %2479 = vmatpush1.msra.mxu0 %v2350
    %2480 = vmatprep.subr.mxu0 0.0
    %2481 = vmatpush1.msra.mxu0 %v2351
    %2482 = vmatprep.subr.mxu0 0.0
    %2483 = vmatpush1.msra.mxu0 %v2352
    %2484 = vmatprep.subr.mxu0 0.0
    %2485 = vmatpush1.msra.mxu0 %v2353
    %2486 = vmatprep.subr.mxu0 0.0
    %2487 = vmatpush1.msra.mxu0 %v2354
    %2488 = vmatprep.subr.mxu0 0.0
    %2489 = vmatpush1.msra.mxu0 %v2355
    %2490 = vmatprep.subr.mxu0 0.0
    %2491 = vmatpush1.msra.mxu0 %v2356
    %2492 = vmatprep.subr.mxu0 0.0
    %2493 = vmatpush1.msra.mxu0 %v2357
    %2494 = vmatprep.subr.mxu0 0.0
    %2495 = vmatpush1.msra.mxu0 %v2358
    %2496 = vmatprep.subr.mxu0 0.0
    %2497 = vmatpush1.msra.mxu0 %v2359
    %2498 = vmatprep.subr.mxu0 0.0
    %2499 = vmatpush1.msra.mxu0 %v2360
    %2500 = vmatprep.subr.mxu0 0.0
    %2501 = vmatpush1.msra.mxu0 %v2361
    %2502 = vmatprep.subr.mxu0 0.0
    %2503 = vmatpush1.msra.mxu0 %v2362
    %2504 = vmatprep.mubr.f32.mxu0 %v2298
    %2505 = vmatmul.mubr.f32.gmra.mrb[0].mxu0 %v2297
    %v2506 = vpop.f32.mrb[0].mxu0
    %v2507 = vadd.f32 %v2437, %v2506
    %v2508 = vpop.f32.mrb[0].mxu0
    %2509 = vdwg.mxu0
    %v2510 = vlaneseq
    %v2511 = vand.u32 %v2510, 127
    %vm2512 = vcmp.lt.s32.totalorder %v2511, 10
    %v2513 = vsel %vm2512, %v2507, -inf
    %vm2514 = vcmask 1041408
    %v2515 = vsel %vm2514, %v2513, -inf
    %2516 = vmax.xlane.f32.xlu0 %v2515
    %v2517 = vpop.xlane.xlu0 %2516
    %v2518 = vsub.f32 %v2513, %v2517
    %v2519 = vmul.f32 %v2518, 1.442695
    %v2520 = vpow.pop %v2519
    %v2521 = vsel %vm2514, %v2520, 0.0
    %2522 = vadd.xlane.f32.xlu0 %v2521
    %v2523 = vpop.xlane.xlu0 %2522
    %v2524 = vlog2.pop %v2523
    %v2525 = vmul.f32 %v2524, 0.6931472
    %v2526 = vsub.f32 %v2518, %v2525
    %2527 = vst [vmem:[#allocation2] sm:$0x3] %v2526
    // Predicated region
    $region22: #{net_forward.5} parent=1 // pred_check
      _
    $region23: #{net_forward.5} parent=1 // pred_check_branch
      %2529 = sbr.rel (0) target = $region25
    $region24: #{net_forward.5} parent=1 // pred_region
      %s2531 = ssub.s32 32, 32
      %2532 = vsyncadd [#allocation3], %s2531
      %s2534 = sshll.u32 [#allocation2], 4
      %s2535 = int_to_ptr.vmem [resolvable:$true] %s2534
      %2537 = dma.vmem_to_hbm [thread:$0]  %s2535, 32, %s5, [#allocation3]
    $region25: #{net_forward.5} parent=1 // pred_fallthru
      _
    // Predicated region
    $region26: #{net_forward.5} parent=1 // pred_check
      _
    $region27: #{net_forward.5} parent=1 // pred_check_branch
      %2539 = sbr.rel (0) target = $region29
    $region28: #{net_forward.5} parent=1 // pred_region
      %2540 = dma.done [#allocation3], 32
    $region29: #{net_forward.5} parent=1 // pred_fallthru
      _
    %2541 = vsyncpa [#allocation3], 1

</llo_original>
